<compile_context>
chip_gen: v6e
topology: v6e:2x2x1
jax: 0.10.0
libtpu: 0.0.40
codegen_flags: <defaults>
</compile_context>

<pallas_src>
import math
import functools

import jax
import jax.numpy as jnp
from jax import lax
from jax.experimental import pallas as pl
from jax.experimental.pallas import tpu as pltpu

LN_EPS = 1e-5  # torch nn.LayerNorm default


def _round_up(n, m):
    return ((n + m - 1) // m) * m


# ----------------------------------------------------------------------------
# Fused kernel: linear1 -> relu -> linear2 -> residual add -> LayerNorm
# operating on a [tile_rows, D] slab of flattened (batch*seq) positions.
# ----------------------------------------------------------------------------
def _ffn_kernel(x_ref, w1_ref, b1_ref, w2_ref, b2_ref, g_ref, beta_ref, o_ref):
    # Residual / LayerNorm path in float32 regardless of input dtype.
    x = x_ref[...].astype(jnp.float32)                        # [T, D]

    # Conv1d(k=1) #1: [T, D] @ [D, F]  (bf16 MXU inputs, f32 accumulate) + relu
    h = jnp.dot(x_ref[...].astype(jnp.bfloat16), w1_ref[...],
                preferred_element_type=jnp.float32) + b1_ref[...]
    h = jnp.maximum(h, 0.0)

    # Conv1d(k=1) #2: [T, F] @ [F, D]
    y = jnp.dot(h.astype(jnp.bfloat16), w2_ref[...],
                preferred_element_type=jnp.float32) + b2_ref[...]

    # residual + two-pass LayerNorm (f32): mean, then centered sum of squares.
    z = x + y
    mu = jnp.mean(z, axis=-1, keepdims=True)
    zc = z - mu
    var = jnp.mean(zc * zc, axis=-1, keepdims=True)
    inv_std = lax.rsqrt(var + LN_EPS)                          # EUP rsqrt
    o_ref[...] = (zc * inv_std * g_ref[...] + beta_ref[...]).astype(o_ref.dtype)


# ----------------------------------------------------------------------------
# Wrapper: flatten [B, S, D] -> [N, D] (free reshape), row-tile, pipeline.
# ----------------------------------------------------------------------------
@functools.partial(jax.jit, static_argnames=("tile_rows",))
def positionwise_feed_forward(x, w1, b1, w2, b2, gamma, beta, *, tile_rows=512):
    # MXU-aligned preferred tile: multiple of 256 (v6e/v7x 2x256^2 MXU; also /128 for v5e).
    assert tile_rows % 256 == 0, "tile_rows must be a multiple of 256"
    B, S, D = x.shape
    F = w1.shape[1]
    N = B * S

    xf = x.reshape(N, D)   # contiguous reshape: no HBM copy, keeps caller dtype

    # Row-tile selection:
    #   * large N: full MXU-aligned tile.
    #   * small N: split rows into (at least) two grid steps so both v7x TensorCores
    #     get work; keep sublane (8) alignment. Partial trailing block is masked.
    if N >= 2 * tile_rows:
        tile = tile_rows
    else:
        tile = min(tile_rows, max(8, _round_up(pl.cdiv(N, 2), 8)))
    grid = (pl.cdiv(N, tile),)

    out_dtype = x.dtype
    act_bytes = jnp.dtype(out_dtype).itemsize
    cost = pl.CostEstimate(
        flops=4 * N * D * F,                              # two matmuls, 2*M*K*N each
        transcendentals=N,                                # one rsqrt per row
        bytes_accessed=(N * D * act_bytes                 # x in
                        + N * D * act_bytes               # out
                        + D * F * 2 + F * D * 2           # bf16 weights
                        + (F + 3 * D) * 4),               # biases + gamma/beta
    )

    def _const(shape):
        # Constant-index operands: DMA'd once; single-buffer to save VMEM (v7x headroom).
        return pl.BlockSpec(shape, lambda i: (0, 0), pipeline_mode=pl.Buffered(1))

    out = pl.pallas_call(
        _ffn_kernel,
        grid=grid,
        in_specs=[
            pl.BlockSpec((tile, D), lambda i: (i, 0)),    # x rows (double-buffered)
            _const((D, F)),                               # w1 (bf16, resident)
            _const((1, F)),                               # b1
            _const((F, D)),                               # w2 (bf16, resident)
            _const((1, D)),                               # b2
            _const((1, D)),                               # LayerNorm gamma
            _const((1, D)),                               # LayerNorm beta
        ],
        out_specs=pl.BlockSpec((tile, D), lambda i: (i, 0)),
        out_shape=jax.ShapeDtypeStruct((N, D), out_dtype),
        compiler_params=pltpu.CompilerParams(
            dimension_semantics=("parallel",),            # shard row tiles across TCs (v7x)
            vmem_limit_bytes=48 * 1024 * 1024,            # safe within v7x's 64 MiB
        ),
        cost_estimate=cost,
    )(
        xf,
        w1.astype(jnp.bfloat16), b1.astype(jnp.float32),   # astype = no-op if pre-cast
        w2.astype(jnp.bfloat16), b2.astype(jnp.float32),
        gamma.astype(jnp.float32), beta.astype(jnp.float32),
    )

    return out.reshape(B, S, D)


# ----------------------------------------------------------------------------
# Pure-JAX references for validation.
# ----------------------------------------------------------------------------
def _reference_bf16(x, w1, b1, w2, b2, gamma, beta):
    # Same bf16 MXU input casts / f32 accumulation as the kernel.
    h = jnp.dot(x.astype(jnp.bfloat16), w1.astype(jnp.bfloat16),
                preferred_element_type=jnp.float32) + b1
    h = jnp.maximum(h, 0.0)
    y = jnp.dot(h.astype(jnp.bfloat16), w2.astype(jnp.bfloat16),
                preferred_element_type=jnp.float32) + b2
    z = x.astype(jnp.float32) + y
    mu = jnp.mean(z, axis=-1, keepdims=True)
    var = jnp.mean((z - mu) ** 2, axis=-1, keepdims=True)
    return (z - mu) / jnp.sqrt(var + LN_EPS) * gamma + beta


def _reference_f32(x, w1, b1, w2, b2, gamma, beta):
    # Full fp32 path (matches the PyTorch module numerics).
    h = jnp.maximum(x @ w1 + b1, 0.0)
    y = h @ w2 + b2
    z = x + y
    mu = jnp.mean(z, axis=-1, keepdims=True)
    var = jnp.mean((z - mu) ** 2, axis=-1, keepdims=True)
    return (z - mu) / jnp.sqrt(var + LN_EPS) * gamma + beta


# ----------------------------------------------------------------------------
if __name__ == "__main__":
    key = jax.random.PRNGKey(0)
    B, S, D, F = 2, 8, 512, 2048            # model_dim=512, ffn_dim=2048 (module defaults)
    k0, k1, k2, k3, k4 = jax.random.split(key, 5)

    x = jax.random.normal(k0, (B, S, D), jnp.float32)

    # Conv1d(k=1) weights as [in, out] matrices, PyTorch-style uniform init bounds.
    bnd1 = 1.0 / math.sqrt(D)
    w1_f32 = jax.random.uniform(k1, (D, F), jnp.float32, -bnd1, bnd1)
    b1 = jax.random.uniform(k2, (1, F), jnp.float32, -bnd1, bnd1)
    bnd2 = 1.0 / math.sqrt(F)
    w2_f32 = jax.random.uniform(k3, (F, D), jnp.float32, -bnd2, bnd2)
    b2 = jax.random.uniform(k4, (1, D), jnp.float32, -bnd2, bnd2)
    gamma = jnp.ones((1, D), jnp.float32)   # nn.LayerNorm default init
    beta = jnp.zeros((1, D), jnp.float32)

    # Pre-cast the MXU weights to bf16 ONCE, outside the jitted forward path,
    # so no per-call f32->bf16 convert op is emitted.
    w1 = w1_f32.astype(jnp.bfloat16)
    w2 = w2_f32.astype(jnp.bfloat16)

    out = positionwise_feed_forward(x, w1, b1, w2, b2, gamma, beta)
    out = jax.block_until_ready(out)
    assert out.shape == (B, S, D)

    # Check against a reference with identical bf16 matmul-input casts (tight) ...
    ref_bf16 = _reference_bf16(x, w1, b1, w2, b2, gamma, beta)
    err = float(jnp.max(jnp.abs(out - ref_bf16)))
    assert err < 5e-2, f"max abs err vs bf16-matched reference {err}"

    # ... and against the full fp32 (PyTorch-equivalent) path with a looser bound,
    # so the error vs. the true module is also bounded.
    ref_f32 = _reference_f32(x, w1_f32, b1, w2_f32, b2, gamma, beta)
    err_f32 = float(jnp.max(jnp.abs(out - ref_f32)))
    assert err_f32 < 1e-1, f"max abs err vs fp32 reference {err_f32}"

    print("KERNEL_OK")
</pallas_src>

<mosaic_0001>
module attributes {stable_mosaic.version = 11 : i64} {
  func.func @_ffn_kernel(%arg0: i32, %arg1: memref<8x512xf32, #tpu.memory_space<vmem>>, %arg2: memref<512x2048xbf16, #tpu.memory_space<vmem>>, %arg3: memref<1x2048xf32, #tpu.memory_space<vmem>>, %arg4: memref<2048x512xbf16, #tpu.memory_space<vmem>>, %arg5: memref<1x512xf32, #tpu.memory_space<vmem>>, %arg6: memref<1x512xf32, #tpu.memory_space<vmem>>, %arg7: memref<1x512xf32, #tpu.memory_space<vmem>>, %arg8: memref<8x512xf32, #tpu.memory_space<vmem>>) attributes {dimension_semantics = [#tpu.dimension_semantics<parallel>], iteration_bounds = array<i64: 2>, scalar_prefetch = 0 : i64, scratch_operands = 0 : i64, tpu.core_type = #tpu.core_type<tc>, window_params = [{transform_indices = @transform_0, window_bounds = array<i64: 8, 512>}, {pipeline_mode = #tpu.pipeline_mode<synchronous>, transform_indices = @transform_1, window_bounds = array<i64: 512, 2048>}, {pipeline_mode = #tpu.pipeline_mode<synchronous>, transform_indices = @transform_2, window_bounds = array<i64: 1, 2048>}, {pipeline_mode = #tpu.pipeline_mode<synchronous>, transform_indices = @transform_3, window_bounds = array<i64: 2048, 512>}, {pipeline_mode = #tpu.pipeline_mode<synchronous>, transform_indices = @transform_4, window_bounds = array<i64: 1, 512>}, {pipeline_mode = #tpu.pipeline_mode<synchronous>, transform_indices = @transform_5, window_bounds = array<i64: 1, 512>}, {pipeline_mode = #tpu.pipeline_mode<synchronous>, transform_indices = @transform_6, window_bounds = array<i64: 1, 512>}, {transform_indices = @transform_7, window_bounds = array<i64: 8, 512>}]} {
    %c0 = arith.constant 0 : index
    %c0_0 = arith.constant 0 : index
    %0 = vector.load %arg1[%c0, %c0_0] : memref<8x512xf32, #tpu.memory_space<vmem>>, vector<8x512xf32>
    %c0_1 = arith.constant 0 : index
    %c0_2 = arith.constant 0 : index
    %1 = vector.load %arg1[%c0_1, %c0_2] : memref<8x512xf32, #tpu.memory_space<vmem>>, vector<8x512xf32>
    %2 = arith.truncf %1 : vector<8x512xf32> to vector<8x512xbf16>
    %c0_3 = arith.constant 0 : index
    %c0_4 = arith.constant 0 : index
    %3 = vector.load %arg2[%c0_3, %c0_4] : memref<512x2048xbf16, #tpu.memory_space<vmem>>, vector<512x2048xbf16>
    %cst = arith.constant dense<0.000000e+00> : vector<8x2048xf32>
    %4 = tpu.matmul %2, %3, %cst {dimension_numbers = #tpu.dot_dimension_numbers<[1], [0], [0], [1], [0, 0, 1, 1], [], []>} : vector<8x512xbf16>, vector<512x2048xbf16>, vector<8x2048xf32> -> vector<8x2048xf32>
    %c0_5 = arith.constant 0 : index
    %c0_6 = arith.constant 0 : index
    %5 = vector.load %arg3[%c0_5, %c0_6] : memref<1x2048xf32, #tpu.memory_space<vmem>>, vector<1x2048xf32>
    %6 = vector.broadcast %5 : vector<1x2048xf32> to vector<8x2048xf32>
    %7 = arith.addf %4, %6 : vector<8x2048xf32>
    %cst_7 = arith.constant 0.000000e+00 : f32
    %8 = vector.broadcast %cst_7 : f32 to vector<8x2048xf32>
    %9 = arith.maximumf %7, %8 : vector<8x2048xf32>
    %10 = arith.truncf %9 : vector<8x2048xf32> to vector<8x2048xbf16>
    %c0_8 = arith.constant 0 : index
    %c0_9 = arith.constant 0 : index
    %11 = vector.load %arg4[%c0_8, %c0_9] : memref<2048x512xbf16, #tpu.memory_space<vmem>>, vector<2048x512xbf16>
    %cst_10 = arith.constant dense<0.000000e+00> : vector<8x512xf32>
    %12 = tpu.matmul %10, %11, %cst_10 {dimension_numbers = #tpu.dot_dimension_numbers<[1], [0], [0], [1], [0, 0, 1, 1], [], []>} : vector<8x2048xbf16>, vector<2048x512xbf16>, vector<8x512xf32> -> vector<8x512xf32>
    %c0_11 = arith.constant 0 : index
    %c0_12 = arith.constant 0 : index
    %13 = vector.load %arg5[%c0_11, %c0_12] : memref<1x512xf32, #tpu.memory_space<vmem>>, vector<1x512xf32>
    %14 = vector.broadcast %13 : vector<1x512xf32> to vector<8x512xf32>
    %15 = arith.addf %12, %14 : vector<8x512xf32>
    %16 = arith.addf %0, %15 : vector<8x512xf32>
    %cst_13 = arith.constant dense<0.000000e+00> : vector<8xf32>
    %17 = vector.multi_reduction <add>, %16, %cst_13 [1] : vector<8x512xf32> to vector<8xf32>
    %18 = vector.shape_cast %17 : vector<8xf32> to vector<8x1xf32>
    %cst_14 = arith.constant 5.120000e+02 : f32
    %19 = vector.broadcast %cst_14 : f32 to vector<8x1xf32>
    %20 = arith.divf %18, %19 : vector<8x1xf32>
    %21 = vector.broadcast %20 : vector<8x1xf32> to vector<8x512xf32>
    %22 = arith.subf %16, %21 : vector<8x512xf32>
    %23 = arith.mulf %22, %22 : vector<8x512xf32>
    %cst_15 = arith.constant dense<0.000000e+00> : vector<8xf32>
    %24 = vector.multi_reduction <add>, %23, %cst_15 [1] : vector<8x512xf32> to vector<8xf32>
    %25 = vector.shape_cast %24 : vector<8xf32> to vector<8x1xf32>
    %cst_16 = arith.constant 5.120000e+02 : f32
    %26 = vector.broadcast %cst_16 : f32 to vector<8x1xf32>
    %27 = arith.divf %25, %26 : vector<8x1xf32>
    %cst_17 = arith.constant 9.99999974E-6 : f32
    %28 = vector.broadcast %cst_17 : f32 to vector<8x1xf32>
    %29 = arith.addf %27, %28 : vector<8x1xf32>
    %30 = math.rsqrt %29 : vector<8x1xf32>
    %31 = vector.broadcast %30 : vector<8x1xf32> to vector<8x512xf32>
    %32 = arith.mulf %22, %31 : vector<8x512xf32>
    %c0_18 = arith.constant 0 : index
    %c0_19 = arith.constant 0 : index
    %33 = vector.load %arg6[%c0_18, %c0_19] : memref<1x512xf32, #tpu.memory_space<vmem>>, vector<1x512xf32>
    %34 = vector.broadcast %33 : vector<1x512xf32> to vector<8x512xf32>
    %35 = arith.mulf %32, %34 : vector<8x512xf32>
    %c0_20 = arith.constant 0 : index
    %c0_21 = arith.constant 0 : index
    %36 = vector.load %arg7[%c0_20, %c0_21] : memref<1x512xf32, #tpu.memory_space<vmem>>, vector<1x512xf32>
    %37 = vector.broadcast %36 : vector<1x512xf32> to vector<8x512xf32>
    %38 = arith.addf %35, %37 : vector<8x512xf32>
    %c0_22 = arith.constant 0 : index
    %c0_23 = arith.constant 0 : index
    %39 = vector.load %arg8[%c0_22, %c0_23] : memref<8x512xf32, #tpu.memory_space<vmem>>, vector<8x512xf32>
    tpu.vector_store %arg8[%c0_22, %c0_23], %38 {strides = array<i32>} : memref<8x512xf32, #tpu.memory_space<vmem>>, vector<8x512xf32>,
    return
  }
  func.func @transform_0(%arg0: i32) -> (i32, i32) {
    %c0_i32 = arith.constant 0 : i32
    %c0_i32_0 = arith.constant 0 : i32
    return %arg0, %c0_i32 : i32, i32
  }
  func.func @transform_1(%arg0: i32) -> (i32, i32) {
    %c0_i32 = arith.constant 0 : i32
    %c0_i32_0 = arith.constant 0 : i32
    %c0_i32_1 = arith.constant 0 : i32
    return %c0_i32, %c0_i32_0 : i32, i32
  }
  func.func @transform_2(%arg0: i32) -> (i32, i32) {
    %c0_i32 = arith.constant 0 : i32
    %c0_i32_0 = arith.constant 0 : i32
    %c0_i32_1 = arith.constant 0 : i32
    return %c0_i32, %c0_i32_0 : i32, i32
  }
  func.func @transform_3(%arg0: i32) -> (i32, i32) {
    %c0_i32 = arith.constant 0 : i32
    %c0_i32_0 = arith.constant 0 : i32
    %c0_i32_1 = arith.constant 0 : i32
    return %c0_i32, %c0_i32_0 : i32, i32
  }
  func.func @transform_4(%arg0: i32) -> (i32, i32) {
    %c0_i32 = arith.constant 0 : i32
    %c0_i32_0 = arith.constant 0 : i32
    %c0_i32_1 = arith.constant 0 : i32
    return %c0_i32, %c0_i32_0 : i32, i32
  }
  func.func @transform_5(%arg0: i32) -> (i32, i32) {
    %c0_i32 = arith.constant 0 : i32
    %c0_i32_0 = arith.constant 0 : i32
    %c0_i32_1 = arith.constant 0 : i32
    return %c0_i32, %c0_i32_0 : i32, i32
  }
  func.func @transform_6(%arg0: i32) -> (i32, i32) {
    %c0_i32 = arith.constant 0 : i32
    %c0_i32_0 = arith.constant 0 : i32
    %c0_i32_1 = arith.constant 0 : i32
    return %c0_i32, %c0_i32_0 : i32, i32
  }
  func.func @transform_7(%arg0: i32) -> (i32, i32) {
    %c0_i32 = arith.constant 0 : i32
    %c0_i32_0 = arith.constant 0 : i32
    return %arg0, %c0_i32 : i32, i32
  }
}

</mosaic_0001>

<llo_original>
// kernel: positionwise_feed_forward.1
$region0: #{positionwise_feed_forward.1}
  #allocation0 [shape = 'u32[]', space=smem, size = 0x4, offset = 0x4, fixed_abs, tag = 'smem constant byte address 0x4 - core index']
  #allocation1 [shape = 'u32[144,128]{1,0:T(1,128)}', space=vmem, size = 0x12000, scoped, tag = 'internal scratch']
  %s0 = inlined_call_operand.hbm [shape: f32[16,512], index: 0, kind: input, shape index: {}]
  %s1 = inlined_call_operand.hbm [shape: bf16[512,2048], index: 1, kind: input, shape index: {}]
  %s2 = inlined_call_operand.hbm [shape: f32[1,2048], index: 2, kind: input, shape index: {}]
  %s3 = inlined_call_operand.hbm [shape: bf16[2048,512], index: 3, kind: input, shape index: {}]
  %s4 = inlined_call_operand.hbm [shape: f32[1,512], index: 4, kind: input, shape index: {}]
  %s5 = inlined_call_operand.hbm [shape: f32[1,512], index: 5, kind: input, shape index: {}]
  %s6 = inlined_call_operand.hbm [shape: f32[1,512], index: 6, kind: input, shape index: {}]
  %s7 = inlined_call_operand.hbm [shape: f32[16,512], index: 7, kind: output, shape index: {}]
  %s8 = sld [smem:[#allocation0]]
  $region89: #{positionwise_feed_forward.1} parent=0
    _
  %s10 = ssub.s32 1, %s8
  %s11 = scalar_select 0, %s10, %s8
  $region1: #{positionwise_feed_forward.1} parent=0
    #allocation2 [shape = 'u8[32768]{0}', space=vmem, size = 0x8000, scoped, tag = 'input window, operand 0']
    #allocation3 [shape = 's32[2]{0}', space=sflag, size = 0x8, scoped, tag = 'scoped memory for positionwise_feed_forward.1']
    #allocation4 [shape = 's32[2]{0}', space=sflag, size = 0x8, scoped, tag = 'scoped memory for positionwise_feed_forward.1']
    #allocation5 [shape = 'u8[2097152]{0}', space=vmem, size = 0x200000, scoped, tag = 'input window, operand 1, single buffered']
    #allocation6 [shape = 's32[1]{0}', space=sflag, size = 0x4, scoped, tag = 'scoped memory for positionwise_feed_forward.1']
    #allocation7 [shape = 'u8[8192]{0}', space=vmem, size = 0x2000, scoped, tag = 'input window, operand 2, single buffered']
    #allocation8 [shape = 'u8[2097152]{0}', space=vmem, size = 0x200000, scoped, tag = 'input window, operand 3, single buffered']
    #allocation9 [shape = 's32[1]{0}', space=sflag, size = 0x4, scoped, tag = 'scoped memory for positionwise_feed_forward.1']
    #allocation10 [shape = 'u8[2048]{0}', space=vmem, size = 0x800, scoped, tag = 'input window, operand 4, single buffered']
    #allocation11 [shape = 'u8[2048]{0}', space=vmem, size = 0x800, scoped, tag = 'input window, operand 5, single buffered']
    #allocation12 [shape = 's32[1]{0}', space=sflag, size = 0x4, scoped, tag = 'scoped memory for positionwise_feed_forward.1']
    #allocation13 [shape = 'u8[2048]{0}', space=vmem, size = 0x800, scoped, tag = 'input window, operand 6, single buffered']
    #allocation14 [shape = 'u8[32768]{0}', space=vmem, size = 0x8000, scoped, tag = 'output window, operand 0']
    %12 = vsyncpa [#allocation3], 0
    %s13 = scalar_lea.sflag [#allocation3], 1
    %14 = vsyncpa %s13, 0
    %15 = vsyncpa [#allocation6], 0
    %16 = vsyncpa [#allocation9], 0
    %17 = vsyncpa [#allocation12], 0
    %18 = vsyncpa [#allocation4], 0
    %s19 = scalar_lea.sflag [#allocation4], 1
    %20 = vsyncpa %s19, 0
    loop: start=0, step=1, limit=4
    $region2: #{positionwise_feed_forward.1} parent=1 // loop_pre_header
      _
    $region3: #{positionwise_feed_forward.1} parent=1 // loop_header
      %s22 = sphi 0, %s26
      %p23 = scmp.ge.s32.totalorder %s22, 4
      %s32 = sphi 0, %s34
      %s35 = sphi 0, %s32
      %s36 = sphi 0, %s35
      %s52 = sphi 0, %s36
      %s56 = sphi 0, %s56
      %s58 = sphi 0, %s56
      %s59 = sphi 0, %s58
      %s73 = sphi 0, %s59
      %s77 = sphi 0, %s77
      %s79 = sphi 0, %s77
      %s80 = sphi 0, %s79
      %s94 = sphi 0, %s80
      %s98 = sphi 0, %s98
      %s100 = sphi 0, %s98
      %s101 = sphi 0, %s100
      %s115 = sphi 0, %s101
      %s119 = sphi 0, %s119
      %s121 = sphi 0, %s119
      %s122 = sphi 0, %s121
      %s136 = sphi 0, %s122
      %s140 = sphi 0, %s140
      %s142 = sphi 0, %s140
      %s143 = sphi 0, %s142
      %s157 = sphi 0, %s143
      %s161 = sphi 0, %s161
      %s163 = sphi 0, %s161
      %s164 = sphi 0, %s163
      %s178 = sphi 0, %s164
      %s184 = sphi 0, %s186
      %s187 = sphi 0, %s184
      %s188 = sphi 0, %s187
      %s204 = sphi 0, %s188
    $region4: #{positionwise_feed_forward.1} parent=1 // loop_header_branch
      %25 = sbr.rel (%p23) target = $region8
    $region5: #{positionwise_feed_forward.1} parent=1 // loop_body
      %s27 = ssub.s32 %s22, 1
      %s28 = ssub.s32 %s22, 2
      %s29 = sadd.s32 %s22, 1
      %s30 = ssub.s32 %s22, %s29
      %p31 = scmp.eq.s32.totalorder %s30, 0
      %s33 = sadd.s32 %s32, 1
      %s34 = scalar_select %p31, %s32, %s33
      %p37 = pneg %p31
      %p38 = scmp.eq.s32.totalorder %s22, 1
      %p39 = por %p37, %p38
      %p40 = scmp.ne.s32.totalorder %s32, %s35
      %p41 = scmp.eq.s32.totalorder %s22, 0
      %p42 = por %p40, %p41
      %p43 = scmp.ne.s32.totalorder %s32, %s35
      %p44 = scmp.eq.s32.totalorder %s27, 1
      %p45 = por %p43, %p44
      %p46 = scmp.ne.s32.totalorder %s35, %s36
      %p47 = scmp.eq.s32.totalorder %s27, 0
      %p48 = por %p46, %p47
      %p49 = scmp.ne.s32.totalorder %s35, %s36
      %p50 = scmp.eq.s32.totalorder %s28, 1
      %p51 = por %p49, %p50
      %p53 = scmp.ne.s32.totalorder %s36, %s52
      %p54 = scmp.eq.s32.totalorder %s28, 0
      %p55 = por %p53, %p54
      %s57 = sadd.s32 %s56, 1
      %p60 = scmp.eq.s32.totalorder %s22, 1
      %p61 = scmp.ne.s32.totalorder %s56, %s58
      %p62 = scmp.eq.s32.totalorder %s22, 0
      %p63 = por %p61, %p62
      %p64 = scmp.ne.s32.totalorder %s56, %s58
      %p65 = scmp.eq.s32.totalorder %s27, 1
      %p66 = por %p64, %p65
      %p67 = scmp.ne.s32.totalorder %s58, %s59
      %p68 = scmp.eq.s32.totalorder %s27, 0
      %p69 = por %p67, %p68
      %p70 = scmp.ne.s32.totalorder %s58, %s59
      %p71 = scmp.eq.s32.totalorder %s28, 1
      %p72 = por %p70, %p71
      %p74 = scmp.ne.s32.totalorder %s59, %s73
      %p75 = scmp.eq.s32.totalorder %s28, 0
      %p76 = por %p74, %p75
      %s78 = sadd.s32 %s77, 1
      %p81 = scmp.eq.s32.totalorder %s22, 1
      %p82 = scmp.ne.s32.totalorder %s77, %s79
      %p83 = scmp.eq.s32.totalorder %s22, 0
      %p84 = por %p82, %p83
      %p85 = scmp.ne.s32.totalorder %s77, %s79
      %p86 = scmp.eq.s32.totalorder %s27, 1
      %p87 = por %p85, %p86
      %p88 = scmp.ne.s32.totalorder %s79, %s80
      %p89 = scmp.eq.s32.totalorder %s27, 0
      %p90 = por %p88, %p89
      %p91 = scmp.ne.s32.totalorder %s79, %s80
      %p92 = scmp.eq.s32.totalorder %s28, 1
      %p93 = por %p91, %p92
      %p95 = scmp.ne.s32.totalorder %s80, %s94
      %p96 = scmp.eq.s32.totalorder %s28, 0
      %p97 = por %p95, %p96
      %s99 = sadd.s32 %s98, 1
      %p102 = scmp.eq.s32.totalorder %s22, 1
      %p103 = scmp.ne.s32.totalorder %s98, %s100
      %p104 = scmp.eq.s32.totalorder %s22, 0
      %p105 = por %p103, %p104
      %p106 = scmp.ne.s32.totalorder %s98, %s100
      %p107 = scmp.eq.s32.totalorder %s27, 1
      %p108 = por %p106, %p107
      %p109 = scmp.ne.s32.totalorder %s100, %s101
      %p110 = scmp.eq.s32.totalorder %s27, 0
      %p111 = por %p109, %p110
      %p112 = scmp.ne.s32.totalorder %s100, %s101
      %p113 = scmp.eq.s32.totalorder %s28, 1
      %p114 = por %p112, %p113
      %p116 = scmp.ne.s32.totalorder %s101, %s115
      %p117 = scmp.eq.s32.totalorder %s28, 0
      %p118 = por %p116, %p117
      %s120 = sadd.s32 %s119, 1
      %p123 = scmp.eq.s32.totalorder %s22, 1
      %p124 = scmp.ne.s32.totalorder %s119, %s121
      %p125 = scmp.eq.s32.totalorder %s22, 0
      %p126 = por %p124, %p125
      %p127 = scmp.ne.s32.totalorder %s119, %s121
      %p128 = scmp.eq.s32.totalorder %s27, 1
      %p129 = por %p127, %p128
      %p130 = scmp.ne.s32.totalorder %s121, %s122
      %p131 = scmp.eq.s32.totalorder %s27, 0
      %p132 = por %p130, %p131
      %p133 = scmp.ne.s32.totalorder %s121, %s122
      %p134 = scmp.eq.s32.totalorder %s28, 1
      %p135 = por %p133, %p134
      %p137 = scmp.ne.s32.totalorder %s122, %s136
      %p138 = scmp.eq.s32.totalorder %s28, 0
      %p139 = por %p137, %p138
      %s141 = sadd.s32 %s140, 1
      %p144 = scmp.eq.s32.totalorder %s22, 1
      %p145 = scmp.ne.s32.totalorder %s140, %s142
      %p146 = scmp.eq.s32.totalorder %s22, 0
      %p147 = por %p145, %p146
      %p148 = scmp.ne.s32.totalorder %s140, %s142
      %p149 = scmp.eq.s32.totalorder %s27, 1
      %p150 = por %p148, %p149
      %p151 = scmp.ne.s32.totalorder %s142, %s143
      %p152 = scmp.eq.s32.totalorder %s27, 0
      %p153 = por %p151, %p152
      %p154 = scmp.ne.s32.totalorder %s142, %s143
      %p155 = scmp.eq.s32.totalorder %s28, 1
      %p156 = por %p154, %p155
      %p158 = scmp.ne.s32.totalorder %s143, %s157
      %p159 = scmp.eq.s32.totalorder %s28, 0
      %p160 = por %p158, %p159
      %s162 = sadd.s32 %s161, 1
      %p165 = scmp.eq.s32.totalorder %s22, 1
      %p166 = scmp.ne.s32.totalorder %s161, %s163
      %p167 = scmp.eq.s32.totalorder %s22, 0
      %p168 = por %p166, %p167
      %p169 = scmp.ne.s32.totalorder %s161, %s163
      %p170 = scmp.eq.s32.totalorder %s27, 1
      %p171 = por %p169, %p170
      %p172 = scmp.ne.s32.totalorder %s163, %s164
      %p173 = scmp.eq.s32.totalorder %s27, 0
      %p174 = por %p172, %p173
      %p175 = scmp.ne.s32.totalorder %s163, %s164
      %p176 = scmp.eq.s32.totalorder %s28, 1
      %p177 = por %p175, %p176
      %p179 = scmp.ne.s32.totalorder %s164, %s178
      %p180 = scmp.eq.s32.totalorder %s28, 0
      %p181 = por %p179, %p180
      %s182 = ssub.s32 %s22, %s29
      %p183 = scmp.eq.s32.totalorder %s182, 0
      %s185 = sadd.s32 %s184, 1
      %s186 = scalar_select %p183, %s184, %s185
      %p189 = pneg %p183
      %p190 = scmp.eq.s32.totalorder %s22, 1
      %p191 = por %p189, %p190
      %p192 = scmp.ne.s32.totalorder %s184, %s187
      %p193 = scmp.eq.s32.totalorder %s22, 0
      %p194 = por %p192, %p193
      %p195 = scmp.ne.s32.totalorder %s184, %s187
      %p196 = scmp.eq.s32.totalorder %s27, 1
      %p197 = por %p195, %p196
      %p198 = scmp.ne.s32.totalorder %s187, %s188
      %p199 = scmp.eq.s32.totalorder %s27, 0
      %p200 = por %p198, %p199
      %p201 = scmp.ne.s32.totalorder %s187, %s188
      %p202 = scmp.eq.s32.totalorder %s28, 1
      %p203 = por %p201, %p202
      %p205 = scmp.ne.s32.totalorder %s188, %s204
      %p206 = scmp.eq.s32.totalorder %s28, 0
      %p207 = por %p205, %p206
      %p208 = scmp.le.s32.totalorder 1, %s22
      %p209 = scmp.lt.s32.totalorder %s22, 3
      %p210 = pnand %p208, %p209
      %p211 = pneg %p210
      // Predicated region
      $region9: #{positionwise_feed_forward.1} parent=5 // pred_check
        _
      $region10: #{positionwise_feed_forward.1} parent=5 // pred_check_branch
        %213 = sbr.rel (%p210) target = $region12
      $region11: #{positionwise_feed_forward.1} parent=5 // pred_region
        %s214 = ssub.s32 %s22, 1
        // Predicated region
        $region13: #{positionwise_feed_forward.1} parent=11 // pred_check
          %p215 = pneg %p69
        $region14: #{positionwise_feed_forward.1} parent=11 // pred_check_branch
          %217 = sbr.rel (%p215) target = $region16
        $region15: #{positionwise_feed_forward.1} parent=11 // pred_region
          %s219 = ssub.s32 65536, 65536
          %220 = vsyncadd [#allocation6], %s219
          %s221 = sshll.u32 [#allocation5], 4
          %s222 = int_to_ptr.vmem [resolvable:$true] %s221
          %227 = dma.hbm_to_vmem [thread:$0]  %s1, 65536, %s222, [#allocation6], 1024, 1024, 64
        $region16: #{positionwise_feed_forward.1} parent=11 // pred_fallthru
          _
        // Predicated region
        $region17: #{positionwise_feed_forward.1} parent=11 // pred_check
          %p228 = pneg %p90
        $region18: #{positionwise_feed_forward.1} parent=11 // pred_check_branch
          %230 = sbr.rel (%p228) target = $region20
        $region19: #{positionwise_feed_forward.1} parent=11 // pred_region
          %s232 = ssub.s32 256, 256
          %233 = vsyncadd [#allocation6], %s232
          %s235 = sshll.u32 [#allocation7], 4
          %s236 = int_to_ptr.vmem [resolvable:$true] %s235
          %238 = dma.hbm_to_vmem [thread:$0]  %s2, 256, %s236, [#allocation6]
        $region20: #{positionwise_feed_forward.1} parent=11 // pred_fallthru
          _
        // Predicated region
        $region21: #{positionwise_feed_forward.1} parent=11 // pred_check
          %p239 = pneg %p111
        $region22: #{positionwise_feed_forward.1} parent=11 // pred_check_branch
          %241 = sbr.rel (%p239) target = $region24
        $region23: #{positionwise_feed_forward.1} parent=11 // pred_region
          %s243 = ssub.s32 65536, 65536
          %244 = vsyncadd [#allocation9], %s243
          %s245 = sshll.u32 [#allocation8], 4
          %s246 = int_to_ptr.vmem [resolvable:$true] %s245
          %251 = dma.hbm_to_vmem [thread:$0]  %s3, 65536, %s246, [#allocation9], 256, 256, 16
        $region24: #{positionwise_feed_forward.1} parent=11 // pred_fallthru
          _
        // Predicated region
        $region25: #{positionwise_feed_forward.1} parent=11 // pred_check
          %p252 = pneg %p132
        $region26: #{positionwise_feed_forward.1} parent=11 // pred_check_branch
          %254 = sbr.rel (%p252) target = $region28
        $region27: #{positionwise_feed_forward.1} parent=11 // pred_region
          %s256 = ssub.s32 64, 64
          %257 = vsyncadd [#allocation9], %s256
          %s259 = sshll.u32 [#allocation10], 4
          %s260 = int_to_ptr.vmem [resolvable:$true] %s259
          %262 = dma.hbm_to_vmem [thread:$0]  %s4, 64, %s260, [#allocation9]
        $region28: #{positionwise_feed_forward.1} parent=11 // pred_fallthru
          _
        // Predicated region
        $region29: #{positionwise_feed_forward.1} parent=11 // pred_check
          %p263 = pneg %p153
        $region30: #{positionwise_feed_forward.1} parent=11 // pred_check_branch
          %265 = sbr.rel (%p263) target = $region32
        $region31: #{positionwise_feed_forward.1} parent=11 // pred_region
          %s267 = ssub.s32 64, 64
          %268 = vsyncadd [#allocation12], %s267
          %s270 = sshll.u32 [#allocation11], 4
          %s271 = int_to_ptr.vmem [resolvable:$true] %s270
          %273 = dma.hbm_to_vmem [thread:$0]  %s5, 64, %s271, [#allocation12]
        $region32: #{positionwise_feed_forward.1} parent=11 // pred_fallthru
          _
        // Predicated region
        $region33: #{positionwise_feed_forward.1} parent=11 // pred_check
          %p274 = pneg %p174
        $region34: #{positionwise_feed_forward.1} parent=11 // pred_check_branch
          %276 = sbr.rel (%p274) target = $region36
        $region35: #{positionwise_feed_forward.1} parent=11 // pred_region
          %s278 = ssub.s32 64, 64
          %279 = vsyncadd [#allocation12], %s278
          %s281 = sshll.u32 [#allocation13], 4
          %s282 = int_to_ptr.vmem [resolvable:$true] %s281
          %284 = dma.hbm_to_vmem [thread:$0]  %s6, 64, %s282, [#allocation12]
        $region36: #{positionwise_feed_forward.1} parent=11 // pred_fallthru
          _
      $region12: #{positionwise_feed_forward.1} parent=5 // pred_fallthru
        _
      %p285 = scmp.lt.s32.totalorder %s22, 2
      // Predicated region
      $region37: #{positionwise_feed_forward.1} parent=5 // pred_check
        %p286 = pneg %p285
      $region38: #{positionwise_feed_forward.1} parent=5 // pred_check_branch
        %288 = sbr.rel (%p286) target = $region40
      $region39: #{positionwise_feed_forward.1} parent=5 // pred_region
        // Predicated region
        $region41: #{positionwise_feed_forward.1} parent=39 // pred_check
          %p289 = pneg %p42
        $region42: #{positionwise_feed_forward.1} parent=39 // pred_check_branch
          %291 = sbr.rel (%p289) target = $region44
        $region43: #{positionwise_feed_forward.1} parent=39 // pred_region
          %s292 = sand.u32 %s32, 1
          %s293 = scalar_lea.sflag [#allocation3], %s292
          %s294 = sand.u32 %s32, 1
          %s295 = smul.addr %s294, 32
          %s296 = scalar_lea.vmem [#allocation2], %s295
          %s298 = ssub.s32 512, 512
          %299 = vsyncadd %s293, %s298
          %s300 = smul.addr %s22, 4
          %s301 = smul.addr %s300, 128
          %s302 = scalar_lea.hbm %s0, %s301
          %s304 = sshll.u32 %s296, 4
          %s305 = int_to_ptr.vmem [resolvable:$true] %s304
          %307 = dma.hbm_to_vmem [thread:$0]  %s302, 512, %s305, %s293
        $region44: #{positionwise_feed_forward.1} parent=39 // pred_fallthru
          _
      $region40: #{positionwise_feed_forward.1} parent=5 // pred_fallthru
        _
      %p308 = scmp.le.s32.totalorder 1, %s22
      %p309 = scmp.lt.s32.totalorder %s22, 3
      %p310 = pnand %p308, %p309
      %p311 = pneg %p310
      // Predicated region
      $region45: #{positionwise_feed_forward.1} parent=5 // pred_check
        _
      $region46: #{positionwise_feed_forward.1} parent=5 // pred_check_branch
        %313 = sbr.rel (%p310) target = $region48
      $region47: #{positionwise_feed_forward.1} parent=5 // pred_region
        %s314 = ssub.s32 %s22, 1
        %s315 = sand.u32 %s35, 1
        %s316 = scalar_lea.sflag [#allocation3], %s315
        %s317 = sand.u32 %s35, 1
        %s318 = smul.addr %s317, 32
        %s319 = scalar_lea.vmem [#allocation2], %s318
        // Predicated region
        $region49: #{positionwise_feed_forward.1} parent=47 // pred_check
          %p320 = pneg %p48
        $region50: #{positionwise_feed_forward.1} parent=47 // pred_check_branch
          %322 = sbr.rel (%p320) target = $region52
        $region51: #{positionwise_feed_forward.1} parent=47 // pred_region
          %323 = dma.done %s316, 512
        $region52: #{positionwise_feed_forward.1} parent=47 // pred_fallthru
          _
        // Predicated region
        $region53: #{positionwise_feed_forward.1} parent=47 // pred_check
          %p324 = pneg %p69
        $region54: #{positionwise_feed_forward.1} parent=47 // pred_check_branch
          %326 = sbr.rel (%p324) target = $region56
        $region55: #{positionwise_feed_forward.1} parent=47 // pred_region
          %327 = dma.done [#allocation6], 65536
        $region56: #{positionwise_feed_forward.1} parent=47 // pred_fallthru
          _
        // Predicated region
        $region57: #{positionwise_feed_forward.1} parent=47 // pred_check
          %p328 = pneg %p90
        $region58: #{positionwise_feed_forward.1} parent=47 // pred_check_branch
          %330 = sbr.rel (%p328) target = $region60
        $region59: #{positionwise_feed_forward.1} parent=47 // pred_region
          %331 = dma.done [#allocation6], 256
        $region60: #{positionwise_feed_forward.1} parent=47 // pred_fallthru
          _
        // Predicated region
        $region61: #{positionwise_feed_forward.1} parent=47 // pred_check
          %p332 = pneg %p111
        $region62: #{positionwise_feed_forward.1} parent=47 // pred_check_branch
          %334 = sbr.rel (%p332) target = $region64
        $region63: #{positionwise_feed_forward.1} parent=47 // pred_region
          %335 = dma.done [#allocation9], 65536
        $region64: #{positionwise_feed_forward.1} parent=47 // pred_fallthru
          _
        // Predicated region
        $region65: #{positionwise_feed_forward.1} parent=47 // pred_check
          %p336 = pneg %p132
        $region66: #{positionwise_feed_forward.1} parent=47 // pred_check_branch
          %338 = sbr.rel (%p336) target = $region68
        $region67: #{positionwise_feed_forward.1} parent=47 // pred_region
          %339 = dma.done [#allocation9], 64
        $region68: #{positionwise_feed_forward.1} parent=47 // pred_fallthru
          _
        // Predicated region
        $region69: #{positionwise_feed_forward.1} parent=47 // pred_check
          %p340 = pneg %p153
        $region70: #{positionwise_feed_forward.1} parent=47 // pred_check_branch
          %342 = sbr.rel (%p340) target = $region72
        $region71: #{positionwise_feed_forward.1} parent=47 // pred_region
          %343 = dma.done [#allocation12], 64
        $region72: #{positionwise_feed_forward.1} parent=47 // pred_fallthru
          _
        // Predicated region
        $region73: #{positionwise_feed_forward.1} parent=47 // pred_check
          %p344 = pneg %p174
        $region74: #{positionwise_feed_forward.1} parent=47 // pred_check_branch
          %346 = sbr.rel (%p344) target = $region76
        $region75: #{positionwise_feed_forward.1} parent=47 // pred_region
          %347 = dma.done [#allocation12], 64
        $region76: #{positionwise_feed_forward.1} parent=47 // pred_fallthru
          _
        %s348 = sand.u32 %s35, 1
        %s349 = scalar_lea.sflag [#allocation3], %s348
        %s350 = sand.u32 %s35, 1
        %s351 = smul.addr %s350, 32
        %s352 = scalar_lea.vmem [#allocation2], %s351
        %p353 = pneg %p48
        %p354 = pneg %p45
        %p355 = pneg %p69
        %p356 = pneg %p66
        %p357 = pneg %p90
        %p358 = pneg %p87
        %p359 = pneg %p111
        %p360 = pneg %p108
        %p361 = pneg %p132
        %p362 = pneg %p129
        %p363 = pneg %p153
        %p364 = pneg %p150
        %p365 = pneg %p174
        %p366 = pneg %p171
        %p367 = pneg %p200
        %p368 = pneg %p197
        %s369 = sand.u32 %s187, 1
        %s370 = scalar_lea.sflag [#allocation4], %s369
        %s371 = sand.u32 %s187, 1
        %s372 = smul.addr %s371, 32
        %s373 = scalar_lea.vmem [#allocation14], %s372
        %v374 = vld [vmem:[%s319] sm:$0xff]
        %v375 = vld [vmem:[%s319 + $0x8] sm:$0xff]
        %v376 = vld [vmem:[%s319 + $0x10] sm:$0xff]
        %v377 = vld [vmem:[%s319 + $0x18] sm:$0xff]
        %v378 = vpack.c.bf16 %v374, %v374
        %v379 = vpack.c.bf16 %v375, %v375
        %v380 = vpack.c.bf16 %v376, %v376
        %v381 = vpack.c.bf16 %v377, %v377
        %v382 = vld [vmem:[#allocation5] sm:$0xff]
        %v383 = vld [vmem:[#allocation5 + $0x8] sm:$0xff]
        %v384 = vld [vmem:[#allocation5 + $0x10] sm:$0xff]
        %v385 = vld [vmem:[#allocation5 + $0x18] sm:$0xff]
        %v386 = vld [vmem:[#allocation5 + $0x20] sm:$0xff]
        %v387 = vld [vmem:[#allocation5 + $0x28] sm:$0xff]
        %v388 = vld [vmem:[#allocation5 + $0x30] sm:$0xff]
        %v389 = vld [vmem:[#allocation5 + $0x38] sm:$0xff]
        %v390 = vld [vmem:[#allocation5 + $0x40] sm:$0xff]
        %v391 = vld [vmem:[#allocation5 + $0x48] sm:$0xff]
        %v392 = vld [vmem:[#allocation5 + $0x50] sm:$0xff]
        %v393 = vld [vmem:[#allocation5 + $0x58] sm:$0xff]
        %v394 = vld [vmem:[#allocation5 + $0x60] sm:$0xff]
        %v395 = vld [vmem:[#allocation5 + $0x68] sm:$0xff]
        %v396 = vld [vmem:[#allocation5 + $0x70] sm:$0xff]
        %v397 = vld [vmem:[#allocation5 + $0x78] sm:$0xff]
        %v398 = vld [vmem:[#allocation5 + $0x80] sm:$0xff]
        %v399 = vld [vmem:[#allocation5 + $0x88] sm:$0xff]
        %v400 = vld [vmem:[#allocation5 + $0x90] sm:$0xff]
        %v401 = vld [vmem:[#allocation5 + $0x98] sm:$0xff]
        %v402 = vld [vmem:[#allocation5 + $0xa0] sm:$0xff]
        %v403 = vld [vmem:[#allocation5 + $0xa8] sm:$0xff]
        %v404 = vld [vmem:[#allocation5 + $0xb0] sm:$0xff]
        %v405 = vld [vmem:[#allocation5 + $0xb8] sm:$0xff]
        %v406 = vld [vmem:[#allocation5 + $0xc0] sm:$0xff]
        %v407 = vld [vmem:[#allocation5 + $0xc8] sm:$0xff]
        %v408 = vld [vmem:[#allocation5 + $0xd0] sm:$0xff]
        %v409 = vld [vmem:[#allocation5 + $0xd8] sm:$0xff]
        %v410 = vld [vmem:[#allocation5 + $0xe0] sm:$0xff]
        %v411 = vld [vmem:[#allocation5 + $0xe8] sm:$0xff]
        %v412 = vld [vmem:[#allocation5 + $0xf0] sm:$0xff]
        %v413 = vld [vmem:[#allocation5 + $0xf8] sm:$0xff]
        %v414 = vld [vmem:[#allocation5 + $0x100] sm:$0xff]
        %v415 = vld [vmem:[#allocation5 + $0x108] sm:$0xff]
        %v416 = vld [vmem:[#allocation5 + $0x110] sm:$0xff]
        %v417 = vld [vmem:[#allocation5 + $0x118] sm:$0xff]
        %v418 = vld [vmem:[#allocation5 + $0x120] sm:$0xff]
        %v419 = vld [vmem:[#allocation5 + $0x128] sm:$0xff]
        %v420 = vld [vmem:[#allocation5 + $0x130] sm:$0xff]
        %v421 = vld [vmem:[#allocation5 + $0x138] sm:$0xff]
        %v422 = vld [vmem:[#allocation5 + $0x140] sm:$0xff]
        %v423 = vld [vmem:[#allocation5 + $0x148] sm:$0xff]
        %v424 = vld [vmem:[#allocation5 + $0x150] sm:$0xff]
        %v425 = vld [vmem:[#allocation5 + $0x158] sm:$0xff]
        %v426 = vld [vmem:[#allocation5 + $0x160] sm:$0xff]
        %v427 = vld [vmem:[#allocation5 + $0x168] sm:$0xff]
        %v428 = vld [vmem:[#allocation5 + $0x170] sm:$0xff]
        %v429 = vld [vmem:[#allocation5 + $0x178] sm:$0xff]
        %v430 = vld [vmem:[#allocation5 + $0x180] sm:$0xff]
        %v431 = vld [vmem:[#allocation5 + $0x188] sm:$0xff]
        %v432 = vld [vmem:[#allocation5 + $0x190] sm:$0xff]
        %v433 = vld [vmem:[#allocation5 + $0x198] sm:$0xff]
        %v434 = vld [vmem:[#allocation5 + $0x1a0] sm:$0xff]
        %v435 = vld [vmem:[#allocation5 + $0x1a8] sm:$0xff]
        %v436 = vld [vmem:[#allocation5 + $0x1b0] sm:$0xff]
        %v437 = vld [vmem:[#allocation5 + $0x1b8] sm:$0xff]
        %v438 = vld [vmem:[#allocation5 + $0x1c0] sm:$0xff]
        %v439 = vld [vmem:[#allocation5 + $0x1c8] sm:$0xff]
        %v440 = vld [vmem:[#allocation5 + $0x1d0] sm:$0xff]
        %v441 = vld [vmem:[#allocation5 + $0x1d8] sm:$0xff]
        %v442 = vld [vmem:[#allocation5 + $0x1e0] sm:$0xff]
        %v443 = vld [vmem:[#allocation5 + $0x1e8] sm:$0xff]
        %v444 = vld [vmem:[#allocation5 + $0x1f0] sm:$0xff]
        %v445 = vld [vmem:[#allocation5 + $0x1f8] sm:$0xff]
        %v446 = vld [vmem:[#allocation5 + $0x200] sm:$0xff]
        %v447 = vld [vmem:[#allocation5 + $0x208] sm:$0xff]
        %v448 = vld [vmem:[#allocation5 + $0x210] sm:$0xff]
        %v449 = vld [vmem:[#allocation5 + $0x218] sm:$0xff]
        %v450 = vld [vmem:[#allocation5 + $0x220] sm:$0xff]
        %v451 = vld [vmem:[#allocation5 + $0x228] sm:$0xff]
        %v452 = vld [vmem:[#allocation5 + $0x230] sm:$0xff]
        %v453 = vld [vmem:[#allocation5 + $0x238] sm:$0xff]
        %v454 = vld [vmem:[#allocation5 + $0x240] sm:$0xff]
        %v455 = vld [vmem:[#allocation5 + $0x248] sm:$0xff]
        %v456 = vld [vmem:[#allocation5 + $0x250] sm:$0xff]
        %v457 = vld [vmem:[#allocation5 + $0x258] sm:$0xff]
        %v458 = vld [vmem:[#allocation5 + $0x260] sm:$0xff]
        %v459 = vld [vmem:[#allocation5 + $0x268] sm:$0xff]
        %v460 = vld [vmem:[#allocation5 + $0x270] sm:$0xff]
        %v461 = vld [vmem:[#allocation5 + $0x278] sm:$0xff]
        %v462 = vld [vmem:[#allocation5 + $0x280] sm:$0xff]
        %v463 = vld [vmem:[#allocation5 + $0x288] sm:$0xff]
        %v464 = vld [vmem:[#allocation5 + $0x290] sm:$0xff]
        %v465 = vld [vmem:[#allocation5 + $0x298] sm:$0xff]
        %v466 = vld [vmem:[#allocation5 + $0x2a0] sm:$0xff]
        %v467 = vld [vmem:[#allocation5 + $0x2a8] sm:$0xff]
        %v468 = vld [vmem:[#allocation5 + $0x2b0] sm:$0xff]
        %v469 = vld [vmem:[#allocation5 + $0x2b8] sm:$0xff]
        %v470 = vld [vmem:[#allocation5 + $0x2c0] sm:$0xff]
        %v471 = vld [vmem:[#allocation5 + $0x2c8] sm:$0xff]
        %v472 = vld [vmem:[#allocation5 + $0x2d0] sm:$0xff]
        %v473 = vld [vmem:[#allocation5 + $0x2d8] sm:$0xff]
        %v474 = vld [vmem:[#allocation5 + $0x2e0] sm:$0xff]
        %v475 = vld [vmem:[#allocation5 + $0x2e8] sm:$0xff]
        %v476 = vld [vmem:[#allocation5 + $0x2f0] sm:$0xff]
        %v477 = vld [vmem:[#allocation5 + $0x2f8] sm:$0xff]
        %v478 = vld [vmem:[#allocation5 + $0x300] sm:$0xff]
        %v479 = vld [vmem:[#allocation5 + $0x308] sm:$0xff]
        %v480 = vld [vmem:[#allocation5 + $0x310] sm:$0xff]
        %v481 = vld [vmem:[#allocation5 + $0x318] sm:$0xff]
        %v482 = vld [vmem:[#allocation5 + $0x320] sm:$0xff]
        %v483 = vld [vmem:[#allocation5 + $0x328] sm:$0xff]
        %v484 = vld [vmem:[#allocation5 + $0x330] sm:$0xff]
        %v485 = vld [vmem:[#allocation5 + $0x338] sm:$0xff]
        %v486 = vld [vmem:[#allocation5 + $0x340] sm:$0xff]
        %v487 = vld [vmem:[#allocation5 + $0x348] sm:$0xff]
        %v488 = vld [vmem:[#allocation5 + $0x350] sm:$0xff]
        %v489 = vld [vmem:[#allocation5 + $0x358] sm:$0xff]
        %v490 = vld [vmem:[#allocation5 + $0x360] sm:$0xff]
        %v491 = vld [vmem:[#allocation5 + $0x368] sm:$0xff]
        %v492 = vld [vmem:[#allocation5 + $0x370] sm:$0xff]
        %v493 = vld [vmem:[#allocation5 + $0x378] sm:$0xff]
        %v494 = vld [vmem:[#allocation5 + $0x380] sm:$0xff]
        %v495 = vld [vmem:[#allocation5 + $0x388] sm:$0xff]
        %v496 = vld [vmem:[#allocation5 + $0x390] sm:$0xff]
        %v497 = vld [vmem:[#allocation5 + $0x398] sm:$0xff]
        %v498 = vld [vmem:[#allocation5 + $0x3a0] sm:$0xff]
        %v499 = vld [vmem:[#allocation5 + $0x3a8] sm:$0xff]
        %v500 = vld [vmem:[#allocation5 + $0x3b0] sm:$0xff]
        %v501 = vld [vmem:[#allocation5 + $0x3b8] sm:$0xff]
        %v502 = vld [vmem:[#allocation5 + $0x3c0] sm:$0xff]
        %v503 = vld [vmem:[#allocation5 + $0x3c8] sm:$0xff]
        %v504 = vld [vmem:[#allocation5 + $0x3d0] sm:$0xff]
        %v505 = vld [vmem:[#allocation5 + $0x3d8] sm:$0xff]
        %v506 = vld [vmem:[#allocation5 + $0x3e0] sm:$0xff]
        %v507 = vld [vmem:[#allocation5 + $0x3e8] sm:$0xff]
        %v508 = vld [vmem:[#allocation5 + $0x3f0] sm:$0xff]
        %v509 = vld [vmem:[#allocation5 + $0x3f8] sm:$0xff]
        %v510 = vld [vmem:[#allocation5 + $0x400] sm:$0xff]
        %v511 = vld [vmem:[#allocation5 + $0x408] sm:$0xff]
        %v512 = vld [vmem:[#allocation5 + $0x410] sm:$0xff]
        %v513 = vld [vmem:[#allocation5 + $0x418] sm:$0xff]
        %v514 = vld [vmem:[#allocation5 + $0x420] sm:$0xff]
        %v515 = vld [vmem:[#allocation5 + $0x428] sm:$0xff]
        %v516 = vld [vmem:[#allocation5 + $0x430] sm:$0xff]
        %v517 = vld [vmem:[#allocation5 + $0x438] sm:$0xff]
        %v518 = vld [vmem:[#allocation5 + $0x440] sm:$0xff]
        %v519 = vld [vmem:[#allocation5 + $0x448] sm:$0xff]
        %v520 = vld [vmem:[#allocation5 + $0x450] sm:$0xff]
        %v521 = vld [vmem:[#allocation5 + $0x458] sm:$0xff]
        %v522 = vld [vmem:[#allocation5 + $0x460] sm:$0xff]
        %v523 = vld [vmem:[#allocation5 + $0x468] sm:$0xff]
        %v524 = vld [vmem:[#allocation5 + $0x470] sm:$0xff]
        %v525 = vld [vmem:[#allocation5 + $0x478] sm:$0xff]
        %v526 = vld [vmem:[#allocation5 + $0x480] sm:$0xff]
        %v527 = vld [vmem:[#allocation5 + $0x488] sm:$0xff]
        %v528 = vld [vmem:[#allocation5 + $0x490] sm:$0xff]
        %v529 = vld [vmem:[#allocation5 + $0x498] sm:$0xff]
        %v530 = vld [vmem:[#allocation5 + $0x4a0] sm:$0xff]
        %v531 = vld [vmem:[#allocation5 + $0x4a8] sm:$0xff]
        %v532 = vld [vmem:[#allocation5 + $0x4b0] sm:$0xff]
        %v533 = vld [vmem:[#allocation5 + $0x4b8] sm:$0xff]
        %v534 = vld [vmem:[#allocation5 + $0x4c0] sm:$0xff]
        %v535 = vld [vmem:[#allocation5 + $0x4c8] sm:$0xff]
        %v536 = vld [vmem:[#allocation5 + $0x4d0] sm:$0xff]
        %v537 = vld [vmem:[#allocation5 + $0x4d8] sm:$0xff]
        %v538 = vld [vmem:[#allocation5 + $0x4e0] sm:$0xff]
        %v539 = vld [vmem:[#allocation5 + $0x4e8] sm:$0xff]
        %v540 = vld [vmem:[#allocation5 + $0x4f0] sm:$0xff]
        %v541 = vld [vmem:[#allocation5 + $0x4f8] sm:$0xff]
        %v542 = vld [vmem:[#allocation5 + $0x500] sm:$0xff]
        %v543 = vld [vmem:[#allocation5 + $0x508] sm:$0xff]
        %v544 = vld [vmem:[#allocation5 + $0x510] sm:$0xff]
        %v545 = vld [vmem:[#allocation5 + $0x518] sm:$0xff]
        %v546 = vld [vmem:[#allocation5 + $0x520] sm:$0xff]
        %v547 = vld [vmem:[#allocation5 + $0x528] sm:$0xff]
        %v548 = vld [vmem:[#allocation5 + $0x530] sm:$0xff]
        %v549 = vld [vmem:[#allocation5 + $0x538] sm:$0xff]
        %v550 = vld [vmem:[#allocation5 + $0x540] sm:$0xff]
        %v551 = vld [vmem:[#allocation5 + $0x548] sm:$0xff]
        %v552 = vld [vmem:[#allocation5 + $0x550] sm:$0xff]
        %v553 = vld [vmem:[#allocation5 + $0x558] sm:$0xff]
        %v554 = vld [vmem:[#allocation5 + $0x560] sm:$0xff]
        %v555 = vld [vmem:[#allocation5 + $0x568] sm:$0xff]
        %v556 = vld [vmem:[#allocation5 + $0x570] sm:$0xff]
        %v557 = vld [vmem:[#allocation5 + $0x578] sm:$0xff]
        %v558 = vld [vmem:[#allocation5 + $0x580] sm:$0xff]
        %v559 = vld [vmem:[#allocation5 + $0x588] sm:$0xff]
        %v560 = vld [vmem:[#allocation5 + $0x590] sm:$0xff]
        %v561 = vld [vmem:[#allocation5 + $0x598] sm:$0xff]
        %v562 = vld [vmem:[#allocation5 + $0x5a0] sm:$0xff]
        %v563 = vld [vmem:[#allocation5 + $0x5a8] sm:$0xff]
        %v564 = vld [vmem:[#allocation5 + $0x5b0] sm:$0xff]
        %v565 = vld [vmem:[#allocation5 + $0x5b8] sm:$0xff]
        %v566 = vld [vmem:[#allocation5 + $0x5c0] sm:$0xff]
        %v567 = vld [vmem:[#allocation5 + $0x5c8] sm:$0xff]
        %v568 = vld [vmem:[#allocation5 + $0x5d0] sm:$0xff]
        %v569 = vld [vmem:[#allocation5 + $0x5d8] sm:$0xff]
        %v570 = vld [vmem:[#allocation5 + $0x5e0] sm:$0xff]
        %v571 = vld [vmem:[#allocation5 + $0x5e8] sm:$0xff]
        %v572 = vld [vmem:[#allocation5 + $0x5f0] sm:$0xff]
        %v573 = vld [vmem:[#allocation5 + $0x5f8] sm:$0xff]
        %v574 = vld [vmem:[#allocation5 + $0x600] sm:$0xff]
        %v575 = vld [vmem:[#allocation5 + $0x608] sm:$0xff]
        %v576 = vld [vmem:[#allocation5 + $0x610] sm:$0xff]
        %v577 = vld [vmem:[#allocation5 + $0x618] sm:$0xff]
        %v578 = vld [vmem:[#allocation5 + $0x620] sm:$0xff]
        %v579 = vld [vmem:[#allocation5 + $0x628] sm:$0xff]
        %v580 = vld [vmem:[#allocation5 + $0x630] sm:$0xff]
        %v581 = vld [vmem:[#allocation5 + $0x638] sm:$0xff]
        %v582 = vld [vmem:[#allocation5 + $0x640] sm:$0xff]
        %v583 = vld [vmem:[#allocation5 + $0x648] sm:$0xff]
        %v584 = vld [vmem:[#allocation5 + $0x650] sm:$0xff]
        %v585 = vld [vmem:[#allocation5 + $0x658] sm:$0xff]
        %v586 = vld [vmem:[#allocation5 + $0x660] sm:$0xff]
        %v587 = vld [vmem:[#allocation5 + $0x668] sm:$0xff]
        %v588 = vld [vmem:[#allocation5 + $0x670] sm:$0xff]
        %v589 = vld [vmem:[#allocation5 + $0x678] sm:$0xff]
        %v590 = vld [vmem:[#allocation5 + $0x680] sm:$0xff]
        %v591 = vld [vmem:[#allocation5 + $0x688] sm:$0xff]
        %v592 = vld [vmem:[#allocation5 + $0x690] sm:$0xff]
        %v593 = vld [vmem:[#allocation5 + $0x698] sm:$0xff]
        %v594 = vld [vmem:[#allocation5 + $0x6a0] sm:$0xff]
        %v595 = vld [vmem:[#allocation5 + $0x6a8] sm:$0xff]
        %v596 = vld [vmem:[#allocation5 + $0x6b0] sm:$0xff]
        %v597 = vld [vmem:[#allocation5 + $0x6b8] sm:$0xff]
        %v598 = vld [vmem:[#allocation5 + $0x6c0] sm:$0xff]
        %v599 = vld [vmem:[#allocation5 + $0x6c8] sm:$0xff]
        %v600 = vld [vmem:[#allocation5 + $0x6d0] sm:$0xff]
        %v601 = vld [vmem:[#allocation5 + $0x6d8] sm:$0xff]
        %v602 = vld [vmem:[#allocation5 + $0x6e0] sm:$0xff]
        %v603 = vld [vmem:[#allocation5 + $0x6e8] sm:$0xff]
        %v604 = vld [vmem:[#allocation5 + $0x6f0] sm:$0xff]
        %v605 = vld [vmem:[#allocation5 + $0x6f8] sm:$0xff]
        %v606 = vld [vmem:[#allocation5 + $0x700] sm:$0xff]
        %v607 = vld [vmem:[#allocation5 + $0x708] sm:$0xff]
        %v608 = vld [vmem:[#allocation5 + $0x710] sm:$0xff]
        %v609 = vld [vmem:[#allocation5 + $0x718] sm:$0xff]
        %v610 = vld [vmem:[#allocation5 + $0x720] sm:$0xff]
        %v611 = vld [vmem:[#allocation5 + $0x728] sm:$0xff]
        %v612 = vld [vmem:[#allocation5 + $0x730] sm:$0xff]
        %v613 = vld [vmem:[#allocation5 + $0x738] sm:$0xff]
        %v614 = vld [vmem:[#allocation5 + $0x740] sm:$0xff]
        %v615 = vld [vmem:[#allocation5 + $0x748] sm:$0xff]
        %v616 = vld [vmem:[#allocation5 + $0x750] sm:$0xff]
        %v617 = vld [vmem:[#allocation5 + $0x758] sm:$0xff]
        %v618 = vld [vmem:[#allocation5 + $0x760] sm:$0xff]
        %v619 = vld [vmem:[#allocation5 + $0x768] sm:$0xff]
        %v620 = vld [vmem:[#allocation5 + $0x770] sm:$0xff]
        %v621 = vld [vmem:[#allocation5 + $0x778] sm:$0xff]
        %v622 = vld [vmem:[#allocation5 + $0x780] sm:$0xff]
        %v623 = vld [vmem:[#allocation5 + $0x788] sm:$0xff]
        %v624 = vld [vmem:[#allocation5 + $0x790] sm:$0xff]
        %v625 = vld [vmem:[#allocation5 + $0x798] sm:$0xff]
        %v626 = vld [vmem:[#allocation5 + $0x7a0] sm:$0xff]
        %v627 = vld [vmem:[#allocation5 + $0x7a8] sm:$0xff]
        %v628 = vld [vmem:[#allocation5 + $0x7b0] sm:$0xff]
        %v629 = vld [vmem:[#allocation5 + $0x7b8] sm:$0xff]
        %v630 = vld [vmem:[#allocation5 + $0x7c0] sm:$0xff]
        %v631 = vld [vmem:[#allocation5 + $0x7c8] sm:$0xff]
        %v632 = vld [vmem:[#allocation5 + $0x7d0] sm:$0xff]
        %v633 = vld [vmem:[#allocation5 + $0x7d8] sm:$0xff]
        %v634 = vld [vmem:[#allocation5 + $0x7e0] sm:$0xff]
        %v635 = vld [vmem:[#allocation5 + $0x7e8] sm:$0xff]
        %v636 = vld [vmem:[#allocation5 + $0x7f0] sm:$0xff]
        %v637 = vld [vmem:[#allocation5 + $0x7f8] sm:$0xff]
        %v638 = vld [vmem:[#allocation5 + $0x800] sm:$0xff]
        %v639 = vld [vmem:[#allocation5 + $0x808] sm:$0xff]
        %v640 = vld [vmem:[#allocation5 + $0x810] sm:$0xff]
        %v641 = vld [vmem:[#allocation5 + $0x818] sm:$0xff]
        %v642 = vld [vmem:[#allocation5 + $0x820] sm:$0xff]
        %v643 = vld [vmem:[#allocation5 + $0x828] sm:$0xff]
        %v644 = vld [vmem:[#allocation5 + $0x830] sm:$0xff]
        %v645 = vld [vmem:[#allocation5 + $0x838] sm:$0xff]
        %v646 = vld [vmem:[#allocation5 + $0x840] sm:$0xff]
        %v647 = vld [vmem:[#allocation5 + $0x848] sm:$0xff]
        %v648 = vld [vmem:[#allocation5 + $0x850] sm:$0xff]
        %v649 = vld [vmem:[#allocation5 + $0x858] sm:$0xff]
        %v650 = vld [vmem:[#allocation5 + $0x860] sm:$0xff]
        %v651 = vld [vmem:[#allocation5 + $0x868] sm:$0xff]
        %v652 = vld [vmem:[#allocation5 + $0x870] sm:$0xff]
        %v653 = vld [vmem:[#allocation5 + $0x878] sm:$0xff]
        %v654 = vld [vmem:[#allocation5 + $0x880] sm:$0xff]
        %v655 = vld [vmem:[#allocation5 + $0x888] sm:$0xff]
        %v656 = vld [vmem:[#allocation5 + $0x890] sm:$0xff]
        %v657 = vld [vmem:[#allocation5 + $0x898] sm:$0xff]
        %v658 = vld [vmem:[#allocation5 + $0x8a0] sm:$0xff]
        %v659 = vld [vmem:[#allocation5 + $0x8a8] sm:$0xff]
        %v660 = vld [vmem:[#allocation5 + $0x8b0] sm:$0xff]
        %v661 = vld [vmem:[#allocation5 + $0x8b8] sm:$0xff]
        %v662 = vld [vmem:[#allocation5 + $0x8c0] sm:$0xff]
        %v663 = vld [vmem:[#allocation5 + $0x8c8] sm:$0xff]
        %v664 = vld [vmem:[#allocation5 + $0x8d0] sm:$0xff]
        %v665 = vld [vmem:[#allocation5 + $0x8d8] sm:$0xff]
        %v666 = vld [vmem:[#allocation5 + $0x8e0] sm:$0xff]
        %v667 = vld [vmem:[#allocation5 + $0x8e8] sm:$0xff]
        %v668 = vld [vmem:[#allocation5 + $0x8f0] sm:$0xff]
        %v669 = vld [vmem:[#allocation5 + $0x8f8] sm:$0xff]
        %v670 = vld [vmem:[#allocation5 + $0x900] sm:$0xff]
        %v671 = vld [vmem:[#allocation5 + $0x908] sm:$0xff]
        %v672 = vld [vmem:[#allocation5 + $0x910] sm:$0xff]
        %v673 = vld [vmem:[#allocation5 + $0x918] sm:$0xff]
        %v674 = vld [vmem:[#allocation5 + $0x920] sm:$0xff]
        %v675 = vld [vmem:[#allocation5 + $0x928] sm:$0xff]
        %v676 = vld [vmem:[#allocation5 + $0x930] sm:$0xff]
        %v677 = vld [vmem:[#allocation5 + $0x938] sm:$0xff]
        %v678 = vld [vmem:[#allocation5 + $0x940] sm:$0xff]
        %v679 = vld [vmem:[#allocation5 + $0x948] sm:$0xff]
        %v680 = vld [vmem:[#allocation5 + $0x950] sm:$0xff]
        %v681 = vld [vmem:[#allocation5 + $0x958] sm:$0xff]
        %v682 = vld [vmem:[#allocation5 + $0x960] sm:$0xff]
        %v683 = vld [vmem:[#allocation5 + $0x968] sm:$0xff]
        %v684 = vld [vmem:[#allocation5 + $0x970] sm:$0xff]
        %v685 = vld [vmem:[#allocation5 + $0x978] sm:$0xff]
        %v686 = vld [vmem:[#allocation5 + $0x980] sm:$0xff]
        %v687 = vld [vmem:[#allocation5 + $0x988] sm:$0xff]
        %v688 = vld [vmem:[#allocation5 + $0x990] sm:$0xff]
        %v689 = vld [vmem:[#allocation5 + $0x998] sm:$0xff]
        %v690 = vld [vmem:[#allocation5 + $0x9a0] sm:$0xff]
        %v691 = vld [vmem:[#allocation5 + $0x9a8] sm:$0xff]
        %v692 = vld [vmem:[#allocation5 + $0x9b0] sm:$0xff]
        %v693 = vld [vmem:[#allocation5 + $0x9b8] sm:$0xff]
        %v694 = vld [vmem:[#allocation5 + $0x9c0] sm:$0xff]
        %v695 = vld [vmem:[#allocation5 + $0x9c8] sm:$0xff]
        %v696 = vld [vmem:[#allocation5 + $0x9d0] sm:$0xff]
        %v697 = vld [vmem:[#allocation5 + $0x9d8] sm:$0xff]
        %v698 = vld [vmem:[#allocation5 + $0x9e0] sm:$0xff]
        %v699 = vld [vmem:[#allocation5 + $0x9e8] sm:$0xff]
        %v700 = vld [vmem:[#allocation5 + $0x9f0] sm:$0xff]
        %v701 = vld [vmem:[#allocation5 + $0x9f8] sm:$0xff]
        %v702 = vld [vmem:[#allocation5 + $0xa00] sm:$0xff]
        %v703 = vld [vmem:[#allocation5 + $0xa08] sm:$0xff]
        %v704 = vld [vmem:[#allocation5 + $0xa10] sm:$0xff]
        %v705 = vld [vmem:[#allocation5 + $0xa18] sm:$0xff]
        %v706 = vld [vmem:[#allocation5 + $0xa20] sm:$0xff]
        %v707 = vld [vmem:[#allocation5 + $0xa28] sm:$0xff]
        %v708 = vld [vmem:[#allocation5 + $0xa30] sm:$0xff]
        %v709 = vld [vmem:[#allocation5 + $0xa38] sm:$0xff]
        %v710 = vld [vmem:[#allocation5 + $0xa40] sm:$0xff]
        %v711 = vld [vmem:[#allocation5 + $0xa48] sm:$0xff]
        %v712 = vld [vmem:[#allocation5 + $0xa50] sm:$0xff]
        %v713 = vld [vmem:[#allocation5 + $0xa58] sm:$0xff]
        %v714 = vld [vmem:[#allocation5 + $0xa60] sm:$0xff]
        %v715 = vld [vmem:[#allocation5 + $0xa68] sm:$0xff]
        %v716 = vld [vmem:[#allocation5 + $0xa70] sm:$0xff]
        %v717 = vld [vmem:[#allocation5 + $0xa78] sm:$0xff]
        %v718 = vld [vmem:[#allocation5 + $0xa80] sm:$0xff]
        %v719 = vld [vmem:[#allocation5 + $0xa88] sm:$0xff]
        %v720 = vld [vmem:[#allocation5 + $0xa90] sm:$0xff]
        %v721 = vld [vmem:[#allocation5 + $0xa98] sm:$0xff]
        %v722 = vld [vmem:[#allocation5 + $0xaa0] sm:$0xff]
        %v723 = vld [vmem:[#allocation5 + $0xaa8] sm:$0xff]
        %v724 = vld [vmem:[#allocation5 + $0xab0] sm:$0xff]
        %v725 = vld [vmem:[#allocation5 + $0xab8] sm:$0xff]
        %v726 = vld [vmem:[#allocation5 + $0xac0] sm:$0xff]
        %v727 = vld [vmem:[#allocation5 + $0xac8] sm:$0xff]
        %v728 = vld [vmem:[#allocation5 + $0xad0] sm:$0xff]
        %v729 = vld [vmem:[#allocation5 + $0xad8] sm:$0xff]
        %v730 = vld [vmem:[#allocation5 + $0xae0] sm:$0xff]
        %v731 = vld [vmem:[#allocation5 + $0xae8] sm:$0xff]
        %v732 = vld [vmem:[#allocation5 + $0xaf0] sm:$0xff]
        %v733 = vld [vmem:[#allocation5 + $0xaf8] sm:$0xff]
        %v734 = vld [vmem:[#allocation5 + $0xb00] sm:$0xff]
        %v735 = vld [vmem:[#allocation5 + $0xb08] sm:$0xff]
        %v736 = vld [vmem:[#allocation5 + $0xb10] sm:$0xff]
        %v737 = vld [vmem:[#allocation5 + $0xb18] sm:$0xff]
        %v738 = vld [vmem:[#allocation5 + $0xb20] sm:$0xff]
        %v739 = vld [vmem:[#allocation5 + $0xb28] sm:$0xff]
        %v740 = vld [vmem:[#allocation5 + $0xb30] sm:$0xff]
        %v741 = vld [vmem:[#allocation5 + $0xb38] sm:$0xff]
        %v742 = vld [vmem:[#allocation5 + $0xb40] sm:$0xff]
        %v743 = vld [vmem:[#allocation5 + $0xb48] sm:$0xff]
        %v744 = vld [vmem:[#allocation5 + $0xb50] sm:$0xff]
        %v745 = vld [vmem:[#allocation5 + $0xb58] sm:$0xff]
        %v746 = vld [vmem:[#allocation5 + $0xb60] sm:$0xff]
        %v747 = vld [vmem:[#allocation5 + $0xb68] sm:$0xff]
        %v748 = vld [vmem:[#allocation5 + $0xb70] sm:$0xff]
        %v749 = vld [vmem:[#allocation5 + $0xb78] sm:$0xff]
        %v750 = vld [vmem:[#allocation5 + $0xb80] sm:$0xff]
        %v751 = vld [vmem:[#allocation5 + $0xb88] sm:$0xff]
        %v752 = vld [vmem:[#allocation5 + $0xb90] sm:$0xff]
        %v753 = vld [vmem:[#allocation5 + $0xb98] sm:$0xff]
        %v754 = vld [vmem:[#allocation5 + $0xba0] sm:$0xff]
        %v755 = vld [vmem:[#allocation5 + $0xba8] sm:$0xff]
        %v756 = vld [vmem:[#allocation5 + $0xbb0] sm:$0xff]
        %v757 = vld [vmem:[#allocation5 + $0xbb8] sm:$0xff]
        %v758 = vld [vmem:[#allocation5 + $0xbc0] sm:$0xff]
        %v759 = vld [vmem:[#allocation5 + $0xbc8] sm:$0xff]
        %v760 = vld [vmem:[#allocation5 + $0xbd0] sm:$0xff]
        %v761 = vld [vmem:[#allocation5 + $0xbd8] sm:$0xff]
        %v762 = vld [vmem:[#allocation5 + $0xbe0] sm:$0xff]
        %v763 = vld [vmem:[#allocation5 + $0xbe8] sm:$0xff]
        %v764 = vld [vmem:[#allocation5 + $0xbf0] sm:$0xff]
        %v765 = vld [vmem:[#allocation5 + $0xbf8] sm:$0xff]
        %v766 = vld [vmem:[#allocation5 + $0xc00] sm:$0xff]
        %v767 = vld [vmem:[#allocation5 + $0xc08] sm:$0xff]
        %v768 = vld [vmem:[#allocation5 + $0xc10] sm:$0xff]
        %v769 = vld [vmem:[#allocation5 + $0xc18] sm:$0xff]
        %v770 = vld [vmem:[#allocation5 + $0xc20] sm:$0xff]
        %v771 = vld [vmem:[#allocation5 + $0xc28] sm:$0xff]
        %v772 = vld [vmem:[#allocation5 + $0xc30] sm:$0xff]
        %v773 = vld [vmem:[#allocation5 + $0xc38] sm:$0xff]
        %v774 = vld [vmem:[#allocation5 + $0xc40] sm:$0xff]
        %v775 = vld [vmem:[#allocation5 + $0xc48] sm:$0xff]
        %v776 = vld [vmem:[#allocation5 + $0xc50] sm:$0xff]
        %v777 = vld [vmem:[#allocation5 + $0xc58] sm:$0xff]
        %v778 = vld [vmem:[#allocation5 + $0xc60] sm:$0xff]
        %v779 = vld [vmem:[#allocation5 + $0xc68] sm:$0xff]
        %v780 = vld [vmem:[#allocation5 + $0xc70] sm:$0xff]
        %v781 = vld [vmem:[#allocation5 + $0xc78] sm:$0xff]
        %v782 = vld [vmem:[#allocation5 + $0xc80] sm:$0xff]
        %v783 = vld [vmem:[#allocation5 + $0xc88] sm:$0xff]
        %v784 = vld [vmem:[#allocation5 + $0xc90] sm:$0xff]
        %v785 = vld [vmem:[#allocation5 + $0xc98] sm:$0xff]
        %v786 = vld [vmem:[#allocation5 + $0xca0] sm:$0xff]
        %v787 = vld [vmem:[#allocation5 + $0xca8] sm:$0xff]
        %v788 = vld [vmem:[#allocation5 + $0xcb0] sm:$0xff]
        %v789 = vld [vmem:[#allocation5 + $0xcb8] sm:$0xff]
        %v790 = vld [vmem:[#allocation5 + $0xcc0] sm:$0xff]
        %v791 = vld [vmem:[#allocation5 + $0xcc8] sm:$0xff]
        %v792 = vld [vmem:[#allocation5 + $0xcd0] sm:$0xff]
        %v793 = vld [vmem:[#allocation5 + $0xcd8] sm:$0xff]
        %v794 = vld [vmem:[#allocation5 + $0xce0] sm:$0xff]
        %v795 = vld [vmem:[#allocation5 + $0xce8] sm:$0xff]
        %v796 = vld [vmem:[#allocation5 + $0xcf0] sm:$0xff]
        %v797 = vld [vmem:[#allocation5 + $0xcf8] sm:$0xff]
        %v798 = vld [vmem:[#allocation5 + $0xd00] sm:$0xff]
        %v799 = vld [vmem:[#allocation5 + $0xd08] sm:$0xff]
        %v800 = vld [vmem:[#allocation5 + $0xd10] sm:$0xff]
        %v801 = vld [vmem:[#allocation5 + $0xd18] sm:$0xff]
        %v802 = vld [vmem:[#allocation5 + $0xd20] sm:$0xff]
        %v803 = vld [vmem:[#allocation5 + $0xd28] sm:$0xff]
        %v804 = vld [vmem:[#allocation5 + $0xd30] sm:$0xff]
        %v805 = vld [vmem:[#allocation5 + $0xd38] sm:$0xff]
        %v806 = vld [vmem:[#allocation5 + $0xd40] sm:$0xff]
        %v807 = vld [vmem:[#allocation5 + $0xd48] sm:$0xff]
        %v808 = vld [vmem:[#allocation5 + $0xd50] sm:$0xff]
        %v809 = vld [vmem:[#allocation5 + $0xd58] sm:$0xff]
        %v810 = vld [vmem:[#allocation5 + $0xd60] sm:$0xff]
        %v811 = vld [vmem:[#allocation5 + $0xd68] sm:$0xff]
        %v812 = vld [vmem:[#allocation5 + $0xd70] sm:$0xff]
        %v813 = vld [vmem:[#allocation5 + $0xd78] sm:$0xff]
        %v814 = vld [vmem:[#allocation5 + $0xd80] sm:$0xff]
        %v815 = vld [vmem:[#allocation5 + $0xd88] sm:$0xff]
        %v816 = vld [vmem:[#allocation5 + $0xd90] sm:$0xff]
        %v817 = vld [vmem:[#allocation5 + $0xd98] sm:$0xff]
        %v818 = vld [vmem:[#allocation5 + $0xda0] sm:$0xff]
        %v819 = vld [vmem:[#allocation5 + $0xda8] sm:$0xff]
        %v820 = vld [vmem:[#allocation5 + $0xdb0] sm:$0xff]
        %v821 = vld [vmem:[#allocation5 + $0xdb8] sm:$0xff]
        %v822 = vld [vmem:[#allocation5 + $0xdc0] sm:$0xff]
        %v823 = vld [vmem:[#allocation5 + $0xdc8] sm:$0xff]
        %v824 = vld [vmem:[#allocation5 + $0xdd0] sm:$0xff]
        %v825 = vld [vmem:[#allocation5 + $0xdd8] sm:$0xff]
        %v826 = vld [vmem:[#allocation5 + $0xde0] sm:$0xff]
        %v827 = vld [vmem:[#allocation5 + $0xde8] sm:$0xff]
        %v828 = vld [vmem:[#allocation5 + $0xdf0] sm:$0xff]
        %v829 = vld [vmem:[#allocation5 + $0xdf8] sm:$0xff]
        %v830 = vld [vmem:[#allocation5 + $0xe00] sm:$0xff]
        %v831 = vld [vmem:[#allocation5 + $0xe08] sm:$0xff]
        %v832 = vld [vmem:[#allocation5 + $0xe10] sm:$0xff]
        %v833 = vld [vmem:[#allocation5 + $0xe18] sm:$0xff]
        %v834 = vld [vmem:[#allocation5 + $0xe20] sm:$0xff]
        %v835 = vld [vmem:[#allocation5 + $0xe28] sm:$0xff]
        %v836 = vld [vmem:[#allocation5 + $0xe30] sm:$0xff]
        %v837 = vld [vmem:[#allocation5 + $0xe38] sm:$0xff]
        %v838 = vld [vmem:[#allocation5 + $0xe40] sm:$0xff]
        %v839 = vld [vmem:[#allocation5 + $0xe48] sm:$0xff]
        %v840 = vld [vmem:[#allocation5 + $0xe50] sm:$0xff]
        %v841 = vld [vmem:[#allocation5 + $0xe58] sm:$0xff]
        %v842 = vld [vmem:[#allocation5 + $0xe60] sm:$0xff]
        %v843 = vld [vmem:[#allocation5 + $0xe68] sm:$0xff]
        %v844 = vld [vmem:[#allocation5 + $0xe70] sm:$0xff]
        %v845 = vld [vmem:[#allocation5 + $0xe78] sm:$0xff]
        %v846 = vld [vmem:[#allocation5 + $0xe80] sm:$0xff]
        %v847 = vld [vmem:[#allocation5 + $0xe88] sm:$0xff]
        %v848 = vld [vmem:[#allocation5 + $0xe90] sm:$0xff]
        %v849 = vld [vmem:[#allocation5 + $0xe98] sm:$0xff]
        %v850 = vld [vmem:[#allocation5 + $0xea0] sm:$0xff]
        %v851 = vld [vmem:[#allocation5 + $0xea8] sm:$0xff]
        %v852 = vld [vmem:[#allocation5 + $0xeb0] sm:$0xff]
        %v853 = vld [vmem:[#allocation5 + $0xeb8] sm:$0xff]
        %v854 = vld [vmem:[#allocation5 + $0xec0] sm:$0xff]
        %v855 = vld [vmem:[#allocation5 + $0xec8] sm:$0xff]
        %v856 = vld [vmem:[#allocation5 + $0xed0] sm:$0xff]
        %v857 = vld [vmem:[#allocation5 + $0xed8] sm:$0xff]
        %v858 = vld [vmem:[#allocation5 + $0xee0] sm:$0xff]
        %v859 = vld [vmem:[#allocation5 + $0xee8] sm:$0xff]
        %v860 = vld [vmem:[#allocation5 + $0xef0] sm:$0xff]
        %v861 = vld [vmem:[#allocation5 + $0xef8] sm:$0xff]
        %v862 = vld [vmem:[#allocation5 + $0xf00] sm:$0xff]
        %v863 = vld [vmem:[#allocation5 + $0xf08] sm:$0xff]
        %v864 = vld [vmem:[#allocation5 + $0xf10] sm:$0xff]
        %v865 = vld [vmem:[#allocation5 + $0xf18] sm:$0xff]
        %v866 = vld [vmem:[#allocation5 + $0xf20] sm:$0xff]
        %v867 = vld [vmem:[#allocation5 + $0xf28] sm:$0xff]
        %v868 = vld [vmem:[#allocation5 + $0xf30] sm:$0xff]
        %v869 = vld [vmem:[#allocation5 + $0xf38] sm:$0xff]
        %v870 = vld [vmem:[#allocation5 + $0xf40] sm:$0xff]
        %v871 = vld [vmem:[#allocation5 + $0xf48] sm:$0xff]
        %v872 = vld [vmem:[#allocation5 + $0xf50] sm:$0xff]
        %v873 = vld [vmem:[#allocation5 + $0xf58] sm:$0xff]
        %v874 = vld [vmem:[#allocation5 + $0xf60] sm:$0xff]
        %v875 = vld [vmem:[#allocation5 + $0xf68] sm:$0xff]
        %v876 = vld [vmem:[#allocation5 + $0xf70] sm:$0xff]
        %v877 = vld [vmem:[#allocation5 + $0xf78] sm:$0xff]
        %v878 = vld [vmem:[#allocation5 + $0xf80] sm:$0xff]
        %v879 = vld [vmem:[#allocation5 + $0xf88] sm:$0xff]
        %v880 = vld [vmem:[#allocation5 + $0xf90] sm:$0xff]
        %v881 = vld [vmem:[#allocation5 + $0xf98] sm:$0xff]
        %v882 = vld [vmem:[#allocation5 + $0xfa0] sm:$0xff]
        %v883 = vld [vmem:[#allocation5 + $0xfa8] sm:$0xff]
        %v884 = vld [vmem:[#allocation5 + $0xfb0] sm:$0xff]
        %v885 = vld [vmem:[#allocation5 + $0xfb8] sm:$0xff]
        %v886 = vld [vmem:[#allocation5 + $0xfc0] sm:$0xff]
        %v887 = vld [vmem:[#allocation5 + $0xfc8] sm:$0xff]
        %v888 = vld [vmem:[#allocation5 + $0xfd0] sm:$0xff]
        %v889 = vld [vmem:[#allocation5 + $0xfd8] sm:$0xff]
        %v890 = vld [vmem:[#allocation5 + $0xfe0] sm:$0xff]
        %v891 = vld [vmem:[#allocation5 + $0xfe8] sm:$0xff]
        %v892 = vld [vmem:[#allocation5 + $0xff0] sm:$0xff]
        %v893 = vld [vmem:[#allocation5 + $0xff8] sm:$0xff]
        %v894 = vld [vmem:[#allocation7] sm:$0xff]
        %v895 = vld [vmem:[#allocation7 + $0x8] sm:$0xff]
        %v898 = vlaneseq
        %v899 = vshrl.u32 %v898, 7
        %v900 = vsub.s32 0, %v899
        %v901 = vrot.slane %v894, %v900
        %v902 = vlaneseq
        %v903 = vshrl.u32 %v902, 7
        %v904 = vsub.s32 1, %v903
        %v905 = vrot.slane %v894, %v904
        %v906 = vlaneseq
        %v907 = vshrl.u32 %v906, 7
        %v908 = vsub.s32 2, %v907
        %v909 = vrot.slane %v894, %v908
        %v910 = vlaneseq
        %v911 = vshrl.u32 %v910, 7
        %v912 = vsub.s32 3, %v911
        %v913 = vrot.slane %v894, %v912
        %v914 = vlaneseq
        %v915 = vshrl.u32 %v914, 7
        %v916 = vsub.s32 4, %v915
        %v917 = vrot.slane %v894, %v916
        %v918 = vlaneseq
        %v919 = vshrl.u32 %v918, 7
        %v920 = vsub.s32 5, %v919
        %v921 = vrot.slane %v894, %v920
        %v922 = vlaneseq
        %v923 = vshrl.u32 %v922, 7
        %v924 = vsub.s32 6, %v923
        %v925 = vrot.slane %v894, %v924
        %v926 = vlaneseq
        %v927 = vshrl.u32 %v926, 7
        %v928 = vsub.s32 7, %v927
        %v929 = vrot.slane %v894, %v928
        %v930 = vlaneseq
        %v931 = vshrl.u32 %v930, 7
        %v932 = vsub.s32 0, %v931
        %v933 = vrot.slane %v895, %v932
        %v934 = vlaneseq
        %v935 = vshrl.u32 %v934, 7
        %v936 = vsub.s32 1, %v935
        %v937 = vrot.slane %v895, %v936
        %v938 = vlaneseq
        %v939 = vshrl.u32 %v938, 7
        %v940 = vsub.s32 2, %v939
        %v941 = vrot.slane %v895, %v940
        %v942 = vlaneseq
        %v943 = vshrl.u32 %v942, 7
        %v944 = vsub.s32 3, %v943
        %v945 = vrot.slane %v895, %v944
        %v946 = vlaneseq
        %v947 = vshrl.u32 %v946, 7
        %v948 = vsub.s32 4, %v947
        %v949 = vrot.slane %v895, %v948
        %v950 = vlaneseq
        %v951 = vshrl.u32 %v950, 7
        %v952 = vsub.s32 5, %v951
        %v953 = vrot.slane %v895, %v952
        %v954 = vlaneseq
        %v955 = vshrl.u32 %v954, 7
        %v956 = vsub.s32 6, %v955
        %v957 = vrot.slane %v895, %v956
        %v958 = vlaneseq
        %v959 = vshrl.u32 %v958, 7
        %v960 = vsub.s32 7, %v959
        %v961 = vrot.slane %v895, %v960
        %v1490 = vunpack.c.l.b16 %v382
        %v1491 = vunpack.c.h.b16 %v382
        %v1492 = vunpack.c.l.b16 %v383
        %v1493 = vunpack.c.h.b16 %v383
        %v1494 = vunpack.c.l.b16 %v384
        %v1495 = vunpack.c.h.b16 %v384
        %v1496 = vunpack.c.l.b16 %v385
        %v1497 = vunpack.c.h.b16 %v385
        %v1498 = vunpack.c.l.b16 %v386
        %v1499 = vunpack.c.h.b16 %v386
        %v1500 = vunpack.c.l.b16 %v387
        %v1501 = vunpack.c.h.b16 %v387
        %v1502 = vunpack.c.l.b16 %v388
        %v1503 = vunpack.c.h.b16 %v388
        %v1504 = vunpack.c.l.b16 %v389
        %v1505 = vunpack.c.h.b16 %v389
        %v1506 = vunpack.c.l.b16 %v390
        %v1507 = vunpack.c.h.b16 %v390
        %v1508 = vunpack.c.l.b16 %v391
        %v1509 = vunpack.c.h.b16 %v391
        %v1510 = vunpack.c.l.b16 %v392
        %v1511 = vunpack.c.h.b16 %v392
        %v1512 = vunpack.c.l.b16 %v393
        %v1513 = vunpack.c.h.b16 %v393
        %v1514 = vunpack.c.l.b16 %v394
        %v1515 = vunpack.c.h.b16 %v394
        %v1516 = vunpack.c.l.b16 %v395
        %v1517 = vunpack.c.h.b16 %v395
        %v1518 = vunpack.c.l.b16 %v396
        %v1519 = vunpack.c.h.b16 %v396
        %v1520 = vunpack.c.l.b16 %v397
        %v1521 = vunpack.c.h.b16 %v397
        %v1522 = vunpack.c.l.b16 %v398
        %v1523 = vunpack.c.h.b16 %v398
        %v1524 = vunpack.c.l.b16 %v399
        %v1525 = vunpack.c.h.b16 %v399
        %v1526 = vunpack.c.l.b16 %v400
        %v1527 = vunpack.c.h.b16 %v400
        %v1528 = vunpack.c.l.b16 %v401
        %v1529 = vunpack.c.h.b16 %v401
        %v1530 = vunpack.c.l.b16 %v402
        %v1531 = vunpack.c.h.b16 %v402
        %v1532 = vunpack.c.l.b16 %v403
        %v1533 = vunpack.c.h.b16 %v403
        %v1534 = vunpack.c.l.b16 %v404
        %v1535 = vunpack.c.h.b16 %v404
        %v1536 = vunpack.c.l.b16 %v405
        %v1537 = vunpack.c.h.b16 %v405
        %v1538 = vunpack.c.l.b16 %v406
        %v1539 = vunpack.c.h.b16 %v406
        %v1540 = vunpack.c.l.b16 %v407
        %v1541 = vunpack.c.h.b16 %v407
        %v1542 = vunpack.c.l.b16 %v408
        %v1543 = vunpack.c.h.b16 %v408
        %v1544 = vunpack.c.l.b16 %v409
        %v1545 = vunpack.c.h.b16 %v409
        %v1546 = vunpack.c.l.b16 %v410
        %v1547 = vunpack.c.h.b16 %v410
        %v1548 = vunpack.c.l.b16 %v411
        %v1549 = vunpack.c.h.b16 %v411
        %v1550 = vunpack.c.l.b16 %v412
        %v1551 = vunpack.c.h.b16 %v412
        %v1552 = vunpack.c.l.b16 %v413
        %v1553 = vunpack.c.h.b16 %v413
        %v1554 = vunpack.c.l.b16 %v414
        %v1555 = vunpack.c.h.b16 %v414
        %v1556 = vunpack.c.l.b16 %v415
        %v1557 = vunpack.c.h.b16 %v415
        %v1558 = vunpack.c.l.b16 %v416
        %v1559 = vunpack.c.h.b16 %v416
        %v1560 = vunpack.c.l.b16 %v417
        %v1561 = vunpack.c.h.b16 %v417
        %v1562 = vunpack.c.l.b16 %v418
        %v1563 = vunpack.c.h.b16 %v418
        %v1564 = vunpack.c.l.b16 %v419
        %v1565 = vunpack.c.h.b16 %v419
        %v1566 = vunpack.c.l.b16 %v420
        %v1567 = vunpack.c.h.b16 %v420
        %v1568 = vunpack.c.l.b16 %v421
        %v1569 = vunpack.c.h.b16 %v421
        %v1570 = vunpack.c.l.b16 %v422
        %v1571 = vunpack.c.h.b16 %v422
        %v1572 = vunpack.c.l.b16 %v423
        %v1573 = vunpack.c.h.b16 %v423
        %v1574 = vunpack.c.l.b16 %v424
        %v1575 = vunpack.c.h.b16 %v424
        %v1576 = vunpack.c.l.b16 %v425
        %v1577 = vunpack.c.h.b16 %v425
        %v1578 = vunpack.c.l.b16 %v426
        %v1579 = vunpack.c.h.b16 %v426
        %v1580 = vunpack.c.l.b16 %v427
        %v1581 = vunpack.c.h.b16 %v427
        %v1582 = vunpack.c.l.b16 %v428
        %v1583 = vunpack.c.h.b16 %v428
        %v1584 = vunpack.c.l.b16 %v429
        %v1585 = vunpack.c.h.b16 %v429
        %v1586 = vunpack.c.l.b16 %v430
        %v1587 = vunpack.c.h.b16 %v430
        %v1588 = vunpack.c.l.b16 %v431
        %v1589 = vunpack.c.h.b16 %v431
        %v1590 = vunpack.c.l.b16 %v432
        %v1591 = vunpack.c.h.b16 %v432
        %v1592 = vunpack.c.l.b16 %v433
        %v1593 = vunpack.c.h.b16 %v433
        %v1594 = vunpack.c.l.b16 %v434
        %v1595 = vunpack.c.h.b16 %v434
        %v1596 = vunpack.c.l.b16 %v435
        %v1597 = vunpack.c.h.b16 %v435
        %v1598 = vunpack.c.l.b16 %v436
        %v1599 = vunpack.c.h.b16 %v436
        %v1600 = vunpack.c.l.b16 %v437
        %v1601 = vunpack.c.h.b16 %v437
        %v1602 = vunpack.c.l.b16 %v438
        %v1603 = vunpack.c.h.b16 %v438
        %v1604 = vunpack.c.l.b16 %v439
        %v1605 = vunpack.c.h.b16 %v439
        %v1606 = vunpack.c.l.b16 %v440
        %v1607 = vunpack.c.h.b16 %v440
        %v1608 = vunpack.c.l.b16 %v441
        %v1609 = vunpack.c.h.b16 %v441
        %v1610 = vunpack.c.l.b16 %v442
        %v1611 = vunpack.c.h.b16 %v442
        %v1612 = vunpack.c.l.b16 %v443
        %v1613 = vunpack.c.h.b16 %v443
        %v1614 = vunpack.c.l.b16 %v444
        %v1615 = vunpack.c.h.b16 %v444
        %v1616 = vunpack.c.l.b16 %v445
        %v1617 = vunpack.c.h.b16 %v445
        %v1618 = vunpack.c.l.b16 %v446
        %v1619 = vunpack.c.h.b16 %v446
        %v1620 = vunpack.c.l.b16 %v447
        %v1621 = vunpack.c.h.b16 %v447
        %v1622 = vunpack.c.l.b16 %v448
        %v1623 = vunpack.c.h.b16 %v448
        %v1624 = vunpack.c.l.b16 %v449
        %v1625 = vunpack.c.h.b16 %v449
        %v1626 = vunpack.c.l.b16 %v450
        %v1627 = vunpack.c.h.b16 %v450
        %v1628 = vunpack.c.l.b16 %v451
        %v1629 = vunpack.c.h.b16 %v451
        %v1630 = vunpack.c.l.b16 %v452
        %v1631 = vunpack.c.h.b16 %v452
        %v1632 = vunpack.c.l.b16 %v453
        %v1633 = vunpack.c.h.b16 %v453
        %v1634 = vunpack.c.l.b16 %v454
        %v1635 = vunpack.c.h.b16 %v454
        %v1636 = vunpack.c.l.b16 %v455
        %v1637 = vunpack.c.h.b16 %v455
        %v1638 = vunpack.c.l.b16 %v456
        %v1639 = vunpack.c.h.b16 %v456
        %v1640 = vunpack.c.l.b16 %v457
        %v1641 = vunpack.c.h.b16 %v457
        %v1642 = vunpack.c.l.b16 %v458
        %v1643 = vunpack.c.h.b16 %v458
        %v1644 = vunpack.c.l.b16 %v459
        %v1645 = vunpack.c.h.b16 %v459
        %v1646 = vunpack.c.l.b16 %v460
        %v1647 = vunpack.c.h.b16 %v460
        %v1648 = vunpack.c.l.b16 %v461
        %v1649 = vunpack.c.h.b16 %v461
        %v1650 = vunpack.c.l.b16 %v462
        %v1651 = vunpack.c.h.b16 %v462
        %v1652 = vunpack.c.l.b16 %v463
        %v1653 = vunpack.c.h.b16 %v463
        %v1654 = vunpack.c.l.b16 %v464
        %v1655 = vunpack.c.h.b16 %v464
        %v1656 = vunpack.c.l.b16 %v465
        %v1657 = vunpack.c.h.b16 %v465
        %v1658 = vunpack.c.l.b16 %v466
        %v1659 = vunpack.c.h.b16 %v466
        %v1660 = vunpack.c.l.b16 %v467
        %v1661 = vunpack.c.h.b16 %v467
        %v1662 = vunpack.c.l.b16 %v468
        %v1663 = vunpack.c.h.b16 %v468
        %v1664 = vunpack.c.l.b16 %v469
        %v1665 = vunpack.c.h.b16 %v469
        %v1666 = vunpack.c.l.b16 %v470
        %v1667 = vunpack.c.h.b16 %v470
        %v1668 = vunpack.c.l.b16 %v471
        %v1669 = vunpack.c.h.b16 %v471
        %v1670 = vunpack.c.l.b16 %v472
        %v1671 = vunpack.c.h.b16 %v472
        %v1672 = vunpack.c.l.b16 %v473
        %v1673 = vunpack.c.h.b16 %v473
        %v1674 = vunpack.c.l.b16 %v474
        %v1675 = vunpack.c.h.b16 %v474
        %v1676 = vunpack.c.l.b16 %v475
        %v1677 = vunpack.c.h.b16 %v475
        %v1678 = vunpack.c.l.b16 %v476
        %v1679 = vunpack.c.h.b16 %v476
        %v1680 = vunpack.c.l.b16 %v477
        %v1681 = vunpack.c.h.b16 %v477
        %v1682 = vunpack.c.l.b16 %v478
        %v1683 = vunpack.c.h.b16 %v478
        %v1684 = vunpack.c.l.b16 %v479
        %v1685 = vunpack.c.h.b16 %v479
        %v1686 = vunpack.c.l.b16 %v480
        %v1687 = vunpack.c.h.b16 %v480
        %v1688 = vunpack.c.l.b16 %v481
        %v1689 = vunpack.c.h.b16 %v481
        %v1690 = vunpack.c.l.b16 %v482
        %v1691 = vunpack.c.h.b16 %v482
        %v1692 = vunpack.c.l.b16 %v483
        %v1693 = vunpack.c.h.b16 %v483
        %v1694 = vunpack.c.l.b16 %v484
        %v1695 = vunpack.c.h.b16 %v484
        %v1696 = vunpack.c.l.b16 %v485
        %v1697 = vunpack.c.h.b16 %v485
        %v1698 = vunpack.c.l.b16 %v486
        %v1699 = vunpack.c.h.b16 %v486
        %v1700 = vunpack.c.l.b16 %v487
        %v1701 = vunpack.c.h.b16 %v487
        %v1702 = vunpack.c.l.b16 %v488
        %v1703 = vunpack.c.h.b16 %v488
        %v1704 = vunpack.c.l.b16 %v489
        %v1705 = vunpack.c.h.b16 %v489
        %v1706 = vunpack.c.l.b16 %v490
        %v1707 = vunpack.c.h.b16 %v490
        %v1708 = vunpack.c.l.b16 %v491
        %v1709 = vunpack.c.h.b16 %v491
        %v1710 = vunpack.c.l.b16 %v492
        %v1711 = vunpack.c.h.b16 %v492
        %v1712 = vunpack.c.l.b16 %v493
        %v1713 = vunpack.c.h.b16 %v493
        %v1714 = vunpack.c.l.b16 %v494
        %v1715 = vunpack.c.h.b16 %v494
        %v1716 = vunpack.c.l.b16 %v495
        %v1717 = vunpack.c.h.b16 %v495
        %v1718 = vunpack.c.l.b16 %v496
        %v1719 = vunpack.c.h.b16 %v496
        %v1720 = vunpack.c.l.b16 %v497
        %v1721 = vunpack.c.h.b16 %v497
        %v1722 = vunpack.c.l.b16 %v498
        %v1723 = vunpack.c.h.b16 %v498
        %v1724 = vunpack.c.l.b16 %v499
        %v1725 = vunpack.c.h.b16 %v499
        %v1726 = vunpack.c.l.b16 %v500
        %v1727 = vunpack.c.h.b16 %v500
        %v1728 = vunpack.c.l.b16 %v501
        %v1729 = vunpack.c.h.b16 %v501
        %v1730 = vunpack.c.l.b16 %v502
        %v1731 = vunpack.c.h.b16 %v502
        %v1732 = vunpack.c.l.b16 %v503
        %v1733 = vunpack.c.h.b16 %v503
        %v1734 = vunpack.c.l.b16 %v504
        %v1735 = vunpack.c.h.b16 %v504
        %v1736 = vunpack.c.l.b16 %v505
        %v1737 = vunpack.c.h.b16 %v505
        %v1738 = vunpack.c.l.b16 %v506
        %v1739 = vunpack.c.h.b16 %v506
        %v1740 = vunpack.c.l.b16 %v507
        %v1741 = vunpack.c.h.b16 %v507
        %v1742 = vunpack.c.l.b16 %v508
        %v1743 = vunpack.c.h.b16 %v508
        %v1744 = vunpack.c.l.b16 %v509
        %v1745 = vunpack.c.h.b16 %v509
        %v1746 = vunpack.c.l.b16 %v510
        %v1747 = vunpack.c.h.b16 %v510
        %v1748 = vunpack.c.l.b16 %v511
        %v1749 = vunpack.c.h.b16 %v511
        %v1750 = vunpack.c.l.b16 %v512
        %v1751 = vunpack.c.h.b16 %v512
        %v1752 = vunpack.c.l.b16 %v513
        %v1753 = vunpack.c.h.b16 %v513
        %v1754 = vunpack.c.l.b16 %v514
        %v1755 = vunpack.c.h.b16 %v514
        %v1756 = vunpack.c.l.b16 %v515
        %v1757 = vunpack.c.h.b16 %v515
        %v1758 = vunpack.c.l.b16 %v516
        %v1759 = vunpack.c.h.b16 %v516
        %v1760 = vunpack.c.l.b16 %v517
        %v1761 = vunpack.c.h.b16 %v517
        %v1762 = vunpack.c.l.b16 %v518
        %v1763 = vunpack.c.h.b16 %v518
        %v1764 = vunpack.c.l.b16 %v519
        %v1765 = vunpack.c.h.b16 %v519
        %v1766 = vunpack.c.l.b16 %v520
        %v1767 = vunpack.c.h.b16 %v520
        %v1768 = vunpack.c.l.b16 %v521
        %v1769 = vunpack.c.h.b16 %v521
        %v1770 = vunpack.c.l.b16 %v522
        %v1771 = vunpack.c.h.b16 %v522
        %v1772 = vunpack.c.l.b16 %v523
        %v1773 = vunpack.c.h.b16 %v523
        %v1774 = vunpack.c.l.b16 %v524
        %v1775 = vunpack.c.h.b16 %v524
        %v1776 = vunpack.c.l.b16 %v525
        %v1777 = vunpack.c.h.b16 %v525
        %v1778 = vunpack.c.l.b16 %v526
        %v1779 = vunpack.c.h.b16 %v526
        %v1780 = vunpack.c.l.b16 %v527
        %v1781 = vunpack.c.h.b16 %v527
        %v1782 = vunpack.c.l.b16 %v528
        %v1783 = vunpack.c.h.b16 %v528
        %v1784 = vunpack.c.l.b16 %v529
        %v1785 = vunpack.c.h.b16 %v529
        %v1786 = vunpack.c.l.b16 %v530
        %v1787 = vunpack.c.h.b16 %v530
        %v1788 = vunpack.c.l.b16 %v531
        %v1789 = vunpack.c.h.b16 %v531
        %v1790 = vunpack.c.l.b16 %v532
        %v1791 = vunpack.c.h.b16 %v532
        %v1792 = vunpack.c.l.b16 %v533
        %v1793 = vunpack.c.h.b16 %v533
        %v1794 = vunpack.c.l.b16 %v534
        %v1795 = vunpack.c.h.b16 %v534
        %v1796 = vunpack.c.l.b16 %v535
        %v1797 = vunpack.c.h.b16 %v535
        %v1798 = vunpack.c.l.b16 %v536
        %v1799 = vunpack.c.h.b16 %v536
        %v1800 = vunpack.c.l.b16 %v537
        %v1801 = vunpack.c.h.b16 %v537
        %v1802 = vunpack.c.l.b16 %v538
        %v1803 = vunpack.c.h.b16 %v538
        %v1804 = vunpack.c.l.b16 %v539
        %v1805 = vunpack.c.h.b16 %v539
        %v1806 = vunpack.c.l.b16 %v540
        %v1807 = vunpack.c.h.b16 %v540
        %v1808 = vunpack.c.l.b16 %v541
        %v1809 = vunpack.c.h.b16 %v541
        %v1810 = vunpack.c.l.b16 %v542
        %v1811 = vunpack.c.h.b16 %v542
        %v1812 = vunpack.c.l.b16 %v543
        %v1813 = vunpack.c.h.b16 %v543
        %v1814 = vunpack.c.l.b16 %v544
        %v1815 = vunpack.c.h.b16 %v544
        %v1816 = vunpack.c.l.b16 %v545
        %v1817 = vunpack.c.h.b16 %v545
        %v1818 = vunpack.c.l.b16 %v546
        %v1819 = vunpack.c.h.b16 %v546
        %v1820 = vunpack.c.l.b16 %v547
        %v1821 = vunpack.c.h.b16 %v547
        %v1822 = vunpack.c.l.b16 %v548
        %v1823 = vunpack.c.h.b16 %v548
        %v1824 = vunpack.c.l.b16 %v549
        %v1825 = vunpack.c.h.b16 %v549
        %v1826 = vunpack.c.l.b16 %v550
        %v1827 = vunpack.c.h.b16 %v550
        %v1828 = vunpack.c.l.b16 %v551
        %v1829 = vunpack.c.h.b16 %v551
        %v1830 = vunpack.c.l.b16 %v552
        %v1831 = vunpack.c.h.b16 %v552
        %v1832 = vunpack.c.l.b16 %v553
        %v1833 = vunpack.c.h.b16 %v553
        %v1834 = vunpack.c.l.b16 %v554
        %v1835 = vunpack.c.h.b16 %v554
        %v1836 = vunpack.c.l.b16 %v555
        %v1837 = vunpack.c.h.b16 %v555
        %v1838 = vunpack.c.l.b16 %v556
        %v1839 = vunpack.c.h.b16 %v556
        %v1840 = vunpack.c.l.b16 %v557
        %v1841 = vunpack.c.h.b16 %v557
        %v1842 = vunpack.c.l.b16 %v558
        %v1843 = vunpack.c.h.b16 %v558
        %v1844 = vunpack.c.l.b16 %v559
        %v1845 = vunpack.c.h.b16 %v559
        %v1846 = vunpack.c.l.b16 %v560
        %v1847 = vunpack.c.h.b16 %v560
        %v1848 = vunpack.c.l.b16 %v561
        %v1849 = vunpack.c.h.b16 %v561
        %v1850 = vunpack.c.l.b16 %v562
        %v1851 = vunpack.c.h.b16 %v562
        %v1852 = vunpack.c.l.b16 %v563
        %v1853 = vunpack.c.h.b16 %v563
        %v1854 = vunpack.c.l.b16 %v564
        %v1855 = vunpack.c.h.b16 %v564
        %v1856 = vunpack.c.l.b16 %v565
        %v1857 = vunpack.c.h.b16 %v565
        %v1858 = vunpack.c.l.b16 %v566
        %v1859 = vunpack.c.h.b16 %v566
        %v1860 = vunpack.c.l.b16 %v567
        %v1861 = vunpack.c.h.b16 %v567
        %v1862 = vunpack.c.l.b16 %v568
        %v1863 = vunpack.c.h.b16 %v568
        %v1864 = vunpack.c.l.b16 %v569
        %v1865 = vunpack.c.h.b16 %v569
        %v1866 = vunpack.c.l.b16 %v570
        %v1867 = vunpack.c.h.b16 %v570
        %v1868 = vunpack.c.l.b16 %v571
        %v1869 = vunpack.c.h.b16 %v571
        %v1870 = vunpack.c.l.b16 %v572
        %v1871 = vunpack.c.h.b16 %v572
        %v1872 = vunpack.c.l.b16 %v573
        %v1873 = vunpack.c.h.b16 %v573
        %v1874 = vunpack.c.l.b16 %v574
        %v1875 = vunpack.c.h.b16 %v574
        %v1876 = vunpack.c.l.b16 %v575
        %v1877 = vunpack.c.h.b16 %v575
        %v1878 = vunpack.c.l.b16 %v576
        %v1879 = vunpack.c.h.b16 %v576
        %v1880 = vunpack.c.l.b16 %v577
        %v1881 = vunpack.c.h.b16 %v577
        %v1882 = vunpack.c.l.b16 %v578
        %v1883 = vunpack.c.h.b16 %v578
        %v1884 = vunpack.c.l.b16 %v579
        %v1885 = vunpack.c.h.b16 %v579
        %v1886 = vunpack.c.l.b16 %v580
        %v1887 = vunpack.c.h.b16 %v580
        %v1888 = vunpack.c.l.b16 %v581
        %v1889 = vunpack.c.h.b16 %v581
        %v1890 = vunpack.c.l.b16 %v582
        %v1891 = vunpack.c.h.b16 %v582
        %v1892 = vunpack.c.l.b16 %v583
        %v1893 = vunpack.c.h.b16 %v583
        %v1894 = vunpack.c.l.b16 %v584
        %v1895 = vunpack.c.h.b16 %v584
        %v1896 = vunpack.c.l.b16 %v585
        %v1897 = vunpack.c.h.b16 %v585
        %v1898 = vunpack.c.l.b16 %v586
        %v1899 = vunpack.c.h.b16 %v586
        %v1900 = vunpack.c.l.b16 %v587
        %v1901 = vunpack.c.h.b16 %v587
        %v1902 = vunpack.c.l.b16 %v588
        %v1903 = vunpack.c.h.b16 %v588
        %v1904 = vunpack.c.l.b16 %v589
        %v1905 = vunpack.c.h.b16 %v589
        %v1906 = vunpack.c.l.b16 %v590
        %v1907 = vunpack.c.h.b16 %v590
        %v1908 = vunpack.c.l.b16 %v591
        %v1909 = vunpack.c.h.b16 %v591
        %v1910 = vunpack.c.l.b16 %v592
        %v1911 = vunpack.c.h.b16 %v592
        %v1912 = vunpack.c.l.b16 %v593
        %v1913 = vunpack.c.h.b16 %v593
        %v1914 = vunpack.c.l.b16 %v594
        %v1915 = vunpack.c.h.b16 %v594
        %v1916 = vunpack.c.l.b16 %v595
        %v1917 = vunpack.c.h.b16 %v595
        %v1918 = vunpack.c.l.b16 %v596
        %v1919 = vunpack.c.h.b16 %v596
        %v1920 = vunpack.c.l.b16 %v597
        %v1921 = vunpack.c.h.b16 %v597
        %v1922 = vunpack.c.l.b16 %v598
        %v1923 = vunpack.c.h.b16 %v598
        %v1924 = vunpack.c.l.b16 %v599
        %v1925 = vunpack.c.h.b16 %v599
        %v1926 = vunpack.c.l.b16 %v600
        %v1927 = vunpack.c.h.b16 %v600
        %v1928 = vunpack.c.l.b16 %v601
        %v1929 = vunpack.c.h.b16 %v601
        %v1930 = vunpack.c.l.b16 %v602
        %v1931 = vunpack.c.h.b16 %v602
        %v1932 = vunpack.c.l.b16 %v603
        %v1933 = vunpack.c.h.b16 %v603
        %v1934 = vunpack.c.l.b16 %v604
        %v1935 = vunpack.c.h.b16 %v604
        %v1936 = vunpack.c.l.b16 %v605
        %v1937 = vunpack.c.h.b16 %v605
        %v1938 = vunpack.c.l.b16 %v606
        %v1939 = vunpack.c.h.b16 %v606
        %v1940 = vunpack.c.l.b16 %v607
        %v1941 = vunpack.c.h.b16 %v607
        %v1942 = vunpack.c.l.b16 %v608
        %v1943 = vunpack.c.h.b16 %v608
        %v1944 = vunpack.c.l.b16 %v609
        %v1945 = vunpack.c.h.b16 %v609
        %v1946 = vunpack.c.l.b16 %v610
        %v1947 = vunpack.c.h.b16 %v610
        %v1948 = vunpack.c.l.b16 %v611
        %v1949 = vunpack.c.h.b16 %v611
        %v1950 = vunpack.c.l.b16 %v612
        %v1951 = vunpack.c.h.b16 %v612
        %v1952 = vunpack.c.l.b16 %v613
        %v1953 = vunpack.c.h.b16 %v613
        %v1954 = vunpack.c.l.b16 %v614
        %v1955 = vunpack.c.h.b16 %v614
        %v1956 = vunpack.c.l.b16 %v615
        %v1957 = vunpack.c.h.b16 %v615
        %v1958 = vunpack.c.l.b16 %v616
        %v1959 = vunpack.c.h.b16 %v616
        %v1960 = vunpack.c.l.b16 %v617
        %v1961 = vunpack.c.h.b16 %v617
        %v1962 = vunpack.c.l.b16 %v618
        %v1963 = vunpack.c.h.b16 %v618
        %v1964 = vunpack.c.l.b16 %v619
        %v1965 = vunpack.c.h.b16 %v619
        %v1966 = vunpack.c.l.b16 %v620
        %v1967 = vunpack.c.h.b16 %v620
        %v1968 = vunpack.c.l.b16 %v621
        %v1969 = vunpack.c.h.b16 %v621
        %v1970 = vunpack.c.l.b16 %v622
        %v1971 = vunpack.c.h.b16 %v622
        %v1972 = vunpack.c.l.b16 %v623
        %v1973 = vunpack.c.h.b16 %v623
        %v1974 = vunpack.c.l.b16 %v624
        %v1975 = vunpack.c.h.b16 %v624
        %v1976 = vunpack.c.l.b16 %v625
        %v1977 = vunpack.c.h.b16 %v625
        %v1978 = vunpack.c.l.b16 %v626
        %v1979 = vunpack.c.h.b16 %v626
        %v1980 = vunpack.c.l.b16 %v627
        %v1981 = vunpack.c.h.b16 %v627
        %v1982 = vunpack.c.l.b16 %v628
        %v1983 = vunpack.c.h.b16 %v628
        %v1984 = vunpack.c.l.b16 %v629
        %v1985 = vunpack.c.h.b16 %v629
        %v1986 = vunpack.c.l.b16 %v630
        %v1987 = vunpack.c.h.b16 %v630
        %v1988 = vunpack.c.l.b16 %v631
        %v1989 = vunpack.c.h.b16 %v631
        %v1990 = vunpack.c.l.b16 %v632
        %v1991 = vunpack.c.h.b16 %v632
        %v1992 = vunpack.c.l.b16 %v633
        %v1993 = vunpack.c.h.b16 %v633
        %v1994 = vunpack.c.l.b16 %v634
        %v1995 = vunpack.c.h.b16 %v634
        %v1996 = vunpack.c.l.b16 %v635
        %v1997 = vunpack.c.h.b16 %v635
        %v1998 = vunpack.c.l.b16 %v636
        %v1999 = vunpack.c.h.b16 %v636
        %v2000 = vunpack.c.l.b16 %v637
        %v2001 = vunpack.c.h.b16 %v637
        %v2002 = vunpack.c.l.b16 %v638
        %v2003 = vunpack.c.h.b16 %v638
        %v2004 = vunpack.c.l.b16 %v639
        %v2005 = vunpack.c.h.b16 %v639
        %v2006 = vunpack.c.l.b16 %v640
        %v2007 = vunpack.c.h.b16 %v640
        %v2008 = vunpack.c.l.b16 %v641
        %v2009 = vunpack.c.h.b16 %v641
        %v2010 = vunpack.c.l.b16 %v642
        %v2011 = vunpack.c.h.b16 %v642
        %v2012 = vunpack.c.l.b16 %v643
        %v2013 = vunpack.c.h.b16 %v643
        %v2014 = vunpack.c.l.b16 %v644
        %v2015 = vunpack.c.h.b16 %v644
        %v2016 = vunpack.c.l.b16 %v645
        %v2017 = vunpack.c.h.b16 %v645
        %v2018 = vunpack.c.l.b16 %v646
        %v2019 = vunpack.c.h.b16 %v646
        %v2020 = vunpack.c.l.b16 %v647
        %v2021 = vunpack.c.h.b16 %v647
        %v2022 = vunpack.c.l.b16 %v648
        %v2023 = vunpack.c.h.b16 %v648
        %v2024 = vunpack.c.l.b16 %v649
        %v2025 = vunpack.c.h.b16 %v649
        %v2026 = vunpack.c.l.b16 %v650
        %v2027 = vunpack.c.h.b16 %v650
        %v2028 = vunpack.c.l.b16 %v651
        %v2029 = vunpack.c.h.b16 %v651
        %v2030 = vunpack.c.l.b16 %v652
        %v2031 = vunpack.c.h.b16 %v652
        %v2032 = vunpack.c.l.b16 %v653
        %v2033 = vunpack.c.h.b16 %v653
        %v2034 = vunpack.c.l.b16 %v654
        %v2035 = vunpack.c.h.b16 %v654
        %v2036 = vunpack.c.l.b16 %v655
        %v2037 = vunpack.c.h.b16 %v655
        %v2038 = vunpack.c.l.b16 %v656
        %v2039 = vunpack.c.h.b16 %v656
        %v2040 = vunpack.c.l.b16 %v657
        %v2041 = vunpack.c.h.b16 %v657
        %v2042 = vunpack.c.l.b16 %v658
        %v2043 = vunpack.c.h.b16 %v658
        %v2044 = vunpack.c.l.b16 %v659
        %v2045 = vunpack.c.h.b16 %v659
        %v2046 = vunpack.c.l.b16 %v660
        %v2047 = vunpack.c.h.b16 %v660
        %v2048 = vunpack.c.l.b16 %v661
        %v2049 = vunpack.c.h.b16 %v661
        %v2050 = vunpack.c.l.b16 %v662
        %v2051 = vunpack.c.h.b16 %v662
        %v2052 = vunpack.c.l.b16 %v663
        %v2053 = vunpack.c.h.b16 %v663
        %v2054 = vunpack.c.l.b16 %v664
        %v2055 = vunpack.c.h.b16 %v664
        %v2056 = vunpack.c.l.b16 %v665
        %v2057 = vunpack.c.h.b16 %v665
        %v2058 = vunpack.c.l.b16 %v666
        %v2059 = vunpack.c.h.b16 %v666
        %v2060 = vunpack.c.l.b16 %v667
        %v2061 = vunpack.c.h.b16 %v667
        %v2062 = vunpack.c.l.b16 %v668
        %v2063 = vunpack.c.h.b16 %v668
        %v2064 = vunpack.c.l.b16 %v669
        %v2065 = vunpack.c.h.b16 %v669
        %v2066 = vunpack.c.l.b16 %v670
        %v2067 = vunpack.c.h.b16 %v670
        %v2068 = vunpack.c.l.b16 %v671
        %v2069 = vunpack.c.h.b16 %v671
        %v2070 = vunpack.c.l.b16 %v672
        %v2071 = vunpack.c.h.b16 %v672
        %v2072 = vunpack.c.l.b16 %v673
        %v2073 = vunpack.c.h.b16 %v673
        %v2074 = vunpack.c.l.b16 %v674
        %v2075 = vunpack.c.h.b16 %v674
        %v2076 = vunpack.c.l.b16 %v675
        %v2077 = vunpack.c.h.b16 %v675
        %v2078 = vunpack.c.l.b16 %v676
        %v2079 = vunpack.c.h.b16 %v676
        %v2080 = vunpack.c.l.b16 %v677
        %v2081 = vunpack.c.h.b16 %v677
        %v2082 = vunpack.c.l.b16 %v678
        %v2083 = vunpack.c.h.b16 %v678
        %v2084 = vunpack.c.l.b16 %v679
        %v2085 = vunpack.c.h.b16 %v679
        %v2086 = vunpack.c.l.b16 %v680
        %v2087 = vunpack.c.h.b16 %v680
        %v2088 = vunpack.c.l.b16 %v681
        %v2089 = vunpack.c.h.b16 %v681
        %v2090 = vunpack.c.l.b16 %v682
        %v2091 = vunpack.c.h.b16 %v682
        %v2092 = vunpack.c.l.b16 %v683
        %v2093 = vunpack.c.h.b16 %v683
        %v2094 = vunpack.c.l.b16 %v684
        %v2095 = vunpack.c.h.b16 %v684
        %v2096 = vunpack.c.l.b16 %v685
        %v2097 = vunpack.c.h.b16 %v685
        %v2098 = vunpack.c.l.b16 %v686
        %v2099 = vunpack.c.h.b16 %v686
        %v2100 = vunpack.c.l.b16 %v687
        %v2101 = vunpack.c.h.b16 %v687
        %v2102 = vunpack.c.l.b16 %v688
        %v2103 = vunpack.c.h.b16 %v688
        %v2104 = vunpack.c.l.b16 %v689
        %v2105 = vunpack.c.h.b16 %v689
        %v2106 = vunpack.c.l.b16 %v690
        %v2107 = vunpack.c.h.b16 %v690
        %v2108 = vunpack.c.l.b16 %v691
        %v2109 = vunpack.c.h.b16 %v691
        %v2110 = vunpack.c.l.b16 %v692
        %v2111 = vunpack.c.h.b16 %v692
        %v2112 = vunpack.c.l.b16 %v693
        %v2113 = vunpack.c.h.b16 %v693
        %v2114 = vunpack.c.l.b16 %v694
        %v2115 = vunpack.c.h.b16 %v694
        %v2116 = vunpack.c.l.b16 %v695
        %v2117 = vunpack.c.h.b16 %v695
        %v2118 = vunpack.c.l.b16 %v696
        %v2119 = vunpack.c.h.b16 %v696
        %v2120 = vunpack.c.l.b16 %v697
        %v2121 = vunpack.c.h.b16 %v697
        %v2122 = vunpack.c.l.b16 %v698
        %v2123 = vunpack.c.h.b16 %v698
        %v2124 = vunpack.c.l.b16 %v699
        %v2125 = vunpack.c.h.b16 %v699
        %v2126 = vunpack.c.l.b16 %v700
        %v2127 = vunpack.c.h.b16 %v700
        %v2128 = vunpack.c.l.b16 %v701
        %v2129 = vunpack.c.h.b16 %v701
        %v2130 = vunpack.c.l.b16 %v702
        %v2131 = vunpack.c.h.b16 %v702
        %v2132 = vunpack.c.l.b16 %v703
        %v2133 = vunpack.c.h.b16 %v703
        %v2134 = vunpack.c.l.b16 %v704
        %v2135 = vunpack.c.h.b16 %v704
        %v2136 = vunpack.c.l.b16 %v705
        %v2137 = vunpack.c.h.b16 %v705
        %v2138 = vunpack.c.l.b16 %v706
        %v2139 = vunpack.c.h.b16 %v706
        %v2140 = vunpack.c.l.b16 %v707
        %v2141 = vunpack.c.h.b16 %v707
        %v2142 = vunpack.c.l.b16 %v708
        %v2143 = vunpack.c.h.b16 %v708
        %v2144 = vunpack.c.l.b16 %v709
        %v2145 = vunpack.c.h.b16 %v709
        %v2146 = vunpack.c.l.b16 %v710
        %v2147 = vunpack.c.h.b16 %v710
        %v2148 = vunpack.c.l.b16 %v711
        %v2149 = vunpack.c.h.b16 %v711
        %v2150 = vunpack.c.l.b16 %v712
        %v2151 = vunpack.c.h.b16 %v712
        %v2152 = vunpack.c.l.b16 %v713
        %v2153 = vunpack.c.h.b16 %v713
        %v2154 = vunpack.c.l.b16 %v714
        %v2155 = vunpack.c.h.b16 %v714
        %v2156 = vunpack.c.l.b16 %v715
        %v2157 = vunpack.c.h.b16 %v715
        %v2158 = vunpack.c.l.b16 %v716
        %v2159 = vunpack.c.h.b16 %v716
        %v2160 = vunpack.c.l.b16 %v717
        %v2161 = vunpack.c.h.b16 %v717
        %v2162 = vunpack.c.l.b16 %v718
        %v2163 = vunpack.c.h.b16 %v718
        %v2164 = vunpack.c.l.b16 %v719
        %v2165 = vunpack.c.h.b16 %v719
        %v2166 = vunpack.c.l.b16 %v720
        %v2167 = vunpack.c.h.b16 %v720
        %v2168 = vunpack.c.l.b16 %v721
        %v2169 = vunpack.c.h.b16 %v721
        %v2170 = vunpack.c.l.b16 %v722
        %v2171 = vunpack.c.h.b16 %v722
        %v2172 = vunpack.c.l.b16 %v723
        %v2173 = vunpack.c.h.b16 %v723
        %v2174 = vunpack.c.l.b16 %v724
        %v2175 = vunpack.c.h.b16 %v724
        %v2176 = vunpack.c.l.b16 %v725
        %v2177 = vunpack.c.h.b16 %v725
        %v2178 = vunpack.c.l.b16 %v726
        %v2179 = vunpack.c.h.b16 %v726
        %v2180 = vunpack.c.l.b16 %v727
        %v2181 = vunpack.c.h.b16 %v727
        %v2182 = vunpack.c.l.b16 %v728
        %v2183 = vunpack.c.h.b16 %v728
        %v2184 = vunpack.c.l.b16 %v729
        %v2185 = vunpack.c.h.b16 %v729
        %v2186 = vunpack.c.l.b16 %v730
        %v2187 = vunpack.c.h.b16 %v730
        %v2188 = vunpack.c.l.b16 %v731
        %v2189 = vunpack.c.h.b16 %v731
        %v2190 = vunpack.c.l.b16 %v732
        %v2191 = vunpack.c.h.b16 %v732
        %v2192 = vunpack.c.l.b16 %v733
        %v2193 = vunpack.c.h.b16 %v733
        %v2194 = vunpack.c.l.b16 %v734
        %v2195 = vunpack.c.h.b16 %v734
        %v2196 = vunpack.c.l.b16 %v735
        %v2197 = vunpack.c.h.b16 %v735
        %v2198 = vunpack.c.l.b16 %v736
        %v2199 = vunpack.c.h.b16 %v736
        %v2200 = vunpack.c.l.b16 %v737
        %v2201 = vunpack.c.h.b16 %v737
        %v2202 = vunpack.c.l.b16 %v738
        %v2203 = vunpack.c.h.b16 %v738
        %v2204 = vunpack.c.l.b16 %v739
        %v2205 = vunpack.c.h.b16 %v739
        %v2206 = vunpack.c.l.b16 %v740
        %v2207 = vunpack.c.h.b16 %v740
        %v2208 = vunpack.c.l.b16 %v741
        %v2209 = vunpack.c.h.b16 %v741
        %v2210 = vunpack.c.l.b16 %v742
        %v2211 = vunpack.c.h.b16 %v742
        %v2212 = vunpack.c.l.b16 %v743
        %v2213 = vunpack.c.h.b16 %v743
        %v2214 = vunpack.c.l.b16 %v744
        %v2215 = vunpack.c.h.b16 %v744
        %v2216 = vunpack.c.l.b16 %v745
        %v2217 = vunpack.c.h.b16 %v745
        %v2218 = vunpack.c.l.b16 %v746
        %v2219 = vunpack.c.h.b16 %v746
        %v2220 = vunpack.c.l.b16 %v747
        %v2221 = vunpack.c.h.b16 %v747
        %v2222 = vunpack.c.l.b16 %v748
        %v2223 = vunpack.c.h.b16 %v748
        %v2224 = vunpack.c.l.b16 %v749
        %v2225 = vunpack.c.h.b16 %v749
        %v2226 = vunpack.c.l.b16 %v750
        %v2227 = vunpack.c.h.b16 %v750
        %v2228 = vunpack.c.l.b16 %v751
        %v2229 = vunpack.c.h.b16 %v751
        %v2230 = vunpack.c.l.b16 %v752
        %v2231 = vunpack.c.h.b16 %v752
        %v2232 = vunpack.c.l.b16 %v753
        %v2233 = vunpack.c.h.b16 %v753
        %v2234 = vunpack.c.l.b16 %v754
        %v2235 = vunpack.c.h.b16 %v754
        %v2236 = vunpack.c.l.b16 %v755
        %v2237 = vunpack.c.h.b16 %v755
        %v2238 = vunpack.c.l.b16 %v756
        %v2239 = vunpack.c.h.b16 %v756
        %v2240 = vunpack.c.l.b16 %v757
        %v2241 = vunpack.c.h.b16 %v757
        %v2242 = vunpack.c.l.b16 %v758
        %v2243 = vunpack.c.h.b16 %v758
        %v2244 = vunpack.c.l.b16 %v759
        %v2245 = vunpack.c.h.b16 %v759
        %v2246 = vunpack.c.l.b16 %v760
        %v2247 = vunpack.c.h.b16 %v760
        %v2248 = vunpack.c.l.b16 %v761
        %v2249 = vunpack.c.h.b16 %v761
        %v2250 = vunpack.c.l.b16 %v762
        %v2251 = vunpack.c.h.b16 %v762
        %v2252 = vunpack.c.l.b16 %v763
        %v2253 = vunpack.c.h.b16 %v763
        %v2254 = vunpack.c.l.b16 %v764
        %v2255 = vunpack.c.h.b16 %v764
        %v2256 = vunpack.c.l.b16 %v765
        %v2257 = vunpack.c.h.b16 %v765
        %v2258 = vunpack.c.l.b16 %v766
        %v2259 = vunpack.c.h.b16 %v766
        %v2260 = vunpack.c.l.b16 %v767
        %v2261 = vunpack.c.h.b16 %v767
        %v2262 = vunpack.c.l.b16 %v768
        %v2263 = vunpack.c.h.b16 %v768
        %v2264 = vunpack.c.l.b16 %v769
        %v2265 = vunpack.c.h.b16 %v769
        %v2266 = vunpack.c.l.b16 %v770
        %v2267 = vunpack.c.h.b16 %v770
        %v2268 = vunpack.c.l.b16 %v771
        %v2269 = vunpack.c.h.b16 %v771
        %v2270 = vunpack.c.l.b16 %v772
        %v2271 = vunpack.c.h.b16 %v772
        %v2272 = vunpack.c.l.b16 %v773
        %v2273 = vunpack.c.h.b16 %v773
        %v2274 = vunpack.c.l.b16 %v774
        %v2275 = vunpack.c.h.b16 %v774
        %v2276 = vunpack.c.l.b16 %v775
        %v2277 = vunpack.c.h.b16 %v775
        %v2278 = vunpack.c.l.b16 %v776
        %v2279 = vunpack.c.h.b16 %v776
        %v2280 = vunpack.c.l.b16 %v777
        %v2281 = vunpack.c.h.b16 %v777
        %v2282 = vunpack.c.l.b16 %v778
        %v2283 = vunpack.c.h.b16 %v778
        %v2284 = vunpack.c.l.b16 %v779
        %v2285 = vunpack.c.h.b16 %v779
        %v2286 = vunpack.c.l.b16 %v780
        %v2287 = vunpack.c.h.b16 %v780
        %v2288 = vunpack.c.l.b16 %v781
        %v2289 = vunpack.c.h.b16 %v781
        %v2290 = vunpack.c.l.b16 %v782
        %v2291 = vunpack.c.h.b16 %v782
        %v2292 = vunpack.c.l.b16 %v783
        %v2293 = vunpack.c.h.b16 %v783
        %v2294 = vunpack.c.l.b16 %v784
        %v2295 = vunpack.c.h.b16 %v784
        %v2296 = vunpack.c.l.b16 %v785
        %v2297 = vunpack.c.h.b16 %v785
        %v2298 = vunpack.c.l.b16 %v786
        %v2299 = vunpack.c.h.b16 %v786
        %v2300 = vunpack.c.l.b16 %v787
        %v2301 = vunpack.c.h.b16 %v787
        %v2302 = vunpack.c.l.b16 %v788
        %v2303 = vunpack.c.h.b16 %v788
        %v2304 = vunpack.c.l.b16 %v789
        %v2305 = vunpack.c.h.b16 %v789
        %v2306 = vunpack.c.l.b16 %v790
        %v2307 = vunpack.c.h.b16 %v790
        %v2308 = vunpack.c.l.b16 %v791
        %v2309 = vunpack.c.h.b16 %v791
        %v2310 = vunpack.c.l.b16 %v792
        %v2311 = vunpack.c.h.b16 %v792
        %v2312 = vunpack.c.l.b16 %v793
        %v2313 = vunpack.c.h.b16 %v793
        %v2314 = vunpack.c.l.b16 %v794
        %v2315 = vunpack.c.h.b16 %v794
        %v2316 = vunpack.c.l.b16 %v795
        %v2317 = vunpack.c.h.b16 %v795
        %v2318 = vunpack.c.l.b16 %v796
        %v2319 = vunpack.c.h.b16 %v796
        %v2320 = vunpack.c.l.b16 %v797
        %v2321 = vunpack.c.h.b16 %v797
        %v2322 = vunpack.c.l.b16 %v798
        %v2323 = vunpack.c.h.b16 %v798
        %v2324 = vunpack.c.l.b16 %v799
        %v2325 = vunpack.c.h.b16 %v799
        %v2326 = vunpack.c.l.b16 %v800
        %v2327 = vunpack.c.h.b16 %v800
        %v2328 = vunpack.c.l.b16 %v801
        %v2329 = vunpack.c.h.b16 %v801
        %v2330 = vunpack.c.l.b16 %v802
        %v2331 = vunpack.c.h.b16 %v802
        %v2332 = vunpack.c.l.b16 %v803
        %v2333 = vunpack.c.h.b16 %v803
        %v2334 = vunpack.c.l.b16 %v804
        %v2335 = vunpack.c.h.b16 %v804
        %v2336 = vunpack.c.l.b16 %v805
        %v2337 = vunpack.c.h.b16 %v805
        %v2338 = vunpack.c.l.b16 %v806
        %v2339 = vunpack.c.h.b16 %v806
        %v2340 = vunpack.c.l.b16 %v807
        %v2341 = vunpack.c.h.b16 %v807
        %v2342 = vunpack.c.l.b16 %v808
        %v2343 = vunpack.c.h.b16 %v808
        %v2344 = vunpack.c.l.b16 %v809
        %v2345 = vunpack.c.h.b16 %v809
        %v2346 = vunpack.c.l.b16 %v810
        %v2347 = vunpack.c.h.b16 %v810
        %v2348 = vunpack.c.l.b16 %v811
        %v2349 = vunpack.c.h.b16 %v811
        %v2350 = vunpack.c.l.b16 %v812
        %v2351 = vunpack.c.h.b16 %v812
        %v2352 = vunpack.c.l.b16 %v813
        %v2353 = vunpack.c.h.b16 %v813
        %v2354 = vunpack.c.l.b16 %v814
        %v2355 = vunpack.c.h.b16 %v814
        %v2356 = vunpack.c.l.b16 %v815
        %v2357 = vunpack.c.h.b16 %v815
        %v2358 = vunpack.c.l.b16 %v816
        %v2359 = vunpack.c.h.b16 %v816
        %v2360 = vunpack.c.l.b16 %v817
        %v2361 = vunpack.c.h.b16 %v817
        %v2362 = vunpack.c.l.b16 %v818
        %v2363 = vunpack.c.h.b16 %v818
        %v2364 = vunpack.c.l.b16 %v819
        %v2365 = vunpack.c.h.b16 %v819
        %v2366 = vunpack.c.l.b16 %v820
        %v2367 = vunpack.c.h.b16 %v820
        %v2368 = vunpack.c.l.b16 %v821
        %v2369 = vunpack.c.h.b16 %v821
        %v2370 = vunpack.c.l.b16 %v822
        %v2371 = vunpack.c.h.b16 %v822
        %v2372 = vunpack.c.l.b16 %v823
        %v2373 = vunpack.c.h.b16 %v823
        %v2374 = vunpack.c.l.b16 %v824
        %v2375 = vunpack.c.h.b16 %v824
        %v2376 = vunpack.c.l.b16 %v825
        %v2377 = vunpack.c.h.b16 %v825
        %v2378 = vunpack.c.l.b16 %v826
        %v2379 = vunpack.c.h.b16 %v826
        %v2380 = vunpack.c.l.b16 %v827
        %v2381 = vunpack.c.h.b16 %v827
        %v2382 = vunpack.c.l.b16 %v828
        %v2383 = vunpack.c.h.b16 %v828
        %v2384 = vunpack.c.l.b16 %v829
        %v2385 = vunpack.c.h.b16 %v829
        %v2386 = vunpack.c.l.b16 %v830
        %v2387 = vunpack.c.h.b16 %v830
        %v2388 = vunpack.c.l.b16 %v831
        %v2389 = vunpack.c.h.b16 %v831
        %v2390 = vunpack.c.l.b16 %v832
        %v2391 = vunpack.c.h.b16 %v832
        %v2392 = vunpack.c.l.b16 %v833
        %v2393 = vunpack.c.h.b16 %v833
        %v2394 = vunpack.c.l.b16 %v834
        %v2395 = vunpack.c.h.b16 %v834
        %v2396 = vunpack.c.l.b16 %v835
        %v2397 = vunpack.c.h.b16 %v835
        %v2398 = vunpack.c.l.b16 %v836
        %v2399 = vunpack.c.h.b16 %v836
        %v2400 = vunpack.c.l.b16 %v837
        %v2401 = vunpack.c.h.b16 %v837
        %v2402 = vunpack.c.l.b16 %v838
        %v2403 = vunpack.c.h.b16 %v838
        %v2404 = vunpack.c.l.b16 %v839
        %v2405 = vunpack.c.h.b16 %v839
        %v2406 = vunpack.c.l.b16 %v840
        %v2407 = vunpack.c.h.b16 %v840
        %v2408 = vunpack.c.l.b16 %v841
        %v2409 = vunpack.c.h.b16 %v841
        %v2410 = vunpack.c.l.b16 %v842
        %v2411 = vunpack.c.h.b16 %v842
        %v2412 = vunpack.c.l.b16 %v843
        %v2413 = vunpack.c.h.b16 %v843
        %v2414 = vunpack.c.l.b16 %v844
        %v2415 = vunpack.c.h.b16 %v844
        %v2416 = vunpack.c.l.b16 %v845
        %v2417 = vunpack.c.h.b16 %v845
        %v2418 = vunpack.c.l.b16 %v846
        %v2419 = vunpack.c.h.b16 %v846
        %v2420 = vunpack.c.l.b16 %v847
        %v2421 = vunpack.c.h.b16 %v847
        %v2422 = vunpack.c.l.b16 %v848
        %v2423 = vunpack.c.h.b16 %v848
        %v2424 = vunpack.c.l.b16 %v849
        %v2425 = vunpack.c.h.b16 %v849
        %v2426 = vunpack.c.l.b16 %v850
        %v2427 = vunpack.c.h.b16 %v850
        %v2428 = vunpack.c.l.b16 %v851
        %v2429 = vunpack.c.h.b16 %v851
        %v2430 = vunpack.c.l.b16 %v852
        %v2431 = vunpack.c.h.b16 %v852
        %v2432 = vunpack.c.l.b16 %v853
        %v2433 = vunpack.c.h.b16 %v853
        %v2434 = vunpack.c.l.b16 %v854
        %v2435 = vunpack.c.h.b16 %v854
        %v2436 = vunpack.c.l.b16 %v855
        %v2437 = vunpack.c.h.b16 %v855
        %v2438 = vunpack.c.l.b16 %v856
        %v2439 = vunpack.c.h.b16 %v856
        %v2440 = vunpack.c.l.b16 %v857
        %v2441 = vunpack.c.h.b16 %v857
        %v2442 = vunpack.c.l.b16 %v858
        %v2443 = vunpack.c.h.b16 %v858
        %v2444 = vunpack.c.l.b16 %v859
        %v2445 = vunpack.c.h.b16 %v859
        %v2446 = vunpack.c.l.b16 %v860
        %v2447 = vunpack.c.h.b16 %v860
        %v2448 = vunpack.c.l.b16 %v861
        %v2449 = vunpack.c.h.b16 %v861
        %v2450 = vunpack.c.l.b16 %v862
        %v2451 = vunpack.c.h.b16 %v862
        %v2452 = vunpack.c.l.b16 %v863
        %v2453 = vunpack.c.h.b16 %v863
        %v2454 = vunpack.c.l.b16 %v864
        %v2455 = vunpack.c.h.b16 %v864
        %v2456 = vunpack.c.l.b16 %v865
        %v2457 = vunpack.c.h.b16 %v865
        %v2458 = vunpack.c.l.b16 %v866
        %v2459 = vunpack.c.h.b16 %v866
        %v2460 = vunpack.c.l.b16 %v867
        %v2461 = vunpack.c.h.b16 %v867
        %v2462 = vunpack.c.l.b16 %v868
        %v2463 = vunpack.c.h.b16 %v868
        %v2464 = vunpack.c.l.b16 %v869
        %v2465 = vunpack.c.h.b16 %v869
        %v2466 = vunpack.c.l.b16 %v870
        %v2467 = vunpack.c.h.b16 %v870
        %v2468 = vunpack.c.l.b16 %v871
        %v2469 = vunpack.c.h.b16 %v871
        %v2470 = vunpack.c.l.b16 %v872
        %v2471 = vunpack.c.h.b16 %v872
        %v2472 = vunpack.c.l.b16 %v873
        %v2473 = vunpack.c.h.b16 %v873
        %v2474 = vunpack.c.l.b16 %v874
        %v2475 = vunpack.c.h.b16 %v874
        %v2476 = vunpack.c.l.b16 %v875
        %v2477 = vunpack.c.h.b16 %v875
        %v2478 = vunpack.c.l.b16 %v876
        %v2479 = vunpack.c.h.b16 %v876
        %v2480 = vunpack.c.l.b16 %v877
        %v2481 = vunpack.c.h.b16 %v877
        %v2482 = vunpack.c.l.b16 %v878
        %v2483 = vunpack.c.h.b16 %v878
        %v2484 = vunpack.c.l.b16 %v879
        %v2485 = vunpack.c.h.b16 %v879
        %v2486 = vunpack.c.l.b16 %v880
        %v2487 = vunpack.c.h.b16 %v880
        %v2488 = vunpack.c.l.b16 %v881
        %v2489 = vunpack.c.h.b16 %v881
        %v2490 = vunpack.c.l.b16 %v882
        %v2491 = vunpack.c.h.b16 %v882
        %v2492 = vunpack.c.l.b16 %v883
        %v2493 = vunpack.c.h.b16 %v883
        %v2494 = vunpack.c.l.b16 %v884
        %v2495 = vunpack.c.h.b16 %v884
        %v2496 = vunpack.c.l.b16 %v885
        %v2497 = vunpack.c.h.b16 %v885
        %v2498 = vunpack.c.l.b16 %v886
        %v2499 = vunpack.c.h.b16 %v886
        %v2500 = vunpack.c.l.b16 %v887
        %v2501 = vunpack.c.h.b16 %v887
        %v2502 = vunpack.c.l.b16 %v888
        %v2503 = vunpack.c.h.b16 %v888
        %v2504 = vunpack.c.l.b16 %v889
        %v2505 = vunpack.c.h.b16 %v889
        %v2506 = vunpack.c.l.b16 %v890
        %v2507 = vunpack.c.h.b16 %v890
        %v2508 = vunpack.c.l.b16 %v891
        %v2509 = vunpack.c.h.b16 %v891
        %v2510 = vunpack.c.l.b16 %v892
        %v2511 = vunpack.c.h.b16 %v892
        %v2512 = vunpack.c.l.b16 %v893
        %v2513 = vunpack.c.h.b16 %v893
        %v2514 = vpack.c.b16 %v1506, %v1490
        %v2515 = vpack.c.b16 %v1507, %v1491
        %v2516 = vpack.c.b16 %v1508, %v1492
        %v2517 = vpack.c.b16 %v1509, %v1493
        %v2518 = vpack.c.b16 %v1510, %v1494
        %v2519 = vpack.c.b16 %v1511, %v1495
        %v2520 = vpack.c.b16 %v1512, %v1496
        %v2521 = vpack.c.b16 %v1513, %v1497
        %v2522 = vpack.c.b16 %v1514, %v1498
        %v2523 = vpack.c.b16 %v1515, %v1499
        %v2524 = vpack.c.b16 %v1516, %v1500
        %v2525 = vpack.c.b16 %v1517, %v1501
        %v2526 = vpack.c.b16 %v1518, %v1502
        %v2527 = vpack.c.b16 %v1519, %v1503
        %v2528 = vpack.c.b16 %v1520, %v1504
        %v2529 = vpack.c.b16 %v1521, %v1505
        %v2530 = vpack.c.b16 %v1538, %v1522
        %v2531 = vpack.c.b16 %v1539, %v1523
        %v2532 = vpack.c.b16 %v1540, %v1524
        %v2533 = vpack.c.b16 %v1541, %v1525
        %v2534 = vpack.c.b16 %v1542, %v1526
        %v2535 = vpack.c.b16 %v1543, %v1527
        %v2536 = vpack.c.b16 %v1544, %v1528
        %v2537 = vpack.c.b16 %v1545, %v1529
        %v2538 = vpack.c.b16 %v1546, %v1530
        %v2539 = vpack.c.b16 %v1547, %v1531
        %v2540 = vpack.c.b16 %v1548, %v1532
        %v2541 = vpack.c.b16 %v1549, %v1533
        %v2542 = vpack.c.b16 %v1550, %v1534
        %v2543 = vpack.c.b16 %v1551, %v1535
        %v2544 = vpack.c.b16 %v1552, %v1536
        %v2545 = vpack.c.b16 %v1553, %v1537
        %v2546 = vpack.c.b16 %v1570, %v1554
        %v2547 = vpack.c.b16 %v1571, %v1555
        %v2548 = vpack.c.b16 %v1572, %v1556
        %v2549 = vpack.c.b16 %v1573, %v1557
        %v2550 = vpack.c.b16 %v1574, %v1558
        %v2551 = vpack.c.b16 %v1575, %v1559
        %v2552 = vpack.c.b16 %v1576, %v1560
        %v2553 = vpack.c.b16 %v1577, %v1561
        %v2554 = vpack.c.b16 %v1578, %v1562
        %v2555 = vpack.c.b16 %v1579, %v1563
        %v2556 = vpack.c.b16 %v1580, %v1564
        %v2557 = vpack.c.b16 %v1581, %v1565
        %v2558 = vpack.c.b16 %v1582, %v1566
        %v2559 = vpack.c.b16 %v1583, %v1567
        %v2560 = vpack.c.b16 %v1584, %v1568
        %v2561 = vpack.c.b16 %v1585, %v1569
        %v2562 = vpack.c.b16 %v1602, %v1586
        %v2563 = vpack.c.b16 %v1603, %v1587
        %v2564 = vpack.c.b16 %v1604, %v1588
        %v2565 = vpack.c.b16 %v1605, %v1589
        %v2566 = vpack.c.b16 %v1606, %v1590
        %v2567 = vpack.c.b16 %v1607, %v1591
        %v2568 = vpack.c.b16 %v1608, %v1592
        %v2569 = vpack.c.b16 %v1609, %v1593
        %v2570 = vpack.c.b16 %v1610, %v1594
        %v2571 = vpack.c.b16 %v1611, %v1595
        %v2572 = vpack.c.b16 %v1612, %v1596
        %v2573 = vpack.c.b16 %v1613, %v1597
        %v2574 = vpack.c.b16 %v1614, %v1598
        %v2575 = vpack.c.b16 %v1615, %v1599
        %v2576 = vpack.c.b16 %v1616, %v1600
        %v2577 = vpack.c.b16 %v1617, %v1601
        %v2578 = vpack.c.b16 %v1634, %v1618
        %v2579 = vpack.c.b16 %v1635, %v1619
        %v2580 = vpack.c.b16 %v1636, %v1620
        %v2581 = vpack.c.b16 %v1637, %v1621
        %v2582 = vpack.c.b16 %v1638, %v1622
        %v2583 = vpack.c.b16 %v1639, %v1623
        %v2584 = vpack.c.b16 %v1640, %v1624
        %v2585 = vpack.c.b16 %v1641, %v1625
        %v2586 = vpack.c.b16 %v1642, %v1626
        %v2587 = vpack.c.b16 %v1643, %v1627
        %v2588 = vpack.c.b16 %v1644, %v1628
        %v2589 = vpack.c.b16 %v1645, %v1629
        %v2590 = vpack.c.b16 %v1646, %v1630
        %v2591 = vpack.c.b16 %v1647, %v1631
        %v2592 = vpack.c.b16 %v1648, %v1632
        %v2593 = vpack.c.b16 %v1649, %v1633
        %v2594 = vpack.c.b16 %v1666, %v1650
        %v2595 = vpack.c.b16 %v1667, %v1651
        %v2596 = vpack.c.b16 %v1668, %v1652
        %v2597 = vpack.c.b16 %v1669, %v1653
        %v2598 = vpack.c.b16 %v1670, %v1654
        %v2599 = vpack.c.b16 %v1671, %v1655
        %v2600 = vpack.c.b16 %v1672, %v1656
        %v2601 = vpack.c.b16 %v1673, %v1657
        %v2602 = vpack.c.b16 %v1674, %v1658
        %v2603 = vpack.c.b16 %v1675, %v1659
        %v2604 = vpack.c.b16 %v1676, %v1660
        %v2605 = vpack.c.b16 %v1677, %v1661
        %v2606 = vpack.c.b16 %v1678, %v1662
        %v2607 = vpack.c.b16 %v1679, %v1663
        %v2608 = vpack.c.b16 %v1680, %v1664
        %v2609 = vpack.c.b16 %v1681, %v1665
        %v2610 = vpack.c.b16 %v1698, %v1682
        %v2611 = vpack.c.b16 %v1699, %v1683
        %v2612 = vpack.c.b16 %v1700, %v1684
        %v2613 = vpack.c.b16 %v1701, %v1685
        %v2614 = vpack.c.b16 %v1702, %v1686
        %v2615 = vpack.c.b16 %v1703, %v1687
        %v2616 = vpack.c.b16 %v1704, %v1688
        %v2617 = vpack.c.b16 %v1705, %v1689
        %v2618 = vpack.c.b16 %v1706, %v1690
        %v2619 = vpack.c.b16 %v1707, %v1691
        %v2620 = vpack.c.b16 %v1708, %v1692
        %v2621 = vpack.c.b16 %v1709, %v1693
        %v2622 = vpack.c.b16 %v1710, %v1694
        %v2623 = vpack.c.b16 %v1711, %v1695
        %v2624 = vpack.c.b16 %v1712, %v1696
        %v2625 = vpack.c.b16 %v1713, %v1697
        %v2626 = vpack.c.b16 %v1730, %v1714
        %v2627 = vpack.c.b16 %v1731, %v1715
        %v2628 = vpack.c.b16 %v1732, %v1716
        %v2629 = vpack.c.b16 %v1733, %v1717
        %v2630 = vpack.c.b16 %v1734, %v1718
        %v2631 = vpack.c.b16 %v1735, %v1719
        %v2632 = vpack.c.b16 %v1736, %v1720
        %v2633 = vpack.c.b16 %v1737, %v1721
        %v2634 = vpack.c.b16 %v1738, %v1722
        %v2635 = vpack.c.b16 %v1739, %v1723
        %v2636 = vpack.c.b16 %v1740, %v1724
        %v2637 = vpack.c.b16 %v1741, %v1725
        %v2638 = vpack.c.b16 %v1742, %v1726
        %v2639 = vpack.c.b16 %v1743, %v1727
        %v2640 = vpack.c.b16 %v1744, %v1728
        %v2641 = vpack.c.b16 %v1745, %v1729
        %v2642 = vpack.c.b16 %v1762, %v1746
        %v2643 = vpack.c.b16 %v1763, %v1747
        %v2644 = vpack.c.b16 %v1764, %v1748
        %v2645 = vpack.c.b16 %v1765, %v1749
        %v2646 = vpack.c.b16 %v1766, %v1750
        %v2647 = vpack.c.b16 %v1767, %v1751
        %v2648 = vpack.c.b16 %v1768, %v1752
        %v2649 = vpack.c.b16 %v1769, %v1753
        %v2650 = vpack.c.b16 %v1770, %v1754
        %v2651 = vpack.c.b16 %v1771, %v1755
        %v2652 = vpack.c.b16 %v1772, %v1756
        %v2653 = vpack.c.b16 %v1773, %v1757
        %v2654 = vpack.c.b16 %v1774, %v1758
        %v2655 = vpack.c.b16 %v1775, %v1759
        %v2656 = vpack.c.b16 %v1776, %v1760
        %v2657 = vpack.c.b16 %v1777, %v1761
        %v2658 = vpack.c.b16 %v1794, %v1778
        %v2659 = vpack.c.b16 %v1795, %v1779
        %v2660 = vpack.c.b16 %v1796, %v1780
        %v2661 = vpack.c.b16 %v1797, %v1781
        %v2662 = vpack.c.b16 %v1798, %v1782
        %v2663 = vpack.c.b16 %v1799, %v1783
        %v2664 = vpack.c.b16 %v1800, %v1784
        %v2665 = vpack.c.b16 %v1801, %v1785
        %v2666 = vpack.c.b16 %v1802, %v1786
        %v2667 = vpack.c.b16 %v1803, %v1787
        %v2668 = vpack.c.b16 %v1804, %v1788
        %v2669 = vpack.c.b16 %v1805, %v1789
        %v2670 = vpack.c.b16 %v1806, %v1790
        %v2671 = vpack.c.b16 %v1807, %v1791
        %v2672 = vpack.c.b16 %v1808, %v1792
        %v2673 = vpack.c.b16 %v1809, %v1793
        %v2674 = vpack.c.b16 %v1826, %v1810
        %v2675 = vpack.c.b16 %v1827, %v1811
        %v2676 = vpack.c.b16 %v1828, %v1812
        %v2677 = vpack.c.b16 %v1829, %v1813
        %v2678 = vpack.c.b16 %v1830, %v1814
        %v2679 = vpack.c.b16 %v1831, %v1815
        %v2680 = vpack.c.b16 %v1832, %v1816
        %v2681 = vpack.c.b16 %v1833, %v1817
        %v2682 = vpack.c.b16 %v1834, %v1818
        %v2683 = vpack.c.b16 %v1835, %v1819
        %v2684 = vpack.c.b16 %v1836, %v1820
        %v2685 = vpack.c.b16 %v1837, %v1821
        %v2686 = vpack.c.b16 %v1838, %v1822
        %v2687 = vpack.c.b16 %v1839, %v1823
        %v2688 = vpack.c.b16 %v1840, %v1824
        %v2689 = vpack.c.b16 %v1841, %v1825
        %v2690 = vpack.c.b16 %v1858, %v1842
        %v2691 = vpack.c.b16 %v1859, %v1843
        %v2692 = vpack.c.b16 %v1860, %v1844
        %v2693 = vpack.c.b16 %v1861, %v1845
        %v2694 = vpack.c.b16 %v1862, %v1846
        %v2695 = vpack.c.b16 %v1863, %v1847
        %v2696 = vpack.c.b16 %v1864, %v1848
        %v2697 = vpack.c.b16 %v1865, %v1849
        %v2698 = vpack.c.b16 %v1866, %v1850
        %v2699 = vpack.c.b16 %v1867, %v1851
        %v2700 = vpack.c.b16 %v1868, %v1852
        %v2701 = vpack.c.b16 %v1869, %v1853
        %v2702 = vpack.c.b16 %v1870, %v1854
        %v2703 = vpack.c.b16 %v1871, %v1855
        %v2704 = vpack.c.b16 %v1872, %v1856
        %v2705 = vpack.c.b16 %v1873, %v1857
        %v2706 = vpack.c.b16 %v1890, %v1874
        %v2707 = vpack.c.b16 %v1891, %v1875
        %v2708 = vpack.c.b16 %v1892, %v1876
        %v2709 = vpack.c.b16 %v1893, %v1877
        %v2710 = vpack.c.b16 %v1894, %v1878
        %v2711 = vpack.c.b16 %v1895, %v1879
        %v2712 = vpack.c.b16 %v1896, %v1880
        %v2713 = vpack.c.b16 %v1897, %v1881
        %v2714 = vpack.c.b16 %v1898, %v1882
        %v2715 = vpack.c.b16 %v1899, %v1883
        %v2716 = vpack.c.b16 %v1900, %v1884
        %v2717 = vpack.c.b16 %v1901, %v1885
        %v2718 = vpack.c.b16 %v1902, %v1886
        %v2719 = vpack.c.b16 %v1903, %v1887
        %v2720 = vpack.c.b16 %v1904, %v1888
        %v2721 = vpack.c.b16 %v1905, %v1889
        %v2722 = vpack.c.b16 %v1922, %v1906
        %v2723 = vpack.c.b16 %v1923, %v1907
        %v2724 = vpack.c.b16 %v1924, %v1908
        %v2725 = vpack.c.b16 %v1925, %v1909
        %v2726 = vpack.c.b16 %v1926, %v1910
        %v2727 = vpack.c.b16 %v1927, %v1911
        %v2728 = vpack.c.b16 %v1928, %v1912
        %v2729 = vpack.c.b16 %v1929, %v1913
        %v2730 = vpack.c.b16 %v1930, %v1914
        %v2731 = vpack.c.b16 %v1931, %v1915
        %v2732 = vpack.c.b16 %v1932, %v1916
        %v2733 = vpack.c.b16 %v1933, %v1917
        %v2734 = vpack.c.b16 %v1934, %v1918
        %v2735 = vpack.c.b16 %v1935, %v1919
        %v2736 = vpack.c.b16 %v1936, %v1920
        %v2737 = vpack.c.b16 %v1937, %v1921
        %v2738 = vpack.c.b16 %v1954, %v1938
        %v2739 = vpack.c.b16 %v1955, %v1939
        %v2740 = vpack.c.b16 %v1956, %v1940
        %v2741 = vpack.c.b16 %v1957, %v1941
        %v2742 = vpack.c.b16 %v1958, %v1942
        %v2743 = vpack.c.b16 %v1959, %v1943
        %v2744 = vpack.c.b16 %v1960, %v1944
        %v2745 = vpack.c.b16 %v1961, %v1945
        %v2746 = vpack.c.b16 %v1962, %v1946
        %v2747 = vpack.c.b16 %v1963, %v1947
        %v2748 = vpack.c.b16 %v1964, %v1948
        %v2749 = vpack.c.b16 %v1965, %v1949
        %v2750 = vpack.c.b16 %v1966, %v1950
        %v2751 = vpack.c.b16 %v1967, %v1951
        %v2752 = vpack.c.b16 %v1968, %v1952
        %v2753 = vpack.c.b16 %v1969, %v1953
        %v2754 = vpack.c.b16 %v1986, %v1970
        %v2755 = vpack.c.b16 %v1987, %v1971
        %v2756 = vpack.c.b16 %v1988, %v1972
        %v2757 = vpack.c.b16 %v1989, %v1973
        %v2758 = vpack.c.b16 %v1990, %v1974
        %v2759 = vpack.c.b16 %v1991, %v1975
        %v2760 = vpack.c.b16 %v1992, %v1976
        %v2761 = vpack.c.b16 %v1993, %v1977
        %v2762 = vpack.c.b16 %v1994, %v1978
        %v2763 = vpack.c.b16 %v1995, %v1979
        %v2764 = vpack.c.b16 %v1996, %v1980
        %v2765 = vpack.c.b16 %v1997, %v1981
        %v2766 = vpack.c.b16 %v1998, %v1982
        %v2767 = vpack.c.b16 %v1999, %v1983
        %v2768 = vpack.c.b16 %v2000, %v1984
        %v2769 = vpack.c.b16 %v2001, %v1985
        %v2770 = vpack.c.b16 %v2018, %v2002
        %v2771 = vpack.c.b16 %v2019, %v2003
        %v2772 = vpack.c.b16 %v2020, %v2004
        %v2773 = vpack.c.b16 %v2021, %v2005
        %v2774 = vpack.c.b16 %v2022, %v2006
        %v2775 = vpack.c.b16 %v2023, %v2007
        %v2776 = vpack.c.b16 %v2024, %v2008
        %v2777 = vpack.c.b16 %v2025, %v2009
        %v2778 = vpack.c.b16 %v2026, %v2010
        %v2779 = vpack.c.b16 %v2027, %v2011
        %v2780 = vpack.c.b16 %v2028, %v2012
        %v2781 = vpack.c.b16 %v2029, %v2013
        %v2782 = vpack.c.b16 %v2030, %v2014
        %v2783 = vpack.c.b16 %v2031, %v2015
        %v2784 = vpack.c.b16 %v2032, %v2016
        %v2785 = vpack.c.b16 %v2033, %v2017
        %v2786 = vpack.c.b16 %v2050, %v2034
        %v2787 = vpack.c.b16 %v2051, %v2035
        %v2788 = vpack.c.b16 %v2052, %v2036
        %v2789 = vpack.c.b16 %v2053, %v2037
        %v2790 = vpack.c.b16 %v2054, %v2038
        %v2791 = vpack.c.b16 %v2055, %v2039
        %v2792 = vpack.c.b16 %v2056, %v2040
        %v2793 = vpack.c.b16 %v2057, %v2041
        %v2794 = vpack.c.b16 %v2058, %v2042
        %v2795 = vpack.c.b16 %v2059, %v2043
        %v2796 = vpack.c.b16 %v2060, %v2044
        %v2797 = vpack.c.b16 %v2061, %v2045
        %v2798 = vpack.c.b16 %v2062, %v2046
        %v2799 = vpack.c.b16 %v2063, %v2047
        %v2800 = vpack.c.b16 %v2064, %v2048
        %v2801 = vpack.c.b16 %v2065, %v2049
        %v2802 = vpack.c.b16 %v2082, %v2066
        %v2803 = vpack.c.b16 %v2083, %v2067
        %v2804 = vpack.c.b16 %v2084, %v2068
        %v2805 = vpack.c.b16 %v2085, %v2069
        %v2806 = vpack.c.b16 %v2086, %v2070
        %v2807 = vpack.c.b16 %v2087, %v2071
        %v2808 = vpack.c.b16 %v2088, %v2072
        %v2809 = vpack.c.b16 %v2089, %v2073
        %v2810 = vpack.c.b16 %v2090, %v2074
        %v2811 = vpack.c.b16 %v2091, %v2075
        %v2812 = vpack.c.b16 %v2092, %v2076
        %v2813 = vpack.c.b16 %v2093, %v2077
        %v2814 = vpack.c.b16 %v2094, %v2078
        %v2815 = vpack.c.b16 %v2095, %v2079
        %v2816 = vpack.c.b16 %v2096, %v2080
        %v2817 = vpack.c.b16 %v2097, %v2081
        %v2818 = vpack.c.b16 %v2114, %v2098
        %v2819 = vpack.c.b16 %v2115, %v2099
        %v2820 = vpack.c.b16 %v2116, %v2100
        %v2821 = vpack.c.b16 %v2117, %v2101
        %v2822 = vpack.c.b16 %v2118, %v2102
        %v2823 = vpack.c.b16 %v2119, %v2103
        %v2824 = vpack.c.b16 %v2120, %v2104
        %v2825 = vpack.c.b16 %v2121, %v2105
        %v2826 = vpack.c.b16 %v2122, %v2106
        %v2827 = vpack.c.b16 %v2123, %v2107
        %v2828 = vpack.c.b16 %v2124, %v2108
        %v2829 = vpack.c.b16 %v2125, %v2109
        %v2830 = vpack.c.b16 %v2126, %v2110
        %v2831 = vpack.c.b16 %v2127, %v2111
        %v2832 = vpack.c.b16 %v2128, %v2112
        %v2833 = vpack.c.b16 %v2129, %v2113
        %v2834 = vpack.c.b16 %v2146, %v2130
        %v2835 = vpack.c.b16 %v2147, %v2131
        %v2836 = vpack.c.b16 %v2148, %v2132
        %v2837 = vpack.c.b16 %v2149, %v2133
        %v2838 = vpack.c.b16 %v2150, %v2134
        %v2839 = vpack.c.b16 %v2151, %v2135
        %v2840 = vpack.c.b16 %v2152, %v2136
        %v2841 = vpack.c.b16 %v2153, %v2137
        %v2842 = vpack.c.b16 %v2154, %v2138
        %v2843 = vpack.c.b16 %v2155, %v2139
        %v2844 = vpack.c.b16 %v2156, %v2140
        %v2845 = vpack.c.b16 %v2157, %v2141
        %v2846 = vpack.c.b16 %v2158, %v2142
        %v2847 = vpack.c.b16 %v2159, %v2143
        %v2848 = vpack.c.b16 %v2160, %v2144
        %v2849 = vpack.c.b16 %v2161, %v2145
        %v2850 = vpack.c.b16 %v2178, %v2162
        %v2851 = vpack.c.b16 %v2179, %v2163
        %v2852 = vpack.c.b16 %v2180, %v2164
        %v2853 = vpack.c.b16 %v2181, %v2165
        %v2854 = vpack.c.b16 %v2182, %v2166
        %v2855 = vpack.c.b16 %v2183, %v2167
        %v2856 = vpack.c.b16 %v2184, %v2168
        %v2857 = vpack.c.b16 %v2185, %v2169
        %v2858 = vpack.c.b16 %v2186, %v2170
        %v2859 = vpack.c.b16 %v2187, %v2171
        %v2860 = vpack.c.b16 %v2188, %v2172
        %v2861 = vpack.c.b16 %v2189, %v2173
        %v2862 = vpack.c.b16 %v2190, %v2174
        %v2863 = vpack.c.b16 %v2191, %v2175
        %v2864 = vpack.c.b16 %v2192, %v2176
        %v2865 = vpack.c.b16 %v2193, %v2177
        %v2866 = vpack.c.b16 %v2210, %v2194
        %v2867 = vpack.c.b16 %v2211, %v2195
        %v2868 = vpack.c.b16 %v2212, %v2196
        %v2869 = vpack.c.b16 %v2213, %v2197
        %v2870 = vpack.c.b16 %v2214, %v2198
        %v2871 = vpack.c.b16 %v2215, %v2199
        %v2872 = vpack.c.b16 %v2216, %v2200
        %v2873 = vpack.c.b16 %v2217, %v2201
        %v2874 = vpack.c.b16 %v2218, %v2202
        %v2875 = vpack.c.b16 %v2219, %v2203
        %v2876 = vpack.c.b16 %v2220, %v2204
        %v2877 = vpack.c.b16 %v2221, %v2205
        %v2878 = vpack.c.b16 %v2222, %v2206
        %v2879 = vpack.c.b16 %v2223, %v2207
        %v2880 = vpack.c.b16 %v2224, %v2208
        %v2881 = vpack.c.b16 %v2225, %v2209
        %v2882 = vpack.c.b16 %v2242, %v2226
        %v2883 = vpack.c.b16 %v2243, %v2227
        %v2884 = vpack.c.b16 %v2244, %v2228
        %v2885 = vpack.c.b16 %v2245, %v2229
        %v2886 = vpack.c.b16 %v2246, %v2230
        %v2887 = vpack.c.b16 %v2247, %v2231
        %v2888 = vpack.c.b16 %v2248, %v2232
        %v2889 = vpack.c.b16 %v2249, %v2233
        %v2890 = vpack.c.b16 %v2250, %v2234
        %v2891 = vpack.c.b16 %v2251, %v2235
        %v2892 = vpack.c.b16 %v2252, %v2236
        %v2893 = vpack.c.b16 %v2253, %v2237
        %v2894 = vpack.c.b16 %v2254, %v2238
        %v2895 = vpack.c.b16 %v2255, %v2239
        %v2896 = vpack.c.b16 %v2256, %v2240
        %v2897 = vpack.c.b16 %v2257, %v2241
        %v2898 = vpack.c.b16 %v2274, %v2258
        %v2899 = vpack.c.b16 %v2275, %v2259
        %v2900 = vpack.c.b16 %v2276, %v2260
        %v2901 = vpack.c.b16 %v2277, %v2261
        %v2902 = vpack.c.b16 %v2278, %v2262
        %v2903 = vpack.c.b16 %v2279, %v2263
        %v2904 = vpack.c.b16 %v2280, %v2264
        %v2905 = vpack.c.b16 %v2281, %v2265
        %v2906 = vpack.c.b16 %v2282, %v2266
        %v2907 = vpack.c.b16 %v2283, %v2267
        %v2908 = vpack.c.b16 %v2284, %v2268
        %v2909 = vpack.c.b16 %v2285, %v2269
        %v2910 = vpack.c.b16 %v2286, %v2270
        %v2911 = vpack.c.b16 %v2287, %v2271
        %v2912 = vpack.c.b16 %v2288, %v2272
        %v2913 = vpack.c.b16 %v2289, %v2273
        %v2914 = vpack.c.b16 %v2306, %v2290
        %v2915 = vpack.c.b16 %v2307, %v2291
        %v2916 = vpack.c.b16 %v2308, %v2292
        %v2917 = vpack.c.b16 %v2309, %v2293
        %v2918 = vpack.c.b16 %v2310, %v2294
        %v2919 = vpack.c.b16 %v2311, %v2295
        %v2920 = vpack.c.b16 %v2312, %v2296
        %v2921 = vpack.c.b16 %v2313, %v2297
        %v2922 = vpack.c.b16 %v2314, %v2298
        %v2923 = vpack.c.b16 %v2315, %v2299
        %v2924 = vpack.c.b16 %v2316, %v2300
        %v2925 = vpack.c.b16 %v2317, %v2301
        %v2926 = vpack.c.b16 %v2318, %v2302
        %v2927 = vpack.c.b16 %v2319, %v2303
        %v2928 = vpack.c.b16 %v2320, %v2304
        %v2929 = vpack.c.b16 %v2321, %v2305
        %v2930 = vpack.c.b16 %v2338, %v2322
        %v2931 = vpack.c.b16 %v2339, %v2323
        %v2932 = vpack.c.b16 %v2340, %v2324
        %v2933 = vpack.c.b16 %v2341, %v2325
        %v2934 = vpack.c.b16 %v2342, %v2326
        %v2935 = vpack.c.b16 %v2343, %v2327
        %v2936 = vpack.c.b16 %v2344, %v2328
        %v2937 = vpack.c.b16 %v2345, %v2329
        %v2938 = vpack.c.b16 %v2346, %v2330
        %v2939 = vpack.c.b16 %v2347, %v2331
        %v2940 = vpack.c.b16 %v2348, %v2332
        %v2941 = vpack.c.b16 %v2349, %v2333
        %v2942 = vpack.c.b16 %v2350, %v2334
        %v2943 = vpack.c.b16 %v2351, %v2335
        %v2944 = vpack.c.b16 %v2352, %v2336
        %v2945 = vpack.c.b16 %v2353, %v2337
        %v2946 = vpack.c.b16 %v2370, %v2354
        %v2947 = vpack.c.b16 %v2371, %v2355
        %v2948 = vpack.c.b16 %v2372, %v2356
        %v2949 = vpack.c.b16 %v2373, %v2357
        %v2950 = vpack.c.b16 %v2374, %v2358
        %v2951 = vpack.c.b16 %v2375, %v2359
        %v2952 = vpack.c.b16 %v2376, %v2360
        %v2953 = vpack.c.b16 %v2377, %v2361
        %v2954 = vpack.c.b16 %v2378, %v2362
        %v2955 = vpack.c.b16 %v2379, %v2363
        %v2956 = vpack.c.b16 %v2380, %v2364
        %v2957 = vpack.c.b16 %v2381, %v2365
        %v2958 = vpack.c.b16 %v2382, %v2366
        %v2959 = vpack.c.b16 %v2383, %v2367
        %v2960 = vpack.c.b16 %v2384, %v2368
        %v2961 = vpack.c.b16 %v2385, %v2369
        %v2962 = vpack.c.b16 %v2402, %v2386
        %v2963 = vpack.c.b16 %v2403, %v2387
        %v2964 = vpack.c.b16 %v2404, %v2388
        %v2965 = vpack.c.b16 %v2405, %v2389
        %v2966 = vpack.c.b16 %v2406, %v2390
        %v2967 = vpack.c.b16 %v2407, %v2391
        %v2968 = vpack.c.b16 %v2408, %v2392
        %v2969 = vpack.c.b16 %v2409, %v2393
        %v2970 = vpack.c.b16 %v2410, %v2394
        %v2971 = vpack.c.b16 %v2411, %v2395
        %v2972 = vpack.c.b16 %v2412, %v2396
        %v2973 = vpack.c.b16 %v2413, %v2397
        %v2974 = vpack.c.b16 %v2414, %v2398
        %v2975 = vpack.c.b16 %v2415, %v2399
        %v2976 = vpack.c.b16 %v2416, %v2400
        %v2977 = vpack.c.b16 %v2417, %v2401
        %v2978 = vpack.c.b16 %v2434, %v2418
        %v2979 = vpack.c.b16 %v2435, %v2419
        %v2980 = vpack.c.b16 %v2436, %v2420
        %v2981 = vpack.c.b16 %v2437, %v2421
        %v2982 = vpack.c.b16 %v2438, %v2422
        %v2983 = vpack.c.b16 %v2439, %v2423
        %v2984 = vpack.c.b16 %v2440, %v2424
        %v2985 = vpack.c.b16 %v2441, %v2425
        %v2986 = vpack.c.b16 %v2442, %v2426
        %v2987 = vpack.c.b16 %v2443, %v2427
        %v2988 = vpack.c.b16 %v2444, %v2428
        %v2989 = vpack.c.b16 %v2445, %v2429
        %v2990 = vpack.c.b16 %v2446, %v2430
        %v2991 = vpack.c.b16 %v2447, %v2431
        %v2992 = vpack.c.b16 %v2448, %v2432
        %v2993 = vpack.c.b16 %v2449, %v2433
        %v2994 = vpack.c.b16 %v2466, %v2450
        %v2995 = vpack.c.b16 %v2467, %v2451
        %v2996 = vpack.c.b16 %v2468, %v2452
        %v2997 = vpack.c.b16 %v2469, %v2453
        %v2998 = vpack.c.b16 %v2470, %v2454
        %v2999 = vpack.c.b16 %v2471, %v2455
        %v3000 = vpack.c.b16 %v2472, %v2456
        %v3001 = vpack.c.b16 %v2473, %v2457
        %v3002 = vpack.c.b16 %v2474, %v2458
        %v3003 = vpack.c.b16 %v2475, %v2459
        %v3004 = vpack.c.b16 %v2476, %v2460
        %v3005 = vpack.c.b16 %v2477, %v2461
        %v3006 = vpack.c.b16 %v2478, %v2462
        %v3007 = vpack.c.b16 %v2479, %v2463
        %v3008 = vpack.c.b16 %v2480, %v2464
        %v3009 = vpack.c.b16 %v2481, %v2465
        %v3010 = vpack.c.b16 %v2498, %v2482
        %v3011 = vpack.c.b16 %v2499, %v2483
        %v3012 = vpack.c.b16 %v2500, %v2484
        %v3013 = vpack.c.b16 %v2501, %v2485
        %v3014 = vpack.c.b16 %v2502, %v2486
        %v3015 = vpack.c.b16 %v2503, %v2487
        %v3016 = vpack.c.b16 %v2504, %v2488
        %v3017 = vpack.c.b16 %v2505, %v2489
        %v3018 = vpack.c.b16 %v2506, %v2490
        %v3019 = vpack.c.b16 %v2507, %v2491
        %v3020 = vpack.c.b16 %v2508, %v2492
        %v3021 = vpack.c.b16 %v2509, %v2493
        %v3022 = vpack.c.b16 %v2510, %v2494
        %v3023 = vpack.c.b16 %v2511, %v2495
        %v3024 = vpack.c.b16 %v2512, %v2496
        %v3025 = vpack.c.b16 %v2513, %v2497
        %3538 = vmatprep.subr.bf16.mxu0 %v2627
        %3539 = vmatpush1.bf16.msra.mxu0 %v2626
        %3540 = vmatprep.subr.bf16.mxu0 %v2611
        %3541 = vmatpush1.bf16.msra.mxu0 %v2610
        %3542 = vmatprep.subr.bf16.mxu0 %v2595
        %3543 = vmatpush1.bf16.msra.mxu0 %v2594
        %3544 = vmatprep.subr.bf16.mxu0 %v2579
        %3545 = vmatpush1.bf16.msra.mxu0 %v2578
        %3546 = vmatprep.subr.bf16.mxu0 %v2563
        %3547 = vmatpush1.bf16.msra.mxu0 %v2562
        %3548 = vmatprep.subr.bf16.mxu0 %v2547
        %3549 = vmatpush1.bf16.msra.mxu0 %v2546
        %3550 = vmatprep.subr.bf16.mxu0 %v2531
        %3551 = vmatpush1.bf16.msra.mxu0 %v2530
        %3552 = vmatprep.subr.bf16.mxu0 %v2515
        %3553 = vmatpush1.bf16.msra.mxu0 %v2514
        %3554 = vmatprep.subr.bf16.mxu0 %v2755
        %3555 = vmatpush2.bf16.msra.mxu0 %v2754
        %3556 = vmatprep.subr.bf16.mxu0 %v2739
        %3557 = vmatpush2.bf16.msra.mxu0 %v2738
        %3558 = vmatprep.subr.bf16.mxu0 %v2723
        %3559 = vmatpush2.bf16.msra.mxu0 %v2722
        %3560 = vmatprep.subr.bf16.mxu0 %v2707
        %3561 = vmatpush2.bf16.msra.mxu0 %v2706
        %3562 = vmatprep.subr.bf16.mxu0 %v2691
        %3563 = vmatpush2.bf16.msra.mxu0 %v2690
        %3564 = vmatprep.subr.bf16.mxu0 %v2675
        %3565 = vmatpush2.bf16.msra.mxu0 %v2674
        %3566 = vmatprep.subr.bf16.mxu0 %v2659
        %3567 = vmatpush2.bf16.msra.mxu0 %v2658
        %3568 = vmatprep.subr.bf16.mxu0 %v2643
        %3569 = vmatpush2.bf16.msra.mxu0 %v2642
        %3570 = vmatprep.mubr.bf16.mxu0 %v379
        %3571 = vmatmul.mubr.bf16.gmra.mxu0 %v378
        %v3572 = vpop.f32.mrf.mxu0
        %v3573 = vadd.f32 %v901, %v3572
        %v3574 = vpop.f32.mrf.mxu0
        %v3575 = vadd.f32 %v905, %v3574
        %v3576 = vpop.f32.mrf.mxu0
        %v3577 = vpop.f32.mrf.mxu0
        %3578 = vdwg.mxu0
        %3579 = vmatprep.subr.bf16.mxu0 %v2883
        %3580 = vmatpush1.bf16.msra.mxu0 %v2882
        %3581 = vmatprep.subr.bf16.mxu0 %v2867
        %3582 = vmatpush1.bf16.msra.mxu0 %v2866
        %3583 = vmatprep.subr.bf16.mxu0 %v2851
        %3584 = vmatpush1.bf16.msra.mxu0 %v2850
        %3585 = vmatprep.subr.bf16.mxu0 %v2835
        %3586 = vmatpush1.bf16.msra.mxu0 %v2834
        %3587 = vmatprep.subr.bf16.mxu0 %v2819
        %3588 = vmatpush1.bf16.msra.mxu0 %v2818
        %3589 = vmatprep.subr.bf16.mxu0 %v2803
        %3590 = vmatpush1.bf16.msra.mxu0 %v2802
        %3591 = vmatprep.subr.bf16.mxu0 %v2787
        %3592 = vmatpush1.bf16.msra.mxu0 %v2786
        %3593 = vmatprep.subr.bf16.mxu0 %v2771
        %3594 = vmatpush1.bf16.msra.mxu0 %v2770
        %3595 = vmatprep.subr.bf16.mxu0 %v3011
        %3596 = vmatpush2.bf16.msra.mxu0 %v3010
        %3597 = vmatprep.subr.bf16.mxu0 %v2995
        %3598 = vmatpush2.bf16.msra.mxu0 %v2994
        %3599 = vmatprep.subr.bf16.mxu0 %v2979
        %3600 = vmatpush2.bf16.msra.mxu0 %v2978
        %3601 = vmatprep.subr.bf16.mxu0 %v2963
        %3602 = vmatpush2.bf16.msra.mxu0 %v2962
        %3603 = vmatprep.subr.bf16.mxu0 %v2947
        %3604 = vmatpush2.bf16.msra.mxu0 %v2946
        %3605 = vmatprep.subr.bf16.mxu0 %v2931
        %3606 = vmatpush2.bf16.msra.mxu0 %v2930
        %3607 = vmatprep.subr.bf16.mxu0 %v2915
        %3608 = vmatpush2.bf16.msra.mxu0 %v2914
        %3609 = vmatprep.subr.bf16.mxu0 %v2899
        %3610 = vmatpush2.bf16.msra.mxu0 %v2898
        %3611 = vmatprep.mubr.bf16.mxu0 %v381
        %3612 = vmatmul.mubr.bf16.gmra.mxu0 %v380
        %v3613 = vpop.f32.mrf.mxu0
        %v3614 = vadd.f32 %v3573, %v3613
        %v3615 = vpop.f32.mrf.mxu0
        %v3616 = vadd.f32 %v3575, %v3615
        %v3617 = vpop.f32.mrf.mxu0
        %v3618 = vpop.f32.mrf.mxu0
        %3619 = vdwg.mxu0
        %3620 = vmatprep.subr.bf16.mxu0 %v2629
        %3621 = vmatpush1.bf16.msra.mxu0 %v2628
        %3622 = vmatprep.subr.bf16.mxu0 %v2613
        %3623 = vmatpush1.bf16.msra.mxu0 %v2612
        %3624 = vmatprep.subr.bf16.mxu0 %v2597
        %3625 = vmatpush1.bf16.msra.mxu0 %v2596
        %3626 = vmatprep.subr.bf16.mxu0 %v2581
        %3627 = vmatpush1.bf16.msra.mxu0 %v2580
        %3628 = vmatprep.subr.bf16.mxu0 %v2565
        %3629 = vmatpush1.bf16.msra.mxu0 %v2564
        %3630 = vmatprep.subr.bf16.mxu0 %v2549
        %3631 = vmatpush1.bf16.msra.mxu0 %v2548
        %3632 = vmatprep.subr.bf16.mxu0 %v2533
        %3633 = vmatpush1.bf16.msra.mxu0 %v2532
        %3634 = vmatprep.subr.bf16.mxu0 %v2517
        %3635 = vmatpush1.bf16.msra.mxu0 %v2516
        %3636 = vmatprep.subr.bf16.mxu0 %v2757
        %3637 = vmatpush2.bf16.msra.mxu0 %v2756
        %3638 = vmatprep.subr.bf16.mxu0 %v2741
        %3639 = vmatpush2.bf16.msra.mxu0 %v2740
        %3640 = vmatprep.subr.bf16.mxu0 %v2725
        %3641 = vmatpush2.bf16.msra.mxu0 %v2724
        %3642 = vmatprep.subr.bf16.mxu0 %v2709
        %3643 = vmatpush2.bf16.msra.mxu0 %v2708
        %3644 = vmatprep.subr.bf16.mxu0 %v2693
        %3645 = vmatpush2.bf16.msra.mxu0 %v2692
        %3646 = vmatprep.subr.bf16.mxu0 %v2677
        %3647 = vmatpush2.bf16.msra.mxu0 %v2676
        %3648 = vmatprep.subr.bf16.mxu0 %v2661
        %3649 = vmatpush2.bf16.msra.mxu0 %v2660
        %3650 = vmatprep.subr.bf16.mxu0 %v2645
        %3651 = vmatpush2.bf16.msra.mxu0 %v2644
        %3652 = vmatprep.mubr.bf16.mxu0 %v379
        %3653 = vmatmul.mubr.bf16.gmra.mxu0 %v378
        %v3654 = vpop.f32.mrf.mxu0
        %v3655 = vadd.f32 %v909, %v3654
        %v3656 = vpop.f32.mrf.mxu0
        %v3657 = vadd.f32 %v913, %v3656
        %v3658 = vpop.f32.mrf.mxu0
        %v3659 = vpop.f32.mrf.mxu0
        %3660 = vdwg.mxu0
        %3661 = vmatprep.subr.bf16.mxu0 %v2885
        %3662 = vmatpush1.bf16.msra.mxu0 %v2884
        %3663 = vmatprep.subr.bf16.mxu0 %v2869
        %3664 = vmatpush1.bf16.msra.mxu0 %v2868
        %3665 = vmatprep.subr.bf16.mxu0 %v2853
        %3666 = vmatpush1.bf16.msra.mxu0 %v2852
        %3667 = vmatprep.subr.bf16.mxu0 %v2837
        %3668 = vmatpush1.bf16.msra.mxu0 %v2836
        %3669 = vmatprep.subr.bf16.mxu0 %v2821
        %3670 = vmatpush1.bf16.msra.mxu0 %v2820
        %3671 = vmatprep.subr.bf16.mxu0 %v2805
        %3672 = vmatpush1.bf16.msra.mxu0 %v2804
        %3673 = vmatprep.subr.bf16.mxu0 %v2789
        %3674 = vmatpush1.bf16.msra.mxu0 %v2788
        %3675 = vmatprep.subr.bf16.mxu0 %v2773
        %3676 = vmatpush1.bf16.msra.mxu0 %v2772
        %3677 = vmatprep.subr.bf16.mxu0 %v3013
        %3678 = vmatpush2.bf16.msra.mxu0 %v3012
        %3679 = vmatprep.subr.bf16.mxu0 %v2997
        %3680 = vmatpush2.bf16.msra.mxu0 %v2996
        %3681 = vmatprep.subr.bf16.mxu0 %v2981
        %3682 = vmatpush2.bf16.msra.mxu0 %v2980
        %3683 = vmatprep.subr.bf16.mxu0 %v2965
        %3684 = vmatpush2.bf16.msra.mxu0 %v2964
        %3685 = vmatprep.subr.bf16.mxu0 %v2949
        %3686 = vmatpush2.bf16.msra.mxu0 %v2948
        %3687 = vmatprep.subr.bf16.mxu0 %v2933
        %3688 = vmatpush2.bf16.msra.mxu0 %v2932
        %3689 = vmatprep.subr.bf16.mxu0 %v2917
        %3690 = vmatpush2.bf16.msra.mxu0 %v2916
        %3691 = vmatprep.subr.bf16.mxu0 %v2901
        %3692 = vmatpush2.bf16.msra.mxu0 %v2900
        %3693 = vmatprep.mubr.bf16.mxu0 %v381
        %3694 = vmatmul.mubr.bf16.gmra.mxu0 %v380
        %v3695 = vpop.f32.mrf.mxu0
        %v3696 = vadd.f32 %v3655, %v3695
        %v3697 = vpop.f32.mrf.mxu0
        %v3698 = vadd.f32 %v3657, %v3697
        %v3699 = vpop.f32.mrf.mxu0
        %v3700 = vpop.f32.mrf.mxu0
        %3701 = vdwg.mxu0
        %3702 = vmatprep.subr.bf16.mxu0 %v2631
        %3703 = vmatpush1.bf16.msra.mxu0 %v2630
        %3704 = vmatprep.subr.bf16.mxu0 %v2615
        %3705 = vmatpush1.bf16.msra.mxu0 %v2614
        %3706 = vmatprep.subr.bf16.mxu0 %v2599
        %3707 = vmatpush1.bf16.msra.mxu0 %v2598
        %3708 = vmatprep.subr.bf16.mxu0 %v2583
        %3709 = vmatpush1.bf16.msra.mxu0 %v2582
        %3710 = vmatprep.subr.bf16.mxu0 %v2567
        %3711 = vmatpush1.bf16.msra.mxu0 %v2566
        %3712 = vmatprep.subr.bf16.mxu0 %v2551
        %3713 = vmatpush1.bf16.msra.mxu0 %v2550
        %3714 = vmatprep.subr.bf16.mxu0 %v2535
        %3715 = vmatpush1.bf16.msra.mxu0 %v2534
        %3716 = vmatprep.subr.bf16.mxu0 %v2519
        %3717 = vmatpush1.bf16.msra.mxu0 %v2518
        %3718 = vmatprep.subr.bf16.mxu0 %v2759
        %3719 = vmatpush2.bf16.msra.mxu0 %v2758
        %3720 = vmatprep.subr.bf16.mxu0 %v2743
        %3721 = vmatpush2.bf16.msra.mxu0 %v2742
        %3722 = vmatprep.subr.bf16.mxu0 %v2727
        %3723 = vmatpush2.bf16.msra.mxu0 %v2726
        %3724 = vmatprep.subr.bf16.mxu0 %v2711
        %3725 = vmatpush2.bf16.msra.mxu0 %v2710
        %3726 = vmatprep.subr.bf16.mxu0 %v2695
        %3727 = vmatpush2.bf16.msra.mxu0 %v2694
        %3728 = vmatprep.subr.bf16.mxu0 %v2679
        %3729 = vmatpush2.bf16.msra.mxu0 %v2678
        %3730 = vmatprep.subr.bf16.mxu0 %v2663
        %3731 = vmatpush2.bf16.msra.mxu0 %v2662
        %3732 = vmatprep.subr.bf16.mxu0 %v2647
        %3733 = vmatpush2.bf16.msra.mxu0 %v2646
        %3734 = vmatprep.mubr.bf16.mxu0 %v379
        %3735 = vmatmul.mubr.bf16.gmra.mxu0 %v378
        %v3736 = vpop.f32.mrf.mxu0
        %v3737 = vadd.f32 %v917, %v3736
        %v3738 = vpop.f32.mrf.mxu0
        %v3739 = vadd.f32 %v921, %v3738
        %v3740 = vpop.f32.mrf.mxu0
        %v3741 = vpop.f32.mrf.mxu0
        %3742 = vdwg.mxu0
        %3743 = vmatprep.subr.bf16.mxu0 %v2887
        %3744 = vmatpush1.bf16.msra.mxu0 %v2886
        %3745 = vmatprep.subr.bf16.mxu0 %v2871
        %3746 = vmatpush1.bf16.msra.mxu0 %v2870
        %3747 = vmatprep.subr.bf16.mxu0 %v2855
        %3748 = vmatpush1.bf16.msra.mxu0 %v2854
        %3749 = vmatprep.subr.bf16.mxu0 %v2839
        %3750 = vmatpush1.bf16.msra.mxu0 %v2838
        %3751 = vmatprep.subr.bf16.mxu0 %v2823
        %3752 = vmatpush1.bf16.msra.mxu0 %v2822
        %3753 = vmatprep.subr.bf16.mxu0 %v2807
        %3754 = vmatpush1.bf16.msra.mxu0 %v2806
        %3755 = vmatprep.subr.bf16.mxu0 %v2791
        %3756 = vmatpush1.bf16.msra.mxu0 %v2790
        %3757 = vmatprep.subr.bf16.mxu0 %v2775
        %3758 = vmatpush1.bf16.msra.mxu0 %v2774
        %3759 = vmatprep.subr.bf16.mxu0 %v3015
        %3760 = vmatpush2.bf16.msra.mxu0 %v3014
        %3761 = vmatprep.subr.bf16.mxu0 %v2999
        %3762 = vmatpush2.bf16.msra.mxu0 %v2998
        %3763 = vmatprep.subr.bf16.mxu0 %v2983
        %3764 = vmatpush2.bf16.msra.mxu0 %v2982
        %3765 = vmatprep.subr.bf16.mxu0 %v2967
        %3766 = vmatpush2.bf16.msra.mxu0 %v2966
        %3767 = vmatprep.subr.bf16.mxu0 %v2951
        %3768 = vmatpush2.bf16.msra.mxu0 %v2950
        %3769 = vmatprep.subr.bf16.mxu0 %v2935
        %3770 = vmatpush2.bf16.msra.mxu0 %v2934
        %3771 = vmatprep.subr.bf16.mxu0 %v2919
        %3772 = vmatpush2.bf16.msra.mxu0 %v2918
        %3773 = vmatprep.subr.bf16.mxu0 %v2903
        %3774 = vmatpush2.bf16.msra.mxu0 %v2902
        %3775 = vmatprep.mubr.bf16.mxu0 %v381
        %3776 = vmatmul.mubr.bf16.gmra.mxu0 %v380
        %v3777 = vpop.f32.mrf.mxu0
        %v3778 = vadd.f32 %v3737, %v3777
        %v3779 = vpop.f32.mrf.mxu0
        %v3780 = vadd.f32 %v3739, %v3779
        %v3781 = vpop.f32.mrf.mxu0
        %v3782 = vpop.f32.mrf.mxu0
        %3783 = vdwg.mxu0
        %3784 = vmatprep.subr.bf16.mxu0 %v2633
        %3785 = vmatpush1.bf16.msra.mxu0 %v2632
        %3786 = vmatprep.subr.bf16.mxu0 %v2617
        %3787 = vmatpush1.bf16.msra.mxu0 %v2616
        %3788 = vmatprep.subr.bf16.mxu0 %v2601
        %3789 = vmatpush1.bf16.msra.mxu0 %v2600
        %3790 = vmatprep.subr.bf16.mxu0 %v2585
        %3791 = vmatpush1.bf16.msra.mxu0 %v2584
        %3792 = vmatprep.subr.bf16.mxu0 %v2569
        %3793 = vmatpush1.bf16.msra.mxu0 %v2568
        %3794 = vmatprep.subr.bf16.mxu0 %v2553
        %3795 = vmatpush1.bf16.msra.mxu0 %v2552
        %3796 = vmatprep.subr.bf16.mxu0 %v2537
        %3797 = vmatpush1.bf16.msra.mxu0 %v2536
        %3798 = vmatprep.subr.bf16.mxu0 %v2521
        %3799 = vmatpush1.bf16.msra.mxu0 %v2520
        %3800 = vmatprep.subr.bf16.mxu0 %v2761
        %3801 = vmatpush2.bf16.msra.mxu0 %v2760
        %3802 = vmatprep.subr.bf16.mxu0 %v2745
        %3803 = vmatpush2.bf16.msra.mxu0 %v2744
        %3804 = vmatprep.subr.bf16.mxu0 %v2729
        %3805 = vmatpush2.bf16.msra.mxu0 %v2728
        %3806 = vmatprep.subr.bf16.mxu0 %v2713
        %3807 = vmatpush2.bf16.msra.mxu0 %v2712
        %3808 = vmatprep.subr.bf16.mxu0 %v2697
        %3809 = vmatpush2.bf16.msra.mxu0 %v2696
        %3810 = vmatprep.subr.bf16.mxu0 %v2681
        %3811 = vmatpush2.bf16.msra.mxu0 %v2680
        %3812 = vmatprep.subr.bf16.mxu0 %v2665
        %3813 = vmatpush2.bf16.msra.mxu0 %v2664
        %3814 = vmatprep.subr.bf16.mxu0 %v2649
        %3815 = vmatpush2.bf16.msra.mxu0 %v2648
        %3816 = vmatprep.mubr.bf16.mxu0 %v379
        %3817 = vmatmul.mubr.bf16.gmra.mxu0 %v378
        %v3818 = vpop.f32.mrf.mxu0
        %v3819 = vadd.f32 %v925, %v3818
        %v3820 = vpop.f32.mrf.mxu0
        %v3821 = vadd.f32 %v929, %v3820
        %v3822 = vpop.f32.mrf.mxu0
        %v3823 = vpop.f32.mrf.mxu0
        %3824 = vdwg.mxu0
        %3825 = vmatprep.subr.bf16.mxu0 %v2889
        %3826 = vmatpush1.bf16.msra.mxu0 %v2888
        %3827 = vmatprep.subr.bf16.mxu0 %v2873
        %3828 = vmatpush1.bf16.msra.mxu0 %v2872
        %3829 = vmatprep.subr.bf16.mxu0 %v2857
        %3830 = vmatpush1.bf16.msra.mxu0 %v2856
        %3831 = vmatprep.subr.bf16.mxu0 %v2841
        %3832 = vmatpush1.bf16.msra.mxu0 %v2840
        %3833 = vmatprep.subr.bf16.mxu0 %v2825
        %3834 = vmatpush1.bf16.msra.mxu0 %v2824
        %3835 = vmatprep.subr.bf16.mxu0 %v2809
        %3836 = vmatpush1.bf16.msra.mxu0 %v2808
        %3837 = vmatprep.subr.bf16.mxu0 %v2793
        %3838 = vmatpush1.bf16.msra.mxu0 %v2792
        %3839 = vmatprep.subr.bf16.mxu0 %v2777
        %3840 = vmatpush1.bf16.msra.mxu0 %v2776
        %3841 = vmatprep.subr.bf16.mxu0 %v3017
        %3842 = vmatpush2.bf16.msra.mxu0 %v3016
        %3843 = vmatprep.subr.bf16.mxu0 %v3001
        %3844 = vmatpush2.bf16.msra.mxu0 %v3000
        %3845 = vmatprep.subr.bf16.mxu0 %v2985
        %3846 = vmatpush2.bf16.msra.mxu0 %v2984
        %3847 = vmatprep.subr.bf16.mxu0 %v2969
        %3848 = vmatpush2.bf16.msra.mxu0 %v2968
        %3849 = vmatprep.subr.bf16.mxu0 %v2953
        %3850 = vmatpush2.bf16.msra.mxu0 %v2952
        %3851 = vmatprep.subr.bf16.mxu0 %v2937
        %3852 = vmatpush2.bf16.msra.mxu0 %v2936
        %3853 = vmatprep.subr.bf16.mxu0 %v2921
        %3854 = vmatpush2.bf16.msra.mxu0 %v2920
        %3855 = vmatprep.subr.bf16.mxu0 %v2905
        %3856 = vmatpush2.bf16.msra.mxu0 %v2904
        %3857 = vmatprep.mubr.bf16.mxu0 %v381
        %3858 = vmatmul.mubr.bf16.gmra.mxu0 %v380
        %v3859 = vpop.f32.mrf.mxu0
        %v3860 = vadd.f32 %v3819, %v3859
        %v3861 = vpop.f32.mrf.mxu0
        %v3862 = vadd.f32 %v3821, %v3861
        %v3863 = vpop.f32.mrf.mxu0
        %v3864 = vpop.f32.mrf.mxu0
        %3865 = vdwg.mxu0
        %3866 = vmatprep.subr.bf16.mxu0 %v2635
        %3867 = vmatpush1.bf16.msra.mxu0 %v2634
        %3868 = vmatprep.subr.bf16.mxu0 %v2619
        %3869 = vmatpush1.bf16.msra.mxu0 %v2618
        %3870 = vmatprep.subr.bf16.mxu0 %v2603
        %3871 = vmatpush1.bf16.msra.mxu0 %v2602
        %3872 = vmatprep.subr.bf16.mxu0 %v2587
        %3873 = vmatpush1.bf16.msra.mxu0 %v2586
        %3874 = vmatprep.subr.bf16.mxu0 %v2571
        %3875 = vmatpush1.bf16.msra.mxu0 %v2570
        %3876 = vmatprep.subr.bf16.mxu0 %v2555
        %3877 = vmatpush1.bf16.msra.mxu0 %v2554
        %3878 = vmatprep.subr.bf16.mxu0 %v2539
        %3879 = vmatpush1.bf16.msra.mxu0 %v2538
        %3880 = vmatprep.subr.bf16.mxu0 %v2523
        %3881 = vmatpush1.bf16.msra.mxu0 %v2522
        %3882 = vmatprep.subr.bf16.mxu0 %v2763
        %3883 = vmatpush2.bf16.msra.mxu0 %v2762
        %3884 = vmatprep.subr.bf16.mxu0 %v2747
        %3885 = vmatpush2.bf16.msra.mxu0 %v2746
        %3886 = vmatprep.subr.bf16.mxu0 %v2731
        %3887 = vmatpush2.bf16.msra.mxu0 %v2730
        %3888 = vmatprep.subr.bf16.mxu0 %v2715
        %3889 = vmatpush2.bf16.msra.mxu0 %v2714
        %3890 = vmatprep.subr.bf16.mxu0 %v2699
        %3891 = vmatpush2.bf16.msra.mxu0 %v2698
        %3892 = vmatprep.subr.bf16.mxu0 %v2683
        %3893 = vmatpush2.bf16.msra.mxu0 %v2682
        %3894 = vmatprep.subr.bf16.mxu0 %v2667
        %3895 = vmatpush2.bf16.msra.mxu0 %v2666
        %3896 = vmatprep.subr.bf16.mxu0 %v2651
        %3897 = vmatpush2.bf16.msra.mxu0 %v2650
        %3898 = vmatprep.mubr.bf16.mxu0 %v379
        %3899 = vmatmul.mubr.bf16.gmra.mxu0 %v378
        %v3900 = vpop.f32.mrf.mxu0
        %v3901 = vadd.f32 %v933, %v3900
        %v3902 = vpop.f32.mrf.mxu0
        %v3903 = vadd.f32 %v937, %v3902
        %v3904 = vpop.f32.mrf.mxu0
        %v3905 = vpop.f32.mrf.mxu0
        %3906 = vdwg.mxu0
        %3907 = vmatprep.subr.bf16.mxu0 %v2891
        %3908 = vmatpush1.bf16.msra.mxu0 %v2890
        %3909 = vmatprep.subr.bf16.mxu0 %v2875
        %3910 = vmatpush1.bf16.msra.mxu0 %v2874
        %3911 = vmatprep.subr.bf16.mxu0 %v2859
        %3912 = vmatpush1.bf16.msra.mxu0 %v2858
        %3913 = vmatprep.subr.bf16.mxu0 %v2843
        %3914 = vmatpush1.bf16.msra.mxu0 %v2842
        %3915 = vmatprep.subr.bf16.mxu0 %v2827
        %3916 = vmatpush1.bf16.msra.mxu0 %v2826
        %3917 = vmatprep.subr.bf16.mxu0 %v2811
        %3918 = vmatpush1.bf16.msra.mxu0 %v2810
        %3919 = vmatprep.subr.bf16.mxu0 %v2795
        %3920 = vmatpush1.bf16.msra.mxu0 %v2794
        %3921 = vmatprep.subr.bf16.mxu0 %v2779
        %3922 = vmatpush1.bf16.msra.mxu0 %v2778
        %3923 = vmatprep.subr.bf16.mxu0 %v3019
        %3924 = vmatpush2.bf16.msra.mxu0 %v3018
        %3925 = vmatprep.subr.bf16.mxu0 %v3003
        %3926 = vmatpush2.bf16.msra.mxu0 %v3002
        %3927 = vmatprep.subr.bf16.mxu0 %v2987
        %3928 = vmatpush2.bf16.msra.mxu0 %v2986
        %3929 = vmatprep.subr.bf16.mxu0 %v2971
        %3930 = vmatpush2.bf16.msra.mxu0 %v2970
        %3931 = vmatprep.subr.bf16.mxu0 %v2955
        %3932 = vmatpush2.bf16.msra.mxu0 %v2954
        %3933 = vmatprep.subr.bf16.mxu0 %v2939
        %3934 = vmatpush2.bf16.msra.mxu0 %v2938
        %3935 = vmatprep.subr.bf16.mxu0 %v2923
        %3936 = vmatpush2.bf16.msra.mxu0 %v2922
        %3937 = vmatprep.subr.bf16.mxu0 %v2907
        %3938 = vmatpush2.bf16.msra.mxu0 %v2906
        %3939 = vmatprep.mubr.bf16.mxu0 %v381
        %3940 = vmatmul.mubr.bf16.gmra.mxu0 %v380
        %v3941 = vpop.f32.mrf.mxu0
        %v3942 = vadd.f32 %v3901, %v3941
        %v3943 = vpop.f32.mrf.mxu0
        %v3944 = vadd.f32 %v3903, %v3943
        %v3945 = vpop.f32.mrf.mxu0
        %v3946 = vpop.f32.mrf.mxu0
        %3947 = vdwg.mxu0
        %3948 = vmatprep.subr.bf16.mxu0 %v2637
        %3949 = vmatpush1.bf16.msra.mxu0 %v2636
        %3950 = vmatprep.subr.bf16.mxu0 %v2621
        %3951 = vmatpush1.bf16.msra.mxu0 %v2620
        %3952 = vmatprep.subr.bf16.mxu0 %v2605
        %3953 = vmatpush1.bf16.msra.mxu0 %v2604
        %3954 = vmatprep.subr.bf16.mxu0 %v2589
        %3955 = vmatpush1.bf16.msra.mxu0 %v2588
        %3956 = vmatprep.subr.bf16.mxu0 %v2573
        %3957 = vmatpush1.bf16.msra.mxu0 %v2572
        %3958 = vmatprep.subr.bf16.mxu0 %v2557
        %3959 = vmatpush1.bf16.msra.mxu0 %v2556
        %3960 = vmatprep.subr.bf16.mxu0 %v2541
        %3961 = vmatpush1.bf16.msra.mxu0 %v2540
        %3962 = vmatprep.subr.bf16.mxu0 %v2525
        %3963 = vmatpush1.bf16.msra.mxu0 %v2524
        %3964 = vmatprep.subr.bf16.mxu0 %v2765
        %3965 = vmatpush2.bf16.msra.mxu0 %v2764
        %3966 = vmatprep.subr.bf16.mxu0 %v2749
        %3967 = vmatpush2.bf16.msra.mxu0 %v2748
        %3968 = vmatprep.subr.bf16.mxu0 %v2733
        %3969 = vmatpush2.bf16.msra.mxu0 %v2732
        %3970 = vmatprep.subr.bf16.mxu0 %v2717
        %3971 = vmatpush2.bf16.msra.mxu0 %v2716
        %3972 = vmatprep.subr.bf16.mxu0 %v2701
        %3973 = vmatpush2.bf16.msra.mxu0 %v2700
        %3974 = vmatprep.subr.bf16.mxu0 %v2685
        %3975 = vmatpush2.bf16.msra.mxu0 %v2684
        %3976 = vmatprep.subr.bf16.mxu0 %v2669
        %3977 = vmatpush2.bf16.msra.mxu0 %v2668
        %3978 = vmatprep.subr.bf16.mxu0 %v2653
        %3979 = vmatpush2.bf16.msra.mxu0 %v2652
        %3980 = vmatprep.mubr.bf16.mxu0 %v379
        %3981 = vmatmul.mubr.bf16.gmra.mxu0 %v378
        %v3982 = vpop.f32.mrf.mxu0
        %v3983 = vadd.f32 %v941, %v3982
        %v3984 = vpop.f32.mrf.mxu0
        %v3985 = vadd.f32 %v945, %v3984
        %v3986 = vpop.f32.mrf.mxu0
        %v3987 = vpop.f32.mrf.mxu0
        %3988 = vdwg.mxu0
        %3989 = vmatprep.subr.bf16.mxu0 %v2893
        %3990 = vmatpush1.bf16.msra.mxu0 %v2892
        %3991 = vmatprep.subr.bf16.mxu0 %v2877
        %3992 = vmatpush1.bf16.msra.mxu0 %v2876
        %3993 = vmatprep.subr.bf16.mxu0 %v2861
        %3994 = vmatpush1.bf16.msra.mxu0 %v2860
        %3995 = vmatprep.subr.bf16.mxu0 %v2845
        %3996 = vmatpush1.bf16.msra.mxu0 %v2844
        %3997 = vmatprep.subr.bf16.mxu0 %v2829
        %3998 = vmatpush1.bf16.msra.mxu0 %v2828
        %3999 = vmatprep.subr.bf16.mxu0 %v2813
        %4000 = vmatpush1.bf16.msra.mxu0 %v2812
        %4001 = vmatprep.subr.bf16.mxu0 %v2797
        %4002 = vmatpush1.bf16.msra.mxu0 %v2796
        %4003 = vmatprep.subr.bf16.mxu0 %v2781
        %4004 = vmatpush1.bf16.msra.mxu0 %v2780
        %4005 = vmatprep.subr.bf16.mxu0 %v3021
        %4006 = vmatpush2.bf16.msra.mxu0 %v3020
        %4007 = vmatprep.subr.bf16.mxu0 %v3005
        %4008 = vmatpush2.bf16.msra.mxu0 %v3004
        %4009 = vmatprep.subr.bf16.mxu0 %v2989
        %4010 = vmatpush2.bf16.msra.mxu0 %v2988
        %4011 = vmatprep.subr.bf16.mxu0 %v2973
        %4012 = vmatpush2.bf16.msra.mxu0 %v2972
        %4013 = vmatprep.subr.bf16.mxu0 %v2957
        %4014 = vmatpush2.bf16.msra.mxu0 %v2956
        %4015 = vmatprep.subr.bf16.mxu0 %v2941
        %4016 = vmatpush2.bf16.msra.mxu0 %v2940
        %4017 = vmatprep.subr.bf16.mxu0 %v2925
        %4018 = vmatpush2.bf16.msra.mxu0 %v2924
        %4019 = vmatprep.subr.bf16.mxu0 %v2909
        %4020 = vmatpush2.bf16.msra.mxu0 %v2908
        %4021 = vmatprep.mubr.bf16.mxu0 %v381
        %4022 = vmatmul.mubr.bf16.gmra.mxu0 %v380
        %v4023 = vpop.f32.mrf.mxu0
        %v4024 = vadd.f32 %v3983, %v4023
        %v4025 = vpop.f32.mrf.mxu0
        %v4026 = vadd.f32 %v3985, %v4025
        %v4027 = vpop.f32.mrf.mxu0
        %v4028 = vpop.f32.mrf.mxu0
        %4029 = vdwg.mxu0
        %4030 = vmatprep.subr.bf16.mxu0 %v2639
        %4031 = vmatpush1.bf16.msra.mxu0 %v2638
        %4032 = vmatprep.subr.bf16.mxu0 %v2623
        %4033 = vmatpush1.bf16.msra.mxu0 %v2622
        %4034 = vmatprep.subr.bf16.mxu0 %v2607
        %4035 = vmatpush1.bf16.msra.mxu0 %v2606
        %4036 = vmatprep.subr.bf16.mxu0 %v2591
        %4037 = vmatpush1.bf16.msra.mxu0 %v2590
        %4038 = vmatprep.subr.bf16.mxu0 %v2575
        %4039 = vmatpush1.bf16.msra.mxu0 %v2574
        %4040 = vmatprep.subr.bf16.mxu0 %v2559
        %4041 = vmatpush1.bf16.msra.mxu0 %v2558
        %4042 = vmatprep.subr.bf16.mxu0 %v2543
        %4043 = vmatpush1.bf16.msra.mxu0 %v2542
        %4044 = vmatprep.subr.bf16.mxu0 %v2527
        %4045 = vmatpush1.bf16.msra.mxu0 %v2526
        %4046 = vmatprep.subr.bf16.mxu0 %v2767
        %4047 = vmatpush2.bf16.msra.mxu0 %v2766
        %4048 = vmatprep.subr.bf16.mxu0 %v2751
        %4049 = vmatpush2.bf16.msra.mxu0 %v2750
        %4050 = vmatprep.subr.bf16.mxu0 %v2735
        %4051 = vmatpush2.bf16.msra.mxu0 %v2734
        %4052 = vmatprep.subr.bf16.mxu0 %v2719
        %4053 = vmatpush2.bf16.msra.mxu0 %v2718
        %4054 = vmatprep.subr.bf16.mxu0 %v2703
        %4055 = vmatpush2.bf16.msra.mxu0 %v2702
        %4056 = vmatprep.subr.bf16.mxu0 %v2687
        %4057 = vmatpush2.bf16.msra.mxu0 %v2686
        %4058 = vmatprep.subr.bf16.mxu0 %v2671
        %4059 = vmatpush2.bf16.msra.mxu0 %v2670
        %4060 = vmatprep.subr.bf16.mxu0 %v2655
        %4061 = vmatpush2.bf16.msra.mxu0 %v2654
        %4062 = vmatprep.mubr.bf16.mxu0 %v379
        %4063 = vmatmul.mubr.bf16.gmra.mxu0 %v378
        %v4064 = vpop.f32.mrf.mxu0
        %v4065 = vadd.f32 %v949, %v4064
        %v4066 = vpop.f32.mrf.mxu0
        %v4067 = vadd.f32 %v953, %v4066
        %v4068 = vpop.f32.mrf.mxu0
        %v4069 = vpop.f32.mrf.mxu0
        %4070 = vdwg.mxu0
        %4071 = vmatprep.subr.bf16.mxu0 %v2895
        %4072 = vmatpush1.bf16.msra.mxu0 %v2894
        %4073 = vmatprep.subr.bf16.mxu0 %v2879
        %4074 = vmatpush1.bf16.msra.mxu0 %v2878
        %4075 = vmatprep.subr.bf16.mxu0 %v2863
        %4076 = vmatpush1.bf16.msra.mxu0 %v2862
        %4077 = vmatprep.subr.bf16.mxu0 %v2847
        %4078 = vmatpush1.bf16.msra.mxu0 %v2846
        %4079 = vmatprep.subr.bf16.mxu0 %v2831
        %4080 = vmatpush1.bf16.msra.mxu0 %v2830
        %4081 = vmatprep.subr.bf16.mxu0 %v2815
        %4082 = vmatpush1.bf16.msra.mxu0 %v2814
        %4083 = vmatprep.subr.bf16.mxu0 %v2799
        %4084 = vmatpush1.bf16.msra.mxu0 %v2798
        %4085 = vmatprep.subr.bf16.mxu0 %v2783
        %4086 = vmatpush1.bf16.msra.mxu0 %v2782
        %4087 = vmatprep.subr.bf16.mxu0 %v3023
        %4088 = vmatpush2.bf16.msra.mxu0 %v3022
        %4089 = vmatprep.subr.bf16.mxu0 %v3007
        %4090 = vmatpush2.bf16.msra.mxu0 %v3006
        %4091 = vmatprep.subr.bf16.mxu0 %v2991
        %4092 = vmatpush2.bf16.msra.mxu0 %v2990
        %4093 = vmatprep.subr.bf16.mxu0 %v2975
        %4094 = vmatpush2.bf16.msra.mxu0 %v2974
        %4095 = vmatprep.subr.bf16.mxu0 %v2959
        %4096 = vmatpush2.bf16.msra.mxu0 %v2958
        %4097 = vmatprep.subr.bf16.mxu0 %v2943
        %4098 = vmatpush2.bf16.msra.mxu0 %v2942
        %4099 = vmatprep.subr.bf16.mxu0 %v2927
        %4100 = vmatpush2.bf16.msra.mxu0 %v2926
        %4101 = vmatprep.subr.bf16.mxu0 %v2911
        %4102 = vmatpush2.bf16.msra.mxu0 %v2910
        %4103 = vmatprep.mubr.bf16.mxu0 %v381
        %4104 = vmatmul.mubr.bf16.gmra.mxu0 %v380
        %v4105 = vpop.f32.mrf.mxu0
        %v4106 = vadd.f32 %v4065, %v4105
        %v4107 = vpop.f32.mrf.mxu0
        %v4108 = vadd.f32 %v4067, %v4107
        %v4109 = vpop.f32.mrf.mxu0
        %v4110 = vpop.f32.mrf.mxu0
        %4111 = vdwg.mxu0
        %4112 = vmatprep.subr.bf16.mxu0 %v2641
        %4113 = vmatpush1.bf16.msra.mxu0 %v2640
        %4114 = vmatprep.subr.bf16.mxu0 %v2625
        %4115 = vmatpush1.bf16.msra.mxu0 %v2624
        %4116 = vmatprep.subr.bf16.mxu0 %v2609
        %4117 = vmatpush1.bf16.msra.mxu0 %v2608
        %4118 = vmatprep.subr.bf16.mxu0 %v2593
        %4119 = vmatpush1.bf16.msra.mxu0 %v2592
        %4120 = vmatprep.subr.bf16.mxu0 %v2577
        %4121 = vmatpush1.bf16.msra.mxu0 %v2576
        %4122 = vmatprep.subr.bf16.mxu0 %v2561
        %4123 = vmatpush1.bf16.msra.mxu0 %v2560
        %4124 = vmatprep.subr.bf16.mxu0 %v2545
        %4125 = vmatpush1.bf16.msra.mxu0 %v2544
        %4126 = vmatprep.subr.bf16.mxu0 %v2529
        %4127 = vmatpush1.bf16.msra.mxu0 %v2528
        %4128 = vmatprep.subr.bf16.mxu0 %v2769
        %4129 = vmatpush2.bf16.msra.mxu0 %v2768
        %4130 = vmatprep.subr.bf16.mxu0 %v2753
        %4131 = vmatpush2.bf16.msra.mxu0 %v2752
        %4132 = vmatprep.subr.bf16.mxu0 %v2737
        %4133 = vmatpush2.bf16.msra.mxu0 %v2736
        %4134 = vmatprep.subr.bf16.mxu0 %v2721
        %4135 = vmatpush2.bf16.msra.mxu0 %v2720
        %4136 = vmatprep.subr.bf16.mxu0 %v2705
        %4137 = vmatpush2.bf16.msra.mxu0 %v2704
        %4138 = vmatprep.subr.bf16.mxu0 %v2689
        %4139 = vmatpush2.bf16.msra.mxu0 %v2688
        %4140 = vmatprep.subr.bf16.mxu0 %v2673
        %4141 = vmatpush2.bf16.msra.mxu0 %v2672
        %4142 = vmatprep.subr.bf16.mxu0 %v2657
        %4143 = vmatpush2.bf16.msra.mxu0 %v2656
        %4144 = vmatprep.mubr.bf16.mxu0 %v379
        %4145 = vmatmul.mubr.bf16.gmra.mxu0 %v378
        %v4146 = vpop.f32.mrf.mxu0
        %v4147 = vadd.f32 %v957, %v4146
        %v4148 = vpop.f32.mrf.mxu0
        %v4149 = vadd.f32 %v961, %v4148
        %v4150 = vpop.f32.mrf.mxu0
        %v4151 = vpop.f32.mrf.mxu0
        %4152 = vdwg.mxu0
        %4153 = vmatprep.subr.bf16.mxu0 %v2897
        %4154 = vmatpush1.bf16.msra.mxu0 %v2896
        %4155 = vmatprep.subr.bf16.mxu0 %v2881
        %4156 = vmatpush1.bf16.msra.mxu0 %v2880
        %4157 = vmatprep.subr.bf16.mxu0 %v2865
        %4158 = vmatpush1.bf16.msra.mxu0 %v2864
        %4159 = vmatprep.subr.bf16.mxu0 %v2849
        %4160 = vmatpush1.bf16.msra.mxu0 %v2848
        %4161 = vmatprep.subr.bf16.mxu0 %v2833
        %4162 = vmatpush1.bf16.msra.mxu0 %v2832
        %4163 = vmatprep.subr.bf16.mxu0 %v2817
        %4164 = vmatpush1.bf16.msra.mxu0 %v2816
        %4165 = vmatprep.subr.bf16.mxu0 %v2801
        %4166 = vmatpush1.bf16.msra.mxu0 %v2800
        %4167 = vmatprep.subr.bf16.mxu0 %v2785
        %4168 = vmatpush1.bf16.msra.mxu0 %v2784
        %4169 = vmatprep.subr.bf16.mxu0 %v3025
        %4170 = vmatpush2.bf16.msra.mxu0 %v3024
        %4171 = vmatprep.subr.bf16.mxu0 %v3009
        %4172 = vmatpush2.bf16.msra.mxu0 %v3008
        %4173 = vmatprep.subr.bf16.mxu0 %v2993
        %4174 = vmatpush2.bf16.msra.mxu0 %v2992
        %4175 = vmatprep.subr.bf16.mxu0 %v2977
        %4176 = vmatpush2.bf16.msra.mxu0 %v2976
        %4177 = vmatprep.subr.bf16.mxu0 %v2961
        %4178 = vmatpush2.bf16.msra.mxu0 %v2960
        %4179 = vmatprep.subr.bf16.mxu0 %v2945
        %4180 = vmatpush2.bf16.msra.mxu0 %v2944
        %4181 = vmatprep.subr.bf16.mxu0 %v2929
        %4182 = vmatpush2.bf16.msra.mxu0 %v2928
        %4183 = vmatprep.subr.bf16.mxu0 %v2913
        %4184 = vmatpush2.bf16.msra.mxu0 %v2912
        %4185 = vmatprep.mubr.bf16.mxu0 %v381
        %4186 = vmatmul.mubr.bf16.gmra.mxu0 %v380
        %v4187 = vpop.f32.mrf.mxu0
        %v4188 = vadd.f32 %v4147, %v4187
        %v4189 = vpop.f32.mrf.mxu0
        %v4190 = vadd.f32 %v4149, %v4189
        %v4191 = vpop.f32.mrf.mxu0
        %v4192 = vpop.f32.mrf.mxu0
        %4193 = vdwg.mxu0
        %v4194 = vmax.f32 %v3614, 0.0
        %v4195 = vmax.f32 %v3616, 0.0
        %v4196 = vmax.f32 %v3696, 0.0
        %v4197 = vmax.f32 %v3698, 0.0
        %v4198 = vmax.f32 %v3778, 0.0
        %v4199 = vmax.f32 %v3780, 0.0
        %v4200 = vmax.f32 %v3860, 0.0
        %v4201 = vmax.f32 %v3862, 0.0
        %v4202 = vmax.f32 %v3942, 0.0
        %v4203 = vmax.f32 %v3944, 0.0
        %v4204 = vmax.f32 %v4024, 0.0
        %v4205 = vmax.f32 %v4026, 0.0
        %v4206 = vmax.f32 %v4106, 0.0
        %v4207 = vmax.f32 %v4108, 0.0
        %v4208 = vmax.f32 %v4188, 0.0
        %v4209 = vmax.f32 %v4190, 0.0
        %v4210 = vpack.c.bf16 %v4194, %v4194
        %v4211 = vpack.c.bf16 %v4195, %v4195
        %v4212 = vpack.c.bf16 %v4196, %v4196
        %v4213 = vpack.c.bf16 %v4197, %v4197
        %v4214 = vpack.c.bf16 %v4198, %v4198
        %v4215 = vpack.c.bf16 %v4199, %v4199
        %v4216 = vpack.c.bf16 %v4200, %v4200
        %v4217 = vpack.c.bf16 %v4201, %v4201
        %v4218 = vpack.c.bf16 %v4202, %v4202
        %v4219 = vpack.c.bf16 %v4203, %v4203
        %v4220 = vpack.c.bf16 %v4204, %v4204
        %v4221 = vpack.c.bf16 %v4205, %v4205
        %v4222 = vpack.c.bf16 %v4206, %v4206
        %v4223 = vpack.c.bf16 %v4207, %v4207
        %v4224 = vpack.c.bf16 %v4208, %v4208
        %v4225 = vpack.c.bf16 %v4209, %v4209
        %v4226 = vld [vmem:[#allocation8] sm:$0xff]
        %v4227 = vld [vmem:[#allocation8 + $0x8] sm:$0xff]
        %v4228 = vld [vmem:[#allocation8 + $0x10] sm:$0xff]
        %v4229 = vld [vmem:[#allocation8 + $0x18] sm:$0xff]
        %v4230 = vld [vmem:[#allocation8 + $0x20] sm:$0xff]
        %v4231 = vld [vmem:[#allocation8 + $0x28] sm:$0xff]
        %v4232 = vld [vmem:[#allocation8 + $0x30] sm:$0xff]
        %v4233 = vld [vmem:[#allocation8 + $0x38] sm:$0xff]
        %v4234 = vld [vmem:[#allocation8 + $0x40] sm:$0xff]
        %v4235 = vld [vmem:[#allocation8 + $0x48] sm:$0xff]
        %v4236 = vld [vmem:[#allocation8 + $0x50] sm:$0xff]
        %v4237 = vld [vmem:[#allocation8 + $0x58] sm:$0xff]
        %v4238 = vld [vmem:[#allocation8 + $0x60] sm:$0xff]
        %v4239 = vld [vmem:[#allocation8 + $0x68] sm:$0xff]
        %v4240 = vld [vmem:[#allocation8 + $0x70] sm:$0xff]
        %v4241 = vld [vmem:[#allocation8 + $0x78] sm:$0xff]
        %v4242 = vld [vmem:[#allocation8 + $0x80] sm:$0xff]
        %v4243 = vld [vmem:[#allocation8 + $0x88] sm:$0xff]
        %v4244 = vld [vmem:[#allocation8 + $0x90] sm:$0xff]
        %v4245 = vld [vmem:[#allocation8 + $0x98] sm:$0xff]
        %v4246 = vld [vmem:[#allocation8 + $0xa0] sm:$0xff]
        %v4247 = vld [vmem:[#allocation8 + $0xa8] sm:$0xff]
        %v4248 = vld [vmem:[#allocation8 + $0xb0] sm:$0xff]
        %v4249 = vld [vmem:[#allocation8 + $0xb8] sm:$0xff]
        %v4250 = vld [vmem:[#allocation8 + $0xc0] sm:$0xff]
        %v4251 = vld [vmem:[#allocation8 + $0xc8] sm:$0xff]
        %v4252 = vld [vmem:[#allocation8 + $0xd0] sm:$0xff]
        %v4253 = vld [vmem:[#allocation8 + $0xd8] sm:$0xff]
        %v4254 = vld [vmem:[#allocation8 + $0xe0] sm:$0xff]
        %v4255 = vld [vmem:[#allocation8 + $0xe8] sm:$0xff]
        %v4256 = vld [vmem:[#allocation8 + $0xf0] sm:$0xff]
        %v4257 = vld [vmem:[#allocation8 + $0xf8] sm:$0xff]
        %v4258 = vld [vmem:[#allocation8 + $0x100] sm:$0xff]
        %v4259 = vld [vmem:[#allocation8 + $0x108] sm:$0xff]
        %v4260 = vld [vmem:[#allocation8 + $0x110] sm:$0xff]
        %v4261 = vld [vmem:[#allocation8 + $0x118] sm:$0xff]
        %v4262 = vld [vmem:[#allocation8 + $0x120] sm:$0xff]
        %v4263 = vld [vmem:[#allocation8 + $0x128] sm:$0xff]
        %v4264 = vld [vmem:[#allocation8 + $0x130] sm:$0xff]
        %v4265 = vld [vmem:[#allocation8 + $0x138] sm:$0xff]
        %v4266 = vld [vmem:[#allocation8 + $0x140] sm:$0xff]
        %v4267 = vld [vmem:[#allocation8 + $0x148] sm:$0xff]
        %v4268 = vld [vmem:[#allocation8 + $0x150] sm:$0xff]
        %v4269 = vld [vmem:[#allocation8 + $0x158] sm:$0xff]
        %v4270 = vld [vmem:[#allocation8 + $0x160] sm:$0xff]
        %v4271 = vld [vmem:[#allocation8 + $0x168] sm:$0xff]
        %v4272 = vld [vmem:[#allocation8 + $0x170] sm:$0xff]
        %v4273 = vld [vmem:[#allocation8 + $0x178] sm:$0xff]
        %v4274 = vld [vmem:[#allocation8 + $0x180] sm:$0xff]
        %v4275 = vld [vmem:[#allocation8 + $0x188] sm:$0xff]
        %v4276 = vld [vmem:[#allocation8 + $0x190] sm:$0xff]
        %v4277 = vld [vmem:[#allocation8 + $0x198] sm:$0xff]
        %v4278 = vld [vmem:[#allocation8 + $0x1a0] sm:$0xff]
        %v4279 = vld [vmem:[#allocation8 + $0x1a8] sm:$0xff]
        %v4280 = vld [vmem:[#allocation8 + $0x1b0] sm:$0xff]
        %v4281 = vld [vmem:[#allocation8 + $0x1b8] sm:$0xff]
        %v4282 = vld [vmem:[#allocation8 + $0x1c0] sm:$0xff]
        %v4283 = vld [vmem:[#allocation8 + $0x1c8] sm:$0xff]
        %v4284 = vld [vmem:[#allocation8 + $0x1d0] sm:$0xff]
        %v4285 = vld [vmem:[#allocation8 + $0x1d8] sm:$0xff]
        %v4286 = vld [vmem:[#allocation8 + $0x1e0] sm:$0xff]
        %v4287 = vld [vmem:[#allocation8 + $0x1e8] sm:$0xff]
        %v4288 = vld [vmem:[#allocation8 + $0x1f0] sm:$0xff]
        %v4289 = vld [vmem:[#allocation8 + $0x1f8] sm:$0xff]
        %v4290 = vld [vmem:[#allocation8 + $0x200] sm:$0xff]
        %v4291 = vld [vmem:[#allocation8 + $0x208] sm:$0xff]
        %v4292 = vld [vmem:[#allocation8 + $0x210] sm:$0xff]
        %v4293 = vld [vmem:[#allocation8 + $0x218] sm:$0xff]
        %v4294 = vld [vmem:[#allocation8 + $0x220] sm:$0xff]
        %v4295 = vld [vmem:[#allocation8 + $0x228] sm:$0xff]
        %v4296 = vld [vmem:[#allocation8 + $0x230] sm:$0xff]
        %v4297 = vld [vmem:[#allocation8 + $0x238] sm:$0xff]
        %v4298 = vld [vmem:[#allocation8 + $0x240] sm:$0xff]
        %v4299 = vld [vmem:[#allocation8 + $0x248] sm:$0xff]
        %v4300 = vld [vmem:[#allocation8 + $0x250] sm:$0xff]
        %v4301 = vld [vmem:[#allocation8 + $0x258] sm:$0xff]
        %v4302 = vld [vmem:[#allocation8 + $0x260] sm:$0xff]
        %v4303 = vld [vmem:[#allocation8 + $0x268] sm:$0xff]
        %v4304 = vld [vmem:[#allocation8 + $0x270] sm:$0xff]
        %v4305 = vld [vmem:[#allocation8 + $0x278] sm:$0xff]
        %v4306 = vld [vmem:[#allocation8 + $0x280] sm:$0xff]
        %v4307 = vld [vmem:[#allocation8 + $0x288] sm:$0xff]
        %v4308 = vld [vmem:[#allocation8 + $0x290] sm:$0xff]
        %v4309 = vld [vmem:[#allocation8 + $0x298] sm:$0xff]
        %v4310 = vld [vmem:[#allocation8 + $0x2a0] sm:$0xff]
        %v4311 = vld [vmem:[#allocation8 + $0x2a8] sm:$0xff]
        %v4312 = vld [vmem:[#allocation8 + $0x2b0] sm:$0xff]
        %v4313 = vld [vmem:[#allocation8 + $0x2b8] sm:$0xff]
        %v4314 = vld [vmem:[#allocation8 + $0x2c0] sm:$0xff]
        %v4315 = vld [vmem:[#allocation8 + $0x2c8] sm:$0xff]
        %v4316 = vld [vmem:[#allocation8 + $0x2d0] sm:$0xff]
        %v4317 = vld [vmem:[#allocation8 + $0x2d8] sm:$0xff]
        %v4318 = vld [vmem:[#allocation8 + $0x2e0] sm:$0xff]
        %v4319 = vld [vmem:[#allocation8 + $0x2e8] sm:$0xff]
        %v4320 = vld [vmem:[#allocation8 + $0x2f0] sm:$0xff]
        %v4321 = vld [vmem:[#allocation8 + $0x2f8] sm:$0xff]
        %v4322 = vld [vmem:[#allocation8 + $0x300] sm:$0xff]
        %v4323 = vld [vmem:[#allocation8 + $0x308] sm:$0xff]
        %v4324 = vld [vmem:[#allocation8 + $0x310] sm:$0xff]
        %v4325 = vld [vmem:[#allocation8 + $0x318] sm:$0xff]
        %v4326 = vld [vmem:[#allocation8 + $0x320] sm:$0xff]
        %v4327 = vld [vmem:[#allocation8 + $0x328] sm:$0xff]
        %v4328 = vld [vmem:[#allocation8 + $0x330] sm:$0xff]
        %v4329 = vld [vmem:[#allocation8 + $0x338] sm:$0xff]
        %v4330 = vld [vmem:[#allocation8 + $0x340] sm:$0xff]
        %v4331 = vld [vmem:[#allocation8 + $0x348] sm:$0xff]
        %v4332 = vld [vmem:[#allocation8 + $0x350] sm:$0xff]
        %v4333 = vld [vmem:[#allocation8 + $0x358] sm:$0xff]
        %v4334 = vld [vmem:[#allocation8 + $0x360] sm:$0xff]
        %v4335 = vld [vmem:[#allocation8 + $0x368] sm:$0xff]
        %v4336 = vld [vmem:[#allocation8 + $0x370] sm:$0xff]
        %v4337 = vld [vmem:[#allocation8 + $0x378] sm:$0xff]
        %v4338 = vld [vmem:[#allocation8 + $0x380] sm:$0xff]
        %v4339 = vld [vmem:[#allocation8 + $0x388] sm:$0xff]
        %v4340 = vld [vmem:[#allocation8 + $0x390] sm:$0xff]
        %v4341 = vld [vmem:[#allocation8 + $0x398] sm:$0xff]
        %v4342 = vld [vmem:[#allocation8 + $0x3a0] sm:$0xff]
        %v4343 = vld [vmem:[#allocation8 + $0x3a8] sm:$0xff]
        %v4344 = vld [vmem:[#allocation8 + $0x3b0] sm:$0xff]
        %v4345 = vld [vmem:[#allocation8 + $0x3b8] sm:$0xff]
        %v4346 = vld [vmem:[#allocation8 + $0x3c0] sm:$0xff]
        %v4347 = vld [vmem:[#allocation8 + $0x3c8] sm:$0xff]
        %v4348 = vld [vmem:[#allocation8 + $0x3d0] sm:$0xff]
        %v4349 = vld [vmem:[#allocation8 + $0x3d8] sm:$0xff]
        %v4350 = vld [vmem:[#allocation8 + $0x3e0] sm:$0xff]
        %v4351 = vld [vmem:[#allocation8 + $0x3e8] sm:$0xff]
        %v4352 = vld [vmem:[#allocation8 + $0x3f0] sm:$0xff]
        %v4353 = vld [vmem:[#allocation8 + $0x3f8] sm:$0xff]
        %v4354 = vld [vmem:[#allocation8 + $0x400] sm:$0xff]
        %v4355 = vld [vmem:[#allocation8 + $0x408] sm:$0xff]
        %v4356 = vld [vmem:[#allocation8 + $0x410] sm:$0xff]
        %v4357 = vld [vmem:[#allocation8 + $0x418] sm:$0xff]
        %v4358 = vld [vmem:[#allocation8 + $0x420] sm:$0xff]
        %v4359 = vld [vmem:[#allocation8 + $0x428] sm:$0xff]
        %v4360 = vld [vmem:[#allocation8 + $0x430] sm:$0xff]
        %v4361 = vld [vmem:[#allocation8 + $0x438] sm:$0xff]
        %v4362 = vld [vmem:[#allocation8 + $0x440] sm:$0xff]
        %v4363 = vld [vmem:[#allocation8 + $0x448] sm:$0xff]
        %v4364 = vld [vmem:[#allocation8 + $0x450] sm:$0xff]
        %v4365 = vld [vmem:[#allocation8 + $0x458] sm:$0xff]
        %v4366 = vld [vmem:[#allocation8 + $0x460] sm:$0xff]
        %v4367 = vld [vmem:[#allocation8 + $0x468] sm:$0xff]
        %v4368 = vld [vmem:[#allocation8 + $0x470] sm:$0xff]
        %v4369 = vld [vmem:[#allocation8 + $0x478] sm:$0xff]
        %v4370 = vld [vmem:[#allocation8 + $0x480] sm:$0xff]
        %v4371 = vld [vmem:[#allocation8 + $0x488] sm:$0xff]
        %v4372 = vld [vmem:[#allocation8 + $0x490] sm:$0xff]
        %v4373 = vld [vmem:[#allocation8 + $0x498] sm:$0xff]
        %v4374 = vld [vmem:[#allocation8 + $0x4a0] sm:$0xff]
        %v4375 = vld [vmem:[#allocation8 + $0x4a8] sm:$0xff]
        %v4376 = vld [vmem:[#allocation8 + $0x4b0] sm:$0xff]
        %v4377 = vld [vmem:[#allocation8 + $0x4b8] sm:$0xff]
        %v4378 = vld [vmem:[#allocation8 + $0x4c0] sm:$0xff]
        %v4379 = vld [vmem:[#allocation8 + $0x4c8] sm:$0xff]
        %v4380 = vld [vmem:[#allocation8 + $0x4d0] sm:$0xff]
        %v4381 = vld [vmem:[#allocation8 + $0x4d8] sm:$0xff]
        %v4382 = vld [vmem:[#allocation8 + $0x4e0] sm:$0xff]
        %v4383 = vld [vmem:[#allocation8 + $0x4e8] sm:$0xff]
        %v4384 = vld [vmem:[#allocation8 + $0x4f0] sm:$0xff]
        %v4385 = vld [vmem:[#allocation8 + $0x4f8] sm:$0xff]
        %v4386 = vld [vmem:[#allocation8 + $0x500] sm:$0xff]
        %v4387 = vld [vmem:[#allocation8 + $0x508] sm:$0xff]
        %v4388 = vld [vmem:[#allocation8 + $0x510] sm:$0xff]
        %v4389 = vld [vmem:[#allocation8 + $0x518] sm:$0xff]
        %v4390 = vld [vmem:[#allocation8 + $0x520] sm:$0xff]
        %v4391 = vld [vmem:[#allocation8 + $0x528] sm:$0xff]
        %v4392 = vld [vmem:[#allocation8 + $0x530] sm:$0xff]
        %v4393 = vld [vmem:[#allocation8 + $0x538] sm:$0xff]
        %v4394 = vld [vmem:[#allocation8 + $0x540] sm:$0xff]
        %v4395 = vld [vmem:[#allocation8 + $0x548] sm:$0xff]
        %v4396 = vld [vmem:[#allocation8 + $0x550] sm:$0xff]
        %v4397 = vld [vmem:[#allocation8 + $0x558] sm:$0xff]
        %v4398 = vld [vmem:[#allocation8 + $0x560] sm:$0xff]
        %v4399 = vld [vmem:[#allocation8 + $0x568] sm:$0xff]
        %v4400 = vld [vmem:[#allocation8 + $0x570] sm:$0xff]
        %v4401 = vld [vmem:[#allocation8 + $0x578] sm:$0xff]
        %v4402 = vld [vmem:[#allocation8 + $0x580] sm:$0xff]
        %v4403 = vld [vmem:[#allocation8 + $0x588] sm:$0xff]
        %v4404 = vld [vmem:[#allocation8 + $0x590] sm:$0xff]
        %v4405 = vld [vmem:[#allocation8 + $0x598] sm:$0xff]
        %v4406 = vld [vmem:[#allocation8 + $0x5a0] sm:$0xff]
        %v4407 = vld [vmem:[#allocation8 + $0x5a8] sm:$0xff]
        %v4408 = vld [vmem:[#allocation8 + $0x5b0] sm:$0xff]
        %v4409 = vld [vmem:[#allocation8 + $0x5b8] sm:$0xff]
        %v4410 = vld [vmem:[#allocation8 + $0x5c0] sm:$0xff]
        %v4411 = vld [vmem:[#allocation8 + $0x5c8] sm:$0xff]
        %v4412 = vld [vmem:[#allocation8 + $0x5d0] sm:$0xff]
        %v4413 = vld [vmem:[#allocation8 + $0x5d8] sm:$0xff]
        %v4414 = vld [vmem:[#allocation8 + $0x5e0] sm:$0xff]
        %v4415 = vld [vmem:[#allocation8 + $0x5e8] sm:$0xff]
        %v4416 = vld [vmem:[#allocation8 + $0x5f0] sm:$0xff]
        %v4417 = vld [vmem:[#allocation8 + $0x5f8] sm:$0xff]
        %v4418 = vld [vmem:[#allocation8 + $0x600] sm:$0xff]
        %v4419 = vld [vmem:[#allocation8 + $0x608] sm:$0xff]
        %v4420 = vld [vmem:[#allocation8 + $0x610] sm:$0xff]
        %v4421 = vld [vmem:[#allocation8 + $0x618] sm:$0xff]
        %v4422 = vld [vmem:[#allocation8 + $0x620] sm:$0xff]
        %v4423 = vld [vmem:[#allocation8 + $0x628] sm:$0xff]
        %v4424 = vld [vmem:[#allocation8 + $0x630] sm:$0xff]
        %v4425 = vld [vmem:[#allocation8 + $0x638] sm:$0xff]
        %v4426 = vld [vmem:[#allocation8 + $0x640] sm:$0xff]
        %v4427 = vld [vmem:[#allocation8 + $0x648] sm:$0xff]
        %v4428 = vld [vmem:[#allocation8 + $0x650] sm:$0xff]
        %v4429 = vld [vmem:[#allocation8 + $0x658] sm:$0xff]
        %v4430 = vld [vmem:[#allocation8 + $0x660] sm:$0xff]
        %v4431 = vld [vmem:[#allocation8 + $0x668] sm:$0xff]
        %v4432 = vld [vmem:[#allocation8 + $0x670] sm:$0xff]
        %v4433 = vld [vmem:[#allocation8 + $0x678] sm:$0xff]
        %v4434 = vld [vmem:[#allocation8 + $0x680] sm:$0xff]
        %v4435 = vld [vmem:[#allocation8 + $0x688] sm:$0xff]
        %v4436 = vld [vmem:[#allocation8 + $0x690] sm:$0xff]
        %v4437 = vld [vmem:[#allocation8 + $0x698] sm:$0xff]
        %v4438 = vld [vmem:[#allocation8 + $0x6a0] sm:$0xff]
        %v4439 = vld [vmem:[#allocation8 + $0x6a8] sm:$0xff]
        %v4440 = vld [vmem:[#allocation8 + $0x6b0] sm:$0xff]
        %v4441 = vld [vmem:[#allocation8 + $0x6b8] sm:$0xff]
        %v4442 = vld [vmem:[#allocation8 + $0x6c0] sm:$0xff]
        %v4443 = vld [vmem:[#allocation8 + $0x6c8] sm:$0xff]
        %v4444 = vld [vmem:[#allocation8 + $0x6d0] sm:$0xff]
        %v4445 = vld [vmem:[#allocation8 + $0x6d8] sm:$0xff]
        %v4446 = vld [vmem:[#allocation8 + $0x6e0] sm:$0xff]
        %v4447 = vld [vmem:[#allocation8 + $0x6e8] sm:$0xff]
        %v4448 = vld [vmem:[#allocation8 + $0x6f0] sm:$0xff]
        %v4449 = vld [vmem:[#allocation8 + $0x6f8] sm:$0xff]
        %v4450 = vld [vmem:[#allocation8 + $0x700] sm:$0xff]
        %v4451 = vld [vmem:[#allocation8 + $0x708] sm:$0xff]
        %v4452 = vld [vmem:[#allocation8 + $0x710] sm:$0xff]
        %v4453 = vld [vmem:[#allocation8 + $0x718] sm:$0xff]
        %v4454 = vld [vmem:[#allocation8 + $0x720] sm:$0xff]
        %v4455 = vld [vmem:[#allocation8 + $0x728] sm:$0xff]
        %v4456 = vld [vmem:[#allocation8 + $0x730] sm:$0xff]
        %v4457 = vld [vmem:[#allocation8 + $0x738] sm:$0xff]
        %v4458 = vld [vmem:[#allocation8 + $0x740] sm:$0xff]
        %v4459 = vld [vmem:[#allocation8 + $0x748] sm:$0xff]
        %v4460 = vld [vmem:[#allocation8 + $0x750] sm:$0xff]
        %v4461 = vld [vmem:[#allocation8 + $0x758] sm:$0xff]
        %v4462 = vld [vmem:[#allocation8 + $0x760] sm:$0xff]
        %v4463 = vld [vmem:[#allocation8 + $0x768] sm:$0xff]
        %v4464 = vld [vmem:[#allocation8 + $0x770] sm:$0xff]
        %v4465 = vld [vmem:[#allocation8 + $0x778] sm:$0xff]
        %v4466 = vld [vmem:[#allocation8 + $0x780] sm:$0xff]
        %v4467 = vld [vmem:[#allocation8 + $0x788] sm:$0xff]
        %v4468 = vld [vmem:[#allocation8 + $0x790] sm:$0xff]
        %v4469 = vld [vmem:[#allocation8 + $0x798] sm:$0xff]
        %v4470 = vld [vmem:[#allocation8 + $0x7a0] sm:$0xff]
        %v4471 = vld [vmem:[#allocation8 + $0x7a8] sm:$0xff]
        %v4472 = vld [vmem:[#allocation8 + $0x7b0] sm:$0xff]
        %v4473 = vld [vmem:[#allocation8 + $0x7b8] sm:$0xff]
        %v4474 = vld [vmem:[#allocation8 + $0x7c0] sm:$0xff]
        %v4475 = vld [vmem:[#allocation8 + $0x7c8] sm:$0xff]
        %v4476 = vld [vmem:[#allocation8 + $0x7d0] sm:$0xff]
        %v4477 = vld [vmem:[#allocation8 + $0x7d8] sm:$0xff]
        %v4478 = vld [vmem:[#allocation8 + $0x7e0] sm:$0xff]
        %v4479 = vld [vmem:[#allocation8 + $0x7e8] sm:$0xff]
        %v4480 = vld [vmem:[#allocation8 + $0x7f0] sm:$0xff]
        %v4481 = vld [vmem:[#allocation8 + $0x7f8] sm:$0xff]
        %v4482 = vld [vmem:[#allocation8 + $0x800] sm:$0xff]
        %v4483 = vld [vmem:[#allocation8 + $0x808] sm:$0xff]
        %v4484 = vld [vmem:[#allocation8 + $0x810] sm:$0xff]
        %v4485 = vld [vmem:[#allocation8 + $0x818] sm:$0xff]
        %v4486 = vld [vmem:[#allocation8 + $0x820] sm:$0xff]
        %v4487 = vld [vmem:[#allocation8 + $0x828] sm:$0xff]
        %v4488 = vld [vmem:[#allocation8 + $0x830] sm:$0xff]
        %v4489 = vld [vmem:[#allocation8 + $0x838] sm:$0xff]
        %v4490 = vld [vmem:[#allocation8 + $0x840] sm:$0xff]
        %v4491 = vld [vmem:[#allocation8 + $0x848] sm:$0xff]
        %v4492 = vld [vmem:[#allocation8 + $0x850] sm:$0xff]
        %v4493 = vld [vmem:[#allocation8 + $0x858] sm:$0xff]
        %v4494 = vld [vmem:[#allocation8 + $0x860] sm:$0xff]
        %v4495 = vld [vmem:[#allocation8 + $0x868] sm:$0xff]
        %v4496 = vld [vmem:[#allocation8 + $0x870] sm:$0xff]
        %v4497 = vld [vmem:[#allocation8 + $0x878] sm:$0xff]
        %v4498 = vld [vmem:[#allocation8 + $0x880] sm:$0xff]
        %v4499 = vld [vmem:[#allocation8 + $0x888] sm:$0xff]
        %v4500 = vld [vmem:[#allocation8 + $0x890] sm:$0xff]
        %v4501 = vld [vmem:[#allocation8 + $0x898] sm:$0xff]
        %v4502 = vld [vmem:[#allocation8 + $0x8a0] sm:$0xff]
        %v4503 = vld [vmem:[#allocation8 + $0x8a8] sm:$0xff]
        %v4504 = vld [vmem:[#allocation8 + $0x8b0] sm:$0xff]
        %v4505 = vld [vmem:[#allocation8 + $0x8b8] sm:$0xff]
        %v4506 = vld [vmem:[#allocation8 + $0x8c0] sm:$0xff]
        %v4507 = vld [vmem:[#allocation8 + $0x8c8] sm:$0xff]
        %v4508 = vld [vmem:[#allocation8 + $0x8d0] sm:$0xff]
        %v4509 = vld [vmem:[#allocation8 + $0x8d8] sm:$0xff]
        %v4510 = vld [vmem:[#allocation8 + $0x8e0] sm:$0xff]
        %v4511 = vld [vmem:[#allocation8 + $0x8e8] sm:$0xff]
        %v4512 = vld [vmem:[#allocation8 + $0x8f0] sm:$0xff]
        %v4513 = vld [vmem:[#allocation8 + $0x8f8] sm:$0xff]
        %v4514 = vld [vmem:[#allocation8 + $0x900] sm:$0xff]
        %v4515 = vld [vmem:[#allocation8 + $0x908] sm:$0xff]
        %v4516 = vld [vmem:[#allocation8 + $0x910] sm:$0xff]
        %v4517 = vld [vmem:[#allocation8 + $0x918] sm:$0xff]
        %v4518 = vld [vmem:[#allocation8 + $0x920] sm:$0xff]
        %v4519 = vld [vmem:[#allocation8 + $0x928] sm:$0xff]
        %v4520 = vld [vmem:[#allocation8 + $0x930] sm:$0xff]
        %v4521 = vld [vmem:[#allocation8 + $0x938] sm:$0xff]
        %v4522 = vld [vmem:[#allocation8 + $0x940] sm:$0xff]
        %v4523 = vld [vmem:[#allocation8 + $0x948] sm:$0xff]
        %v4524 = vld [vmem:[#allocation8 + $0x950] sm:$0xff]
        %v4525 = vld [vmem:[#allocation8 + $0x958] sm:$0xff]
        %v4526 = vld [vmem:[#allocation8 + $0x960] sm:$0xff]
        %v4527 = vld [vmem:[#allocation8 + $0x968] sm:$0xff]
        %v4528 = vld [vmem:[#allocation8 + $0x970] sm:$0xff]
        %v4529 = vld [vmem:[#allocation8 + $0x978] sm:$0xff]
        %v4530 = vld [vmem:[#allocation8 + $0x980] sm:$0xff]
        %v4531 = vld [vmem:[#allocation8 + $0x988] sm:$0xff]
        %v4532 = vld [vmem:[#allocation8 + $0x990] sm:$0xff]
        %v4533 = vld [vmem:[#allocation8 + $0x998] sm:$0xff]
        %v4534 = vld [vmem:[#allocation8 + $0x9a0] sm:$0xff]
        %v4535 = vld [vmem:[#allocation8 + $0x9a8] sm:$0xff]
        %v4536 = vld [vmem:[#allocation8 + $0x9b0] sm:$0xff]
        %v4537 = vld [vmem:[#allocation8 + $0x9b8] sm:$0xff]
        %v4538 = vld [vmem:[#allocation8 + $0x9c0] sm:$0xff]
        %v4539 = vld [vmem:[#allocation8 + $0x9c8] sm:$0xff]
        %v4540 = vld [vmem:[#allocation8 + $0x9d0] sm:$0xff]
        %v4541 = vld [vmem:[#allocation8 + $0x9d8] sm:$0xff]
        %v4542 = vld [vmem:[#allocation8 + $0x9e0] sm:$0xff]
        %v4543 = vld [vmem:[#allocation8 + $0x9e8] sm:$0xff]
        %v4544 = vld [vmem:[#allocation8 + $0x9f0] sm:$0xff]
        %v4545 = vld [vmem:[#allocation8 + $0x9f8] sm:$0xff]
        %v4546 = vld [vmem:[#allocation8 + $0xa00] sm:$0xff]
        %v4547 = vld [vmem:[#allocation8 + $0xa08] sm:$0xff]
        %v4548 = vld [vmem:[#allocation8 + $0xa10] sm:$0xff]
        %v4549 = vld [vmem:[#allocation8 + $0xa18] sm:$0xff]
        %v4550 = vld [vmem:[#allocation8 + $0xa20] sm:$0xff]
        %v4551 = vld [vmem:[#allocation8 + $0xa28] sm:$0xff]
        %v4552 = vld [vmem:[#allocation8 + $0xa30] sm:$0xff]
        %v4553 = vld [vmem:[#allocation8 + $0xa38] sm:$0xff]
        %v4554 = vld [vmem:[#allocation8 + $0xa40] sm:$0xff]
        %v4555 = vld [vmem:[#allocation8 + $0xa48] sm:$0xff]
        %v4556 = vld [vmem:[#allocation8 + $0xa50] sm:$0xff]
        %v4557 = vld [vmem:[#allocation8 + $0xa58] sm:$0xff]
        %v4558 = vld [vmem:[#allocation8 + $0xa60] sm:$0xff]
        %v4559 = vld [vmem:[#allocation8 + $0xa68] sm:$0xff]
        %v4560 = vld [vmem:[#allocation8 + $0xa70] sm:$0xff]
        %v4561 = vld [vmem:[#allocation8 + $0xa78] sm:$0xff]
        %v4562 = vld [vmem:[#allocation8 + $0xa80] sm:$0xff]
        %v4563 = vld [vmem:[#allocation8 + $0xa88] sm:$0xff]
        %v4564 = vld [vmem:[#allocation8 + $0xa90] sm:$0xff]
        %v4565 = vld [vmem:[#allocation8 + $0xa98] sm:$0xff]
        %v4566 = vld [vmem:[#allocation8 + $0xaa0] sm:$0xff]
        %v4567 = vld [vmem:[#allocation8 + $0xaa8] sm:$0xff]
        %v4568 = vld [vmem:[#allocation8 + $0xab0] sm:$0xff]
        %v4569 = vld [vmem:[#allocation8 + $0xab8] sm:$0xff]
        %v4570 = vld [vmem:[#allocation8 + $0xac0] sm:$0xff]
        %v4571 = vld [vmem:[#allocation8 + $0xac8] sm:$0xff]
        %v4572 = vld [vmem:[#allocation8 + $0xad0] sm:$0xff]
        %v4573 = vld [vmem:[#allocation8 + $0xad8] sm:$0xff]
        %v4574 = vld [vmem:[#allocation8 + $0xae0] sm:$0xff]
        %v4575 = vld [vmem:[#allocation8 + $0xae8] sm:$0xff]
        %v4576 = vld [vmem:[#allocation8 + $0xaf0] sm:$0xff]
        %v4577 = vld [vmem:[#allocation8 + $0xaf8] sm:$0xff]
        %v4578 = vld [vmem:[#allocation8 + $0xb00] sm:$0xff]
        %v4579 = vld [vmem:[#allocation8 + $0xb08] sm:$0xff]
        %v4580 = vld [vmem:[#allocation8 + $0xb10] sm:$0xff]
        %v4581 = vld [vmem:[#allocation8 + $0xb18] sm:$0xff]
        %v4582 = vld [vmem:[#allocation8 + $0xb20] sm:$0xff]
        %v4583 = vld [vmem:[#allocation8 + $0xb28] sm:$0xff]
        %v4584 = vld [vmem:[#allocation8 + $0xb30] sm:$0xff]
        %v4585 = vld [vmem:[#allocation8 + $0xb38] sm:$0xff]
        %v4586 = vld [vmem:[#allocation8 + $0xb40] sm:$0xff]
        %v4587 = vld [vmem:[#allocation8 + $0xb48] sm:$0xff]
        %v4588 = vld [vmem:[#allocation8 + $0xb50] sm:$0xff]
        %v4589 = vld [vmem:[#allocation8 + $0xb58] sm:$0xff]
        %v4590 = vld [vmem:[#allocation8 + $0xb60] sm:$0xff]
        %v4591 = vld [vmem:[#allocation8 + $0xb68] sm:$0xff]
        %v4592 = vld [vmem:[#allocation8 + $0xb70] sm:$0xff]
        %v4593 = vld [vmem:[#allocation8 + $0xb78] sm:$0xff]
        %v4594 = vld [vmem:[#allocation8 + $0xb80] sm:$0xff]
        %v4595 = vld [vmem:[#allocation8 + $0xb88] sm:$0xff]
        %v4596 = vld [vmem:[#allocation8 + $0xb90] sm:$0xff]
        %v4597 = vld [vmem:[#allocation8 + $0xb98] sm:$0xff]
        %v4598 = vld [vmem:[#allocation8 + $0xba0] sm:$0xff]
        %v4599 = vld [vmem:[#allocation8 + $0xba8] sm:$0xff]
        %v4600 = vld [vmem:[#allocation8 + $0xbb0] sm:$0xff]
        %v4601 = vld [vmem:[#allocation8 + $0xbb8] sm:$0xff]
        %v4602 = vld [vmem:[#allocation8 + $0xbc0] sm:$0xff]
        %v4603 = vld [vmem:[#allocation8 + $0xbc8] sm:$0xff]
        %v4604 = vld [vmem:[#allocation8 + $0xbd0] sm:$0xff]
        %v4605 = vld [vmem:[#allocation8 + $0xbd8] sm:$0xff]
        %v4606 = vld [vmem:[#allocation8 + $0xbe0] sm:$0xff]
        %v4607 = vld [vmem:[#allocation8 + $0xbe8] sm:$0xff]
        %v4608 = vld [vmem:[#allocation8 + $0xbf0] sm:$0xff]
        %v4609 = vld [vmem:[#allocation8 + $0xbf8] sm:$0xff]
        %v4610 = vld [vmem:[#allocation8 + $0xc00] sm:$0xff]
        %v4611 = vld [vmem:[#allocation8 + $0xc08] sm:$0xff]
        %v4612 = vld [vmem:[#allocation8 + $0xc10] sm:$0xff]
        %v4613 = vld [vmem:[#allocation8 + $0xc18] sm:$0xff]
        %v4614 = vld [vmem:[#allocation8 + $0xc20] sm:$0xff]
        %v4615 = vld [vmem:[#allocation8 + $0xc28] sm:$0xff]
        %v4616 = vld [vmem:[#allocation8 + $0xc30] sm:$0xff]
        %v4617 = vld [vmem:[#allocation8 + $0xc38] sm:$0xff]
        %v4618 = vld [vmem:[#allocation8 + $0xc40] sm:$0xff]
        %v4619 = vld [vmem:[#allocation8 + $0xc48] sm:$0xff]
        %v4620 = vld [vmem:[#allocation8 + $0xc50] sm:$0xff]
        %v4621 = vld [vmem:[#allocation8 + $0xc58] sm:$0xff]
        %v4622 = vld [vmem:[#allocation8 + $0xc60] sm:$0xff]
        %v4623 = vld [vmem:[#allocation8 + $0xc68] sm:$0xff]
        %v4624 = vld [vmem:[#allocation8 + $0xc70] sm:$0xff]
        %v4625 = vld [vmem:[#allocation8 + $0xc78] sm:$0xff]
        %v4626 = vld [vmem:[#allocation8 + $0xc80] sm:$0xff]
        %v4627 = vld [vmem:[#allocation8 + $0xc88] sm:$0xff]
        %v4628 = vld [vmem:[#allocation8 + $0xc90] sm:$0xff]
        %v4629 = vld [vmem:[#allocation8 + $0xc98] sm:$0xff]
        %v4630 = vld [vmem:[#allocation8 + $0xca0] sm:$0xff]
        %v4631 = vld [vmem:[#allocation8 + $0xca8] sm:$0xff]
        %v4632 = vld [vmem:[#allocation8 + $0xcb0] sm:$0xff]
        %v4633 = vld [vmem:[#allocation8 + $0xcb8] sm:$0xff]
        %v4634 = vld [vmem:[#allocation8 + $0xcc0] sm:$0xff]
        %v4635 = vld [vmem:[#allocation8 + $0xcc8] sm:$0xff]
        %v4636 = vld [vmem:[#allocation8 + $0xcd0] sm:$0xff]
        %v4637 = vld [vmem:[#allocation8 + $0xcd8] sm:$0xff]
        %v4638 = vld [vmem:[#allocation8 + $0xce0] sm:$0xff]
        %v4639 = vld [vmem:[#allocation8 + $0xce8] sm:$0xff]
        %v4640 = vld [vmem:[#allocation8 + $0xcf0] sm:$0xff]
        %v4641 = vld [vmem:[#allocation8 + $0xcf8] sm:$0xff]
        %v4642 = vld [vmem:[#allocation8 + $0xd00] sm:$0xff]
        %v4643 = vld [vmem:[#allocation8 + $0xd08] sm:$0xff]
        %v4644 = vld [vmem:[#allocation8 + $0xd10] sm:$0xff]
        %v4645 = vld [vmem:[#allocation8 + $0xd18] sm:$0xff]
        %v4646 = vld [vmem:[#allocation8 + $0xd20] sm:$0xff]
        %v4647 = vld [vmem:[#allocation8 + $0xd28] sm:$0xff]
        %v4648 = vld [vmem:[#allocation8 + $0xd30] sm:$0xff]
        %v4649 = vld [vmem:[#allocation8 + $0xd38] sm:$0xff]
        %v4650 = vld [vmem:[#allocation8 + $0xd40] sm:$0xff]
        %v4651 = vld [vmem:[#allocation8 + $0xd48] sm:$0xff]
        %v4652 = vld [vmem:[#allocation8 + $0xd50] sm:$0xff]
        %v4653 = vld [vmem:[#allocation8 + $0xd58] sm:$0xff]
        %v4654 = vld [vmem:[#allocation8 + $0xd60] sm:$0xff]
        %v4655 = vld [vmem:[#allocation8 + $0xd68] sm:$0xff]
        %v4656 = vld [vmem:[#allocation8 + $0xd70] sm:$0xff]
        %v4657 = vld [vmem:[#allocation8 + $0xd78] sm:$0xff]
        %v4658 = vld [vmem:[#allocation8 + $0xd80] sm:$0xff]
        %v4659 = vld [vmem:[#allocation8 + $0xd88] sm:$0xff]
        %v4660 = vld [vmem:[#allocation8 + $0xd90] sm:$0xff]
        %v4661 = vld [vmem:[#allocation8 + $0xd98] sm:$0xff]
        %v4662 = vld [vmem:[#allocation8 + $0xda0] sm:$0xff]
        %v4663 = vld [vmem:[#allocation8 + $0xda8] sm:$0xff]
        %v4664 = vld [vmem:[#allocation8 + $0xdb0] sm:$0xff]
        %v4665 = vld [vmem:[#allocation8 + $0xdb8] sm:$0xff]
        %v4666 = vld [vmem:[#allocation8 + $0xdc0] sm:$0xff]
        %v4667 = vld [vmem:[#allocation8 + $0xdc8] sm:$0xff]
        %v4668 = vld [vmem:[#allocation8 + $0xdd0] sm:$0xff]
        %v4669 = vld [vmem:[#allocation8 + $0xdd8] sm:$0xff]
        %v4670 = vld [vmem:[#allocation8 + $0xde0] sm:$0xff]
        %v4671 = vld [vmem:[#allocation8 + $0xde8] sm:$0xff]
        %v4672 = vld [vmem:[#allocation8 + $0xdf0] sm:$0xff]
        %v4673 = vld [vmem:[#allocation8 + $0xdf8] sm:$0xff]
        %v4674 = vld [vmem:[#allocation8 + $0xe00] sm:$0xff]
        %v4675 = vld [vmem:[#allocation8 + $0xe08] sm:$0xff]
        %v4676 = vld [vmem:[#allocation8 + $0xe10] sm:$0xff]
        %v4677 = vld [vmem:[#allocation8 + $0xe18] sm:$0xff]
        %v4678 = vld [vmem:[#allocation8 + $0xe20] sm:$0xff]
        %v4679 = vld [vmem:[#allocation8 + $0xe28] sm:$0xff]
        %v4680 = vld [vmem:[#allocation8 + $0xe30] sm:$0xff]
        %v4681 = vld [vmem:[#allocation8 + $0xe38] sm:$0xff]
        %v4682 = vld [vmem:[#allocation8 + $0xe40] sm:$0xff]
        %v4683 = vld [vmem:[#allocation8 + $0xe48] sm:$0xff]
        %v4684 = vld [vmem:[#allocation8 + $0xe50] sm:$0xff]
        %v4685 = vld [vmem:[#allocation8 + $0xe58] sm:$0xff]
        %v4686 = vld [vmem:[#allocation8 + $0xe60] sm:$0xff]
        %v4687 = vld [vmem:[#allocation8 + $0xe68] sm:$0xff]
        %v4688 = vld [vmem:[#allocation8 + $0xe70] sm:$0xff]
        %v4689 = vld [vmem:[#allocation8 + $0xe78] sm:$0xff]
        %v4690 = vld [vmem:[#allocation8 + $0xe80] sm:$0xff]
        %v4691 = vld [vmem:[#allocation8 + $0xe88] sm:$0xff]
        %v4692 = vld [vmem:[#allocation8 + $0xe90] sm:$0xff]
        %v4693 = vld [vmem:[#allocation8 + $0xe98] sm:$0xff]
        %v4694 = vld [vmem:[#allocation8 + $0xea0] sm:$0xff]
        %v4695 = vld [vmem:[#allocation8 + $0xea8] sm:$0xff]
        %v4696 = vld [vmem:[#allocation8 + $0xeb0] sm:$0xff]
        %v4697 = vld [vmem:[#allocation8 + $0xeb8] sm:$0xff]
        %v4698 = vld [vmem:[#allocation8 + $0xec0] sm:$0xff]
        %v4699 = vld [vmem:[#allocation8 + $0xec8] sm:$0xff]
        %v4700 = vld [vmem:[#allocation8 + $0xed0] sm:$0xff]
        %v4701 = vld [vmem:[#allocation8 + $0xed8] sm:$0xff]
        %v4702 = vld [vmem:[#allocation8 + $0xee0] sm:$0xff]
        %v4703 = vld [vmem:[#allocation8 + $0xee8] sm:$0xff]
        %v4704 = vld [vmem:[#allocation8 + $0xef0] sm:$0xff]
        %v4705 = vld [vmem:[#allocation8 + $0xef8] sm:$0xff]
        %v4706 = vld [vmem:[#allocation8 + $0xf00] sm:$0xff]
        %v4707 = vld [vmem:[#allocation8 + $0xf08] sm:$0xff]
        %v4708 = vld [vmem:[#allocation8 + $0xf10] sm:$0xff]
        %v4709 = vld [vmem:[#allocation8 + $0xf18] sm:$0xff]
        %v4710 = vld [vmem:[#allocation8 + $0xf20] sm:$0xff]
        %v4711 = vld [vmem:[#allocation8 + $0xf28] sm:$0xff]
        %v4712 = vld [vmem:[#allocation8 + $0xf30] sm:$0xff]
        %v4713 = vld [vmem:[#allocation8 + $0xf38] sm:$0xff]
        %v4714 = vld [vmem:[#allocation8 + $0xf40] sm:$0xff]
        %v4715 = vld [vmem:[#allocation8 + $0xf48] sm:$0xff]
        %v4716 = vld [vmem:[#allocation8 + $0xf50] sm:$0xff]
        %v4717 = vld [vmem:[#allocation8 + $0xf58] sm:$0xff]
        %v4718 = vld [vmem:[#allocation8 + $0xf60] sm:$0xff]
        %v4719 = vld [vmem:[#allocation8 + $0xf68] sm:$0xff]
        %v4720 = vld [vmem:[#allocation8 + $0xf70] sm:$0xff]
        %v4721 = vld [vmem:[#allocation8 + $0xf78] sm:$0xff]
        %v4722 = vld [vmem:[#allocation8 + $0xf80] sm:$0xff]
        %v4723 = vld [vmem:[#allocation8 + $0xf88] sm:$0xff]
        %v4724 = vld [vmem:[#allocation8 + $0xf90] sm:$0xff]
        %v4725 = vld [vmem:[#allocation8 + $0xf98] sm:$0xff]
        %v4726 = vld [vmem:[#allocation8 + $0xfa0] sm:$0xff]
        %v4727 = vld [vmem:[#allocation8 + $0xfa8] sm:$0xff]
        %v4728 = vld [vmem:[#allocation8 + $0xfb0] sm:$0xff]
        %v4729 = vld [vmem:[#allocation8 + $0xfb8] sm:$0xff]
        %v4730 = vld [vmem:[#allocation8 + $0xfc0] sm:$0xff]
        %v4731 = vld [vmem:[#allocation8 + $0xfc8] sm:$0xff]
        %v4732 = vld [vmem:[#allocation8 + $0xfd0] sm:$0xff]
        %v4733 = vld [vmem:[#allocation8 + $0xfd8] sm:$0xff]
        %v4734 = vld [vmem:[#allocation8 + $0xfe0] sm:$0xff]
        %v4735 = vld [vmem:[#allocation8 + $0xfe8] sm:$0xff]
        %v4736 = vld [vmem:[#allocation8 + $0xff0] sm:$0xff]
        %v4737 = vld [vmem:[#allocation8 + $0xff8] sm:$0xff]
        %v4738 = vld [vmem:[#allocation10] sm:$0xf]
        %v4740 = vlaneseq
        %v4741 = vshrl.u32 %v4740, 7
        %v4742 = vsub.s32 0, %v4741
        %v4743 = vrot.slane %v4738, %v4742
        %v4744 = vlaneseq
        %v4745 = vshrl.u32 %v4744, 7
        %v4746 = vsub.s32 1, %v4745
        %v4747 = vrot.slane %v4738, %v4746
        %v4748 = vlaneseq
        %v4749 = vshrl.u32 %v4748, 7
        %v4750 = vsub.s32 2, %v4749
        %v4751 = vrot.slane %v4738, %v4750
        %v4752 = vlaneseq
        %v4753 = vshrl.u32 %v4752, 7
        %v4754 = vsub.s32 3, %v4753
        %v4755 = vrot.slane %v4738, %v4754
        %v5272 = vunpack.c.l.b16 %v4226
        %v5273 = vunpack.c.h.b16 %v4226
        %v5274 = vunpack.c.l.b16 %v4227
        %v5275 = vunpack.c.h.b16 %v4227
        %v5276 = vunpack.c.l.b16 %v4228
        %v5277 = vunpack.c.h.b16 %v4228
        %v5278 = vunpack.c.l.b16 %v4229
        %v5279 = vunpack.c.h.b16 %v4229
        %v5280 = vunpack.c.l.b16 %v4230
        %v5281 = vunpack.c.h.b16 %v4230
        %v5282 = vunpack.c.l.b16 %v4231
        %v5283 = vunpack.c.h.b16 %v4231
        %v5284 = vunpack.c.l.b16 %v4232
        %v5285 = vunpack.c.h.b16 %v4232
        %v5286 = vunpack.c.l.b16 %v4233
        %v5287 = vunpack.c.h.b16 %v4233
        %v5288 = vunpack.c.l.b16 %v4234
        %v5289 = vunpack.c.h.b16 %v4234
        %v5290 = vunpack.c.l.b16 %v4235
        %v5291 = vunpack.c.h.b16 %v4235
        %v5292 = vunpack.c.l.b16 %v4236
        %v5293 = vunpack.c.h.b16 %v4236
        %v5294 = vunpack.c.l.b16 %v4237
        %v5295 = vunpack.c.h.b16 %v4237
        %v5296 = vunpack.c.l.b16 %v4238
        %v5297 = vunpack.c.h.b16 %v4238
        %v5298 = vunpack.c.l.b16 %v4239
        %v5299 = vunpack.c.h.b16 %v4239
        %v5300 = vunpack.c.l.b16 %v4240
        %v5301 = vunpack.c.h.b16 %v4240
        %v5302 = vunpack.c.l.b16 %v4241
        %v5303 = vunpack.c.h.b16 %v4241
        %v5304 = vunpack.c.l.b16 %v4242
        %v5305 = vunpack.c.h.b16 %v4242
        %v5306 = vunpack.c.l.b16 %v4243
        %v5307 = vunpack.c.h.b16 %v4243
        %v5308 = vunpack.c.l.b16 %v4244
        %v5309 = vunpack.c.h.b16 %v4244
        %v5310 = vunpack.c.l.b16 %v4245
        %v5311 = vunpack.c.h.b16 %v4245
        %v5312 = vunpack.c.l.b16 %v4246
        %v5313 = vunpack.c.h.b16 %v4246
        %v5314 = vunpack.c.l.b16 %v4247
        %v5315 = vunpack.c.h.b16 %v4247
        %v5316 = vunpack.c.l.b16 %v4248
        %v5317 = vunpack.c.h.b16 %v4248
        %v5318 = vunpack.c.l.b16 %v4249
        %v5319 = vunpack.c.h.b16 %v4249
        %v5320 = vunpack.c.l.b16 %v4250
        %v5321 = vunpack.c.h.b16 %v4250
        %v5322 = vunpack.c.l.b16 %v4251
        %v5323 = vunpack.c.h.b16 %v4251
        %v5324 = vunpack.c.l.b16 %v4252
        %v5325 = vunpack.c.h.b16 %v4252
        %v5326 = vunpack.c.l.b16 %v4253
        %v5327 = vunpack.c.h.b16 %v4253
        %v5328 = vunpack.c.l.b16 %v4254
        %v5329 = vunpack.c.h.b16 %v4254
        %v5330 = vunpack.c.l.b16 %v4255
        %v5331 = vunpack.c.h.b16 %v4255
        %v5332 = vunpack.c.l.b16 %v4256
        %v5333 = vunpack.c.h.b16 %v4256
        %v5334 = vunpack.c.l.b16 %v4257
        %v5335 = vunpack.c.h.b16 %v4257
        %v5336 = vunpack.c.l.b16 %v4258
        %v5337 = vunpack.c.h.b16 %v4258
        %v5338 = vunpack.c.l.b16 %v4259
        %v5339 = vunpack.c.h.b16 %v4259
        %v5340 = vunpack.c.l.b16 %v4260
        %v5341 = vunpack.c.h.b16 %v4260
        %v5342 = vunpack.c.l.b16 %v4261
        %v5343 = vunpack.c.h.b16 %v4261
        %v5344 = vunpack.c.l.b16 %v4262
        %v5345 = vunpack.c.h.b16 %v4262
        %v5346 = vunpack.c.l.b16 %v4263
        %v5347 = vunpack.c.h.b16 %v4263
        %v5348 = vunpack.c.l.b16 %v4264
        %v5349 = vunpack.c.h.b16 %v4264
        %v5350 = vunpack.c.l.b16 %v4265
        %v5351 = vunpack.c.h.b16 %v4265
        %v5352 = vunpack.c.l.b16 %v4266
        %v5353 = vunpack.c.h.b16 %v4266
        %v5354 = vunpack.c.l.b16 %v4267
        %v5355 = vunpack.c.h.b16 %v4267
        %v5356 = vunpack.c.l.b16 %v4268
        %v5357 = vunpack.c.h.b16 %v4268
        %v5358 = vunpack.c.l.b16 %v4269
        %v5359 = vunpack.c.h.b16 %v4269
        %v5360 = vunpack.c.l.b16 %v4270
        %v5361 = vunpack.c.h.b16 %v4270
        %v5362 = vunpack.c.l.b16 %v4271
        %v5363 = vunpack.c.h.b16 %v4271
        %v5364 = vunpack.c.l.b16 %v4272
        %v5365 = vunpack.c.h.b16 %v4272
        %v5366 = vunpack.c.l.b16 %v4273
        %v5367 = vunpack.c.h.b16 %v4273
        %v5368 = vunpack.c.l.b16 %v4274
        %v5369 = vunpack.c.h.b16 %v4274
        %v5370 = vunpack.c.l.b16 %v4275
        %v5371 = vunpack.c.h.b16 %v4275
        %v5372 = vunpack.c.l.b16 %v4276
        %v5373 = vunpack.c.h.b16 %v4276
        %v5374 = vunpack.c.l.b16 %v4277
        %v5375 = vunpack.c.h.b16 %v4277
        %v5376 = vunpack.c.l.b16 %v4278
        %v5377 = vunpack.c.h.b16 %v4278
        %v5378 = vunpack.c.l.b16 %v4279
        %v5379 = vunpack.c.h.b16 %v4279
        %v5380 = vunpack.c.l.b16 %v4280
        %v5381 = vunpack.c.h.b16 %v4280
        %v5382 = vunpack.c.l.b16 %v4281
        %v5383 = vunpack.c.h.b16 %v4281
        %v5384 = vunpack.c.l.b16 %v4282
        %v5385 = vunpack.c.h.b16 %v4282
        %v5386 = vunpack.c.l.b16 %v4283
        %v5387 = vunpack.c.h.b16 %v4283
        %v5388 = vunpack.c.l.b16 %v4284
        %v5389 = vunpack.c.h.b16 %v4284
        %v5390 = vunpack.c.l.b16 %v4285
        %v5391 = vunpack.c.h.b16 %v4285
        %v5392 = vunpack.c.l.b16 %v4286
        %v5393 = vunpack.c.h.b16 %v4286
        %v5394 = vunpack.c.l.b16 %v4287
        %v5395 = vunpack.c.h.b16 %v4287
        %v5396 = vunpack.c.l.b16 %v4288
        %v5397 = vunpack.c.h.b16 %v4288
        %v5398 = vunpack.c.l.b16 %v4289
        %v5399 = vunpack.c.h.b16 %v4289
        %v5400 = vunpack.c.l.b16 %v4290
        %v5401 = vunpack.c.h.b16 %v4290
        %v5402 = vunpack.c.l.b16 %v4291
        %v5403 = vunpack.c.h.b16 %v4291
        %v5404 = vunpack.c.l.b16 %v4292
        %v5405 = vunpack.c.h.b16 %v4292
        %v5406 = vunpack.c.l.b16 %v4293
        %v5407 = vunpack.c.h.b16 %v4293
        %v5408 = vunpack.c.l.b16 %v4294
        %v5409 = vunpack.c.h.b16 %v4294
        %v5410 = vunpack.c.l.b16 %v4295
        %v5411 = vunpack.c.h.b16 %v4295
        %v5412 = vunpack.c.l.b16 %v4296
        %v5413 = vunpack.c.h.b16 %v4296
        %v5414 = vunpack.c.l.b16 %v4297
        %v5415 = vunpack.c.h.b16 %v4297
        %v5416 = vunpack.c.l.b16 %v4298
        %v5417 = vunpack.c.h.b16 %v4298
        %v5418 = vunpack.c.l.b16 %v4299
        %v5419 = vunpack.c.h.b16 %v4299
        %v5420 = vunpack.c.l.b16 %v4300
        %v5421 = vunpack.c.h.b16 %v4300
        %v5422 = vunpack.c.l.b16 %v4301
        %v5423 = vunpack.c.h.b16 %v4301
        %v5424 = vunpack.c.l.b16 %v4302
        %v5425 = vunpack.c.h.b16 %v4302
        %v5426 = vunpack.c.l.b16 %v4303
        %v5427 = vunpack.c.h.b16 %v4303
        %v5428 = vunpack.c.l.b16 %v4304
        %v5429 = vunpack.c.h.b16 %v4304
        %v5430 = vunpack.c.l.b16 %v4305
        %v5431 = vunpack.c.h.b16 %v4305
        %v5432 = vunpack.c.l.b16 %v4306
        %v5433 = vunpack.c.h.b16 %v4306
        %v5434 = vunpack.c.l.b16 %v4307
        %v5435 = vunpack.c.h.b16 %v4307
        %v5436 = vunpack.c.l.b16 %v4308
        %v5437 = vunpack.c.h.b16 %v4308
        %v5438 = vunpack.c.l.b16 %v4309
        %v5439 = vunpack.c.h.b16 %v4309
        %v5440 = vunpack.c.l.b16 %v4310
        %v5441 = vunpack.c.h.b16 %v4310
        %v5442 = vunpack.c.l.b16 %v4311
        %v5443 = vunpack.c.h.b16 %v4311
        %v5444 = vunpack.c.l.b16 %v4312
        %v5445 = vunpack.c.h.b16 %v4312
        %v5446 = vunpack.c.l.b16 %v4313
        %v5447 = vunpack.c.h.b16 %v4313
        %v5448 = vunpack.c.l.b16 %v4314
        %v5449 = vunpack.c.h.b16 %v4314
        %v5450 = vunpack.c.l.b16 %v4315
        %v5451 = vunpack.c.h.b16 %v4315
        %v5452 = vunpack.c.l.b16 %v4316
        %v5453 = vunpack.c.h.b16 %v4316
        %v5454 = vunpack.c.l.b16 %v4317
        %v5455 = vunpack.c.h.b16 %v4317
        %v5456 = vunpack.c.l.b16 %v4318
        %v5457 = vunpack.c.h.b16 %v4318
        %v5458 = vunpack.c.l.b16 %v4319
        %v5459 = vunpack.c.h.b16 %v4319
        %v5460 = vunpack.c.l.b16 %v4320
        %v5461 = vunpack.c.h.b16 %v4320
        %v5462 = vunpack.c.l.b16 %v4321
        %v5463 = vunpack.c.h.b16 %v4321
        %v5464 = vunpack.c.l.b16 %v4322
        %v5465 = vunpack.c.h.b16 %v4322
        %v5466 = vunpack.c.l.b16 %v4323
        %v5467 = vunpack.c.h.b16 %v4323
        %v5468 = vunpack.c.l.b16 %v4324
        %v5469 = vunpack.c.h.b16 %v4324
        %v5470 = vunpack.c.l.b16 %v4325
        %v5471 = vunpack.c.h.b16 %v4325
        %v5472 = vunpack.c.l.b16 %v4326
        %v5473 = vunpack.c.h.b16 %v4326
        %v5474 = vunpack.c.l.b16 %v4327
        %v5475 = vunpack.c.h.b16 %v4327
        %v5476 = vunpack.c.l.b16 %v4328
        %v5477 = vunpack.c.h.b16 %v4328
        %v5478 = vunpack.c.l.b16 %v4329
        %v5479 = vunpack.c.h.b16 %v4329
        %v5480 = vunpack.c.l.b16 %v4330
        %v5481 = vunpack.c.h.b16 %v4330
        %v5482 = vunpack.c.l.b16 %v4331
        %v5483 = vunpack.c.h.b16 %v4331
        %v5484 = vunpack.c.l.b16 %v4332
        %v5485 = vunpack.c.h.b16 %v4332
        %v5486 = vunpack.c.l.b16 %v4333
        %v5487 = vunpack.c.h.b16 %v4333
        %v5488 = vunpack.c.l.b16 %v4334
        %v5489 = vunpack.c.h.b16 %v4334
        %v5490 = vunpack.c.l.b16 %v4335
        %v5491 = vunpack.c.h.b16 %v4335
        %v5492 = vunpack.c.l.b16 %v4336
        %v5493 = vunpack.c.h.b16 %v4336
        %v5494 = vunpack.c.l.b16 %v4337
        %v5495 = vunpack.c.h.b16 %v4337
        %v5496 = vunpack.c.l.b16 %v4338
        %v5497 = vunpack.c.h.b16 %v4338
        %v5498 = vunpack.c.l.b16 %v4339
        %v5499 = vunpack.c.h.b16 %v4339
        %v5500 = vunpack.c.l.b16 %v4340
        %v5501 = vunpack.c.h.b16 %v4340
        %v5502 = vunpack.c.l.b16 %v4341
        %v5503 = vunpack.c.h.b16 %v4341
        %v5504 = vunpack.c.l.b16 %v4342
        %v5505 = vunpack.c.h.b16 %v4342
        %v5506 = vunpack.c.l.b16 %v4343
        %v5507 = vunpack.c.h.b16 %v4343
        %v5508 = vunpack.c.l.b16 %v4344
        %v5509 = vunpack.c.h.b16 %v4344
        %v5510 = vunpack.c.l.b16 %v4345
        %v5511 = vunpack.c.h.b16 %v4345
        %v5512 = vunpack.c.l.b16 %v4346
        %v5513 = vunpack.c.h.b16 %v4346
        %v5514 = vunpack.c.l.b16 %v4347
        %v5515 = vunpack.c.h.b16 %v4347
        %v5516 = vunpack.c.l.b16 %v4348
        %v5517 = vunpack.c.h.b16 %v4348
        %v5518 = vunpack.c.l.b16 %v4349
        %v5519 = vunpack.c.h.b16 %v4349
        %v5520 = vunpack.c.l.b16 %v4350
        %v5521 = vunpack.c.h.b16 %v4350
        %v5522 = vunpack.c.l.b16 %v4351
        %v5523 = vunpack.c.h.b16 %v4351
        %v5524 = vunpack.c.l.b16 %v4352
        %v5525 = vunpack.c.h.b16 %v4352
        %v5526 = vunpack.c.l.b16 %v4353
        %v5527 = vunpack.c.h.b16 %v4353
        %v5528 = vunpack.c.l.b16 %v4354
        %v5529 = vunpack.c.h.b16 %v4354
        %v5530 = vunpack.c.l.b16 %v4355
        %v5531 = vunpack.c.h.b16 %v4355
        %v5532 = vunpack.c.l.b16 %v4356
        %v5533 = vunpack.c.h.b16 %v4356
        %v5534 = vunpack.c.l.b16 %v4357
        %v5535 = vunpack.c.h.b16 %v4357
        %v5536 = vunpack.c.l.b16 %v4358
        %v5537 = vunpack.c.h.b16 %v4358
        %v5538 = vunpack.c.l.b16 %v4359
        %v5539 = vunpack.c.h.b16 %v4359
        %v5540 = vunpack.c.l.b16 %v4360
        %v5541 = vunpack.c.h.b16 %v4360
        %v5542 = vunpack.c.l.b16 %v4361
        %v5543 = vunpack.c.h.b16 %v4361
        %v5544 = vunpack.c.l.b16 %v4362
        %v5545 = vunpack.c.h.b16 %v4362
        %v5546 = vunpack.c.l.b16 %v4363
        %v5547 = vunpack.c.h.b16 %v4363
        %v5548 = vunpack.c.l.b16 %v4364
        %v5549 = vunpack.c.h.b16 %v4364
        %v5550 = vunpack.c.l.b16 %v4365
        %v5551 = vunpack.c.h.b16 %v4365
        %v5552 = vunpack.c.l.b16 %v4366
        %v5553 = vunpack.c.h.b16 %v4366
        %v5554 = vunpack.c.l.b16 %v4367
        %v5555 = vunpack.c.h.b16 %v4367
        %v5556 = vunpack.c.l.b16 %v4368
        %v5557 = vunpack.c.h.b16 %v4368
        %v5558 = vunpack.c.l.b16 %v4369
        %v5559 = vunpack.c.h.b16 %v4369
        %v5560 = vunpack.c.l.b16 %v4370
        %v5561 = vunpack.c.h.b16 %v4370
        %v5562 = vunpack.c.l.b16 %v4371
        %v5563 = vunpack.c.h.b16 %v4371
        %v5564 = vunpack.c.l.b16 %v4372
        %v5565 = vunpack.c.h.b16 %v4372
        %v5566 = vunpack.c.l.b16 %v4373
        %v5567 = vunpack.c.h.b16 %v4373
        %v5568 = vunpack.c.l.b16 %v4374
        %v5569 = vunpack.c.h.b16 %v4374
        %v5570 = vunpack.c.l.b16 %v4375
        %v5571 = vunpack.c.h.b16 %v4375
        %v5572 = vunpack.c.l.b16 %v4376
        %v5573 = vunpack.c.h.b16 %v4376
        %v5574 = vunpack.c.l.b16 %v4377
        %v5575 = vunpack.c.h.b16 %v4377
        %v5576 = vunpack.c.l.b16 %v4378
        %v5577 = vunpack.c.h.b16 %v4378
        %v5578 = vunpack.c.l.b16 %v4379
        %v5579 = vunpack.c.h.b16 %v4379
        %v5580 = vunpack.c.l.b16 %v4380
        %v5581 = vunpack.c.h.b16 %v4380
        %v5582 = vunpack.c.l.b16 %v4381
        %v5583 = vunpack.c.h.b16 %v4381
        %v5584 = vunpack.c.l.b16 %v4382
        %v5585 = vunpack.c.h.b16 %v4382
        %v5586 = vunpack.c.l.b16 %v4383
        %v5587 = vunpack.c.h.b16 %v4383
        %v5588 = vunpack.c.l.b16 %v4384
        %v5589 = vunpack.c.h.b16 %v4384
        %v5590 = vunpack.c.l.b16 %v4385
        %v5591 = vunpack.c.h.b16 %v4385
        %v5592 = vunpack.c.l.b16 %v4386
        %v5593 = vunpack.c.h.b16 %v4386
        %v5594 = vunpack.c.l.b16 %v4387
        %v5595 = vunpack.c.h.b16 %v4387
        %v5596 = vunpack.c.l.b16 %v4388
        %v5597 = vunpack.c.h.b16 %v4388
        %v5598 = vunpack.c.l.b16 %v4389
        %v5599 = vunpack.c.h.b16 %v4389
        %v5600 = vunpack.c.l.b16 %v4390
        %v5601 = vunpack.c.h.b16 %v4390
        %v5602 = vunpack.c.l.b16 %v4391
        %v5603 = vunpack.c.h.b16 %v4391
        %v5604 = vunpack.c.l.b16 %v4392
        %v5605 = vunpack.c.h.b16 %v4392
        %v5606 = vunpack.c.l.b16 %v4393
        %v5607 = vunpack.c.h.b16 %v4393
        %v5608 = vunpack.c.l.b16 %v4394
        %v5609 = vunpack.c.h.b16 %v4394
        %v5610 = vunpack.c.l.b16 %v4395
        %v5611 = vunpack.c.h.b16 %v4395
        %v5612 = vunpack.c.l.b16 %v4396
        %v5613 = vunpack.c.h.b16 %v4396
        %v5614 = vunpack.c.l.b16 %v4397
        %v5615 = vunpack.c.h.b16 %v4397
        %v5616 = vunpack.c.l.b16 %v4398
        %v5617 = vunpack.c.h.b16 %v4398
        %v5618 = vunpack.c.l.b16 %v4399
        %v5619 = vunpack.c.h.b16 %v4399
        %v5620 = vunpack.c.l.b16 %v4400
        %v5621 = vunpack.c.h.b16 %v4400
        %v5622 = vunpack.c.l.b16 %v4401
        %v5623 = vunpack.c.h.b16 %v4401
        %v5624 = vunpack.c.l.b16 %v4402
        %v5625 = vunpack.c.h.b16 %v4402
        %v5626 = vunpack.c.l.b16 %v4403
        %v5627 = vunpack.c.h.b16 %v4403
        %v5628 = vunpack.c.l.b16 %v4404
        %v5629 = vunpack.c.h.b16 %v4404
        %v5630 = vunpack.c.l.b16 %v4405
        %v5631 = vunpack.c.h.b16 %v4405
        %v5632 = vunpack.c.l.b16 %v4406
        %v5633 = vunpack.c.h.b16 %v4406
        %v5634 = vunpack.c.l.b16 %v4407
        %v5635 = vunpack.c.h.b16 %v4407
        %v5636 = vunpack.c.l.b16 %v4408
        %v5637 = vunpack.c.h.b16 %v4408
        %v5638 = vunpack.c.l.b16 %v4409
        %v5639 = vunpack.c.h.b16 %v4409
        %v5640 = vunpack.c.l.b16 %v4410
        %v5641 = vunpack.c.h.b16 %v4410
        %v5642 = vunpack.c.l.b16 %v4411
        %v5643 = vunpack.c.h.b16 %v4411
        %v5644 = vunpack.c.l.b16 %v4412
        %v5645 = vunpack.c.h.b16 %v4412
        %v5646 = vunpack.c.l.b16 %v4413
        %v5647 = vunpack.c.h.b16 %v4413
        %v5648 = vunpack.c.l.b16 %v4414
        %v5649 = vunpack.c.h.b16 %v4414
        %v5650 = vunpack.c.l.b16 %v4415
        %v5651 = vunpack.c.h.b16 %v4415
        %v5652 = vunpack.c.l.b16 %v4416
        %v5653 = vunpack.c.h.b16 %v4416
        %v5654 = vunpack.c.l.b16 %v4417
        %v5655 = vunpack.c.h.b16 %v4417
        %v5656 = vunpack.c.l.b16 %v4418
        %v5657 = vunpack.c.h.b16 %v4418
        %v5658 = vunpack.c.l.b16 %v4419
        %v5659 = vunpack.c.h.b16 %v4419
        %v5660 = vunpack.c.l.b16 %v4420
        %v5661 = vunpack.c.h.b16 %v4420
        %v5662 = vunpack.c.l.b16 %v4421
        %v5663 = vunpack.c.h.b16 %v4421
        %v5664 = vunpack.c.l.b16 %v4422
        %v5665 = vunpack.c.h.b16 %v4422
        %v5666 = vunpack.c.l.b16 %v4423
        %v5667 = vunpack.c.h.b16 %v4423
        %v5668 = vunpack.c.l.b16 %v4424
        %v5669 = vunpack.c.h.b16 %v4424
        %v5670 = vunpack.c.l.b16 %v4425
        %v5671 = vunpack.c.h.b16 %v4425
        %v5672 = vunpack.c.l.b16 %v4426
        %v5673 = vunpack.c.h.b16 %v4426
        %v5674 = vunpack.c.l.b16 %v4427
        %v5675 = vunpack.c.h.b16 %v4427
        %v5676 = vunpack.c.l.b16 %v4428
        %v5677 = vunpack.c.h.b16 %v4428
        %v5678 = vunpack.c.l.b16 %v4429
        %v5679 = vunpack.c.h.b16 %v4429
        %v5680 = vunpack.c.l.b16 %v4430
        %v5681 = vunpack.c.h.b16 %v4430
        %v5682 = vunpack.c.l.b16 %v4431
        %v5683 = vunpack.c.h.b16 %v4431
        %v5684 = vunpack.c.l.b16 %v4432
        %v5685 = vunpack.c.h.b16 %v4432
        %v5686 = vunpack.c.l.b16 %v4433
        %v5687 = vunpack.c.h.b16 %v4433
        %v5688 = vunpack.c.l.b16 %v4434
        %v5689 = vunpack.c.h.b16 %v4434
        %v5690 = vunpack.c.l.b16 %v4435
        %v5691 = vunpack.c.h.b16 %v4435
        %v5692 = vunpack.c.l.b16 %v4436
        %v5693 = vunpack.c.h.b16 %v4436
        %v5694 = vunpack.c.l.b16 %v4437
        %v5695 = vunpack.c.h.b16 %v4437
        %v5696 = vunpack.c.l.b16 %v4438
        %v5697 = vunpack.c.h.b16 %v4438
        %v5698 = vunpack.c.l.b16 %v4439
        %v5699 = vunpack.c.h.b16 %v4439
        %v5700 = vunpack.c.l.b16 %v4440
        %v5701 = vunpack.c.h.b16 %v4440
        %v5702 = vunpack.c.l.b16 %v4441
        %v5703 = vunpack.c.h.b16 %v4441
        %v5704 = vunpack.c.l.b16 %v4442
        %v5705 = vunpack.c.h.b16 %v4442
        %v5706 = vunpack.c.l.b16 %v4443
        %v5707 = vunpack.c.h.b16 %v4443
        %v5708 = vunpack.c.l.b16 %v4444
        %v5709 = vunpack.c.h.b16 %v4444
        %v5710 = vunpack.c.l.b16 %v4445
        %v5711 = vunpack.c.h.b16 %v4445
        %v5712 = vunpack.c.l.b16 %v4446
        %v5713 = vunpack.c.h.b16 %v4446
        %v5714 = vunpack.c.l.b16 %v4447
        %v5715 = vunpack.c.h.b16 %v4447
        %v5716 = vunpack.c.l.b16 %v4448
        %v5717 = vunpack.c.h.b16 %v4448
        %v5718 = vunpack.c.l.b16 %v4449
        %v5719 = vunpack.c.h.b16 %v4449
        %v5720 = vunpack.c.l.b16 %v4450
        %v5721 = vunpack.c.h.b16 %v4450
        %v5722 = vunpack.c.l.b16 %v4451
        %v5723 = vunpack.c.h.b16 %v4451
        %v5724 = vunpack.c.l.b16 %v4452
        %v5725 = vunpack.c.h.b16 %v4452
        %v5726 = vunpack.c.l.b16 %v4453
        %v5727 = vunpack.c.h.b16 %v4453
        %v5728 = vunpack.c.l.b16 %v4454
        %v5729 = vunpack.c.h.b16 %v4454
        %v5730 = vunpack.c.l.b16 %v4455
        %v5731 = vunpack.c.h.b16 %v4455
        %v5732 = vunpack.c.l.b16 %v4456
        %v5733 = vunpack.c.h.b16 %v4456
        %v5734 = vunpack.c.l.b16 %v4457
        %v5735 = vunpack.c.h.b16 %v4457
        %v5736 = vunpack.c.l.b16 %v4458
        %v5737 = vunpack.c.h.b16 %v4458
        %v5738 = vunpack.c.l.b16 %v4459
        %v5739 = vunpack.c.h.b16 %v4459
        %v5740 = vunpack.c.l.b16 %v4460
        %v5741 = vunpack.c.h.b16 %v4460
        %v5742 = vunpack.c.l.b16 %v4461
        %v5743 = vunpack.c.h.b16 %v4461
        %v5744 = vunpack.c.l.b16 %v4462
        %v5745 = vunpack.c.h.b16 %v4462
        %v5746 = vunpack.c.l.b16 %v4463
        %v5747 = vunpack.c.h.b16 %v4463
        %v5748 = vunpack.c.l.b16 %v4464
        %v5749 = vunpack.c.h.b16 %v4464
        %v5750 = vunpack.c.l.b16 %v4465
        %v5751 = vunpack.c.h.b16 %v4465
        %v5752 = vunpack.c.l.b16 %v4466
        %v5753 = vunpack.c.h.b16 %v4466
        %v5754 = vunpack.c.l.b16 %v4467
        %v5755 = vunpack.c.h.b16 %v4467
        %v5756 = vunpack.c.l.b16 %v4468
        %v5757 = vunpack.c.h.b16 %v4468
        %v5758 = vunpack.c.l.b16 %v4469
        %v5759 = vunpack.c.h.b16 %v4469
        %v5760 = vunpack.c.l.b16 %v4470
        %v5761 = vunpack.c.h.b16 %v4470
        %v5762 = vunpack.c.l.b16 %v4471
        %v5763 = vunpack.c.h.b16 %v4471
        %v5764 = vunpack.c.l.b16 %v4472
        %v5765 = vunpack.c.h.b16 %v4472
        %v5766 = vunpack.c.l.b16 %v4473
        %v5767 = vunpack.c.h.b16 %v4473
        %v5768 = vunpack.c.l.b16 %v4474
        %v5769 = vunpack.c.h.b16 %v4474
        %v5770 = vunpack.c.l.b16 %v4475
        %v5771 = vunpack.c.h.b16 %v4475
        %v5772 = vunpack.c.l.b16 %v4476
        %v5773 = vunpack.c.h.b16 %v4476
        %v5774 = vunpack.c.l.b16 %v4477
        %v5775 = vunpack.c.h.b16 %v4477
        %v5776 = vunpack.c.l.b16 %v4478
        %v5777 = vunpack.c.h.b16 %v4478
        %v5778 = vunpack.c.l.b16 %v4479
        %v5779 = vunpack.c.h.b16 %v4479
        %v5780 = vunpack.c.l.b16 %v4480
        %v5781 = vunpack.c.h.b16 %v4480
        %v5782 = vunpack.c.l.b16 %v4481
        %v5783 = vunpack.c.h.b16 %v4481
        %v5784 = vunpack.c.l.b16 %v4482
        %v5785 = vunpack.c.h.b16 %v4482
        %v5786 = vunpack.c.l.b16 %v4483
        %v5787 = vunpack.c.h.b16 %v4483
        %v5788 = vunpack.c.l.b16 %v4484
        %v5789 = vunpack.c.h.b16 %v4484
        %v5790 = vunpack.c.l.b16 %v4485
        %v5791 = vunpack.c.h.b16 %v4485
        %v5792 = vunpack.c.l.b16 %v4486
        %v5793 = vunpack.c.h.b16 %v4486
        %v5794 = vunpack.c.l.b16 %v4487
        %v5795 = vunpack.c.h.b16 %v4487
        %v5796 = vunpack.c.l.b16 %v4488
        %v5797 = vunpack.c.h.b16 %v4488
        %v5798 = vunpack.c.l.b16 %v4489
        %v5799 = vunpack.c.h.b16 %v4489
        %v5800 = vunpack.c.l.b16 %v4490
        %v5801 = vunpack.c.h.b16 %v4490
        %v5802 = vunpack.c.l.b16 %v4491
        %v5803 = vunpack.c.h.b16 %v4491
        %v5804 = vunpack.c.l.b16 %v4492
        %v5805 = vunpack.c.h.b16 %v4492
        %v5806 = vunpack.c.l.b16 %v4493
        %v5807 = vunpack.c.h.b16 %v4493
        %v5808 = vunpack.c.l.b16 %v4494
        %v5809 = vunpack.c.h.b16 %v4494
        %v5810 = vunpack.c.l.b16 %v4495
        %v5811 = vunpack.c.h.b16 %v4495
        %v5812 = vunpack.c.l.b16 %v4496
        %v5813 = vunpack.c.h.b16 %v4496
        %v5814 = vunpack.c.l.b16 %v4497
        %v5815 = vunpack.c.h.b16 %v4497
        %v5816 = vunpack.c.l.b16 %v4498
        %v5817 = vunpack.c.h.b16 %v4498
        %v5818 = vunpack.c.l.b16 %v4499
        %v5819 = vunpack.c.h.b16 %v4499
        %v5820 = vunpack.c.l.b16 %v4500
        %v5821 = vunpack.c.h.b16 %v4500
        %v5822 = vunpack.c.l.b16 %v4501
        %v5823 = vunpack.c.h.b16 %v4501
        %v5824 = vunpack.c.l.b16 %v4502
        %v5825 = vunpack.c.h.b16 %v4502
        %v5826 = vunpack.c.l.b16 %v4503
        %v5827 = vunpack.c.h.b16 %v4503
        %v5828 = vunpack.c.l.b16 %v4504
        %v5829 = vunpack.c.h.b16 %v4504
        %v5830 = vunpack.c.l.b16 %v4505
        %v5831 = vunpack.c.h.b16 %v4505
        %v5832 = vunpack.c.l.b16 %v4506
        %v5833 = vunpack.c.h.b16 %v4506
        %v5834 = vunpack.c.l.b16 %v4507
        %v5835 = vunpack.c.h.b16 %v4507
        %v5836 = vunpack.c.l.b16 %v4508
        %v5837 = vunpack.c.h.b16 %v4508
        %v5838 = vunpack.c.l.b16 %v4509
        %v5839 = vunpack.c.h.b16 %v4509
        %v5840 = vunpack.c.l.b16 %v4510
        %v5841 = vunpack.c.h.b16 %v4510
        %v5842 = vunpack.c.l.b16 %v4511
        %v5843 = vunpack.c.h.b16 %v4511
        %v5844 = vunpack.c.l.b16 %v4512
        %v5845 = vunpack.c.h.b16 %v4512
        %v5846 = vunpack.c.l.b16 %v4513
        %v5847 = vunpack.c.h.b16 %v4513
        %v5848 = vunpack.c.l.b16 %v4514
        %v5849 = vunpack.c.h.b16 %v4514
        %v5850 = vunpack.c.l.b16 %v4515
        %v5851 = vunpack.c.h.b16 %v4515
        %v5852 = vunpack.c.l.b16 %v4516
        %v5853 = vunpack.c.h.b16 %v4516
        %v5854 = vunpack.c.l.b16 %v4517
        %v5855 = vunpack.c.h.b16 %v4517
        %v5856 = vunpack.c.l.b16 %v4518
        %v5857 = vunpack.c.h.b16 %v4518
        %v5858 = vunpack.c.l.b16 %v4519
        %v5859 = vunpack.c.h.b16 %v4519
        %v5860 = vunpack.c.l.b16 %v4520
        %v5861 = vunpack.c.h.b16 %v4520
        %v5862 = vunpack.c.l.b16 %v4521
        %v5863 = vunpack.c.h.b16 %v4521
        %v5864 = vunpack.c.l.b16 %v4522
        %v5865 = vunpack.c.h.b16 %v4522
        %v5866 = vunpack.c.l.b16 %v4523
        %v5867 = vunpack.c.h.b16 %v4523
        %v5868 = vunpack.c.l.b16 %v4524
        %v5869 = vunpack.c.h.b16 %v4524
        %v5870 = vunpack.c.l.b16 %v4525
        %v5871 = vunpack.c.h.b16 %v4525
        %v5872 = vunpack.c.l.b16 %v4526
        %v5873 = vunpack.c.h.b16 %v4526
        %v5874 = vunpack.c.l.b16 %v4527
        %v5875 = vunpack.c.h.b16 %v4527
        %v5876 = vunpack.c.l.b16 %v4528
        %v5877 = vunpack.c.h.b16 %v4528
        %v5878 = vunpack.c.l.b16 %v4529
        %v5879 = vunpack.c.h.b16 %v4529
        %v5880 = vunpack.c.l.b16 %v4530
        %v5881 = vunpack.c.h.b16 %v4530
        %v5882 = vunpack.c.l.b16 %v4531
        %v5883 = vunpack.c.h.b16 %v4531
        %v5884 = vunpack.c.l.b16 %v4532
        %v5885 = vunpack.c.h.b16 %v4532
        %v5886 = vunpack.c.l.b16 %v4533
        %v5887 = vunpack.c.h.b16 %v4533
        %v5888 = vunpack.c.l.b16 %v4534
        %v5889 = vunpack.c.h.b16 %v4534
        %v5890 = vunpack.c.l.b16 %v4535
        %v5891 = vunpack.c.h.b16 %v4535
        %v5892 = vunpack.c.l.b16 %v4536
        %v5893 = vunpack.c.h.b16 %v4536
        %v5894 = vunpack.c.l.b16 %v4537
        %v5895 = vunpack.c.h.b16 %v4537
        %v5896 = vunpack.c.l.b16 %v4538
        %v5897 = vunpack.c.h.b16 %v4538
        %v5898 = vunpack.c.l.b16 %v4539
        %v5899 = vunpack.c.h.b16 %v4539
        %v5900 = vunpack.c.l.b16 %v4540
        %v5901 = vunpack.c.h.b16 %v4540
        %v5902 = vunpack.c.l.b16 %v4541
        %v5903 = vunpack.c.h.b16 %v4541
        %v5904 = vunpack.c.l.b16 %v4542
        %v5905 = vunpack.c.h.b16 %v4542
        %v5906 = vunpack.c.l.b16 %v4543
        %v5907 = vunpack.c.h.b16 %v4543
        %v5908 = vunpack.c.l.b16 %v4544
        %v5909 = vunpack.c.h.b16 %v4544
        %v5910 = vunpack.c.l.b16 %v4545
        %v5911 = vunpack.c.h.b16 %v4545
        %v5912 = vunpack.c.l.b16 %v4546
        %v5913 = vunpack.c.h.b16 %v4546
        %v5914 = vunpack.c.l.b16 %v4547
        %v5915 = vunpack.c.h.b16 %v4547
        %v5916 = vunpack.c.l.b16 %v4548
        %v5917 = vunpack.c.h.b16 %v4548
        %v5918 = vunpack.c.l.b16 %v4549
        %v5919 = vunpack.c.h.b16 %v4549
        %v5920 = vunpack.c.l.b16 %v4550
        %v5921 = vunpack.c.h.b16 %v4550
        %v5922 = vunpack.c.l.b16 %v4551
        %v5923 = vunpack.c.h.b16 %v4551
        %v5924 = vunpack.c.l.b16 %v4552
        %v5925 = vunpack.c.h.b16 %v4552
        %v5926 = vunpack.c.l.b16 %v4553
        %v5927 = vunpack.c.h.b16 %v4553
        %v5928 = vunpack.c.l.b16 %v4554
        %v5929 = vunpack.c.h.b16 %v4554
        %v5930 = vunpack.c.l.b16 %v4555
        %v5931 = vunpack.c.h.b16 %v4555
        %v5932 = vunpack.c.l.b16 %v4556
        %v5933 = vunpack.c.h.b16 %v4556
        %v5934 = vunpack.c.l.b16 %v4557
        %v5935 = vunpack.c.h.b16 %v4557
        %v5936 = vunpack.c.l.b16 %v4558
        %v5937 = vunpack.c.h.b16 %v4558
        %v5938 = vunpack.c.l.b16 %v4559
        %v5939 = vunpack.c.h.b16 %v4559
        %v5940 = vunpack.c.l.b16 %v4560
        %v5941 = vunpack.c.h.b16 %v4560
        %v5942 = vunpack.c.l.b16 %v4561
        %v5943 = vunpack.c.h.b16 %v4561
        %v5944 = vunpack.c.l.b16 %v4562
        %v5945 = vunpack.c.h.b16 %v4562
        %v5946 = vunpack.c.l.b16 %v4563
        %v5947 = vunpack.c.h.b16 %v4563
        %v5948 = vunpack.c.l.b16 %v4564
        %v5949 = vunpack.c.h.b16 %v4564
        %v5950 = vunpack.c.l.b16 %v4565
        %v5951 = vunpack.c.h.b16 %v4565
        %v5952 = vunpack.c.l.b16 %v4566
        %v5953 = vunpack.c.h.b16 %v4566
        %v5954 = vunpack.c.l.b16 %v4567
        %v5955 = vunpack.c.h.b16 %v4567
        %v5956 = vunpack.c.l.b16 %v4568
        %v5957 = vunpack.c.h.b16 %v4568
        %v5958 = vunpack.c.l.b16 %v4569
        %v5959 = vunpack.c.h.b16 %v4569
        %v5960 = vunpack.c.l.b16 %v4570
        %v5961 = vunpack.c.h.b16 %v4570
        %v5962 = vunpack.c.l.b16 %v4571
        %v5963 = vunpack.c.h.b16 %v4571
        %v5964 = vunpack.c.l.b16 %v4572
        %v5965 = vunpack.c.h.b16 %v4572
        %v5966 = vunpack.c.l.b16 %v4573
        %v5967 = vunpack.c.h.b16 %v4573
        %v5968 = vunpack.c.l.b16 %v4574
        %v5969 = vunpack.c.h.b16 %v4574
        %v5970 = vunpack.c.l.b16 %v4575
        %v5971 = vunpack.c.h.b16 %v4575
        %v5972 = vunpack.c.l.b16 %v4576
        %v5973 = vunpack.c.h.b16 %v4576
        %v5974 = vunpack.c.l.b16 %v4577
        %v5975 = vunpack.c.h.b16 %v4577
        %v5976 = vunpack.c.l.b16 %v4578
        %v5977 = vunpack.c.h.b16 %v4578
        %v5978 = vunpack.c.l.b16 %v4579
        %v5979 = vunpack.c.h.b16 %v4579
        %v5980 = vunpack.c.l.b16 %v4580
        %v5981 = vunpack.c.h.b16 %v4580
        %v5982 = vunpack.c.l.b16 %v4581
        %v5983 = vunpack.c.h.b16 %v4581
        %v5984 = vunpack.c.l.b16 %v4582
        %v5985 = vunpack.c.h.b16 %v4582
        %v5986 = vunpack.c.l.b16 %v4583
        %v5987 = vunpack.c.h.b16 %v4583
        %v5988 = vunpack.c.l.b16 %v4584
        %v5989 = vunpack.c.h.b16 %v4584
        %v5990 = vunpack.c.l.b16 %v4585
        %v5991 = vunpack.c.h.b16 %v4585
        %v5992 = vunpack.c.l.b16 %v4586
        %v5993 = vunpack.c.h.b16 %v4586
        %v5994 = vunpack.c.l.b16 %v4587
        %v5995 = vunpack.c.h.b16 %v4587
        %v5996 = vunpack.c.l.b16 %v4588
        %v5997 = vunpack.c.h.b16 %v4588
        %v5998 = vunpack.c.l.b16 %v4589
        %v5999 = vunpack.c.h.b16 %v4589
        %v6000 = vunpack.c.l.b16 %v4590
        %v6001 = vunpack.c.h.b16 %v4590
        %v6002 = vunpack.c.l.b16 %v4591
        %v6003 = vunpack.c.h.b16 %v4591
        %v6004 = vunpack.c.l.b16 %v4592
        %v6005 = vunpack.c.h.b16 %v4592
        %v6006 = vunpack.c.l.b16 %v4593
        %v6007 = vunpack.c.h.b16 %v4593
        %v6008 = vunpack.c.l.b16 %v4594
        %v6009 = vunpack.c.h.b16 %v4594
        %v6010 = vunpack.c.l.b16 %v4595
        %v6011 = vunpack.c.h.b16 %v4595
        %v6012 = vunpack.c.l.b16 %v4596
        %v6013 = vunpack.c.h.b16 %v4596
        %v6014 = vunpack.c.l.b16 %v4597
        %v6015 = vunpack.c.h.b16 %v4597
        %v6016 = vunpack.c.l.b16 %v4598
        %v6017 = vunpack.c.h.b16 %v4598
        %v6018 = vunpack.c.l.b16 %v4599
        %v6019 = vunpack.c.h.b16 %v4599
        %v6020 = vunpack.c.l.b16 %v4600
        %v6021 = vunpack.c.h.b16 %v4600
        %v6022 = vunpack.c.l.b16 %v4601
        %v6023 = vunpack.c.h.b16 %v4601
        %v6024 = vunpack.c.l.b16 %v4602
        %v6025 = vunpack.c.h.b16 %v4602
        %v6026 = vunpack.c.l.b16 %v4603
        %v6027 = vunpack.c.h.b16 %v4603
        %v6028 = vunpack.c.l.b16 %v4604
        %v6029 = vunpack.c.h.b16 %v4604
        %v6030 = vunpack.c.l.b16 %v4605
        %v6031 = vunpack.c.h.b16 %v4605
        %v6032 = vunpack.c.l.b16 %v4606
        %v6033 = vunpack.c.h.b16 %v4606
        %v6034 = vunpack.c.l.b16 %v4607
        %v6035 = vunpack.c.h.b16 %v4607
        %v6036 = vunpack.c.l.b16 %v4608
        %v6037 = vunpack.c.h.b16 %v4608
        %v6038 = vunpack.c.l.b16 %v4609
        %v6039 = vunpack.c.h.b16 %v4609
        %v6040 = vunpack.c.l.b16 %v4610
        %v6041 = vunpack.c.h.b16 %v4610
        %v6042 = vunpack.c.l.b16 %v4611
        %v6043 = vunpack.c.h.b16 %v4611
        %v6044 = vunpack.c.l.b16 %v4612
        %v6045 = vunpack.c.h.b16 %v4612
        %v6046 = vunpack.c.l.b16 %v4613
        %v6047 = vunpack.c.h.b16 %v4613
        %v6048 = vunpack.c.l.b16 %v4614
        %v6049 = vunpack.c.h.b16 %v4614
        %v6050 = vunpack.c.l.b16 %v4615
        %v6051 = vunpack.c.h.b16 %v4615
        %v6052 = vunpack.c.l.b16 %v4616
        %v6053 = vunpack.c.h.b16 %v4616
        %v6054 = vunpack.c.l.b16 %v4617
        %v6055 = vunpack.c.h.b16 %v4617
        %v6056 = vunpack.c.l.b16 %v4618
        %v6057 = vunpack.c.h.b16 %v4618
        %v6058 = vunpack.c.l.b16 %v4619
        %v6059 = vunpack.c.h.b16 %v4619
        %v6060 = vunpack.c.l.b16 %v4620
        %v6061 = vunpack.c.h.b16 %v4620
        %v6062 = vunpack.c.l.b16 %v4621
        %v6063 = vunpack.c.h.b16 %v4621
        %v6064 = vunpack.c.l.b16 %v4622
        %v6065 = vunpack.c.h.b16 %v4622
        %v6066 = vunpack.c.l.b16 %v4623
        %v6067 = vunpack.c.h.b16 %v4623
        %v6068 = vunpack.c.l.b16 %v4624
        %v6069 = vunpack.c.h.b16 %v4624
        %v6070 = vunpack.c.l.b16 %v4625
        %v6071 = vunpack.c.h.b16 %v4625
        %v6072 = vunpack.c.l.b16 %v4626
        %v6073 = vunpack.c.h.b16 %v4626
        %v6074 = vunpack.c.l.b16 %v4627
        %v6075 = vunpack.c.h.b16 %v4627
        %v6076 = vunpack.c.l.b16 %v4628
        %v6077 = vunpack.c.h.b16 %v4628
        %v6078 = vunpack.c.l.b16 %v4629
        %v6079 = vunpack.c.h.b16 %v4629
        %v6080 = vunpack.c.l.b16 %v4630
        %v6081 = vunpack.c.h.b16 %v4630
        %v6082 = vunpack.c.l.b16 %v4631
        %v6083 = vunpack.c.h.b16 %v4631
        %v6084 = vunpack.c.l.b16 %v4632
        %v6085 = vunpack.c.h.b16 %v4632
        %v6086 = vunpack.c.l.b16 %v4633
        %v6087 = vunpack.c.h.b16 %v4633
        %v6088 = vunpack.c.l.b16 %v4634
        %v6089 = vunpack.c.h.b16 %v4634
        %v6090 = vunpack.c.l.b16 %v4635
        %v6091 = vunpack.c.h.b16 %v4635
        %v6092 = vunpack.c.l.b16 %v4636
        %v6093 = vunpack.c.h.b16 %v4636
        %v6094 = vunpack.c.l.b16 %v4637
        %v6095 = vunpack.c.h.b16 %v4637
        %v6096 = vunpack.c.l.b16 %v4638
        %v6097 = vunpack.c.h.b16 %v4638
        %v6098 = vunpack.c.l.b16 %v4639
        %v6099 = vunpack.c.h.b16 %v4639
        %v6100 = vunpack.c.l.b16 %v4640
        %v6101 = vunpack.c.h.b16 %v4640
        %v6102 = vunpack.c.l.b16 %v4641
        %v6103 = vunpack.c.h.b16 %v4641
        %v6104 = vunpack.c.l.b16 %v4642
        %v6105 = vunpack.c.h.b16 %v4642
        %v6106 = vunpack.c.l.b16 %v4643
        %v6107 = vunpack.c.h.b16 %v4643
        %v6108 = vunpack.c.l.b16 %v4644
        %v6109 = vunpack.c.h.b16 %v4644
        %v6110 = vunpack.c.l.b16 %v4645
        %v6111 = vunpack.c.h.b16 %v4645
        %v6112 = vunpack.c.l.b16 %v4646
        %v6113 = vunpack.c.h.b16 %v4646
        %v6114 = vunpack.c.l.b16 %v4647
        %v6115 = vunpack.c.h.b16 %v4647
        %v6116 = vunpack.c.l.b16 %v4648
        %v6117 = vunpack.c.h.b16 %v4648
        %v6118 = vunpack.c.l.b16 %v4649
        %v6119 = vunpack.c.h.b16 %v4649
        %v6120 = vunpack.c.l.b16 %v4650
        %v6121 = vunpack.c.h.b16 %v4650
        %v6122 = vunpack.c.l.b16 %v4651
        %v6123 = vunpack.c.h.b16 %v4651
        %v6124 = vunpack.c.l.b16 %v4652
        %v6125 = vunpack.c.h.b16 %v4652
        %v6126 = vunpack.c.l.b16 %v4653
        %v6127 = vunpack.c.h.b16 %v4653
        %v6128 = vunpack.c.l.b16 %v4654
        %v6129 = vunpack.c.h.b16 %v4654
        %v6130 = vunpack.c.l.b16 %v4655
        %v6131 = vunpack.c.h.b16 %v4655
        %v6132 = vunpack.c.l.b16 %v4656
        %v6133 = vunpack.c.h.b16 %v4656
        %v6134 = vunpack.c.l.b16 %v4657
        %v6135 = vunpack.c.h.b16 %v4657
        %v6136 = vunpack.c.l.b16 %v4658
        %v6137 = vunpack.c.h.b16 %v4658
        %v6138 = vunpack.c.l.b16 %v4659
        %v6139 = vunpack.c.h.b16 %v4659
        %v6140 = vunpack.c.l.b16 %v4660
        %v6141 = vunpack.c.h.b16 %v4660
        %v6142 = vunpack.c.l.b16 %v4661
        %v6143 = vunpack.c.h.b16 %v4661
        %v6144 = vunpack.c.l.b16 %v4662
        %v6145 = vunpack.c.h.b16 %v4662
        %v6146 = vunpack.c.l.b16 %v4663
        %v6147 = vunpack.c.h.b16 %v4663
        %v6148 = vunpack.c.l.b16 %v4664
        %v6149 = vunpack.c.h.b16 %v4664
        %v6150 = vunpack.c.l.b16 %v4665
        %v6151 = vunpack.c.h.b16 %v4665
        %v6152 = vunpack.c.l.b16 %v4666
        %v6153 = vunpack.c.h.b16 %v4666
        %v6154 = vunpack.c.l.b16 %v4667
        %v6155 = vunpack.c.h.b16 %v4667
        %v6156 = vunpack.c.l.b16 %v4668
        %v6157 = vunpack.c.h.b16 %v4668
        %v6158 = vunpack.c.l.b16 %v4669
        %v6159 = vunpack.c.h.b16 %v4669
        %v6160 = vunpack.c.l.b16 %v4670
        %v6161 = vunpack.c.h.b16 %v4670
        %v6162 = vunpack.c.l.b16 %v4671
        %v6163 = vunpack.c.h.b16 %v4671
        %v6164 = vunpack.c.l.b16 %v4672
        %v6165 = vunpack.c.h.b16 %v4672
        %v6166 = vunpack.c.l.b16 %v4673
        %v6167 = vunpack.c.h.b16 %v4673
        %v6168 = vunpack.c.l.b16 %v4674
        %v6169 = vunpack.c.h.b16 %v4674
        %v6170 = vunpack.c.l.b16 %v4675
        %v6171 = vunpack.c.h.b16 %v4675
        %v6172 = vunpack.c.l.b16 %v4676
        %v6173 = vunpack.c.h.b16 %v4676
        %v6174 = vunpack.c.l.b16 %v4677
        %v6175 = vunpack.c.h.b16 %v4677
        %v6176 = vunpack.c.l.b16 %v4678
        %v6177 = vunpack.c.h.b16 %v4678
        %v6178 = vunpack.c.l.b16 %v4679
        %v6179 = vunpack.c.h.b16 %v4679
        %v6180 = vunpack.c.l.b16 %v4680
        %v6181 = vunpack.c.h.b16 %v4680
        %v6182 = vunpack.c.l.b16 %v4681
        %v6183 = vunpack.c.h.b16 %v4681
        %v6184 = vunpack.c.l.b16 %v4682
        %v6185 = vunpack.c.h.b16 %v4682
        %v6186 = vunpack.c.l.b16 %v4683
        %v6187 = vunpack.c.h.b16 %v4683
        %v6188 = vunpack.c.l.b16 %v4684
        %v6189 = vunpack.c.h.b16 %v4684
        %v6190 = vunpack.c.l.b16 %v4685
        %v6191 = vunpack.c.h.b16 %v4685
        %v6192 = vunpack.c.l.b16 %v4686
        %v6193 = vunpack.c.h.b16 %v4686
        %v6194 = vunpack.c.l.b16 %v4687
        %v6195 = vunpack.c.h.b16 %v4687
        %v6196 = vunpack.c.l.b16 %v4688
        %v6197 = vunpack.c.h.b16 %v4688
        %v6198 = vunpack.c.l.b16 %v4689
        %v6199 = vunpack.c.h.b16 %v4689
        %v6200 = vunpack.c.l.b16 %v4690
        %v6201 = vunpack.c.h.b16 %v4690
        %v6202 = vunpack.c.l.b16 %v4691
        %v6203 = vunpack.c.h.b16 %v4691
        %v6204 = vunpack.c.l.b16 %v4692
        %v6205 = vunpack.c.h.b16 %v4692
        %v6206 = vunpack.c.l.b16 %v4693
        %v6207 = vunpack.c.h.b16 %v4693
        %v6208 = vunpack.c.l.b16 %v4694
        %v6209 = vunpack.c.h.b16 %v4694
        %v6210 = vunpack.c.l.b16 %v4695
        %v6211 = vunpack.c.h.b16 %v4695
        %v6212 = vunpack.c.l.b16 %v4696
        %v6213 = vunpack.c.h.b16 %v4696
        %v6214 = vunpack.c.l.b16 %v4697
        %v6215 = vunpack.c.h.b16 %v4697
        %v6216 = vunpack.c.l.b16 %v4698
        %v6217 = vunpack.c.h.b16 %v4698
        %v6218 = vunpack.c.l.b16 %v4699
        %v6219 = vunpack.c.h.b16 %v4699
        %v6220 = vunpack.c.l.b16 %v4700
        %v6221 = vunpack.c.h.b16 %v4700
        %v6222 = vunpack.c.l.b16 %v4701
        %v6223 = vunpack.c.h.b16 %v4701
        %v6224 = vunpack.c.l.b16 %v4702
        %v6225 = vunpack.c.h.b16 %v4702
        %v6226 = vunpack.c.l.b16 %v4703
        %v6227 = vunpack.c.h.b16 %v4703
        %v6228 = vunpack.c.l.b16 %v4704
        %v6229 = vunpack.c.h.b16 %v4704
        %v6230 = vunpack.c.l.b16 %v4705
        %v6231 = vunpack.c.h.b16 %v4705
        %v6232 = vunpack.c.l.b16 %v4706
        %v6233 = vunpack.c.h.b16 %v4706
        %v6234 = vunpack.c.l.b16 %v4707
        %v6235 = vunpack.c.h.b16 %v4707
        %v6236 = vunpack.c.l.b16 %v4708
        %v6237 = vunpack.c.h.b16 %v4708
        %v6238 = vunpack.c.l.b16 %v4709
        %v6239 = vunpack.c.h.b16 %v4709
        %v6240 = vunpack.c.l.b16 %v4710
        %v6241 = vunpack.c.h.b16 %v4710
        %v6242 = vunpack.c.l.b16 %v4711
        %v6243 = vunpack.c.h.b16 %v4711
        %v6244 = vunpack.c.l.b16 %v4712
        %v6245 = vunpack.c.h.b16 %v4712
        %v6246 = vunpack.c.l.b16 %v4713
        %v6247 = vunpack.c.h.b16 %v4713
        %v6248 = vunpack.c.l.b16 %v4714
        %v6249 = vunpack.c.h.b16 %v4714
        %v6250 = vunpack.c.l.b16 %v4715
        %v6251 = vunpack.c.h.b16 %v4715
        %v6252 = vunpack.c.l.b16 %v4716
        %v6253 = vunpack.c.h.b16 %v4716
        %v6254 = vunpack.c.l.b16 %v4717
        %v6255 = vunpack.c.h.b16 %v4717
        %v6256 = vunpack.c.l.b16 %v4718
        %v6257 = vunpack.c.h.b16 %v4718
        %v6258 = vunpack.c.l.b16 %v4719
        %v6259 = vunpack.c.h.b16 %v4719
        %v6260 = vunpack.c.l.b16 %v4720
        %v6261 = vunpack.c.h.b16 %v4720
        %v6262 = vunpack.c.l.b16 %v4721
        %v6263 = vunpack.c.h.b16 %v4721
        %v6264 = vunpack.c.l.b16 %v4722
        %v6265 = vunpack.c.h.b16 %v4722
        %v6266 = vunpack.c.l.b16 %v4723
        %v6267 = vunpack.c.h.b16 %v4723
        %v6268 = vunpack.c.l.b16 %v4724
        %v6269 = vunpack.c.h.b16 %v4724
        %v6270 = vunpack.c.l.b16 %v4725
        %v6271 = vunpack.c.h.b16 %v4725
        %v6272 = vunpack.c.l.b16 %v4726
        %v6273 = vunpack.c.h.b16 %v4726
        %v6274 = vunpack.c.l.b16 %v4727
        %v6275 = vunpack.c.h.b16 %v4727
        %v6276 = vunpack.c.l.b16 %v4728
        %v6277 = vunpack.c.h.b16 %v4728
        %v6278 = vunpack.c.l.b16 %v4729
        %v6279 = vunpack.c.h.b16 %v4729
        %v6280 = vunpack.c.l.b16 %v4730
        %v6281 = vunpack.c.h.b16 %v4730
        %v6282 = vunpack.c.l.b16 %v4731
        %v6283 = vunpack.c.h.b16 %v4731
        %v6284 = vunpack.c.l.b16 %v4732
        %v6285 = vunpack.c.h.b16 %v4732
        %v6286 = vunpack.c.l.b16 %v4733
        %v6287 = vunpack.c.h.b16 %v4733
        %v6288 = vunpack.c.l.b16 %v4734
        %v6289 = vunpack.c.h.b16 %v4734
        %v6290 = vunpack.c.l.b16 %v4735
        %v6291 = vunpack.c.h.b16 %v4735
        %v6292 = vunpack.c.l.b16 %v4736
        %v6293 = vunpack.c.h.b16 %v4736
        %v6294 = vunpack.c.l.b16 %v4737
        %v6295 = vunpack.c.h.b16 %v4737
        %v6296 = vpack.c.b16 %v5276, %v5272
        %v6297 = vpack.c.b16 %v5277, %v5273
        %v6298 = vpack.c.b16 %v5278, %v5274
        %v6299 = vpack.c.b16 %v5279, %v5275
        %v6300 = vpack.c.b16 %v5284, %v5280
        %v6301 = vpack.c.b16 %v5285, %v5281
        %v6302 = vpack.c.b16 %v5286, %v5282
        %v6303 = vpack.c.b16 %v5287, %v5283
        %v6304 = vpack.c.b16 %v5292, %v5288
        %v6305 = vpack.c.b16 %v5293, %v5289
        %v6306 = vpack.c.b16 %v5294, %v5290
        %v6307 = vpack.c.b16 %v5295, %v5291
        %v6308 = vpack.c.b16 %v5300, %v5296
        %v6309 = vpack.c.b16 %v5301, %v5297
        %v6310 = vpack.c.b16 %v5302, %v5298
        %v6311 = vpack.c.b16 %v5303, %v5299
        %v6312 = vpack.c.b16 %v5308, %v5304
        %v6313 = vpack.c.b16 %v5309, %v5305
        %v6314 = vpack.c.b16 %v5310, %v5306
        %v6315 = vpack.c.b16 %v5311, %v5307
        %v6316 = vpack.c.b16 %v5316, %v5312
        %v6317 = vpack.c.b16 %v5317, %v5313
        %v6318 = vpack.c.b16 %v5318, %v5314
        %v6319 = vpack.c.b16 %v5319, %v5315
        %v6320 = vpack.c.b16 %v5324, %v5320
        %v6321 = vpack.c.b16 %v5325, %v5321
        %v6322 = vpack.c.b16 %v5326, %v5322
        %v6323 = vpack.c.b16 %v5327, %v5323
        %v6324 = vpack.c.b16 %v5332, %v5328
        %v6325 = vpack.c.b16 %v5333, %v5329
        %v6326 = vpack.c.b16 %v5334, %v5330
        %v6327 = vpack.c.b16 %v5335, %v5331
        %v6328 = vpack.c.b16 %v5340, %v5336
        %v6329 = vpack.c.b16 %v5341, %v5337
        %v6330 = vpack.c.b16 %v5342, %v5338
        %v6331 = vpack.c.b16 %v5343, %v5339
        %v6332 = vpack.c.b16 %v5348, %v5344
        %v6333 = vpack.c.b16 %v5349, %v5345
        %v6334 = vpack.c.b16 %v5350, %v5346
        %v6335 = vpack.c.b16 %v5351, %v5347
        %v6336 = vpack.c.b16 %v5356, %v5352
        %v6337 = vpack.c.b16 %v5357, %v5353
        %v6338 = vpack.c.b16 %v5358, %v5354
        %v6339 = vpack.c.b16 %v5359, %v5355
        %v6340 = vpack.c.b16 %v5364, %v5360
        %v6341 = vpack.c.b16 %v5365, %v5361
        %v6342 = vpack.c.b16 %v5366, %v5362
        %v6343 = vpack.c.b16 %v5367, %v5363
        %v6344 = vpack.c.b16 %v5372, %v5368
        %v6345 = vpack.c.b16 %v5373, %v5369
        %v6346 = vpack.c.b16 %v5374, %v5370
        %v6347 = vpack.c.b16 %v5375, %v5371
        %v6348 = vpack.c.b16 %v5380, %v5376
        %v6349 = vpack.c.b16 %v5381, %v5377
        %v6350 = vpack.c.b16 %v5382, %v5378
        %v6351 = vpack.c.b16 %v5383, %v5379
        %v6352 = vpack.c.b16 %v5388, %v5384
        %v6353 = vpack.c.b16 %v5389, %v5385
        %v6354 = vpack.c.b16 %v5390, %v5386
        %v6355 = vpack.c.b16 %v5391, %v5387
        %v6356 = vpack.c.b16 %v5396, %v5392
        %v6357 = vpack.c.b16 %v5397, %v5393
        %v6358 = vpack.c.b16 %v5398, %v5394
        %v6359 = vpack.c.b16 %v5399, %v5395
        %v6360 = vpack.c.b16 %v5404, %v5400
        %v6361 = vpack.c.b16 %v5405, %v5401
        %v6362 = vpack.c.b16 %v5406, %v5402
        %v6363 = vpack.c.b16 %v5407, %v5403
        %v6364 = vpack.c.b16 %v5412, %v5408
        %v6365 = vpack.c.b16 %v5413, %v5409
        %v6366 = vpack.c.b16 %v5414, %v5410
        %v6367 = vpack.c.b16 %v5415, %v5411
        %v6368 = vpack.c.b16 %v5420, %v5416
        %v6369 = vpack.c.b16 %v5421, %v5417
        %v6370 = vpack.c.b16 %v5422, %v5418
        %v6371 = vpack.c.b16 %v5423, %v5419
        %v6372 = vpack.c.b16 %v5428, %v5424
        %v6373 = vpack.c.b16 %v5429, %v5425
        %v6374 = vpack.c.b16 %v5430, %v5426
        %v6375 = vpack.c.b16 %v5431, %v5427
        %v6376 = vpack.c.b16 %v5436, %v5432
        %v6377 = vpack.c.b16 %v5437, %v5433
        %v6378 = vpack.c.b16 %v5438, %v5434
        %v6379 = vpack.c.b16 %v5439, %v5435
        %v6380 = vpack.c.b16 %v5444, %v5440
        %v6381 = vpack.c.b16 %v5445, %v5441
        %v6382 = vpack.c.b16 %v5446, %v5442
        %v6383 = vpack.c.b16 %v5447, %v5443
        %v6384 = vpack.c.b16 %v5452, %v5448
        %v6385 = vpack.c.b16 %v5453, %v5449
        %v6386 = vpack.c.b16 %v5454, %v5450
        %v6387 = vpack.c.b16 %v5455, %v5451
        %v6388 = vpack.c.b16 %v5460, %v5456
        %v6389 = vpack.c.b16 %v5461, %v5457
        %v6390 = vpack.c.b16 %v5462, %v5458
        %v6391 = vpack.c.b16 %v5463, %v5459
        %v6392 = vpack.c.b16 %v5468, %v5464
        %v6393 = vpack.c.b16 %v5469, %v5465
        %v6394 = vpack.c.b16 %v5470, %v5466
        %v6395 = vpack.c.b16 %v5471, %v5467
        %v6396 = vpack.c.b16 %v5476, %v5472
        %v6397 = vpack.c.b16 %v5477, %v5473
        %v6398 = vpack.c.b16 %v5478, %v5474
        %v6399 = vpack.c.b16 %v5479, %v5475
        %v6400 = vpack.c.b16 %v5484, %v5480
        %v6401 = vpack.c.b16 %v5485, %v5481
        %v6402 = vpack.c.b16 %v5486, %v5482
        %v6403 = vpack.c.b16 %v5487, %v5483
        %v6404 = vpack.c.b16 %v5492, %v5488
        %v6405 = vpack.c.b16 %v5493, %v5489
        %v6406 = vpack.c.b16 %v5494, %v5490
        %v6407 = vpack.c.b16 %v5495, %v5491
        %v6408 = vpack.c.b16 %v5500, %v5496
        %v6409 = vpack.c.b16 %v5501, %v5497
        %v6410 = vpack.c.b16 %v5502, %v5498
        %v6411 = vpack.c.b16 %v5503, %v5499
        %v6412 = vpack.c.b16 %v5508, %v5504
        %v6413 = vpack.c.b16 %v5509, %v5505
        %v6414 = vpack.c.b16 %v5510, %v5506
        %v6415 = vpack.c.b16 %v5511, %v5507
        %v6416 = vpack.c.b16 %v5516, %v5512
        %v6417 = vpack.c.b16 %v5517, %v5513
        %v6418 = vpack.c.b16 %v5518, %v5514
        %v6419 = vpack.c.b16 %v5519, %v5515
        %v6420 = vpack.c.b16 %v5524, %v5520
        %v6421 = vpack.c.b16 %v5525, %v5521
        %v6422 = vpack.c.b16 %v5526, %v5522
        %v6423 = vpack.c.b16 %v5527, %v5523
        %v6424 = vpack.c.b16 %v5532, %v5528
        %v6425 = vpack.c.b16 %v5533, %v5529
        %v6426 = vpack.c.b16 %v5534, %v5530
        %v6427 = vpack.c.b16 %v5535, %v5531
        %v6428 = vpack.c.b16 %v5540, %v5536
        %v6429 = vpack.c.b16 %v5541, %v5537
        %v6430 = vpack.c.b16 %v5542, %v5538
        %v6431 = vpack.c.b16 %v5543, %v5539
        %v6432 = vpack.c.b16 %v5548, %v5544
        %v6433 = vpack.c.b16 %v5549, %v5545
        %v6434 = vpack.c.b16 %v5550, %v5546
        %v6435 = vpack.c.b16 %v5551, %v5547
        %v6436 = vpack.c.b16 %v5556, %v5552
        %v6437 = vpack.c.b16 %v5557, %v5553
        %v6438 = vpack.c.b16 %v5558, %v5554
        %v6439 = vpack.c.b16 %v5559, %v5555
        %v6440 = vpack.c.b16 %v5564, %v5560
        %v6441 = vpack.c.b16 %v5565, %v5561
        %v6442 = vpack.c.b16 %v5566, %v5562
        %v6443 = vpack.c.b16 %v5567, %v5563
        %v6444 = vpack.c.b16 %v5572, %v5568
        %v6445 = vpack.c.b16 %v5573, %v5569
        %v6446 = vpack.c.b16 %v5574, %v5570
        %v6447 = vpack.c.b16 %v5575, %v5571
        %v6448 = vpack.c.b16 %v5580, %v5576
        %v6449 = vpack.c.b16 %v5581, %v5577
        %v6450 = vpack.c.b16 %v5582, %v5578
        %v6451 = vpack.c.b16 %v5583, %v5579
        %v6452 = vpack.c.b16 %v5588, %v5584
        %v6453 = vpack.c.b16 %v5589, %v5585
        %v6454 = vpack.c.b16 %v5590, %v5586
        %v6455 = vpack.c.b16 %v5591, %v5587
        %v6456 = vpack.c.b16 %v5596, %v5592
        %v6457 = vpack.c.b16 %v5597, %v5593
        %v6458 = vpack.c.b16 %v5598, %v5594
        %v6459 = vpack.c.b16 %v5599, %v5595
        %v6460 = vpack.c.b16 %v5604, %v5600
        %v6461 = vpack.c.b16 %v5605, %v5601
        %v6462 = vpack.c.b16 %v5606, %v5602
        %v6463 = vpack.c.b16 %v5607, %v5603
        %v6464 = vpack.c.b16 %v5612, %v5608
        %v6465 = vpack.c.b16 %v5613, %v5609
        %v6466 = vpack.c.b16 %v5614, %v5610
        %v6467 = vpack.c.b16 %v5615, %v5611
        %v6468 = vpack.c.b16 %v5620, %v5616
        %v6469 = vpack.c.b16 %v5621, %v5617
        %v6470 = vpack.c.b16 %v5622, %v5618
        %v6471 = vpack.c.b16 %v5623, %v5619
        %v6472 = vpack.c.b16 %v5628, %v5624
        %v6473 = vpack.c.b16 %v5629, %v5625
        %v6474 = vpack.c.b16 %v5630, %v5626
        %v6475 = vpack.c.b16 %v5631, %v5627
        %v6476 = vpack.c.b16 %v5636, %v5632
        %v6477 = vpack.c.b16 %v5637, %v5633
        %v6478 = vpack.c.b16 %v5638, %v5634
        %v6479 = vpack.c.b16 %v5639, %v5635
        %v6480 = vpack.c.b16 %v5644, %v5640
        %v6481 = vpack.c.b16 %v5645, %v5641
        %v6482 = vpack.c.b16 %v5646, %v5642
        %v6483 = vpack.c.b16 %v5647, %v5643
        %v6484 = vpack.c.b16 %v5652, %v5648
        %v6485 = vpack.c.b16 %v5653, %v5649
        %v6486 = vpack.c.b16 %v5654, %v5650
        %v6487 = vpack.c.b16 %v5655, %v5651
        %v6488 = vpack.c.b16 %v5660, %v5656
        %v6489 = vpack.c.b16 %v5661, %v5657
        %v6490 = vpack.c.b16 %v5662, %v5658
        %v6491 = vpack.c.b16 %v5663, %v5659
        %v6492 = vpack.c.b16 %v5668, %v5664
        %v6493 = vpack.c.b16 %v5669, %v5665
        %v6494 = vpack.c.b16 %v5670, %v5666
        %v6495 = vpack.c.b16 %v5671, %v5667
        %v6496 = vpack.c.b16 %v5676, %v5672
        %v6497 = vpack.c.b16 %v5677, %v5673
        %v6498 = vpack.c.b16 %v5678, %v5674
        %v6499 = vpack.c.b16 %v5679, %v5675
        %v6500 = vpack.c.b16 %v5684, %v5680
        %v6501 = vpack.c.b16 %v5685, %v5681
        %v6502 = vpack.c.b16 %v5686, %v5682
        %v6503 = vpack.c.b16 %v5687, %v5683
        %v6504 = vpack.c.b16 %v5692, %v5688
        %v6505 = vpack.c.b16 %v5693, %v5689
        %v6506 = vpack.c.b16 %v5694, %v5690
        %v6507 = vpack.c.b16 %v5695, %v5691
        %v6508 = vpack.c.b16 %v5700, %v5696
        %v6509 = vpack.c.b16 %v5701, %v5697
        %v6510 = vpack.c.b16 %v5702, %v5698
        %v6511 = vpack.c.b16 %v5703, %v5699
        %v6512 = vpack.c.b16 %v5708, %v5704
        %v6513 = vpack.c.b16 %v5709, %v5705
        %v6514 = vpack.c.b16 %v5710, %v5706
        %v6515 = vpack.c.b16 %v5711, %v5707
        %v6516 = vpack.c.b16 %v5716, %v5712
        %v6517 = vpack.c.b16 %v5717, %v5713
        %v6518 = vpack.c.b16 %v5718, %v5714
        %v6519 = vpack.c.b16 %v5719, %v5715
        %v6520 = vpack.c.b16 %v5724, %v5720
        %v6521 = vpack.c.b16 %v5725, %v5721
        %v6522 = vpack.c.b16 %v5726, %v5722
        %v6523 = vpack.c.b16 %v5727, %v5723
        %v6524 = vpack.c.b16 %v5732, %v5728
        %v6525 = vpack.c.b16 %v5733, %v5729
        %v6526 = vpack.c.b16 %v5734, %v5730
        %v6527 = vpack.c.b16 %v5735, %v5731
        %v6528 = vpack.c.b16 %v5740, %v5736
        %v6529 = vpack.c.b16 %v5741, %v5737
        %v6530 = vpack.c.b16 %v5742, %v5738
        %v6531 = vpack.c.b16 %v5743, %v5739
        %v6532 = vpack.c.b16 %v5748, %v5744
        %v6533 = vpack.c.b16 %v5749, %v5745
        %v6534 = vpack.c.b16 %v5750, %v5746
        %v6535 = vpack.c.b16 %v5751, %v5747
        %v6536 = vpack.c.b16 %v5756, %v5752
        %v6537 = vpack.c.b16 %v5757, %v5753
        %v6538 = vpack.c.b16 %v5758, %v5754
        %v6539 = vpack.c.b16 %v5759, %v5755
        %v6540 = vpack.c.b16 %v5764, %v5760
        %v6541 = vpack.c.b16 %v5765, %v5761
        %v6542 = vpack.c.b16 %v5766, %v5762
        %v6543 = vpack.c.b16 %v5767, %v5763
        %v6544 = vpack.c.b16 %v5772, %v5768
        %v6545 = vpack.c.b16 %v5773, %v5769
        %v6546 = vpack.c.b16 %v5774, %v5770
        %v6547 = vpack.c.b16 %v5775, %v5771
        %v6548 = vpack.c.b16 %v5780, %v5776
        %v6549 = vpack.c.b16 %v5781, %v5777
        %v6550 = vpack.c.b16 %v5782, %v5778
        %v6551 = vpack.c.b16 %v5783, %v5779
        %v6552 = vpack.c.b16 %v5788, %v5784
        %v6553 = vpack.c.b16 %v5789, %v5785
        %v6554 = vpack.c.b16 %v5790, %v5786
        %v6555 = vpack.c.b16 %v5791, %v5787
        %v6556 = vpack.c.b16 %v5796, %v5792
        %v6557 = vpack.c.b16 %v5797, %v5793
        %v6558 = vpack.c.b16 %v5798, %v5794
        %v6559 = vpack.c.b16 %v5799, %v5795
        %v6560 = vpack.c.b16 %v5804, %v5800
        %v6561 = vpack.c.b16 %v5805, %v5801
        %v6562 = vpack.c.b16 %v5806, %v5802
        %v6563 = vpack.c.b16 %v5807, %v5803
        %v6564 = vpack.c.b16 %v5812, %v5808
        %v6565 = vpack.c.b16 %v5813, %v5809
        %v6566 = vpack.c.b16 %v5814, %v5810
        %v6567 = vpack.c.b16 %v5815, %v5811
        %v6568 = vpack.c.b16 %v5820, %v5816
        %v6569 = vpack.c.b16 %v5821, %v5817
        %v6570 = vpack.c.b16 %v5822, %v5818
        %v6571 = vpack.c.b16 %v5823, %v5819
        %v6572 = vpack.c.b16 %v5828, %v5824
        %v6573 = vpack.c.b16 %v5829, %v5825
        %v6574 = vpack.c.b16 %v5830, %v5826
        %v6575 = vpack.c.b16 %v5831, %v5827
        %v6576 = vpack.c.b16 %v5836, %v5832
        %v6577 = vpack.c.b16 %v5837, %v5833
        %v6578 = vpack.c.b16 %v5838, %v5834
        %v6579 = vpack.c.b16 %v5839, %v5835
        %v6580 = vpack.c.b16 %v5844, %v5840
        %v6581 = vpack.c.b16 %v5845, %v5841
        %v6582 = vpack.c.b16 %v5846, %v5842
        %v6583 = vpack.c.b16 %v5847, %v5843
        %v6584 = vpack.c.b16 %v5852, %v5848
        %v6585 = vpack.c.b16 %v5853, %v5849
        %v6586 = vpack.c.b16 %v5854, %v5850
        %v6587 = vpack.c.b16 %v5855, %v5851
        %v6588 = vpack.c.b16 %v5860, %v5856
        %v6589 = vpack.c.b16 %v5861, %v5857
        %v6590 = vpack.c.b16 %v5862, %v5858
        %v6591 = vpack.c.b16 %v5863, %v5859
        %v6592 = vpack.c.b16 %v5868, %v5864
        %v6593 = vpack.c.b16 %v5869, %v5865
        %v6594 = vpack.c.b16 %v5870, %v5866
        %v6595 = vpack.c.b16 %v5871, %v5867
        %v6596 = vpack.c.b16 %v5876, %v5872
        %v6597 = vpack.c.b16 %v5877, %v5873
        %v6598 = vpack.c.b16 %v5878, %v5874
        %v6599 = vpack.c.b16 %v5879, %v5875
        %v6600 = vpack.c.b16 %v5884, %v5880
        %v6601 = vpack.c.b16 %v5885, %v5881
        %v6602 = vpack.c.b16 %v5886, %v5882
        %v6603 = vpack.c.b16 %v5887, %v5883
        %v6604 = vpack.c.b16 %v5892, %v5888
        %v6605 = vpack.c.b16 %v5893, %v5889
        %v6606 = vpack.c.b16 %v5894, %v5890
        %v6607 = vpack.c.b16 %v5895, %v5891
        %v6608 = vpack.c.b16 %v5900, %v5896
        %v6609 = vpack.c.b16 %v5901, %v5897
        %v6610 = vpack.c.b16 %v5902, %v5898
        %v6611 = vpack.c.b16 %v5903, %v5899
        %v6612 = vpack.c.b16 %v5908, %v5904
        %v6613 = vpack.c.b16 %v5909, %v5905
        %v6614 = vpack.c.b16 %v5910, %v5906
        %v6615 = vpack.c.b16 %v5911, %v5907
        %v6616 = vpack.c.b16 %v5916, %v5912
        %v6617 = vpack.c.b16 %v5917, %v5913
        %v6618 = vpack.c.b16 %v5918, %v5914
        %v6619 = vpack.c.b16 %v5919, %v5915
        %v6620 = vpack.c.b16 %v5924, %v5920
        %v6621 = vpack.c.b16 %v5925, %v5921
        %v6622 = vpack.c.b16 %v5926, %v5922
        %v6623 = vpack.c.b16 %v5927, %v5923
        %v6624 = vpack.c.b16 %v5932, %v5928
        %v6625 = vpack.c.b16 %v5933, %v5929
        %v6626 = vpack.c.b16 %v5934, %v5930
        %v6627 = vpack.c.b16 %v5935, %v5931
        %v6628 = vpack.c.b16 %v5940, %v5936
        %v6629 = vpack.c.b16 %v5941, %v5937
        %v6630 = vpack.c.b16 %v5942, %v5938
        %v6631 = vpack.c.b16 %v5943, %v5939
        %v6632 = vpack.c.b16 %v5948, %v5944
        %v6633 = vpack.c.b16 %v5949, %v5945
        %v6634 = vpack.c.b16 %v5950, %v5946
        %v6635 = vpack.c.b16 %v5951, %v5947
        %v6636 = vpack.c.b16 %v5956, %v5952
        %v6637 = vpack.c.b16 %v5957, %v5953
        %v6638 = vpack.c.b16 %v5958, %v5954
        %v6639 = vpack.c.b16 %v5959, %v5955
        %v6640 = vpack.c.b16 %v5964, %v5960
        %v6641 = vpack.c.b16 %v5965, %v5961
        %v6642 = vpack.c.b16 %v5966, %v5962
        %v6643 = vpack.c.b16 %v5967, %v5963
        %v6644 = vpack.c.b16 %v5972, %v5968
        %v6645 = vpack.c.b16 %v5973, %v5969
        %v6646 = vpack.c.b16 %v5974, %v5970
        %v6647 = vpack.c.b16 %v5975, %v5971
        %v6648 = vpack.c.b16 %v5980, %v5976
        %v6649 = vpack.c.b16 %v5981, %v5977
        %v6650 = vpack.c.b16 %v5982, %v5978
        %v6651 = vpack.c.b16 %v5983, %v5979
        %v6652 = vpack.c.b16 %v5988, %v5984
        %v6653 = vpack.c.b16 %v5989, %v5985
        %v6654 = vpack.c.b16 %v5990, %v5986
        %v6655 = vpack.c.b16 %v5991, %v5987
        %v6656 = vpack.c.b16 %v5996, %v5992
        %v6657 = vpack.c.b16 %v5997, %v5993
        %v6658 = vpack.c.b16 %v5998, %v5994
        %v6659 = vpack.c.b16 %v5999, %v5995
        %v6660 = vpack.c.b16 %v6004, %v6000
        %v6661 = vpack.c.b16 %v6005, %v6001
        %v6662 = vpack.c.b16 %v6006, %v6002
        %v6663 = vpack.c.b16 %v6007, %v6003
        %v6664 = vpack.c.b16 %v6012, %v6008
        %v6665 = vpack.c.b16 %v6013, %v6009
        %v6666 = vpack.c.b16 %v6014, %v6010
        %v6667 = vpack.c.b16 %v6015, %v6011
        %v6668 = vpack.c.b16 %v6020, %v6016
        %v6669 = vpack.c.b16 %v6021, %v6017
        %v6670 = vpack.c.b16 %v6022, %v6018
        %v6671 = vpack.c.b16 %v6023, %v6019
        %v6672 = vpack.c.b16 %v6028, %v6024
        %v6673 = vpack.c.b16 %v6029, %v6025
        %v6674 = vpack.c.b16 %v6030, %v6026
        %v6675 = vpack.c.b16 %v6031, %v6027
        %v6676 = vpack.c.b16 %v6036, %v6032
        %v6677 = vpack.c.b16 %v6037, %v6033
        %v6678 = vpack.c.b16 %v6038, %v6034
        %v6679 = vpack.c.b16 %v6039, %v6035
        %v6680 = vpack.c.b16 %v6044, %v6040
        %v6681 = vpack.c.b16 %v6045, %v6041
        %v6682 = vpack.c.b16 %v6046, %v6042
        %v6683 = vpack.c.b16 %v6047, %v6043
        %v6684 = vpack.c.b16 %v6052, %v6048
        %v6685 = vpack.c.b16 %v6053, %v6049
        %v6686 = vpack.c.b16 %v6054, %v6050
        %v6687 = vpack.c.b16 %v6055, %v6051
        %v6688 = vpack.c.b16 %v6060, %v6056
        %v6689 = vpack.c.b16 %v6061, %v6057
        %v6690 = vpack.c.b16 %v6062, %v6058
        %v6691 = vpack.c.b16 %v6063, %v6059
        %v6692 = vpack.c.b16 %v6068, %v6064
        %v6693 = vpack.c.b16 %v6069, %v6065
        %v6694 = vpack.c.b16 %v6070, %v6066
        %v6695 = vpack.c.b16 %v6071, %v6067
        %v6696 = vpack.c.b16 %v6076, %v6072
        %v6697 = vpack.c.b16 %v6077, %v6073
        %v6698 = vpack.c.b16 %v6078, %v6074
        %v6699 = vpack.c.b16 %v6079, %v6075
        %v6700 = vpack.c.b16 %v6084, %v6080
        %v6701 = vpack.c.b16 %v6085, %v6081
        %v6702 = vpack.c.b16 %v6086, %v6082
        %v6703 = vpack.c.b16 %v6087, %v6083
        %v6704 = vpack.c.b16 %v6092, %v6088
        %v6705 = vpack.c.b16 %v6093, %v6089
        %v6706 = vpack.c.b16 %v6094, %v6090
        %v6707 = vpack.c.b16 %v6095, %v6091
        %v6708 = vpack.c.b16 %v6100, %v6096
        %v6709 = vpack.c.b16 %v6101, %v6097
        %v6710 = vpack.c.b16 %v6102, %v6098
        %v6711 = vpack.c.b16 %v6103, %v6099
        %v6712 = vpack.c.b16 %v6108, %v6104
        %v6713 = vpack.c.b16 %v6109, %v6105
        %v6714 = vpack.c.b16 %v6110, %v6106
        %v6715 = vpack.c.b16 %v6111, %v6107
        %v6716 = vpack.c.b16 %v6116, %v6112
        %v6717 = vpack.c.b16 %v6117, %v6113
        %v6718 = vpack.c.b16 %v6118, %v6114
        %v6719 = vpack.c.b16 %v6119, %v6115
        %v6720 = vpack.c.b16 %v6124, %v6120
        %v6721 = vpack.c.b16 %v6125, %v6121
        %v6722 = vpack.c.b16 %v6126, %v6122
        %v6723 = vpack.c.b16 %v6127, %v6123
        %v6724 = vpack.c.b16 %v6132, %v6128
        %v6725 = vpack.c.b16 %v6133, %v6129
        %v6726 = vpack.c.b16 %v6134, %v6130
        %v6727 = vpack.c.b16 %v6135, %v6131
        %v6728 = vpack.c.b16 %v6140, %v6136
        %v6729 = vpack.c.b16 %v6141, %v6137
        %v6730 = vpack.c.b16 %v6142, %v6138
        %v6731 = vpack.c.b16 %v6143, %v6139
        %v6732 = vpack.c.b16 %v6148, %v6144
        %v6733 = vpack.c.b16 %v6149, %v6145
        %v6734 = vpack.c.b16 %v6150, %v6146
        %v6735 = vpack.c.b16 %v6151, %v6147
        %v6736 = vpack.c.b16 %v6156, %v6152
        %v6737 = vpack.c.b16 %v6157, %v6153
        %v6738 = vpack.c.b16 %v6158, %v6154
        %v6739 = vpack.c.b16 %v6159, %v6155
        %v6740 = vpack.c.b16 %v6164, %v6160
        %v6741 = vpack.c.b16 %v6165, %v6161
        %v6742 = vpack.c.b16 %v6166, %v6162
        %v6743 = vpack.c.b16 %v6167, %v6163
        %v6744 = vpack.c.b16 %v6172, %v6168
        %v6745 = vpack.c.b16 %v6173, %v6169
        %v6746 = vpack.c.b16 %v6174, %v6170
        %v6747 = vpack.c.b16 %v6175, %v6171
        %v6748 = vpack.c.b16 %v6180, %v6176
        %v6749 = vpack.c.b16 %v6181, %v6177
        %v6750 = vpack.c.b16 %v6182, %v6178
        %v6751 = vpack.c.b16 %v6183, %v6179
        %v6752 = vpack.c.b16 %v6188, %v6184
        %v6753 = vpack.c.b16 %v6189, %v6185
        %v6754 = vpack.c.b16 %v6190, %v6186
        %v6755 = vpack.c.b16 %v6191, %v6187
        %v6756 = vpack.c.b16 %v6196, %v6192
        %v6757 = vpack.c.b16 %v6197, %v6193
        %v6758 = vpack.c.b16 %v6198, %v6194
        %v6759 = vpack.c.b16 %v6199, %v6195
        %v6760 = vpack.c.b16 %v6204, %v6200
        %v6761 = vpack.c.b16 %v6205, %v6201
        %v6762 = vpack.c.b16 %v6206, %v6202
        %v6763 = vpack.c.b16 %v6207, %v6203
        %v6764 = vpack.c.b16 %v6212, %v6208
        %v6765 = vpack.c.b16 %v6213, %v6209
        %v6766 = vpack.c.b16 %v6214, %v6210
        %v6767 = vpack.c.b16 %v6215, %v6211
        %v6768 = vpack.c.b16 %v6220, %v6216
        %v6769 = vpack.c.b16 %v6221, %v6217
        %v6770 = vpack.c.b16 %v6222, %v6218
        %v6771 = vpack.c.b16 %v6223, %v6219
        %v6772 = vpack.c.b16 %v6228, %v6224
        %v6773 = vpack.c.b16 %v6229, %v6225
        %v6774 = vpack.c.b16 %v6230, %v6226
        %v6775 = vpack.c.b16 %v6231, %v6227
        %v6776 = vpack.c.b16 %v6236, %v6232
        %v6777 = vpack.c.b16 %v6237, %v6233
        %v6778 = vpack.c.b16 %v6238, %v6234
        %v6779 = vpack.c.b16 %v6239, %v6235
        %v6780 = vpack.c.b16 %v6244, %v6240
        %v6781 = vpack.c.b16 %v6245, %v6241
        %v6782 = vpack.c.b16 %v6246, %v6242
        %v6783 = vpack.c.b16 %v6247, %v6243
        %v6784 = vpack.c.b16 %v6252, %v6248
        %v6785 = vpack.c.b16 %v6253, %v6249
        %v6786 = vpack.c.b16 %v6254, %v6250
        %v6787 = vpack.c.b16 %v6255, %v6251
        %v6788 = vpack.c.b16 %v6260, %v6256
        %v6789 = vpack.c.b16 %v6261, %v6257
        %v6790 = vpack.c.b16 %v6262, %v6258
        %v6791 = vpack.c.b16 %v6263, %v6259
        %v6792 = vpack.c.b16 %v6268, %v6264
        %v6793 = vpack.c.b16 %v6269, %v6265
        %v6794 = vpack.c.b16 %v6270, %v6266
        %v6795 = vpack.c.b16 %v6271, %v6267
        %v6796 = vpack.c.b16 %v6276, %v6272
        %v6797 = vpack.c.b16 %v6277, %v6273
        %v6798 = vpack.c.b16 %v6278, %v6274
        %v6799 = vpack.c.b16 %v6279, %v6275
        %v6800 = vpack.c.b16 %v6284, %v6280
        %v6801 = vpack.c.b16 %v6285, %v6281
        %v6802 = vpack.c.b16 %v6286, %v6282
        %v6803 = vpack.c.b16 %v6287, %v6283
        %v6804 = vpack.c.b16 %v6292, %v6288
        %v6805 = vpack.c.b16 %v6293, %v6289
        %v6806 = vpack.c.b16 %v6294, %v6290
        %v6807 = vpack.c.b16 %v6295, %v6291
        %7320 = vmatprep.subr.bf16.mxu0 %v6325
        %7321 = vmatpush1.bf16.msra.mxu0 %v6324
        %7322 = vmatprep.subr.bf16.mxu0 %v6321
        %7323 = vmatpush1.bf16.msra.mxu0 %v6320
        %7324 = vmatprep.subr.bf16.mxu0 %v6317
        %7325 = vmatpush1.bf16.msra.mxu0 %v6316
        %7326 = vmatprep.subr.bf16.mxu0 %v6313
        %7327 = vmatpush1.bf16.msra.mxu0 %v6312
        %7328 = vmatprep.subr.bf16.mxu0 %v6309
        %7329 = vmatpush1.bf16.msra.mxu0 %v6308
        %7330 = vmatprep.subr.bf16.mxu0 %v6305
        %7331 = vmatpush1.bf16.msra.mxu0 %v6304
        %7332 = vmatprep.subr.bf16.mxu0 %v6301
        %7333 = vmatpush1.bf16.msra.mxu0 %v6300
        %7334 = vmatprep.subr.bf16.mxu0 %v6297
        %7335 = vmatpush1.bf16.msra.mxu0 %v6296
        %7336 = vmatprep.subr.bf16.mxu0 %v6357
        %7337 = vmatpush2.bf16.msra.mxu0 %v6356
        %7338 = vmatprep.subr.bf16.mxu0 %v6353
        %7339 = vmatpush2.bf16.msra.mxu0 %v6352
        %7340 = vmatprep.subr.bf16.mxu0 %v6349
        %7341 = vmatpush2.bf16.msra.mxu0 %v6348
        %7342 = vmatprep.subr.bf16.mxu0 %v6345
        %7343 = vmatpush2.bf16.msra.mxu0 %v6344
        %7344 = vmatprep.subr.bf16.mxu0 %v6341
        %7345 = vmatpush2.bf16.msra.mxu0 %v6340
        %7346 = vmatprep.subr.bf16.mxu0 %v6337
        %7347 = vmatpush2.bf16.msra.mxu0 %v6336
        %7348 = vmatprep.subr.bf16.mxu0 %v6333
        %7349 = vmatpush2.bf16.msra.mxu0 %v6332
        %7350 = vmatprep.subr.bf16.mxu0 %v6329
        %7351 = vmatpush2.bf16.msra.mxu0 %v6328
        %7352 = vmatprep.mubr.bf16.mxu0 %v4211
        %7353 = vmatmul.mubr.bf16.gmra.mxu0 %v4210
        %v7354 = vpop.f32.mrf.mxu0
        %v7355 = vadd.f32 %v4743, %v7354
        %v7356 = vpop.f32.mrf.mxu0
        %v7357 = vadd.f32 %v4747, %v7356
        %v7358 = vpop.f32.mrf.mxu0
        %v7359 = vpop.f32.mrf.mxu0
        %7360 = vdwg.mxu0
        %7361 = vmatprep.subr.bf16.mxu0 %v6389
        %7362 = vmatpush1.bf16.msra.mxu0 %v6388
        %7363 = vmatprep.subr.bf16.mxu0 %v6385
        %7364 = vmatpush1.bf16.msra.mxu0 %v6384
        %7365 = vmatprep.subr.bf16.mxu0 %v6381
        %7366 = vmatpush1.bf16.msra.mxu0 %v6380
        %7367 = vmatprep.subr.bf16.mxu0 %v6377
        %7368 = vmatpush1.bf16.msra.mxu0 %v6376
        %7369 = vmatprep.subr.bf16.mxu0 %v6373
        %7370 = vmatpush1.bf16.msra.mxu0 %v6372
        %7371 = vmatprep.subr.bf16.mxu0 %v6369
        %7372 = vmatpush1.bf16.msra.mxu0 %v6368
        %7373 = vmatprep.subr.bf16.mxu0 %v6365
        %7374 = vmatpush1.bf16.msra.mxu0 %v6364
        %7375 = vmatprep.subr.bf16.mxu0 %v6361
        %7376 = vmatpush1.bf16.msra.mxu0 %v6360
        %7377 = vmatprep.subr.bf16.mxu0 %v6421
        %7378 = vmatpush2.bf16.msra.mxu0 %v6420
        %7379 = vmatprep.subr.bf16.mxu0 %v6417
        %7380 = vmatpush2.bf16.msra.mxu0 %v6416
        %7381 = vmatprep.subr.bf16.mxu0 %v6413
        %7382 = vmatpush2.bf16.msra.mxu0 %v6412
        %7383 = vmatprep.subr.bf16.mxu0 %v6409
        %7384 = vmatpush2.bf16.msra.mxu0 %v6408
        %7385 = vmatprep.subr.bf16.mxu0 %v6405
        %7386 = vmatpush2.bf16.msra.mxu0 %v6404
        %7387 = vmatprep.subr.bf16.mxu0 %v6401
        %7388 = vmatpush2.bf16.msra.mxu0 %v6400
        %7389 = vmatprep.subr.bf16.mxu0 %v6397
        %7390 = vmatpush2.bf16.msra.mxu0 %v6396
        %7391 = vmatprep.subr.bf16.mxu0 %v6393
        %7392 = vmatpush2.bf16.msra.mxu0 %v6392
        %7393 = vmatprep.mubr.bf16.mxu0 %v4213
        %7394 = vmatmul.mubr.bf16.gmra.mxu0 %v4212
        %v7395 = vpop.f32.mrf.mxu0
        %v7396 = vadd.f32 %v7355, %v7395
        %v7397 = vpop.f32.mrf.mxu0
        %v7398 = vadd.f32 %v7357, %v7397
        %v7399 = vpop.f32.mrf.mxu0
        %v7400 = vpop.f32.mrf.mxu0
        %7401 = vdwg.mxu0
        %7402 = vmatprep.subr.bf16.mxu0 %v6453
        %7403 = vmatpush1.bf16.msra.mxu0 %v6452
        %7404 = vmatprep.subr.bf16.mxu0 %v6449
        %7405 = vmatpush1.bf16.msra.mxu0 %v6448
        %7406 = vmatprep.subr.bf16.mxu0 %v6445
        %7407 = vmatpush1.bf16.msra.mxu0 %v6444
        %7408 = vmatprep.subr.bf16.mxu0 %v6441
        %7409 = vmatpush1.bf16.msra.mxu0 %v6440
        %7410 = vmatprep.subr.bf16.mxu0 %v6437
        %7411 = vmatpush1.bf16.msra.mxu0 %v6436
        %7412 = vmatprep.subr.bf16.mxu0 %v6433
        %7413 = vmatpush1.bf16.msra.mxu0 %v6432
        %7414 = vmatprep.subr.bf16.mxu0 %v6429
        %7415 = vmatpush1.bf16.msra.mxu0 %v6428
        %7416 = vmatprep.subr.bf16.mxu0 %v6425
        %7417 = vmatpush1.bf16.msra.mxu0 %v6424
        %7418 = vmatprep.subr.bf16.mxu0 %v6485
        %7419 = vmatpush2.bf16.msra.mxu0 %v6484
        %7420 = vmatprep.subr.bf16.mxu0 %v6481
        %7421 = vmatpush2.bf16.msra.mxu0 %v6480
        %7422 = vmatprep.subr.bf16.mxu0 %v6477
        %7423 = vmatpush2.bf16.msra.mxu0 %v6476
        %7424 = vmatprep.subr.bf16.mxu0 %v6473
        %7425 = vmatpush2.bf16.msra.mxu0 %v6472
        %7426 = vmatprep.subr.bf16.mxu0 %v6469
        %7427 = vmatpush2.bf16.msra.mxu0 %v6468
        %7428 = vmatprep.subr.bf16.mxu0 %v6465
        %7429 = vmatpush2.bf16.msra.mxu0 %v6464
        %7430 = vmatprep.subr.bf16.mxu0 %v6461
        %7431 = vmatpush2.bf16.msra.mxu0 %v6460
        %7432 = vmatprep.subr.bf16.mxu0 %v6457
        %7433 = vmatpush2.bf16.msra.mxu0 %v6456
        %7434 = vmatprep.mubr.bf16.mxu0 %v4215
        %7435 = vmatmul.mubr.bf16.gmra.mxu0 %v4214
        %v7436 = vpop.f32.mrf.mxu0
        %v7437 = vadd.f32 %v7396, %v7436
        %v7438 = vpop.f32.mrf.mxu0
        %v7439 = vadd.f32 %v7398, %v7438
        %v7440 = vpop.f32.mrf.mxu0
        %v7441 = vpop.f32.mrf.mxu0
        %7442 = vdwg.mxu0
        %7443 = vmatprep.subr.bf16.mxu0 %v6517
        %7444 = vmatpush1.bf16.msra.mxu0 %v6516
        %7445 = vmatprep.subr.bf16.mxu0 %v6513
        %7446 = vmatpush1.bf16.msra.mxu0 %v6512
        %7447 = vmatprep.subr.bf16.mxu0 %v6509
        %7448 = vmatpush1.bf16.msra.mxu0 %v6508
        %7449 = vmatprep.subr.bf16.mxu0 %v6505
        %7450 = vmatpush1.bf16.msra.mxu0 %v6504
        %7451 = vmatprep.subr.bf16.mxu0 %v6501
        %7452 = vmatpush1.bf16.msra.mxu0 %v6500
        %7453 = vmatprep.subr.bf16.mxu0 %v6497
        %7454 = vmatpush1.bf16.msra.mxu0 %v6496
        %7455 = vmatprep.subr.bf16.mxu0 %v6493
        %7456 = vmatpush1.bf16.msra.mxu0 %v6492
        %7457 = vmatprep.subr.bf16.mxu0 %v6489
        %7458 = vmatpush1.bf16.msra.mxu0 %v6488
        %7459 = vmatprep.subr.bf16.mxu0 %v6549
        %7460 = vmatpush2.bf16.msra.mxu0 %v6548
        %7461 = vmatprep.subr.bf16.mxu0 %v6545
        %7462 = vmatpush2.bf16.msra.mxu0 %v6544
        %7463 = vmatprep.subr.bf16.mxu0 %v6541
        %7464 = vmatpush2.bf16.msra.mxu0 %v6540
        %7465 = vmatprep.subr.bf16.mxu0 %v6537
        %7466 = vmatpush2.bf16.msra.mxu0 %v6536
        %7467 = vmatprep.subr.bf16.mxu0 %v6533
        %7468 = vmatpush2.bf16.msra.mxu0 %v6532
        %7469 = vmatprep.subr.bf16.mxu0 %v6529
        %7470 = vmatpush2.bf16.msra.mxu0 %v6528
        %7471 = vmatprep.subr.bf16.mxu0 %v6525
        %7472 = vmatpush2.bf16.msra.mxu0 %v6524
        %7473 = vmatprep.subr.bf16.mxu0 %v6521
        %7474 = vmatpush2.bf16.msra.mxu0 %v6520
        %7475 = vmatprep.mubr.bf16.mxu0 %v4217
        %7476 = vmatmul.mubr.bf16.gmra.mxu0 %v4216
        %v7477 = vpop.f32.mrf.mxu0
        %v7478 = vadd.f32 %v7437, %v7477
        %v7479 = vpop.f32.mrf.mxu0
        %v7480 = vadd.f32 %v7439, %v7479
        %v7481 = vpop.f32.mrf.mxu0
        %v7482 = vpop.f32.mrf.mxu0
        %7483 = vdwg.mxu0
        %7484 = vmatprep.subr.bf16.mxu0 %v6581
        %7485 = vmatpush1.bf16.msra.mxu0 %v6580
        %7486 = vmatprep.subr.bf16.mxu0 %v6577
        %7487 = vmatpush1.bf16.msra.mxu0 %v6576
        %7488 = vmatprep.subr.bf16.mxu0 %v6573
        %7489 = vmatpush1.bf16.msra.mxu0 %v6572
        %7490 = vmatprep.subr.bf16.mxu0 %v6569
        %7491 = vmatpush1.bf16.msra.mxu0 %v6568
        %7492 = vmatprep.subr.bf16.mxu0 %v6565
        %7493 = vmatpush1.bf16.msra.mxu0 %v6564
        %7494 = vmatprep.subr.bf16.mxu0 %v6561
        %7495 = vmatpush1.bf16.msra.mxu0 %v6560
        %7496 = vmatprep.subr.bf16.mxu0 %v6557
        %7497 = vmatpush1.bf16.msra.mxu0 %v6556
        %7498 = vmatprep.subr.bf16.mxu0 %v6553
        %7499 = vmatpush1.bf16.msra.mxu0 %v6552
        %7500 = vmatprep.subr.bf16.mxu0 %v6613
        %7501 = vmatpush2.bf16.msra.mxu0 %v6612
        %7502 = vmatprep.subr.bf16.mxu0 %v6609
        %7503 = vmatpush2.bf16.msra.mxu0 %v6608
        %7504 = vmatprep.subr.bf16.mxu0 %v6605
        %7505 = vmatpush2.bf16.msra.mxu0 %v6604
        %7506 = vmatprep.subr.bf16.mxu0 %v6601
        %7507 = vmatpush2.bf16.msra.mxu0 %v6600
        %7508 = vmatprep.subr.bf16.mxu0 %v6597
        %7509 = vmatpush2.bf16.msra.mxu0 %v6596
        %7510 = vmatprep.subr.bf16.mxu0 %v6593
        %7511 = vmatpush2.bf16.msra.mxu0 %v6592
        %7512 = vmatprep.subr.bf16.mxu0 %v6589
        %7513 = vmatpush2.bf16.msra.mxu0 %v6588
        %7514 = vmatprep.subr.bf16.mxu0 %v6585
        %7515 = vmatpush2.bf16.msra.mxu0 %v6584
        %7516 = vmatprep.mubr.bf16.mxu0 %v4219
        %7517 = vmatmul.mubr.bf16.gmra.mxu0 %v4218
        %v7518 = vpop.f32.mrf.mxu0
        %v7519 = vadd.f32 %v7478, %v7518
        %v7520 = vpop.f32.mrf.mxu0
        %v7521 = vadd.f32 %v7480, %v7520
        %v7522 = vpop.f32.mrf.mxu0
        %v7523 = vpop.f32.mrf.mxu0
        %7524 = vdwg.mxu0
        %7525 = vmatprep.subr.bf16.mxu0 %v6645
        %7526 = vmatpush1.bf16.msra.mxu0 %v6644
        %7527 = vmatprep.subr.bf16.mxu0 %v6641
        %7528 = vmatpush1.bf16.msra.mxu0 %v6640
        %7529 = vmatprep.subr.bf16.mxu0 %v6637
        %7530 = vmatpush1.bf16.msra.mxu0 %v6636
        %7531 = vmatprep.subr.bf16.mxu0 %v6633
        %7532 = vmatpush1.bf16.msra.mxu0 %v6632
        %7533 = vmatprep.subr.bf16.mxu0 %v6629
        %7534 = vmatpush1.bf16.msra.mxu0 %v6628
        %7535 = vmatprep.subr.bf16.mxu0 %v6625
        %7536 = vmatpush1.bf16.msra.mxu0 %v6624
        %7537 = vmatprep.subr.bf16.mxu0 %v6621
        %7538 = vmatpush1.bf16.msra.mxu0 %v6620
        %7539 = vmatprep.subr.bf16.mxu0 %v6617
        %7540 = vmatpush1.bf16.msra.mxu0 %v6616
        %7541 = vmatprep.subr.bf16.mxu0 %v6677
        %7542 = vmatpush2.bf16.msra.mxu0 %v6676
        %7543 = vmatprep.subr.bf16.mxu0 %v6673
        %7544 = vmatpush2.bf16.msra.mxu0 %v6672
        %7545 = vmatprep.subr.bf16.mxu0 %v6669
        %7546 = vmatpush2.bf16.msra.mxu0 %v6668
        %7547 = vmatprep.subr.bf16.mxu0 %v6665
        %7548 = vmatpush2.bf16.msra.mxu0 %v6664
        %7549 = vmatprep.subr.bf16.mxu0 %v6661
        %7550 = vmatpush2.bf16.msra.mxu0 %v6660
        %7551 = vmatprep.subr.bf16.mxu0 %v6657
        %7552 = vmatpush2.bf16.msra.mxu0 %v6656
        %7553 = vmatprep.subr.bf16.mxu0 %v6653
        %7554 = vmatpush2.bf16.msra.mxu0 %v6652
        %7555 = vmatprep.subr.bf16.mxu0 %v6649
        %7556 = vmatpush2.bf16.msra.mxu0 %v6648
        %7557 = vmatprep.mubr.bf16.mxu0 %v4221
        %7558 = vmatmul.mubr.bf16.gmra.mxu0 %v4220
        %v7559 = vpop.f32.mrf.mxu0
        %v7560 = vadd.f32 %v7519, %v7559
        %v7561 = vpop.f32.mrf.mxu0
        %v7562 = vadd.f32 %v7521, %v7561
        %v7563 = vpop.f32.mrf.mxu0
        %v7564 = vpop.f32.mrf.mxu0
        %7565 = vdwg.mxu0
        %7566 = vmatprep.subr.bf16.mxu0 %v6709
        %7567 = vmatpush1.bf16.msra.mxu0 %v6708
        %7568 = vmatprep.subr.bf16.mxu0 %v6705
        %7569 = vmatpush1.bf16.msra.mxu0 %v6704
        %7570 = vmatprep.subr.bf16.mxu0 %v6701
        %7571 = vmatpush1.bf16.msra.mxu0 %v6700
        %7572 = vmatprep.subr.bf16.mxu0 %v6697
        %7573 = vmatpush1.bf16.msra.mxu0 %v6696
        %7574 = vmatprep.subr.bf16.mxu0 %v6693
        %7575 = vmatpush1.bf16.msra.mxu0 %v6692
        %7576 = vmatprep.subr.bf16.mxu0 %v6689
        %7577 = vmatpush1.bf16.msra.mxu0 %v6688
        %7578 = vmatprep.subr.bf16.mxu0 %v6685
        %7579 = vmatpush1.bf16.msra.mxu0 %v6684
        %7580 = vmatprep.subr.bf16.mxu0 %v6681
        %7581 = vmatpush1.bf16.msra.mxu0 %v6680
        %7582 = vmatprep.subr.bf16.mxu0 %v6741
        %7583 = vmatpush2.bf16.msra.mxu0 %v6740
        %7584 = vmatprep.subr.bf16.mxu0 %v6737
        %7585 = vmatpush2.bf16.msra.mxu0 %v6736
        %7586 = vmatprep.subr.bf16.mxu0 %v6733
        %7587 = vmatpush2.bf16.msra.mxu0 %v6732
        %7588 = vmatprep.subr.bf16.mxu0 %v6729
        %7589 = vmatpush2.bf16.msra.mxu0 %v6728
        %7590 = vmatprep.subr.bf16.mxu0 %v6725
        %7591 = vmatpush2.bf16.msra.mxu0 %v6724
        %7592 = vmatprep.subr.bf16.mxu0 %v6721
        %7593 = vmatpush2.bf16.msra.mxu0 %v6720
        %7594 = vmatprep.subr.bf16.mxu0 %v6717
        %7595 = vmatpush2.bf16.msra.mxu0 %v6716
        %7596 = vmatprep.subr.bf16.mxu0 %v6713
        %7597 = vmatpush2.bf16.msra.mxu0 %v6712
        %7598 = vmatprep.mubr.bf16.mxu0 %v4223
        %7599 = vmatmul.mubr.bf16.gmra.mxu0 %v4222
        %v7600 = vpop.f32.mrf.mxu0
        %v7601 = vadd.f32 %v7560, %v7600
        %v7602 = vpop.f32.mrf.mxu0
        %v7603 = vadd.f32 %v7562, %v7602
        %v7604 = vpop.f32.mrf.mxu0
        %v7605 = vpop.f32.mrf.mxu0
        %7606 = vdwg.mxu0
        %7607 = vmatprep.subr.bf16.mxu0 %v6773
        %7608 = vmatpush1.bf16.msra.mxu0 %v6772
        %7609 = vmatprep.subr.bf16.mxu0 %v6769
        %7610 = vmatpush1.bf16.msra.mxu0 %v6768
        %7611 = vmatprep.subr.bf16.mxu0 %v6765
        %7612 = vmatpush1.bf16.msra.mxu0 %v6764
        %7613 = vmatprep.subr.bf16.mxu0 %v6761
        %7614 = vmatpush1.bf16.msra.mxu0 %v6760
        %7615 = vmatprep.subr.bf16.mxu0 %v6757
        %7616 = vmatpush1.bf16.msra.mxu0 %v6756
        %7617 = vmatprep.subr.bf16.mxu0 %v6753
        %7618 = vmatpush1.bf16.msra.mxu0 %v6752
        %7619 = vmatprep.subr.bf16.mxu0 %v6749
        %7620 = vmatpush1.bf16.msra.mxu0 %v6748
        %7621 = vmatprep.subr.bf16.mxu0 %v6745
        %7622 = vmatpush1.bf16.msra.mxu0 %v6744
        %7623 = vmatprep.subr.bf16.mxu0 %v6805
        %7624 = vmatpush2.bf16.msra.mxu0 %v6804
        %7625 = vmatprep.subr.bf16.mxu0 %v6801
        %7626 = vmatpush2.bf16.msra.mxu0 %v6800
        %7627 = vmatprep.subr.bf16.mxu0 %v6797
        %7628 = vmatpush2.bf16.msra.mxu0 %v6796
        %7629 = vmatprep.subr.bf16.mxu0 %v6793
        %7630 = vmatpush2.bf16.msra.mxu0 %v6792
        %7631 = vmatprep.subr.bf16.mxu0 %v6789
        %7632 = vmatpush2.bf16.msra.mxu0 %v6788
        %7633 = vmatprep.subr.bf16.mxu0 %v6785
        %7634 = vmatpush2.bf16.msra.mxu0 %v6784
        %7635 = vmatprep.subr.bf16.mxu0 %v6781
        %7636 = vmatpush2.bf16.msra.mxu0 %v6780
        %7637 = vmatprep.subr.bf16.mxu0 %v6777
        %7638 = vmatpush2.bf16.msra.mxu0 %v6776
        %7639 = vmatprep.mubr.bf16.mxu0 %v4225
        %7640 = vmatmul.mubr.bf16.gmra.mxu0 %v4224
        %v7641 = vpop.f32.mrf.mxu0
        %v7642 = vadd.f32 %v7601, %v7641
        %v7643 = vpop.f32.mrf.mxu0
        %v7644 = vadd.f32 %v7603, %v7643
        %v7645 = vpop.f32.mrf.mxu0
        %v7646 = vpop.f32.mrf.mxu0
        %7647 = vdwg.mxu0
        %7648 = vmatprep.subr.bf16.mxu0 %v6327
        %7649 = vmatpush1.bf16.msra.mxu0 %v6326
        %7650 = vmatprep.subr.bf16.mxu0 %v6323
        %7651 = vmatpush1.bf16.msra.mxu0 %v6322
        %7652 = vmatprep.subr.bf16.mxu0 %v6319
        %7653 = vmatpush1.bf16.msra.mxu0 %v6318
        %7654 = vmatprep.subr.bf16.mxu0 %v6315
        %7655 = vmatpush1.bf16.msra.mxu0 %v6314
        %7656 = vmatprep.subr.bf16.mxu0 %v6311
        %7657 = vmatpush1.bf16.msra.mxu0 %v6310
        %7658 = vmatprep.subr.bf16.mxu0 %v6307
        %7659 = vmatpush1.bf16.msra.mxu0 %v6306
        %7660 = vmatprep.subr.bf16.mxu0 %v6303
        %7661 = vmatpush1.bf16.msra.mxu0 %v6302
        %7662 = vmatprep.subr.bf16.mxu0 %v6299
        %7663 = vmatpush1.bf16.msra.mxu0 %v6298
        %7664 = vmatprep.subr.bf16.mxu0 %v6359
        %7665 = vmatpush2.bf16.msra.mxu0 %v6358
        %7666 = vmatprep.subr.bf16.mxu0 %v6355
        %7667 = vmatpush2.bf16.msra.mxu0 %v6354
        %7668 = vmatprep.subr.bf16.mxu0 %v6351
        %7669 = vmatpush2.bf16.msra.mxu0 %v6350
        %7670 = vmatprep.subr.bf16.mxu0 %v6347
        %7671 = vmatpush2.bf16.msra.mxu0 %v6346
        %7672 = vmatprep.subr.bf16.mxu0 %v6343
        %7673 = vmatpush2.bf16.msra.mxu0 %v6342
        %7674 = vmatprep.subr.bf16.mxu0 %v6339
        %7675 = vmatpush2.bf16.msra.mxu0 %v6338
        %7676 = vmatprep.subr.bf16.mxu0 %v6335
        %7677 = vmatpush2.bf16.msra.mxu0 %v6334
        %7678 = vmatprep.subr.bf16.mxu0 %v6331
        %7679 = vmatpush2.bf16.msra.mxu0 %v6330
        %7680 = vmatprep.mubr.bf16.mxu0 %v4211
        %7681 = vmatmul.mubr.bf16.gmra.mxu0 %v4210
        %v7682 = vpop.f32.mrf.mxu0
        %v7683 = vadd.f32 %v4751, %v7682
        %v7684 = vpop.f32.mrf.mxu0
        %v7685 = vadd.f32 %v4755, %v7684
        %v7686 = vpop.f32.mrf.mxu0
        %v7687 = vpop.f32.mrf.mxu0
        %7688 = vdwg.mxu0
        %7689 = vmatprep.subr.bf16.mxu0 %v6391
        %7690 = vmatpush1.bf16.msra.mxu0 %v6390
        %7691 = vmatprep.subr.bf16.mxu0 %v6387
        %7692 = vmatpush1.bf16.msra.mxu0 %v6386
        %7693 = vmatprep.subr.bf16.mxu0 %v6383
        %7694 = vmatpush1.bf16.msra.mxu0 %v6382
        %7695 = vmatprep.subr.bf16.mxu0 %v6379
        %7696 = vmatpush1.bf16.msra.mxu0 %v6378
        %7697 = vmatprep.subr.bf16.mxu0 %v6375
        %7698 = vmatpush1.bf16.msra.mxu0 %v6374
        %7699 = vmatprep.subr.bf16.mxu0 %v6371
        %7700 = vmatpush1.bf16.msra.mxu0 %v6370
        %7701 = vmatprep.subr.bf16.mxu0 %v6367
        %7702 = vmatpush1.bf16.msra.mxu0 %v6366
        %7703 = vmatprep.subr.bf16.mxu0 %v6363
        %7704 = vmatpush1.bf16.msra.mxu0 %v6362
        %7705 = vmatprep.subr.bf16.mxu0 %v6423
        %7706 = vmatpush2.bf16.msra.mxu0 %v6422
        %7707 = vmatprep.subr.bf16.mxu0 %v6419
        %7708 = vmatpush2.bf16.msra.mxu0 %v6418
        %7709 = vmatprep.subr.bf16.mxu0 %v6415
        %7710 = vmatpush2.bf16.msra.mxu0 %v6414
        %7711 = vmatprep.subr.bf16.mxu0 %v6411
        %7712 = vmatpush2.bf16.msra.mxu0 %v6410
        %7713 = vmatprep.subr.bf16.mxu0 %v6407
        %7714 = vmatpush2.bf16.msra.mxu0 %v6406
        %7715 = vmatprep.subr.bf16.mxu0 %v6403
        %7716 = vmatpush2.bf16.msra.mxu0 %v6402
        %7717 = vmatprep.subr.bf16.mxu0 %v6399
        %7718 = vmatpush2.bf16.msra.mxu0 %v6398
        %7719 = vmatprep.subr.bf16.mxu0 %v6395
        %7720 = vmatpush2.bf16.msra.mxu0 %v6394
        %7721 = vmatprep.mubr.bf16.mxu0 %v4213
        %7722 = vmatmul.mubr.bf16.gmra.mxu0 %v4212
        %v7723 = vpop.f32.mrf.mxu0
        %v7724 = vadd.f32 %v7683, %v7723
        %v7725 = vpop.f32.mrf.mxu0
        %v7726 = vadd.f32 %v7685, %v7725
        %v7727 = vpop.f32.mrf.mxu0
        %v7728 = vpop.f32.mrf.mxu0
        %7729 = vdwg.mxu0
        %7730 = vmatprep.subr.bf16.mxu0 %v6455
        %7731 = vmatpush1.bf16.msra.mxu0 %v6454
        %7732 = vmatprep.subr.bf16.mxu0 %v6451
        %7733 = vmatpush1.bf16.msra.mxu0 %v6450
        %7734 = vmatprep.subr.bf16.mxu0 %v6447
        %7735 = vmatpush1.bf16.msra.mxu0 %v6446
        %7736 = vmatprep.subr.bf16.mxu0 %v6443
        %7737 = vmatpush1.bf16.msra.mxu0 %v6442
        %7738 = vmatprep.subr.bf16.mxu0 %v6439
        %7739 = vmatpush1.bf16.msra.mxu0 %v6438
        %7740 = vmatprep.subr.bf16.mxu0 %v6435
        %7741 = vmatpush1.bf16.msra.mxu0 %v6434
        %7742 = vmatprep.subr.bf16.mxu0 %v6431
        %7743 = vmatpush1.bf16.msra.mxu0 %v6430
        %7744 = vmatprep.subr.bf16.mxu0 %v6427
        %7745 = vmatpush1.bf16.msra.mxu0 %v6426
        %7746 = vmatprep.subr.bf16.mxu0 %v6487
        %7747 = vmatpush2.bf16.msra.mxu0 %v6486
        %7748 = vmatprep.subr.bf16.mxu0 %v6483
        %7749 = vmatpush2.bf16.msra.mxu0 %v6482
        %7750 = vmatprep.subr.bf16.mxu0 %v6479
        %7751 = vmatpush2.bf16.msra.mxu0 %v6478
        %7752 = vmatprep.subr.bf16.mxu0 %v6475
        %7753 = vmatpush2.bf16.msra.mxu0 %v6474
        %7754 = vmatprep.subr.bf16.mxu0 %v6471
        %7755 = vmatpush2.bf16.msra.mxu0 %v6470
        %7756 = vmatprep.subr.bf16.mxu0 %v6467
        %7757 = vmatpush2.bf16.msra.mxu0 %v6466
        %7758 = vmatprep.subr.bf16.mxu0 %v6463
        %7759 = vmatpush2.bf16.msra.mxu0 %v6462
        %7760 = vmatprep.subr.bf16.mxu0 %v6459
        %7761 = vmatpush2.bf16.msra.mxu0 %v6458
        %7762 = vmatprep.mubr.bf16.mxu0 %v4215
        %7763 = vmatmul.mubr.bf16.gmra.mxu0 %v4214
        %v7764 = vpop.f32.mrf.mxu0
        %v7765 = vadd.f32 %v7724, %v7764
        %v7766 = vpop.f32.mrf.mxu0
        %v7767 = vadd.f32 %v7726, %v7766
        %v7768 = vpop.f32.mrf.mxu0
        %v7769 = vpop.f32.mrf.mxu0
        %7770 = vdwg.mxu0
        %7771 = vmatprep.subr.bf16.mxu0 %v6519
        %7772 = vmatpush1.bf16.msra.mxu0 %v6518
        %7773 = vmatprep.subr.bf16.mxu0 %v6515
        %7774 = vmatpush1.bf16.msra.mxu0 %v6514
        %7775 = vmatprep.subr.bf16.mxu0 %v6511
        %7776 = vmatpush1.bf16.msra.mxu0 %v6510
        %7777 = vmatprep.subr.bf16.mxu0 %v6507
        %7778 = vmatpush1.bf16.msra.mxu0 %v6506
        %7779 = vmatprep.subr.bf16.mxu0 %v6503
        %7780 = vmatpush1.bf16.msra.mxu0 %v6502
        %7781 = vmatprep.subr.bf16.mxu0 %v6499
        %7782 = vmatpush1.bf16.msra.mxu0 %v6498
        %7783 = vmatprep.subr.bf16.mxu0 %v6495
        %7784 = vmatpush1.bf16.msra.mxu0 %v6494
        %7785 = vmatprep.subr.bf16.mxu0 %v6491
        %7786 = vmatpush1.bf16.msra.mxu0 %v6490
        %7787 = vmatprep.subr.bf16.mxu0 %v6551
        %7788 = vmatpush2.bf16.msra.mxu0 %v6550
        %7789 = vmatprep.subr.bf16.mxu0 %v6547
        %7790 = vmatpush2.bf16.msra.mxu0 %v6546
        %7791 = vmatprep.subr.bf16.mxu0 %v6543
        %7792 = vmatpush2.bf16.msra.mxu0 %v6542
        %7793 = vmatprep.subr.bf16.mxu0 %v6539
        %7794 = vmatpush2.bf16.msra.mxu0 %v6538
        %7795 = vmatprep.subr.bf16.mxu0 %v6535
        %7796 = vmatpush2.bf16.msra.mxu0 %v6534
        %7797 = vmatprep.subr.bf16.mxu0 %v6531
        %7798 = vmatpush2.bf16.msra.mxu0 %v6530
        %7799 = vmatprep.subr.bf16.mxu0 %v6527
        %7800 = vmatpush2.bf16.msra.mxu0 %v6526
        %7801 = vmatprep.subr.bf16.mxu0 %v6523
        %7802 = vmatpush2.bf16.msra.mxu0 %v6522
        %7803 = vmatprep.mubr.bf16.mxu0 %v4217
        %7804 = vmatmul.mubr.bf16.gmra.mxu0 %v4216
        %v7805 = vpop.f32.mrf.mxu0
        %v7806 = vadd.f32 %v7765, %v7805
        %v7807 = vpop.f32.mrf.mxu0
        %v7808 = vadd.f32 %v7767, %v7807
        %v7809 = vpop.f32.mrf.mxu0
        %v7810 = vpop.f32.mrf.mxu0
        %7811 = vdwg.mxu0
        %7812 = vmatprep.subr.bf16.mxu0 %v6583
        %7813 = vmatpush1.bf16.msra.mxu0 %v6582
        %7814 = vmatprep.subr.bf16.mxu0 %v6579
        %7815 = vmatpush1.bf16.msra.mxu0 %v6578
        %7816 = vmatprep.subr.bf16.mxu0 %v6575
        %7817 = vmatpush1.bf16.msra.mxu0 %v6574
        %7818 = vmatprep.subr.bf16.mxu0 %v6571
        %7819 = vmatpush1.bf16.msra.mxu0 %v6570
        %7820 = vmatprep.subr.bf16.mxu0 %v6567
        %7821 = vmatpush1.bf16.msra.mxu0 %v6566
        %7822 = vmatprep.subr.bf16.mxu0 %v6563
        %7823 = vmatpush1.bf16.msra.mxu0 %v6562
        %7824 = vmatprep.subr.bf16.mxu0 %v6559
        %7825 = vmatpush1.bf16.msra.mxu0 %v6558
        %7826 = vmatprep.subr.bf16.mxu0 %v6555
        %7827 = vmatpush1.bf16.msra.mxu0 %v6554
        %7828 = vmatprep.subr.bf16.mxu0 %v6615
        %7829 = vmatpush2.bf16.msra.mxu0 %v6614
        %7830 = vmatprep.subr.bf16.mxu0 %v6611
        %7831 = vmatpush2.bf16.msra.mxu0 %v6610
        %7832 = vmatprep.subr.bf16.mxu0 %v6607
        %7833 = vmatpush2.bf16.msra.mxu0 %v6606
        %7834 = vmatprep.subr.bf16.mxu0 %v6603
        %7835 = vmatpush2.bf16.msra.mxu0 %v6602
        %7836 = vmatprep.subr.bf16.mxu0 %v6599
        %7837 = vmatpush2.bf16.msra.mxu0 %v6598
        %7838 = vmatprep.subr.bf16.mxu0 %v6595
        %7839 = vmatpush2.bf16.msra.mxu0 %v6594
        %7840 = vmatprep.subr.bf16.mxu0 %v6591
        %7841 = vmatpush2.bf16.msra.mxu0 %v6590
        %7842 = vmatprep.subr.bf16.mxu0 %v6587
        %7843 = vmatpush2.bf16.msra.mxu0 %v6586
        %7844 = vmatprep.mubr.bf16.mxu0 %v4219
        %7845 = vmatmul.mubr.bf16.gmra.mxu0 %v4218
        %v7846 = vpop.f32.mrf.mxu0
        %v7847 = vadd.f32 %v7806, %v7846
        %v7848 = vpop.f32.mrf.mxu0
        %v7849 = vadd.f32 %v7808, %v7848
        %v7850 = vpop.f32.mrf.mxu0
        %v7851 = vpop.f32.mrf.mxu0
        %7852 = vdwg.mxu0
        %7853 = vmatprep.subr.bf16.mxu0 %v6647
        %7854 = vmatpush1.bf16.msra.mxu0 %v6646
        %7855 = vmatprep.subr.bf16.mxu0 %v6643
        %7856 = vmatpush1.bf16.msra.mxu0 %v6642
        %7857 = vmatprep.subr.bf16.mxu0 %v6639
        %7858 = vmatpush1.bf16.msra.mxu0 %v6638
        %7859 = vmatprep.subr.bf16.mxu0 %v6635
        %7860 = vmatpush1.bf16.msra.mxu0 %v6634
        %7861 = vmatprep.subr.bf16.mxu0 %v6631
        %7862 = vmatpush1.bf16.msra.mxu0 %v6630
        %7863 = vmatprep.subr.bf16.mxu0 %v6627
        %7864 = vmatpush1.bf16.msra.mxu0 %v6626
        %7865 = vmatprep.subr.bf16.mxu0 %v6623
        %7866 = vmatpush1.bf16.msra.mxu0 %v6622
        %7867 = vmatprep.subr.bf16.mxu0 %v6619
        %7868 = vmatpush1.bf16.msra.mxu0 %v6618
        %7869 = vmatprep.subr.bf16.mxu0 %v6679
        %7870 = vmatpush2.bf16.msra.mxu0 %v6678
        %7871 = vmatprep.subr.bf16.mxu0 %v6675
        %7872 = vmatpush2.bf16.msra.mxu0 %v6674
        %7873 = vmatprep.subr.bf16.mxu0 %v6671
        %7874 = vmatpush2.bf16.msra.mxu0 %v6670
        %7875 = vmatprep.subr.bf16.mxu0 %v6667
        %7876 = vmatpush2.bf16.msra.mxu0 %v6666
        %7877 = vmatprep.subr.bf16.mxu0 %v6663
        %7878 = vmatpush2.bf16.msra.mxu0 %v6662
        %7879 = vmatprep.subr.bf16.mxu0 %v6659
        %7880 = vmatpush2.bf16.msra.mxu0 %v6658
        %7881 = vmatprep.subr.bf16.mxu0 %v6655
        %7882 = vmatpush2.bf16.msra.mxu0 %v6654
        %7883 = vmatprep.subr.bf16.mxu0 %v6651
        %7884 = vmatpush2.bf16.msra.mxu0 %v6650
        %7885 = vmatprep.mubr.bf16.mxu0 %v4221
        %7886 = vmatmul.mubr.bf16.gmra.mxu0 %v4220
        %v7887 = vpop.f32.mrf.mxu0
        %v7888 = vadd.f32 %v7847, %v7887
        %v7889 = vpop.f32.mrf.mxu0
        %v7890 = vadd.f32 %v7849, %v7889
        %v7891 = vpop.f32.mrf.mxu0
        %v7892 = vpop.f32.mrf.mxu0
        %7893 = vdwg.mxu0
        %7894 = vmatprep.subr.bf16.mxu0 %v6711
        %7895 = vmatpush1.bf16.msra.mxu0 %v6710
        %7896 = vmatprep.subr.bf16.mxu0 %v6707
        %7897 = vmatpush1.bf16.msra.mxu0 %v6706
        %7898 = vmatprep.subr.bf16.mxu0 %v6703
        %7899 = vmatpush1.bf16.msra.mxu0 %v6702
        %7900 = vmatprep.subr.bf16.mxu0 %v6699
        %7901 = vmatpush1.bf16.msra.mxu0 %v6698
        %7902 = vmatprep.subr.bf16.mxu0 %v6695
        %7903 = vmatpush1.bf16.msra.mxu0 %v6694
        %7904 = vmatprep.subr.bf16.mxu0 %v6691
        %7905 = vmatpush1.bf16.msra.mxu0 %v6690
        %7906 = vmatprep.subr.bf16.mxu0 %v6687
        %7907 = vmatpush1.bf16.msra.mxu0 %v6686
        %7908 = vmatprep.subr.bf16.mxu0 %v6683
        %7909 = vmatpush1.bf16.msra.mxu0 %v6682
        %7910 = vmatprep.subr.bf16.mxu0 %v6743
        %7911 = vmatpush2.bf16.msra.mxu0 %v6742
        %7912 = vmatprep.subr.bf16.mxu0 %v6739
        %7913 = vmatpush2.bf16.msra.mxu0 %v6738
        %7914 = vmatprep.subr.bf16.mxu0 %v6735
        %7915 = vmatpush2.bf16.msra.mxu0 %v6734
        %7916 = vmatprep.subr.bf16.mxu0 %v6731
        %7917 = vmatpush2.bf16.msra.mxu0 %v6730
        %7918 = vmatprep.subr.bf16.mxu0 %v6727
        %7919 = vmatpush2.bf16.msra.mxu0 %v6726
        %7920 = vmatprep.subr.bf16.mxu0 %v6723
        %7921 = vmatpush2.bf16.msra.mxu0 %v6722
        %7922 = vmatprep.subr.bf16.mxu0 %v6719
        %7923 = vmatpush2.bf16.msra.mxu0 %v6718
        %7924 = vmatprep.subr.bf16.mxu0 %v6715
        %7925 = vmatpush2.bf16.msra.mxu0 %v6714
        %7926 = vmatprep.mubr.bf16.mxu0 %v4223
        %7927 = vmatmul.mubr.bf16.gmra.mxu0 %v4222
        %v7928 = vpop.f32.mrf.mxu0
        %v7929 = vadd.f32 %v7888, %v7928
        %v7930 = vpop.f32.mrf.mxu0
        %v7931 = vadd.f32 %v7890, %v7930
        %v7932 = vpop.f32.mrf.mxu0
        %v7933 = vpop.f32.mrf.mxu0
        %7934 = vdwg.mxu0
        %7935 = vmatprep.subr.bf16.mxu0 %v6775
        %7936 = vmatpush1.bf16.msra.mxu0 %v6774
        %7937 = vmatprep.subr.bf16.mxu0 %v6771
        %7938 = vmatpush1.bf16.msra.mxu0 %v6770
        %7939 = vmatprep.subr.bf16.mxu0 %v6767
        %7940 = vmatpush1.bf16.msra.mxu0 %v6766
        %7941 = vmatprep.subr.bf16.mxu0 %v6763
        %7942 = vmatpush1.bf16.msra.mxu0 %v6762
        %7943 = vmatprep.subr.bf16.mxu0 %v6759
        %7944 = vmatpush1.bf16.msra.mxu0 %v6758
        %7945 = vmatprep.subr.bf16.mxu0 %v6755
        %7946 = vmatpush1.bf16.msra.mxu0 %v6754
        %7947 = vmatprep.subr.bf16.mxu0 %v6751
        %7948 = vmatpush1.bf16.msra.mxu0 %v6750
        %7949 = vmatprep.subr.bf16.mxu0 %v6747
        %7950 = vmatpush1.bf16.msra.mxu0 %v6746
        %7951 = vmatprep.subr.bf16.mxu0 %v6807
        %7952 = vmatpush2.bf16.msra.mxu0 %v6806
        %7953 = vmatprep.subr.bf16.mxu0 %v6803
        %7954 = vmatpush2.bf16.msra.mxu0 %v6802
        %7955 = vmatprep.subr.bf16.mxu0 %v6799
        %7956 = vmatpush2.bf16.msra.mxu0 %v6798
        %7957 = vmatprep.subr.bf16.mxu0 %v6795
        %7958 = vmatpush2.bf16.msra.mxu0 %v6794
        %7959 = vmatprep.subr.bf16.mxu0 %v6791
        %7960 = vmatpush2.bf16.msra.mxu0 %v6790
        %7961 = vmatprep.subr.bf16.mxu0 %v6787
        %7962 = vmatpush2.bf16.msra.mxu0 %v6786
        %7963 = vmatprep.subr.bf16.mxu0 %v6783
        %7964 = vmatpush2.bf16.msra.mxu0 %v6782
        %7965 = vmatprep.subr.bf16.mxu0 %v6779
        %7966 = vmatpush2.bf16.msra.mxu0 %v6778
        %7967 = vmatprep.mubr.bf16.mxu0 %v4225
        %7968 = vmatmul.mubr.bf16.gmra.mxu0 %v4224
        %v7969 = vpop.f32.mrf.mxu0
        %v7970 = vadd.f32 %v7929, %v7969
        %v7971 = vpop.f32.mrf.mxu0
        %v7972 = vadd.f32 %v7931, %v7971
        %v7973 = vpop.f32.mrf.mxu0
        %v7974 = vpop.f32.mrf.mxu0
        %7975 = vdwg.mxu0
        %v7976 = vadd.f32 %v374, %v7642
        %v7977 = vadd.f32 %v375, %v7644
        %v7978 = vadd.f32 %v376, %v7970
        %v7979 = vadd.f32 %v377, %v7972
        %v7980 = vadd.f32 %v7976, %v7977
        %v7981 = vadd.f32 %v7980, %v7978
        %v7982 = vadd.f32 %v7981, %v7979
        %7983 = vadd.xlane.f32.xlu0 %v7982
        %v7984 = vpop.xlane.xlu0 %7983
        %v7985 = vrcp.pop 512.0
        %v7986 = vmul.f32 %v7984, %v7985
        %v7987 = vsub.f32 %v7976, %v7986
        %v7988 = vsub.f32 %v7977, %v7986
        %v7989 = vsub.f32 %v7978, %v7986
        %v7990 = vsub.f32 %v7979, %v7986
        %v7991 = vmul.f32 %v7987, %v7987
        %v7992 = vmul.f32 %v7988, %v7988
        %v7993 = vmul.f32 %v7989, %v7989
        %v7994 = vmul.f32 %v7990, %v7990
        %v7995 = vadd.f32 %v7991, %v7992
        %v7996 = vadd.f32 %v7995, %v7993
        %v7997 = vadd.f32 %v7996, %v7994
        %7998 = vadd.xlane.f32.xlu0 %v7997
        %v7999 = vpop.xlane.xlu0 %7998
        %v8000 = vmul.f32 %v7999, %v7985
        %v8001 = vadd.f32 %v8000, 1e-05
        %v8002 = vrsqrt.pop %v8001
        %v8003 = vmul.f32 %v7987, %v8002
        %v8004 = vmul.f32 %v7988, %v8002
        %v8005 = vmul.f32 %v7989, %v8002
        %v8006 = vmul.f32 %v7990, %v8002
        %v8007 = vld [vmem:[#allocation11] sm:$0xf]
        %v8009 = vlaneseq
        %v8010 = vshrl.u32 %v8009, 7
        %v8011 = vsub.s32 0, %v8010
        %v8012 = vrot.slane %v8007, %v8011
        %v8013 = vlaneseq
        %v8014 = vshrl.u32 %v8013, 7
        %v8015 = vsub.s32 1, %v8014
        %v8016 = vrot.slane %v8007, %v8015
        %v8017 = vlaneseq
        %v8018 = vshrl.u32 %v8017, 7
        %v8019 = vsub.s32 2, %v8018
        %v8020 = vrot.slane %v8007, %v8019
        %v8021 = vlaneseq
        %v8022 = vshrl.u32 %v8021, 7
        %v8023 = vsub.s32 3, %v8022
        %v8024 = vrot.slane %v8007, %v8023
        %v8029 = vmul.f32 %v8003, %v8012
        %v8030 = vmul.f32 %v8004, %v8016
        %v8031 = vmul.f32 %v8005, %v8020
        %v8032 = vmul.f32 %v8006, %v8024
        %v8033 = vld [vmem:[#allocation13] sm:$0xf]
        %v8035 = vlaneseq
        %v8036 = vshrl.u32 %v8035, 7
        %v8037 = vsub.s32 0, %v8036
        %v8038 = vrot.slane %v8033, %v8037
        %v8039 = vlaneseq
        %v8040 = vshrl.u32 %v8039, 7
        %v8041 = vsub.s32 1, %v8040
        %v8042 = vrot.slane %v8033, %v8041
        %v8043 = vlaneseq
        %v8044 = vshrl.u32 %v8043, 7
        %v8045 = vsub.s32 2, %v8044
        %v8046 = vrot.slane %v8033, %v8045
        %v8047 = vlaneseq
        %v8048 = vshrl.u32 %v8047, 7
        %v8049 = vsub.s32 3, %v8048
        %v8050 = vrot.slane %v8033, %v8049
        %v8055 = vadd.f32 %v8029, %v8038
        %v8056 = vadd.f32 %v8030, %v8042
        %v8057 = vadd.f32 %v8031, %v8046
        %v8058 = vadd.f32 %v8032, %v8050
        %8059 = vst [vmem:[%s373] sm:$0xff] %v8055
        %8060 = vst [vmem:[%s373 + $0x8] sm:$0xff] %v8056
        %8061 = vst [vmem:[%s373 + $0x10] sm:$0xff] %v8057
        %8062 = vst [vmem:[%s373 + $0x18] sm:$0xff] %v8058
        %s8063 = sand.u32 %s187, 1
        %s8064 = scalar_lea.sflag [#allocation4], %s8063
        %s8065 = sand.u32 %s187, 1
        %s8066 = smul.addr %s8065, 32
        %s8067 = scalar_lea.vmem [#allocation14], %s8066
        // Predicated region
        $region77: #{positionwise_feed_forward.1} parent=47 // pred_check
          %p8068 = pneg %p197
        $region78: #{positionwise_feed_forward.1} parent=47 // pred_check_branch
          %8070 = sbr.rel (%p8068) target = $region80
        $region79: #{positionwise_feed_forward.1} parent=47 // pred_region
          %s8072 = ssub.s32 512, 512
          %8073 = vsyncadd %s8064, %s8072
          %s8074 = smul.addr %s27, 4
          %s8075 = smul.addr %s8074, 128
          %s8076 = scalar_lea.hbm %s7, %s8075
          %s8078 = sshll.u32 %s8067, 4
          %s8079 = int_to_ptr.vmem [resolvable:$true] %s8078
          %8081 = dma.vmem_to_hbm [thread:$0]  %s8079, 512, %s8076, %s8064
        $region80: #{positionwise_feed_forward.1} parent=47 // pred_fallthru
          _
      $region48: #{positionwise_feed_forward.1} parent=5 // pred_fallthru
        _
      %p8082 = scmp.le.s32.totalorder 2, %s22
      // Predicated region
      $region81: #{positionwise_feed_forward.1} parent=5 // pred_check
        %p8083 = pneg %p8082
      $region82: #{positionwise_feed_forward.1} parent=5 // pred_check_branch
        %8085 = sbr.rel (%p8083) target = $region84
      $region83: #{positionwise_feed_forward.1} parent=5 // pred_region
        %s8086 = ssub.s32 %s22, 2
        // Predicated region
        $region85: #{positionwise_feed_forward.1} parent=83 // pred_check
          %p8087 = pneg %p203
        $region86: #{positionwise_feed_forward.1} parent=83 // pred_check_branch
          %8089 = sbr.rel (%p8087) target = $region88
        $region87: #{positionwise_feed_forward.1} parent=83 // pred_region
          %s8090 = sand.u32 %s188, 1
          %s8091 = scalar_lea.sflag [#allocation4], %s8090
          %s8092 = sand.u32 %s188, 1
          %s8093 = smul.addr %s8092, 32
          %s8094 = scalar_lea.vmem [#allocation14], %s8093
          %8095 = dma.done %s8091, 512
        $region88: #{positionwise_feed_forward.1} parent=83 // pred_fallthru
          _
      $region84: #{positionwise_feed_forward.1} parent=5 // pred_fallthru
        _
    $region6: #{positionwise_feed_forward.1} parent=1 // loop_footer
      %s26 = sadd.s32 1, %s22
    $region7: #{positionwise_feed_forward.1} parent=1 // loop_footer_branch
      %21 = sbr.rel target = $region3
    $region8: #{positionwise_feed_forward.1} parent=1 // loop_exit
      _
    %8096 = vsyncpa [#allocation3], 1
    %s8097 = scalar_lea.sflag [#allocation3], 1
    %8098 = vsyncpa %s8097, 1
    %8099 = vsyncpa [#allocation6], 1
    %8100 = vsyncpa [#allocation9], 1
    %8101 = vsyncpa [#allocation12], 1
    %8102 = vsyncpa [#allocation4], 1
    %s8103 = scalar_lea.sflag [#allocation4], 1
    %8104 = vsyncpa %s8103, 1

</llo_original>
